<compile_context>
chip_gen: v7x
topology: tpu7x:2x2x1
jax: 0.10.0
libtpu: 0.0.40
codegen_flags: <defaults>
</compile_context>

<pallas_src>
import functools

import jax
import jax.numpy as jnp
from jax import lax
from jax.experimental import pallas as pl
from jax.experimental.pallas import tpu as pltpu

TM = 128  # max row tile for the matmul kernels


# ----------------------------- Pallas kernels -----------------------------

@functools.lru_cache(maxsize=None)
def _make_matmul_kernel(has_pro, has_epi):
    """Fused matmul kernel: [BN+ReLU prologue on A] -> MXU dot -> [BN+ReLU epilogue]."""

    def kernel(*refs):
        i = 0
        a_ref = refs[i]; i += 1
        b_ref = refs[i]; i += 1
        if has_pro:
            ps_ref, pb_ref = refs[i], refs[i + 1]; i += 2
        if has_epi:
            es_ref, eb_ref = refs[i], refs[i + 1]; i += 2
        o_ref = refs[i]

        if has_pro:
            # pre-activation BN + ReLU on the input tile, in f32 (v5e: no bf16 VPU)
            a = a_ref[...].astype(jnp.float32)
            a = jnp.maximum(a * ps_ref[...] + pb_ref[...], 0.0)
            a = a.astype(jnp.bfloat16)
        else:
            a = a_ref[...]
        y = jnp.dot(a, b_ref[...], preferred_element_type=jnp.float32)
        if has_epi:
            # BN + ReLU on the f32 accumulator (next layer's norm/relu)
            y = jnp.maximum(y * es_ref[...] + eb_ref[...], 0.0)
        o_ref[...] = y.astype(o_ref.dtype)

    return kernel


def _choose_tm(M):
    """Pick an M tile: no padding ever; >=2 parallel grid steps when possible (v7x megacore)."""
    if M % 8 != 0:
        return M                      # tiny M (e.g. batch=2): full-dim block is legal
    tm = min(TM, M)
    if M // tm < 2 and M >= 16:
        half = M // 2
        if half % 8 == 0:
            tm = half                 # split so both TensorCores get work on v7x
    return tm


def fused_matmul(a, b, pro=None, epi=None, out_dtype=jnp.bfloat16):
    """a: [M, K]; b: [K, N] bf16. pro/epi = (scale, shift) of shape (1,K)/(1,N) f32.
    Computes [relu(a*ps+pb)] @ b, optionally followed by relu(. * es + eb)."""
    M, K = a.shape
    K2, N = b.shape
    assert K == K2
    tm = _choose_tm(M)
    grid_m = pl.cdiv(M, tm)

    kernel = _make_matmul_kernel(pro is not None, epi is not None)
    in_specs = [pl.BlockSpec((tm, K), lambda i: (i, 0)),
                pl.BlockSpec((K, N), lambda i: (0, 0))]
    args = [a.astype(jnp.bfloat16), b]
    if pro is not None:
        in_specs += [pl.BlockSpec((1, K), lambda i: (0, 0)),
                     pl.BlockSpec((1, K), lambda i: (0, 0))]
        args += [pro[0], pro[1]]
    if epi is not None:
        in_specs += [pl.BlockSpec((1, N), lambda i: (0, 0)),
                     pl.BlockSpec((1, N), lambda i: (0, 0))]
        args += [epi[0], epi[1]]

    return pl.pallas_call(
        kernel,
        out_shape=jax.ShapeDtypeStruct((M, N), out_dtype),
        grid_spec=pltpu.PrefetchScalarGridSpec(
            num_scalar_prefetch=0,
            grid=(grid_m,),
            in_specs=in_specs,
            out_specs=pl.BlockSpec((tm, N), lambda i: (i, 0)),
        ),
        compiler_params=pltpu.CompilerParams(
            dimension_semantics=("parallel",),
            vmem_limit_bytes=32 * 1024 * 1024),
    )(*args)


def _fc_logsoftmax_kernel(a_ref, b_ref, ps_ref, pb_ref, bias_ref, o_ref):
    # norm5 + relu prologue (f32), MXU matmul (bf16), bias add + log_softmax epilogue.
    a = a_ref[...].astype(jnp.float32)
    a = jnp.maximum(a * ps_ref[...] + pb_ref[...], 0.0).astype(jnp.bfloat16)
    y = jnp.dot(a, b_ref[...], preferred_element_type=jnp.float32)
    y = y + bias_ref[...]
    m = jnp.max(y, axis=-1, keepdims=True)
    e = jnp.exp(y - m)
    o_ref[...] = y - m - jnp.log(jnp.sum(e, axis=-1, keepdims=True))


def fc_log_softmax(a, w_mat, bn_scale, bn_shift, bias):
    """a: [M, K]; w_mat: [K, C] bf16; returns log_softmax(relu(bn(a)) @ w + bias)."""
    M, K = a.shape
    N = w_mat.shape[1]
    return pl.pallas_call(
        _fc_logsoftmax_kernel,
        out_shape=jax.ShapeDtypeStruct((M, N), jnp.float32),
        in_specs=[pl.BlockSpec((M, K), lambda: (0, 0)),
                  pl.BlockSpec((K, N), lambda: (0, 0)),
                  pl.BlockSpec((1, K), lambda: (0, 0)),
                  pl.BlockSpec((1, K), lambda: (0, 0)),
                  pl.BlockSpec((1, N), lambda: (0, 0))],
        out_specs=pl.BlockSpec((M, N), lambda: (0, 0)),
    )(a.astype(jnp.bfloat16), w_mat, bn_scale, bn_shift, bias)


# ----------------------------- conv / pooling glue -----------------------------

def _im2col(x, kh, kw, stride, pad):
    # x: [N, H, W, C] -> [N, Ho, Wo, kh*kw*C]; window elements ordered (kh, kw, C)
    N, H, W, C = x.shape
    xp = jnp.pad(x, ((0, 0), (pad, pad), (pad, pad), (0, 0)))
    Ho = (H + 2 * pad - kh) // stride + 1
    Wo = (W + 2 * pad - kw) // stride + 1
    cols = []
    for i in range(kh):
        for j in range(kw):
            cols.append(xp[:, i:i + stride * Ho:stride,
                           j:j + stride * Wo:stride, :])
    return jnp.concatenate(cols, axis=-1), Ho, Wo


def conv1x1(x, w_mat, pro=None, epi=None):
    """1x1 conv as a fused matmul. x: [N,H,W,Cin]; w_mat: [Cin, Cout] bf16."""
    N, H, W, Cin = x.shape
    y = fused_matmul(x.reshape(-1, Cin), w_mat, pro=pro, epi=epi)
    return y.reshape(N, H, W, -1)


def conv_kxk(x, w_mat, kh, kw, stride, pad, epi=None):
    """kxk conv via im2col + fused matmul. w_mat: [kh*kw*Cin, Cout] bf16."""
    # TODO(synk): tap-accumulation (K-reduction grid axis) would avoid im2col HBM traffic;
    # at these tiny shapes launch overhead dominates, so im2col is kept.
    cols, Ho, Wo = _im2col(x, kh, kw, stride, pad)
    N = x.shape[0]
    a = cols.reshape(-1, cols.shape[-1])
    y = fused_matmul(a, w_mat, epi=epi)
    return y.reshape(N, Ho, Wo, -1)


def max_pool_3x3_s2_p1(x):
    # Matches nn.MaxPool2d(kernel_size=3, stride=2, padding=1) (-inf padding).
    N, H, W, C = x.shape
    Ho = (H + 2 - 3) // 2 + 1
    Wo = (W + 2 - 3) // 2 + 1
    neg = jnp.array(-jnp.inf, dtype=x.dtype)
    xp = jnp.pad(x, ((0, 0), (1, 1), (1, 1), (0, 0)), constant_values=neg)
    out = None
    for i in range(3):
        for j in range(3):
            t = xp[:, i:i + 2 * Ho:2, j:j + 2 * Wo:2, :]
            out = t if out is None else jnp.maximum(out, t)
    return out


def avg_pool_2x2(x):
    # Matches nn.AvgPool2d(kernel_size=2, stride=2), no padding.
    N, H, W, C = x.shape
    return x.reshape(N, H // 2, 2, W // 2, 2, C).mean(axis=(2, 4))


# ----------------------------- parameters -----------------------------

def _kaiming_normal(key, shape):
    # nn.init.kaiming_normal: fan_in, gain=sqrt(2). shape = [Cout, Cin, kh, kw]
    fan_in = shape[1] * shape[2] * shape[3]
    std = (2.0 / fan_in) ** 0.5
    return std * jax.random.normal(key, shape, dtype=jnp.float32)


def _make_bn(c):
    return dict(gamma=jnp.ones((c,), jnp.float32),
                beta=jnp.zeros((c,), jnp.float32),
                mean=jnp.zeros((c,), jnp.float32),
                var=jnp.ones((c,), jnp.float32))


def init_densenet(key, growth_rate=8, block_config=(2, 2, 2, 2),
                  num_init_features=16, bn_size=4, num_classes=10):
    keys = iter(jax.random.split(key, 256))
    params = {}
    params['conv0'] = _kaiming_normal(next(keys), (num_init_features, 3, 7, 7))
    params['norm0'] = _make_bn(num_init_features)
    num_features = num_init_features
    blocks = []
    for i, num_layers in enumerate(block_config):
        layers = []
        for l in range(num_layers):
            nin = num_features + l * growth_rate
            layers.append(dict(
                norm1=_make_bn(nin),
                conv1=_kaiming_normal(next(keys),
                                      (bn_size * growth_rate, nin, 1, 1)),
                norm2=_make_bn(bn_size * growth_rate),
                conv2=_kaiming_normal(next(keys),
                                      (growth_rate, bn_size * growth_rate, 3, 3)),
            ))
        num_features += num_layers * growth_rate
        block = dict(layers=layers)
        if i != len(block_config) - 1:
            block['trans_norm'] = _make_bn(num_features)
            block['trans_conv'] = _kaiming_normal(
                next(keys), (num_features // 2, num_features, 1, 1))
            num_features //= 2
        blocks.append(block)
    params['blocks'] = blocks
    params['norm5'] = _make_bn(num_features)
    bound = 1.0 / (num_features ** 0.5)  # PyTorch default Linear weight init
    params['fc_w'] = jax.random.uniform(next(keys), (num_classes, num_features),
                                        jnp.float32, -bound, bound)
    params['fc_b'] = jnp.zeros((num_classes,), jnp.float32)  # zeroed in __init__
    return params


def _fold_bn(bn, eps=1e-5):
    # inference-mode BN folded to (scale, shift), shaped (1, C) f32
    scale = bn['gamma'] / jnp.sqrt(bn['var'] + eps)
    shift = bn['beta'] - bn['mean'] * scale
    c = scale.shape[0]
    return (scale.reshape(1, c).astype(jnp.float32),
            shift.reshape(1, c).astype(jnp.float32))


def _conv_w_to_mat(w):
    # PyTorch [Cout, Cin, kh, kw] -> matmul B of shape [(kh*kw*Cin), Cout], bf16,
    # ordered (kh, kw, Cin) to match _im2col column order.
    Cout, Cin, kh, kw = w.shape
    return jnp.transpose(w, (2, 3, 1, 0)).reshape(kh * kw * Cin, Cout).astype(jnp.bfloat16)


def prepare_params(params):
    """One-time parameter prep: fold BN, reshape/transpose/cast conv + fc weights."""
    p = {'conv0_w': _conv_w_to_mat(params['conv0']),
         'bn0': _fold_bn(params['norm0'])}
    blocks = []
    for block in params['blocks']:
        b = {'layers': []}
        for layer in block['layers']:
            b['layers'].append(dict(
                bn1=_fold_bn(layer['norm1']),
                w1=_conv_w_to_mat(layer['conv1']),
                bn2=_fold_bn(layer['norm2']),
                w2=_conv_w_to_mat(layer['conv2']),
            ))
        if 'trans_norm' in block:
            b['trans_bn'] = _fold_bn(block['trans_norm'])
            b['trans_w'] = _conv_w_to_mat(block['trans_conv'])
        blocks.append(b)
    p['blocks'] = blocks
    p['bn5'] = _fold_bn(params['norm5'])
    p['fc_w'] = params['fc_w'].T.astype(jnp.bfloat16)          # (num_features, num_classes)
    p['fc_b'] = params['fc_b'].reshape(1, -1).astype(jnp.float32)
    return p


# ----------------------------- forward -----------------------------

def densenet_forward(p, x_nchw):
    # layout: NCHW (PyTorch) in -> NHWC internally, bf16 activations
    x = jnp.transpose(x_nchw, (0, 2, 3, 1)).astype(jnp.bfloat16)
    # conv0 + fused norm0/relu0 epilogue, then maxpool
    x = conv_kxk(x, p['conv0_w'], 7, 7, 2, 3, epi=p['bn0'])
    x = max_pool_3x3_s2_p1(x)
    for block in p['blocks']:
        for layer in block['layers']:
            # norm1+relu1 prologue, 1x1 bottleneck conv, norm2+relu2 epilogue — one kernel
            h = conv1x1(x, layer['w1'], pro=layer['bn1'], epi=layer['bn2'])
            # 3x3 conv (input already activated)
            h = conv_kxk(h, layer['w2'], 3, 3, 1, 1)
            # drop_rate = 0 -> F.dropout is a no-op
            x = jnp.concatenate([x, h], axis=-1)     # torch.cat([x, new], dim=1)
        if 'trans_w' in block:
            # transition: norm+relu fused as prologue of the 1x1 conv, then avgpool
            x = conv1x1(x, block['trans_w'], pro=block['trans_bn'])
            x = avg_pool_2x2(x)
    # norm5 + F.relu + view + Linear + log_softmax fused into one kernel.
    # PyTorch: out.view(N, -1) on NCHW features (spatial is 1x1 here).
    N = x.shape[0]
    feat = jnp.transpose(x, (0, 3, 1, 2)).reshape(N, -1)
    return fc_log_softmax(feat, p['fc_w'], p['bn5'][0], p['bn5'][1], p['fc_b'])


if __name__ == "__main__":
    key = jax.random.PRNGKey(0)
    pkey, xkey = jax.random.split(key)
    # Small DenseNet-BC: growth=8, blocks=(2,2,2,2), init=16, classes=10.
    raw_params = init_densenet(pkey)
    params = prepare_params(raw_params)
    # 32x32 input (CIFAR-10 sized) so the final feature map is 1x1, as required
    # by the module's `view(N, -1)` right before the classifier.
    x = jax.random.normal(xkey, (2, 3, 32, 32), dtype=jnp.float32)
    fwd = jax.jit(functools.partial(densenet_forward, params))
    out = fwd(x)
    jax.block_until_ready(out)
    assert out.shape == (2, 10)
    assert bool(jnp.all(jnp.isfinite(out)))
    print("KERNEL_OK")
</pallas_src>

<mosaic_0001>
module attributes {stable_mosaic.version = 11 : i64} {
  func.func @kernel(%arg0: i32, %arg1: memref<128x147xbf16, #tpu.memory_space<vmem>>, %arg2: memref<147x16xbf16, #tpu.memory_space<vmem>>, %arg3: memref<1x16xf32, #tpu.memory_space<vmem>>, %arg4: memref<1x16xf32, #tpu.memory_space<vmem>>, %arg5: memref<128x16xbf16, #tpu.memory_space<vmem>>) attributes {dimension_semantics = [#tpu.dimension_semantics<parallel>], iteration_bounds = array<i64: 4>, scalar_prefetch = 0 : i64, scratch_operands = 0 : i64, tpu.core_type = #tpu.core_type<tc>, window_params = [{transform_indices = @transform_0, window_bounds = array<i64: 128, 147>}, {pipeline_mode = #tpu.pipeline_mode<synchronous>, transform_indices = @transform_1, window_bounds = array<i64: 147, 16>}, {pipeline_mode = #tpu.pipeline_mode<synchronous>, transform_indices = @transform_2, window_bounds = array<i64: 1, 16>}, {pipeline_mode = #tpu.pipeline_mode<synchronous>, transform_indices = @transform_3, window_bounds = array<i64: 1, 16>}, {transform_indices = @transform_4, window_bounds = array<i64: 128, 16>}]} {
    %c0 = arith.constant 0 : index
    %c0_0 = arith.constant 0 : index
    %0 = vector.load %arg1[%c0, %c0_0] : memref<128x147xbf16, #tpu.memory_space<vmem>>, vector<128x147xbf16>
    %c0_1 = arith.constant 0 : index
    %c0_2 = arith.constant 0 : index
    %1 = vector.load %arg2[%c0_1, %c0_2] : memref<147x16xbf16, #tpu.memory_space<vmem>>, vector<147x16xbf16>
    %cst = arith.constant dense<0.000000e+00> : vector<128x16xf32>
    %2 = tpu.matmul %0, %1, %cst {dimension_numbers = #tpu.dot_dimension_numbers<[1], [0], [0], [1], [0, 0, 1, 1], [], []>} : vector<128x147xbf16>, vector<147x16xbf16>, vector<128x16xf32> -> vector<128x16xf32>
    %c0_3 = arith.constant 0 : index
    %c0_4 = arith.constant 0 : index
    %3 = vector.load %arg3[%c0_3, %c0_4] : memref<1x16xf32, #tpu.memory_space<vmem>>, vector<1x16xf32>
    %4 = vector.broadcast %3 : vector<1x16xf32> to vector<128x16xf32>
    %5 = arith.mulf %2, %4 : vector<128x16xf32>
    %c0_5 = arith.constant 0 : index
    %c0_6 = arith.constant 0 : index
    %6 = vector.load %arg4[%c0_5, %c0_6] : memref<1x16xf32, #tpu.memory_space<vmem>>, vector<1x16xf32>
    %7 = vector.broadcast %6 : vector<1x16xf32> to vector<128x16xf32>
    %8 = arith.addf %5, %7 : vector<128x16xf32>
    %cst_7 = arith.constant 0.000000e+00 : f32
    %9 = vector.broadcast %cst_7 : f32 to vector<128x16xf32>
    %10 = arith.maximumf %8, %9 : vector<128x16xf32>
    %11 = arith.truncf %10 : vector<128x16xf32> to vector<128x16xbf16>
    %c0_8 = arith.constant 0 : index
    %c0_9 = arith.constant 0 : index
    %12 = vector.load %arg5[%c0_8, %c0_9] : memref<128x16xbf16, #tpu.memory_space<vmem>>, vector<128x16xbf16>
    tpu.vector_store %arg5[%c0_8, %c0_9], %11 {strides = array<i32>} : memref<128x16xbf16, #tpu.memory_space<vmem>>, vector<128x16xbf16>,
    return
  }
  func.func @transform_0(%arg0: i32) -> (i32, i32) {
    %c0_i32 = arith.constant 0 : i32
    %c0_i32_0 = arith.constant 0 : i32
    return %arg0, %c0_i32 : i32, i32
  }
  func.func @transform_1(%arg0: i32) -> (i32, i32) {
    %c0_i32 = arith.constant 0 : i32
    %c0_i32_0 = arith.constant 0 : i32
    %c0_i32_1 = arith.constant 0 : i32
    return %c0_i32, %c0_i32_0 : i32, i32
  }
  func.func @transform_2(%arg0: i32) -> (i32, i32) {
    %c0_i32 = arith.constant 0 : i32
    %c0_i32_0 = arith.constant 0 : i32
    %c0_i32_1 = arith.constant 0 : i32
    return %c0_i32, %c0_i32_0 : i32, i32
  }
  func.func @transform_3(%arg0: i32) -> (i32, i32) {
    %c0_i32 = arith.constant 0 : i32
    %c0_i32_0 = arith.constant 0 : i32
    %c0_i32_1 = arith.constant 0 : i32
    return %c0_i32, %c0_i32_0 : i32, i32
  }
  func.func @transform_4(%arg0: i32) -> (i32, i32) {
    %c0_i32 = arith.constant 0 : i32
    %c0_i32_0 = arith.constant 0 : i32
    return %arg0, %c0_i32 : i32, i32
  }
}

module attributes {stable_mosaic.version = 11 : i64} {
  func.func @kernel(%arg0: i32, %arg1: memref<64x16xbf16, #tpu.memory_space<vmem>>, %arg2: memref<16x32xbf16, #tpu.memory_space<vmem>>, %arg3: memref<1x16xf32, #tpu.memory_space<vmem>>, %arg4: memref<1x16xf32, #tpu.memory_space<vmem>>, %arg5: memref<1x32xf32, #tpu.memory_space<vmem>>, %arg6: memref<1x32xf32, #tpu.memory_space<vmem>>, %arg7: memref<64x32xbf16, #tpu.memory_space<vmem>>) attributes {dimension_semantics = [#tpu.dimension_semantics<parallel>], iteration_bounds = array<i64: 2>, scalar_prefetch = 0 : i64, scratch_operands = 0 : i64, tpu.core_type = #tpu.core_type<tc>, window_params = [{transform_indices = @transform_0, window_bounds = array<i64: 64, 16>}, {pipeline_mode = #tpu.pipeline_mode<synchronous>, transform_indices = @transform_1, window_bounds = array<i64: 16, 32>}, {pipeline_mode = #tpu.pipeline_mode<synchronous>, transform_indices = @transform_2, window_bounds = array<i64: 1, 16>}, {pipeline_mode = #tpu.pipeline_mode<synchronous>, transform_indices = @transform_3, window_bounds = array<i64: 1, 16>}, {pipeline_mode = #tpu.pipeline_mode<synchronous>, transform_indices = @transform_4, window_bounds = array<i64: 1, 32>}, {pipeline_mode = #tpu.pipeline_mode<synchronous>, transform_indices = @transform_5, window_bounds = array<i64: 1, 32>}, {transform_indices = @transform_6, window_bounds = array<i64: 64, 32>}]} {
    %c0 = arith.constant 0 : index
    %c0_0 = arith.constant 0 : index
    %0 = vector.load %arg1[%c0, %c0_0] : memref<64x16xbf16, #tpu.memory_space<vmem>>, vector<64x16xbf16>
    %1 = arith.extf %0 : vector<64x16xbf16> to vector<64x16xf32>
    %c0_1 = arith.constant 0 : index
    %c0_2 = arith.constant 0 : index
    %2 = vector.load %arg3[%c0_1, %c0_2] : memref<1x16xf32, #tpu.memory_space<vmem>>, vector<1x16xf32>
    %3 = vector.broadcast %2 : vector<1x16xf32> to vector<64x16xf32>
    %4 = arith.mulf %1, %3 : vector<64x16xf32>
    %c0_3 = arith.constant 0 : index
    %c0_4 = arith.constant 0 : index
    %5 = vector.load %arg4[%c0_3, %c0_4] : memref<1x16xf32, #tpu.memory_space<vmem>>, vector<1x16xf32>
    %6 = vector.broadcast %5 : vector<1x16xf32> to vector<64x16xf32>
    %7 = arith.addf %4, %6 : vector<64x16xf32>
    %cst = arith.constant 0.000000e+00 : f32
    %8 = vector.broadcast %cst : f32 to vector<64x16xf32>
    %9 = arith.maximumf %7, %8 : vector<64x16xf32>
    %10 = arith.truncf %9 : vector<64x16xf32> to vector<64x16xbf16>
    %c0_5 = arith.constant 0 : index
    %c0_6 = arith.constant 0 : index
    %11 = vector.load %arg2[%c0_5, %c0_6] : memref<16x32xbf16, #tpu.memory_space<vmem>>, vector<16x32xbf16>
    %cst_7 = arith.constant dense<0.000000e+00> : vector<64x32xf32>
    %12 = tpu.matmul %10, %11, %cst_7 {dimension_numbers = #tpu.dot_dimension_numbers<[1], [0], [0], [1], [0, 0, 1, 1], [], []>} : vector<64x16xbf16>, vector<16x32xbf16>, vector<64x32xf32> -> vector<64x32xf32>
    %c0_8 = arith.constant 0 : index
    %c0_9 = arith.constant 0 : index
    %13 = vector.load %arg5[%c0_8, %c0_9] : memref<1x32xf32, #tpu.memory_space<vmem>>, vector<1x32xf32>
    %14 = vector.broadcast %13 : vector<1x32xf32> to vector<64x32xf32>
    %15 = arith.mulf %12, %14 : vector<64x32xf32>
    %c0_10 = arith.constant 0 : index
    %c0_11 = arith.constant 0 : index
    %16 = vector.load %arg6[%c0_10, %c0_11] : memref<1x32xf32, #tpu.memory_space<vmem>>, vector<1x32xf32>
    %17 = vector.broadcast %16 : vector<1x32xf32> to vector<64x32xf32>
    %18 = arith.addf %15, %17 : vector<64x32xf32>
    %cst_12 = arith.constant 0.000000e+00 : f32
    %19 = vector.broadcast %cst_12 : f32 to vector<64x32xf32>
    %20 = arith.maximumf %18, %19 : vector<64x32xf32>
    %21 = arith.truncf %20 : vector<64x32xf32> to vector<64x32xbf16>
    %c0_13 = arith.constant 0 : index
    %c0_14 = arith.constant 0 : index
    %22 = vector.load %arg7[%c0_13, %c0_14] : memref<64x32xbf16, #tpu.memory_space<vmem>>, vector<64x32xbf16>
    tpu.vector_store %arg7[%c0_13, %c0_14], %21 {strides = array<i32>} : memref<64x32xbf16, #tpu.memory_space<vmem>>, vector<64x32xbf16>,
    return
  }
  func.func @transform_0(%arg0: i32) -> (i32, i32) {
    %c0_i32 = arith.constant 0 : i32
    %c0_i32_0 = arith.constant 0 : i32
    return %arg0, %c0_i32 : i32, i32
  }
  func.func @transform_1(%arg0: i32) -> (i32, i32) {
    %c0_i32 = arith.constant 0 : i32
    %c0_i32_0 = arith.constant 0 : i32
    %c0_i32_1 = arith.constant 0 : i32
    return %c0_i32, %c0_i32_0 : i32, i32
  }
  func.func @transform_2(%arg0: i32) -> (i32, i32) {
    %c0_i32 = arith.constant 0 : i32
    %c0_i32_0 = arith.constant 0 : i32
    %c0_i32_1 = arith.constant 0 : i32
    return %c0_i32, %c0_i32_0 : i32, i32
  }
  func.func @transform_3(%arg0: i32) -> (i32, i32) {
    %c0_i32 = arith.constant 0 : i32
    %c0_i32_0 = arith.constant 0 : i32
    %c0_i32_1 = arith.constant 0 : i32
    return %c0_i32, %c0_i32_0 : i32, i32
  }
  func.func @transform_4(%arg0: i32) -> (i32, i32) {
    %c0_i32 = arith.constant 0 : i32
    %c0_i32_0 = arith.constant 0 : i32
    %c0_i32_1 = arith.constant 0 : i32
    return %c0_i32, %c0_i32_0 : i32, i32
  }
  func.func @transform_5(%arg0: i32) -> (i32, i32) {
    %c0_i32 = arith.constant 0 : i32
    %c0_i32_0 = arith.constant 0 : i32
    %c0_i32_1 = arith.constant 0 : i32
    return %c0_i32, %c0_i32_0 : i32, i32
  }
  func.func @transform_6(%arg0: i32) -> (i32, i32) {
    %c0_i32 = arith.constant 0 : i32
    %c0_i32_0 = arith.constant 0 : i32
    return %arg0, %c0_i32 : i32, i32
  }
}

module attributes {stable_mosaic.version = 11 : i64} {
  func.func @kernel(%arg0: i32, %arg1: memref<64x288xbf16, #tpu.memory_space<vmem>>, %arg2: memref<288x8xbf16, #tpu.memory_space<vmem>>, %arg3: memref<64x8xbf16, #tpu.memory_space<vmem>>) attributes {dimension_semantics = [#tpu.dimension_semantics<parallel>], iteration_bounds = array<i64: 2>, scalar_prefetch = 0 : i64, scratch_operands = 0 : i64, tpu.core_type = #tpu.core_type<tc>, window_params = [{transform_indices = @transform_0, window_bounds = array<i64: 64, 288>}, {pipeline_mode = #tpu.pipeline_mode<synchronous>, transform_indices = @transform_1, window_bounds = array<i64: 288, 8>}, {transform_indices = @transform_2, window_bounds = array<i64: 64, 8>}]} {
    %c0 = arith.constant 0 : index
    %c0_0 = arith.constant 0 : index
    %0 = vector.load %arg1[%c0, %c0_0] : memref<64x288xbf16, #tpu.memory_space<vmem>>, vector<64x288xbf16>
    %c0_1 = arith.constant 0 : index
    %c0_2 = arith.constant 0 : index
    %1 = vector.load %arg2[%c0_1, %c0_2] : memref<288x8xbf16, #tpu.memory_space<vmem>>, vector<288x8xbf16>
    %cst = arith.constant dense<0.000000e+00> : vector<64x8xf32>
    %2 = tpu.matmul %0, %1, %cst {dimension_numbers = #tpu.dot_dimension_numbers<[1], [0], [0], [1], [0, 0, 1, 1], [], []>} : vector<64x288xbf16>, vector<288x8xbf16>, vector<64x8xf32> -> vector<64x8xf32>
    %3 = arith.truncf %2 : vector<64x8xf32> to vector<64x8xbf16>
    %c0_3 = arith.constant 0 : index
    %c0_4 = arith.constant 0 : index
    %4 = vector.load %arg3[%c0_3, %c0_4] : memref<64x8xbf16, #tpu.memory_space<vmem>>, vector<64x8xbf16>
    tpu.vector_store %arg3[%c0_3, %c0_4], %3 {strides = array<i32>} : memref<64x8xbf16, #tpu.memory_space<vmem>>, vector<64x8xbf16>,
    return
  }
  func.func @transform_0(%arg0: i32) -> (i32, i32) {
    %c0_i32 = arith.constant 0 : i32
    %c0_i32_0 = arith.constant 0 : i32
    return %arg0, %c0_i32 : i32, i32
  }
  func.func @transform_1(%arg0: i32) -> (i32, i32) {
    %c0_i32 = arith.constant 0 : i32
    %c0_i32_0 = arith.constant 0 : i32
    %c0_i32_1 = arith.constant 0 : i32
    return %c0_i32, %c0_i32_0 : i32, i32
  }
  func.func @transform_2(%arg0: i32) -> (i32, i32) {
    %c0_i32 = arith.constant 0 : i32
    %c0_i32_0 = arith.constant 0 : i32
    return %arg0, %c0_i32 : i32, i32
  }
}

module attributes {stable_mosaic.version = 11 : i64} {
  func.func @kernel(%arg0: i32, %arg1: memref<64x24xbf16, #tpu.memory_space<vmem>>, %arg2: memref<24x32xbf16, #tpu.memory_space<vmem>>, %arg3: memref<1x24xf32, #tpu.memory_space<vmem>>, %arg4: memref<1x24xf32, #tpu.memory_space<vmem>>, %arg5: memref<1x32xf32, #tpu.memory_space<vmem>>, %arg6: memref<1x32xf32, #tpu.memory_space<vmem>>, %arg7: memref<64x32xbf16, #tpu.memory_space<vmem>>) attributes {dimension_semantics = [#tpu.dimension_semantics<parallel>], iteration_bounds = array<i64: 2>, scalar_prefetch = 0 : i64, scratch_operands = 0 : i64, tpu.core_type = #tpu.core_type<tc>, window_params = [{transform_indices = @transform_0, window_bounds = array<i64: 64, 24>}, {pipeline_mode = #tpu.pipeline_mode<synchronous>, transform_indices = @transform_1, window_bounds = array<i64: 24, 32>}, {pipeline_mode = #tpu.pipeline_mode<synchronous>, transform_indices = @transform_2, window_bounds = array<i64: 1, 24>}, {pipeline_mode = #tpu.pipeline_mode<synchronous>, transform_indices = @transform_3, window_bounds = array<i64: 1, 24>}, {pipeline_mode = #tpu.pipeline_mode<synchronous>, transform_indices = @transform_4, window_bounds = array<i64: 1, 32>}, {pipeline_mode = #tpu.pipeline_mode<synchronous>, transform_indices = @transform_5, window_bounds = array<i64: 1, 32>}, {transform_indices = @transform_6, window_bounds = array<i64: 64, 32>}]} {
    %c0 = arith.constant 0 : index
    %c0_0 = arith.constant 0 : index
    %0 = vector.load %arg1[%c0, %c0_0] : memref<64x24xbf16, #tpu.memory_space<vmem>>, vector<64x24xbf16>
    %1 = arith.extf %0 : vector<64x24xbf16> to vector<64x24xf32>
    %c0_1 = arith.constant 0 : index
    %c0_2 = arith.constant 0 : index
    %2 = vector.load %arg3[%c0_1, %c0_2] : memref<1x24xf32, #tpu.memory_space<vmem>>, vector<1x24xf32>
    %3 = vector.broadcast %2 : vector<1x24xf32> to vector<64x24xf32>
    %4 = arith.mulf %1, %3 : vector<64x24xf32>
    %c0_3 = arith.constant 0 : index
    %c0_4 = arith.constant 0 : index
    %5 = vector.load %arg4[%c0_3, %c0_4] : memref<1x24xf32, #tpu.memory_space<vmem>>, vector<1x24xf32>
    %6 = vector.broadcast %5 : vector<1x24xf32> to vector<64x24xf32>
    %7 = arith.addf %4, %6 : vector<64x24xf32>
    %cst = arith.constant 0.000000e+00 : f32
    %8 = vector.broadcast %cst : f32 to vector<64x24xf32>
    %9 = arith.maximumf %7, %8 : vector<64x24xf32>
    %10 = arith.truncf %9 : vector<64x24xf32> to vector<64x24xbf16>
    %c0_5 = arith.constant 0 : index
    %c0_6 = arith.constant 0 : index
    %11 = vector.load %arg2[%c0_5, %c0_6] : memref<24x32xbf16, #tpu.memory_space<vmem>>, vector<24x32xbf16>
    %cst_7 = arith.constant dense<0.000000e+00> : vector<64x32xf32>
    %12 = tpu.matmul %10, %11, %cst_7 {dimension_numbers = #tpu.dot_dimension_numbers<[1], [0], [0], [1], [0, 0, 1, 1], [], []>} : vector<64x24xbf16>, vector<24x32xbf16>, vector<64x32xf32> -> vector<64x32xf32>
    %c0_8 = arith.constant 0 : index
    %c0_9 = arith.constant 0 : index
    %13 = vector.load %arg5[%c0_8, %c0_9] : memref<1x32xf32, #tpu.memory_space<vmem>>, vector<1x32xf32>
    %14 = vector.broadcast %13 : vector<1x32xf32> to vector<64x32xf32>
    %15 = arith.mulf %12, %14 : vector<64x32xf32>
    %c0_10 = arith.constant 0 : index
    %c0_11 = arith.constant 0 : index
    %16 = vector.load %arg6[%c0_10, %c0_11] : memref<1x32xf32, #tpu.memory_space<vmem>>, vector<1x32xf32>
    %17 = vector.broadcast %16 : vector<1x32xf32> to vector<64x32xf32>
    %18 = arith.addf %15, %17 : vector<64x32xf32>
    %cst_12 = arith.constant 0.000000e+00 : f32
    %19 = vector.broadcast %cst_12 : f32 to vector<64x32xf32>
    %20 = arith.maximumf %18, %19 : vector<64x32xf32>
    %21 = arith.truncf %20 : vector<64x32xf32> to vector<64x32xbf16>
    %c0_13 = arith.constant 0 : index
    %c0_14 = arith.constant 0 : index
    %22 = vector.load %arg7[%c0_13, %c0_14] : memref<64x32xbf16, #tpu.memory_space<vmem>>, vector<64x32xbf16>
    tpu.vector_store %arg7[%c0_13, %c0_14], %21 {strides = array<i32>} : memref<64x32xbf16, #tpu.memory_space<vmem>>, vector<64x32xbf16>,
    return
  }
  func.func @transform_0(%arg0: i32) -> (i32, i32) {
    %c0_i32 = arith.constant 0 : i32
    %c0_i32_0 = arith.constant 0 : i32
    return %arg0, %c0_i32 : i32, i32
  }
  func.func @transform_1(%arg0: i32) -> (i32, i32) {
    %c0_i32 = arith.constant 0 : i32
    %c0_i32_0 = arith.constant 0 : i32
    %c0_i32_1 = arith.constant 0 : i32
    return %c0_i32, %c0_i32_0 : i32, i32
  }
  func.func @transform_2(%arg0: i32) -> (i32, i32) {
    %c0_i32 = arith.constant 0 : i32
    %c0_i32_0 = arith.constant 0 : i32
    %c0_i32_1 = arith.constant 0 : i32
    return %c0_i32, %c0_i32_0 : i32, i32
  }
  func.func @transform_3(%arg0: i32) -> (i32, i32) {
    %c0_i32 = arith.constant 0 : i32
    %c0_i32_0 = arith.constant 0 : i32
    %c0_i32_1 = arith.constant 0 : i32
    return %c0_i32, %c0_i32_0 : i32, i32
  }
  func.func @transform_4(%arg0: i32) -> (i32, i32) {
    %c0_i32 = arith.constant 0 : i32
    %c0_i32_0 = arith.constant 0 : i32
    %c0_i32_1 = arith.constant 0 : i32
    return %c0_i32, %c0_i32_0 : i32, i32
  }
  func.func @transform_5(%arg0: i32) -> (i32, i32) {
    %c0_i32 = arith.constant 0 : i32
    %c0_i32_0 = arith.constant 0 : i32
    %c0_i32_1 = arith.constant 0 : i32
    return %c0_i32, %c0_i32_0 : i32, i32
  }
  func.func @transform_6(%arg0: i32) -> (i32, i32) {
    %c0_i32 = arith.constant 0 : i32
    %c0_i32_0 = arith.constant 0 : i32
    return %arg0, %c0_i32 : i32, i32
  }
}

module attributes {stable_mosaic.version = 11 : i64} {
  func.func @kernel(%arg0: i32, %arg1: memref<64x32xbf16, #tpu.memory_space<vmem>>, %arg2: memref<32x16xbf16, #tpu.memory_space<vmem>>, %arg3: memref<1x32xf32, #tpu.memory_space<vmem>>, %arg4: memref<1x32xf32, #tpu.memory_space<vmem>>, %arg5: memref<64x16xbf16, #tpu.memory_space<vmem>>) attributes {dimension_semantics = [#tpu.dimension_semantics<parallel>], iteration_bounds = array<i64: 2>, scalar_prefetch = 0 : i64, scratch_operands = 0 : i64, tpu.core_type = #tpu.core_type<tc>, window_params = [{transform_indices = @transform_0, window_bounds = array<i64: 64, 32>}, {pipeline_mode = #tpu.pipeline_mode<synchronous>, transform_indices = @transform_1, window_bounds = array<i64: 32, 16>}, {pipeline_mode = #tpu.pipeline_mode<synchronous>, transform_indices = @transform_2, window_bounds = array<i64: 1, 32>}, {pipeline_mode = #tpu.pipeline_mode<synchronous>, transform_indices = @transform_3, window_bounds = array<i64: 1, 32>}, {transform_indices = @transform_4, window_bounds = array<i64: 64, 16>}]} {
    %c0 = arith.constant 0 : index
    %c0_0 = arith.constant 0 : index
    %0 = vector.load %arg1[%c0, %c0_0] : memref<64x32xbf16, #tpu.memory_space<vmem>>, vector<64x32xbf16>
    %1 = arith.extf %0 : vector<64x32xbf16> to vector<64x32xf32>
    %c0_1 = arith.constant 0 : index
    %c0_2 = arith.constant 0 : index
    %2 = vector.load %arg3[%c0_1, %c0_2] : memref<1x32xf32, #tpu.memory_space<vmem>>, vector<1x32xf32>
    %3 = vector.broadcast %2 : vector<1x32xf32> to vector<64x32xf32>
    %4 = arith.mulf %1, %3 : vector<64x32xf32>
    %c0_3 = arith.constant 0 : index
    %c0_4 = arith.constant 0 : index
    %5 = vector.load %arg4[%c0_3, %c0_4] : memref<1x32xf32, #tpu.memory_space<vmem>>, vector<1x32xf32>
    %6 = vector.broadcast %5 : vector<1x32xf32> to vector<64x32xf32>
    %7 = arith.addf %4, %6 : vector<64x32xf32>
    %cst = arith.constant 0.000000e+00 : f32
    %8 = vector.broadcast %cst : f32 to vector<64x32xf32>
    %9 = arith.maximumf %7, %8 : vector<64x32xf32>
    %10 = arith.truncf %9 : vector<64x32xf32> to vector<64x32xbf16>
    %c0_5 = arith.constant 0 : index
    %c0_6 = arith.constant 0 : index
    %11 = vector.load %arg2[%c0_5, %c0_6] : memref<32x16xbf16, #tpu.memory_space<vmem>>, vector<32x16xbf16>
    %cst_7 = arith.constant dense<0.000000e+00> : vector<64x16xf32>
    %12 = tpu.matmul %10, %11, %cst_7 {dimension_numbers = #tpu.dot_dimension_numbers<[1], [0], [0], [1], [0, 0, 1, 1], [], []>} : vector<64x32xbf16>, vector<32x16xbf16>, vector<64x16xf32> -> vector<64x16xf32>
    %13 = arith.truncf %12 : vector<64x16xf32> to vector<64x16xbf16>
    %c0_8 = arith.constant 0 : index
    %c0_9 = arith.constant 0 : index
    %14 = vector.load %arg5[%c0_8, %c0_9] : memref<64x16xbf16, #tpu.memory_space<vmem>>, vector<64x16xbf16>
    tpu.vector_store %arg5[%c0_8, %c0_9], %13 {strides = array<i32>} : memref<64x16xbf16, #tpu.memory_space<vmem>>, vector<64x16xbf16>,
    return
  }
  func.func @transform_0(%arg0: i32) -> (i32, i32) {
    %c0_i32 = arith.constant 0 : i32
    %c0_i32_0 = arith.constant 0 : i32
    return %arg0, %c0_i32 : i32, i32
  }
  func.func @transform_1(%arg0: i32) -> (i32, i32) {
    %c0_i32 = arith.constant 0 : i32
    %c0_i32_0 = arith.constant 0 : i32
    %c0_i32_1 = arith.constant 0 : i32
    return %c0_i32, %c0_i32_0 : i32, i32
  }
  func.func @transform_2(%arg0: i32) -> (i32, i32) {
    %c0_i32 = arith.constant 0 : i32
    %c0_i32_0 = arith.constant 0 : i32
    %c0_i32_1 = arith.constant 0 : i32
    return %c0_i32, %c0_i32_0 : i32, i32
  }
  func.func @transform_3(%arg0: i32) -> (i32, i32) {
    %c0_i32 = arith.constant 0 : i32
    %c0_i32_0 = arith.constant 0 : i32
    %c0_i32_1 = arith.constant 0 : i32
    return %c0_i32, %c0_i32_0 : i32, i32
  }
  func.func @transform_4(%arg0: i32) -> (i32, i32) {
    %c0_i32 = arith.constant 0 : i32
    %c0_i32_0 = arith.constant 0 : i32
    return %arg0, %c0_i32 : i32, i32
  }
}

module attributes {stable_mosaic.version = 11 : i64} {
  func.func @kernel(%arg0: i32, %arg1: memref<16x16xbf16, #tpu.memory_space<vmem>>, %arg2: memref<16x32xbf16, #tpu.memory_space<vmem>>, %arg3: memref<1x16xf32, #tpu.memory_space<vmem>>, %arg4: memref<1x16xf32, #tpu.memory_space<vmem>>, %arg5: memref<1x32xf32, #tpu.memory_space<vmem>>, %arg6: memref<1x32xf32, #tpu.memory_space<vmem>>, %arg7: memref<16x32xbf16, #tpu.memory_space<vmem>>) attributes {dimension_semantics = [#tpu.dimension_semantics<parallel>], iteration_bounds = array<i64: 2>, scalar_prefetch = 0 : i64, scratch_operands = 0 : i64, tpu.core_type = #tpu.core_type<tc>, window_params = [{transform_indices = @transform_0, window_bounds = array<i64: 16, 16>}, {pipeline_mode = #tpu.pipeline_mode<synchronous>, transform_indices = @transform_1, window_bounds = array<i64: 16, 32>}, {pipeline_mode = #tpu.pipeline_mode<synchronous>, transform_indices = @transform_2, window_bounds = array<i64: 1, 16>}, {pipeline_mode = #tpu.pipeline_mode<synchronous>, transform_indices = @transform_3, window_bounds = array<i64: 1, 16>}, {pipeline_mode = #tpu.pipeline_mode<synchronous>, transform_indices = @transform_4, window_bounds = array<i64: 1, 32>}, {pipeline_mode = #tpu.pipeline_mode<synchronous>, transform_indices = @transform_5, window_bounds = array<i64: 1, 32>}, {transform_indices = @transform_6, window_bounds = array<i64: 16, 32>}]} {
    %c0 = arith.constant 0 : index
    %c0_0 = arith.constant 0 : index
    %0 = vector.load %arg1[%c0, %c0_0] : memref<16x16xbf16, #tpu.memory_space<vmem>>, vector<16x16xbf16>
    %1 = arith.extf %0 : vector<16x16xbf16> to vector<16x16xf32>
    %c0_1 = arith.constant 0 : index
    %c0_2 = arith.constant 0 : index
    %2 = vector.load %arg3[%c0_1, %c0_2] : memref<1x16xf32, #tpu.memory_space<vmem>>, vector<1x16xf32>
    %3 = vector.broadcast %2 : vector<1x16xf32> to vector<16x16xf32>
    %4 = arith.mulf %1, %3 : vector<16x16xf32>
    %c0_3 = arith.constant 0 : index
    %c0_4 = arith.constant 0 : index
    %5 = vector.load %arg4[%c0_3, %c0_4] : memref<1x16xf32, #tpu.memory_space<vmem>>, vector<1x16xf32>
    %6 = vector.broadcast %5 : vector<1x16xf32> to vector<16x16xf32>
    %7 = arith.addf %4, %6 : vector<16x16xf32>
    %cst = arith.constant 0.000000e+00 : f32
    %8 = vector.broadcast %cst : f32 to vector<16x16xf32>
    %9 = arith.maximumf %7, %8 : vector<16x16xf32>
    %10 = arith.truncf %9 : vector<16x16xf32> to vector<16x16xbf16>
    %c0_5 = arith.constant 0 : index
    %c0_6 = arith.constant 0 : index
    %11 = vector.load %arg2[%c0_5, %c0_6] : memref<16x32xbf16, #tpu.memory_space<vmem>>, vector<16x32xbf16>
    %cst_7 = arith.constant dense<0.000000e+00> : vector<16x32xf32>
    %12 = tpu.matmul %10, %11, %cst_7 {dimension_numbers = #tpu.dot_dimension_numbers<[1], [0], [0], [1], [0, 0, 1, 1], [], []>} : vector<16x16xbf16>, vector<16x32xbf16>, vector<16x32xf32> -> vector<16x32xf32>
    %c0_8 = arith.constant 0 : index
    %c0_9 = arith.constant 0 : index
    %13 = vector.load %arg5[%c0_8, %c0_9] : memref<1x32xf32, #tpu.memory_space<vmem>>, vector<1x32xf32>
    %14 = vector.broadcast %13 : vector<1x32xf32> to vector<16x32xf32>
    %15 = arith.mulf %12, %14 : vector<16x32xf32>
    %c0_10 = arith.constant 0 : index
    %c0_11 = arith.constant 0 : index
    %16 = vector.load %arg6[%c0_10, %c0_11] : memref<1x32xf32, #tpu.memory_space<vmem>>, vector<1x32xf32>
    %17 = vector.broadcast %16 : vector<1x32xf32> to vector<16x32xf32>
    %18 = arith.addf %15, %17 : vector<16x32xf32>
    %cst_12 = arith.constant 0.000000e+00 : f32
    %19 = vector.broadcast %cst_12 : f32 to vector<16x32xf32>
    %20 = arith.maximumf %18, %19 : vector<16x32xf32>
    %21 = arith.truncf %20 : vector<16x32xf32> to vector<16x32xbf16>
    %c0_13 = arith.constant 0 : index
    %c0_14 = arith.constant 0 : index
    %22 = vector.load %arg7[%c0_13, %c0_14] : memref<16x32xbf16, #tpu.memory_space<vmem>>, vector<16x32xbf16>
    tpu.vector_store %arg7[%c0_13, %c0_14], %21 {strides = array<i32>} : memref<16x32xbf16, #tpu.memory_space<vmem>>, vector<16x32xbf16>,
    return
  }
  func.func @transform_0(%arg0: i32) -> (i32, i32) {
    %c0_i32 = arith.constant 0 : i32
    %c0_i32_0 = arith.constant 0 : i32
    return %arg0, %c0_i32 : i32, i32
  }
  func.func @transform_1(%arg0: i32) -> (i32, i32) {
    %c0_i32 = arith.constant 0 : i32
    %c0_i32_0 = arith.constant 0 : i32
    %c0_i32_1 = arith.constant 0 : i32
    return %c0_i32, %c0_i32_0 : i32, i32
  }
  func.func @transform_2(%arg0: i32) -> (i32, i32) {
    %c0_i32 = arith.constant 0 : i32
    %c0_i32_0 = arith.constant 0 : i32
    %c0_i32_1 = arith.constant 0 : i32
    return %c0_i32, %c0_i32_0 : i32, i32
  }
  func.func @transform_3(%arg0: i32) -> (i32, i32) {
    %c0_i32 = arith.constant 0 : i32
    %c0_i32_0 = arith.constant 0 : i32
    %c0_i32_1 = arith.constant 0 : i32
    return %c0_i32, %c0_i32_0 : i32, i32
  }
  func.func @transform_4(%arg0: i32) -> (i32, i32) {
    %c0_i32 = arith.constant 0 : i32
    %c0_i32_0 = arith.constant 0 : i32
    %c0_i32_1 = arith.constant 0 : i32
    return %c0_i32, %c0_i32_0 : i32, i32
  }
  func.func @transform_5(%arg0: i32) -> (i32, i32) {
    %c0_i32 = arith.constant 0 : i32
    %c0_i32_0 = arith.constant 0 : i32
    %c0_i32_1 = arith.constant 0 : i32
    return %c0_i32, %c0_i32_0 : i32, i32
  }
  func.func @transform_6(%arg0: i32) -> (i32, i32) {
    %c0_i32 = arith.constant 0 : i32
    %c0_i32_0 = arith.constant 0 : i32
    return %arg0, %c0_i32 : i32, i32
  }
}

module attributes {stable_mosaic.version = 11 : i64} {
  func.func @kernel(%arg0: i32, %arg1: memref<16x288xbf16, #tpu.memory_space<vmem>>, %arg2: memref<288x8xbf16, #tpu.memory_space<vmem>>, %arg3: memref<16x8xbf16, #tpu.memory_space<vmem>>) attributes {dimension_semantics = [#tpu.dimension_semantics<parallel>], iteration_bounds = array<i64: 2>, scalar_prefetch = 0 : i64, scratch_operands = 0 : i64, tpu.core_type = #tpu.core_type<tc>, window_params = [{transform_indices = @transform_0, window_bounds = array<i64: 16, 288>}, {pipeline_mode = #tpu.pipeline_mode<synchronous>, transform_indices = @transform_1, window_bounds = array<i64: 288, 8>}, {transform_indices = @transform_2, window_bounds = array<i64: 16, 8>}]} {
    %c0 = arith.constant 0 : index
    %c0_0 = arith.constant 0 : index
    %0 = vector.load %arg1[%c0, %c0_0] : memref<16x288xbf16, #tpu.memory_space<vmem>>, vector<16x288xbf16>
    %c0_1 = arith.constant 0 : index
    %c0_2 = arith.constant 0 : index
    %1 = vector.load %arg2[%c0_1, %c0_2] : memref<288x8xbf16, #tpu.memory_space<vmem>>, vector<288x8xbf16>
    %cst = arith.constant dense<0.000000e+00> : vector<16x8xf32>
    %2 = tpu.matmul %0, %1, %cst {dimension_numbers = #tpu.dot_dimension_numbers<[1], [0], [0], [1], [0, 0, 1, 1], [], []>} : vector<16x288xbf16>, vector<288x8xbf16>, vector<16x8xf32> -> vector<16x8xf32>
    %3 = arith.truncf %2 : vector<16x8xf32> to vector<16x8xbf16>
    %c0_3 = arith.constant 0 : index
    %c0_4 = arith.constant 0 : index
    %4 = vector.load %arg3[%c0_3, %c0_4] : memref<16x8xbf16, #tpu.memory_space<vmem>>, vector<16x8xbf16>
    tpu.vector_store %arg3[%c0_3, %c0_4], %3 {strides = array<i32>} : memref<16x8xbf16, #tpu.memory_space<vmem>>, vector<16x8xbf16>,
    return
  }
  func.func @transform_0(%arg0: i32) -> (i32, i32) {
    %c0_i32 = arith.constant 0 : i32
    %c0_i32_0 = arith.constant 0 : i32
    return %arg0, %c0_i32 : i32, i32
  }
  func.func @transform_1(%arg0: i32) -> (i32, i32) {
    %c0_i32 = arith.constant 0 : i32
    %c0_i32_0 = arith.constant 0 : i32
    %c0_i32_1 = arith.constant 0 : i32
    return %c0_i32, %c0_i32_0 : i32, i32
  }
  func.func @transform_2(%arg0: i32) -> (i32, i32) {
    %c0_i32 = arith.constant 0 : i32
    %c0_i32_0 = arith.constant 0 : i32
    return %arg0, %c0_i32 : i32, i32
  }
}

module attributes {stable_mosaic.version = 11 : i64} {
  func.func @kernel(%arg0: i32, %arg1: memref<16x24xbf16, #tpu.memory_space<vmem>>, %arg2: memref<24x32xbf16, #tpu.memory_space<vmem>>, %arg3: memref<1x24xf32, #tpu.memory_space<vmem>>, %arg4: memref<1x24xf32, #tpu.memory_space<vmem>>, %arg5: memref<1x32xf32, #tpu.memory_space<vmem>>, %arg6: memref<1x32xf32, #tpu.memory_space<vmem>>, %arg7: memref<16x32xbf16, #tpu.memory_space<vmem>>) attributes {dimension_semantics = [#tpu.dimension_semantics<parallel>], iteration_bounds = array<i64: 2>, scalar_prefetch = 0 : i64, scratch_operands = 0 : i64, tpu.core_type = #tpu.core_type<tc>, window_params = [{transform_indices = @transform_0, window_bounds = array<i64: 16, 24>}, {pipeline_mode = #tpu.pipeline_mode<synchronous>, transform_indices = @transform_1, window_bounds = array<i64: 24, 32>}, {pipeline_mode = #tpu.pipeline_mode<synchronous>, transform_indices = @transform_2, window_bounds = array<i64: 1, 24>}, {pipeline_mode = #tpu.pipeline_mode<synchronous>, transform_indices = @transform_3, window_bounds = array<i64: 1, 24>}, {pipeline_mode = #tpu.pipeline_mode<synchronous>, transform_indices = @transform_4, window_bounds = array<i64: 1, 32>}, {pipeline_mode = #tpu.pipeline_mode<synchronous>, transform_indices = @transform_5, window_bounds = array<i64: 1, 32>}, {transform_indices = @transform_6, window_bounds = array<i64: 16, 32>}]} {
    %c0 = arith.constant 0 : index
    %c0_0 = arith.constant 0 : index
    %0 = vector.load %arg1[%c0, %c0_0] : memref<16x24xbf16, #tpu.memory_space<vmem>>, vector<16x24xbf16>
    %1 = arith.extf %0 : vector<16x24xbf16> to vector<16x24xf32>
    %c0_1 = arith.constant 0 : index
    %c0_2 = arith.constant 0 : index
    %2 = vector.load %arg3[%c0_1, %c0_2] : memref<1x24xf32, #tpu.memory_space<vmem>>, vector<1x24xf32>
    %3 = vector.broadcast %2 : vector<1x24xf32> to vector<16x24xf32>
    %4 = arith.mulf %1, %3 : vector<16x24xf32>
    %c0_3 = arith.constant 0 : index
    %c0_4 = arith.constant 0 : index
    %5 = vector.load %arg4[%c0_3, %c0_4] : memref<1x24xf32, #tpu.memory_space<vmem>>, vector<1x24xf32>
    %6 = vector.broadcast %5 : vector<1x24xf32> to vector<16x24xf32>
    %7 = arith.addf %4, %6 : vector<16x24xf32>
    %cst = arith.constant 0.000000e+00 : f32
    %8 = vector.broadcast %cst : f32 to vector<16x24xf32>
    %9 = arith.maximumf %7, %8 : vector<16x24xf32>
    %10 = arith.truncf %9 : vector<16x24xf32> to vector<16x24xbf16>
    %c0_5 = arith.constant 0 : index
    %c0_6 = arith.constant 0 : index
    %11 = vector.load %arg2[%c0_5, %c0_6] : memref<24x32xbf16, #tpu.memory_space<vmem>>, vector<24x32xbf16>
    %cst_7 = arith.constant dense<0.000000e+00> : vector<16x32xf32>
    %12 = tpu.matmul %10, %11, %cst_7 {dimension_numbers = #tpu.dot_dimension_numbers<[1], [0], [0], [1], [0, 0, 1, 1], [], []>} : vector<16x24xbf16>, vector<24x32xbf16>, vector<16x32xf32> -> vector<16x32xf32>
    %c0_8 = arith.constant 0 : index
    %c0_9 = arith.constant 0 : index
    %13 = vector.load %arg5[%c0_8, %c0_9] : memref<1x32xf32, #tpu.memory_space<vmem>>, vector<1x32xf32>
    %14 = vector.broadcast %13 : vector<1x32xf32> to vector<16x32xf32>
    %15 = arith.mulf %12, %14 : vector<16x32xf32>
    %c0_10 = arith.constant 0 : index
    %c0_11 = arith.constant 0 : index
    %16 = vector.load %arg6[%c0_10, %c0_11] : memref<1x32xf32, #tpu.memory_space<vmem>>, vector<1x32xf32>
    %17 = vector.broadcast %16 : vector<1x32xf32> to vector<16x32xf32>
    %18 = arith.addf %15, %17 : vector<16x32xf32>
    %cst_12 = arith.constant 0.000000e+00 : f32
    %19 = vector.broadcast %cst_12 : f32 to vector<16x32xf32>
    %20 = arith.maximumf %18, %19 : vector<16x32xf32>
    %21 = arith.truncf %20 : vector<16x32xf32> to vector<16x32xbf16>
    %c0_13 = arith.constant 0 : index
    %c0_14 = arith.constant 0 : index
    %22 = vector.load %arg7[%c0_13, %c0_14] : memref<16x32xbf16, #tpu.memory_space<vmem>>, vector<16x32xbf16>
    tpu.vector_store %arg7[%c0_13, %c0_14], %21 {strides = array<i32>} : memref<16x32xbf16, #tpu.memory_space<vmem>>, vector<16x32xbf16>,
    return
  }
  func.func @transform_0(%arg0: i32) -> (i32, i32) {
    %c0_i32 = arith.constant 0 : i32
    %c0_i32_0 = arith.constant 0 : i32
    return %arg0, %c0_i32 : i32, i32
  }
  func.func @transform_1(%arg0: i32) -> (i32, i32) {
    %c0_i32 = arith.constant 0 : i32
    %c0_i32_0 = arith.constant 0 : i32
    %c0_i32_1 = arith.constant 0 : i32
    return %c0_i32, %c0_i32_0 : i32, i32
  }
  func.func @transform_2(%arg0: i32) -> (i32, i32) {
    %c0_i32 = arith.constant 0 : i32
    %c0_i32_0 = arith.constant 0 : i32
    %c0_i32_1 = arith.constant 0 : i32
    return %c0_i32, %c0_i32_0 : i32, i32
  }
  func.func @transform_3(%arg0: i32) -> (i32, i32) {
    %c0_i32 = arith.constant 0 : i32
    %c0_i32_0 = arith.constant 0 : i32
    %c0_i32_1 = arith.constant 0 : i32
    return %c0_i32, %c0_i32_0 : i32, i32
  }
  func.func @transform_4(%arg0: i32) -> (i32, i32) {
    %c0_i32 = arith.constant 0 : i32
    %c0_i32_0 = arith.constant 0 : i32
    %c0_i32_1 = arith.constant 0 : i32
    return %c0_i32, %c0_i32_0 : i32, i32
  }
  func.func @transform_5(%arg0: i32) -> (i32, i32) {
    %c0_i32 = arith.constant 0 : i32
    %c0_i32_0 = arith.constant 0 : i32
    %c0_i32_1 = arith.constant 0 : i32
    return %c0_i32, %c0_i32_0 : i32, i32
  }
  func.func @transform_6(%arg0: i32) -> (i32, i32) {
    %c0_i32 = arith.constant 0 : i32
    %c0_i32_0 = arith.constant 0 : i32
    return %arg0, %c0_i32 : i32, i32
  }
}

module attributes {stable_mosaic.version = 11 : i64} {
  func.func @kernel(%arg0: i32, %arg1: memref<16x32xbf16, #tpu.memory_space<vmem>>, %arg2: memref<32x16xbf16, #tpu.memory_space<vmem>>, %arg3: memref<1x32xf32, #tpu.memory_space<vmem>>, %arg4: memref<1x32xf32, #tpu.memory_space<vmem>>, %arg5: memref<16x16xbf16, #tpu.memory_space<vmem>>) attributes {dimension_semantics = [#tpu.dimension_semantics<parallel>], iteration_bounds = array<i64: 2>, scalar_prefetch = 0 : i64, scratch_operands = 0 : i64, tpu.core_type = #tpu.core_type<tc>, window_params = [{transform_indices = @transform_0, window_bounds = array<i64: 16, 32>}, {pipeline_mode = #tpu.pipeline_mode<synchronous>, transform_indices = @transform_1, window_bounds = array<i64: 32, 16>}, {pipeline_mode = #tpu.pipeline_mode<synchronous>, transform_indices = @transform_2, window_bounds = array<i64: 1, 32>}, {pipeline_mode = #tpu.pipeline_mode<synchronous>, transform_indices = @transform_3, window_bounds = array<i64: 1, 32>}, {transform_indices = @transform_4, window_bounds = array<i64: 16, 16>}]} {
    %c0 = arith.constant 0 : index
    %c0_0 = arith.constant 0 : index
    %0 = vector.load %arg1[%c0, %c0_0] : memref<16x32xbf16, #tpu.memory_space<vmem>>, vector<16x32xbf16>
    %1 = arith.extf %0 : vector<16x32xbf16> to vector<16x32xf32>
    %c0_1 = arith.constant 0 : index
    %c0_2 = arith.constant 0 : index
    %2 = vector.load %arg3[%c0_1, %c0_2] : memref<1x32xf32, #tpu.memory_space<vmem>>, vector<1x32xf32>
    %3 = vector.broadcast %2 : vector<1x32xf32> to vector<16x32xf32>
    %4 = arith.mulf %1, %3 : vector<16x32xf32>
    %c0_3 = arith.constant 0 : index
    %c0_4 = arith.constant 0 : index
    %5 = vector.load %arg4[%c0_3, %c0_4] : memref<1x32xf32, #tpu.memory_space<vmem>>, vector<1x32xf32>
    %6 = vector.broadcast %5 : vector<1x32xf32> to vector<16x32xf32>
    %7 = arith.addf %4, %6 : vector<16x32xf32>
    %cst = arith.constant 0.000000e+00 : f32
    %8 = vector.broadcast %cst : f32 to vector<16x32xf32>
    %9 = arith.maximumf %7, %8 : vector<16x32xf32>
    %10 = arith.truncf %9 : vector<16x32xf32> to vector<16x32xbf16>
    %c0_5 = arith.constant 0 : index
    %c0_6 = arith.constant 0 : index
    %11 = vector.load %arg2[%c0_5, %c0_6] : memref<32x16xbf16, #tpu.memory_space<vmem>>, vector<32x16xbf16>
    %cst_7 = arith.constant dense<0.000000e+00> : vector<16x16xf32>
    %12 = tpu.matmul %10, %11, %cst_7 {dimension_numbers = #tpu.dot_dimension_numbers<[1], [0], [0], [1], [0, 0, 1, 1], [], []>} : vector<16x32xbf16>, vector<32x16xbf16>, vector<16x16xf32> -> vector<16x16xf32>
    %13 = arith.truncf %12 : vector<16x16xf32> to vector<16x16xbf16>
    %c0_8 = arith.constant 0 : index
    %c0_9 = arith.constant 0 : index
    %14 = vector.load %arg5[%c0_8, %c0_9] : memref<16x16xbf16, #tpu.memory_space<vmem>>, vector<16x16xbf16>
    tpu.vector_store %arg5[%c0_8, %c0_9], %13 {strides = array<i32>} : memref<16x16xbf16, #tpu.memory_space<vmem>>, vector<16x16xbf16>,
    return
  }
  func.func @transform_0(%arg0: i32) -> (i32, i32) {
    %c0_i32 = arith.constant 0 : i32
    %c0_i32_0 = arith.constant 0 : i32
    return %arg0, %c0_i32 : i32, i32
  }
  func.func @transform_1(%arg0: i32) -> (i32, i32) {
    %c0_i32 = arith.constant 0 : i32
    %c0_i32_0 = arith.constant 0 : i32
    %c0_i32_1 = arith.constant 0 : i32
    return %c0_i32, %c0_i32_0 : i32, i32
  }
  func.func @transform_2(%arg0: i32) -> (i32, i32) {
    %c0_i32 = arith.constant 0 : i32
    %c0_i32_0 = arith.constant 0 : i32
    %c0_i32_1 = arith.constant 0 : i32
    return %c0_i32, %c0_i32_0 : i32, i32
  }
  func.func @transform_3(%arg0: i32) -> (i32, i32) {
    %c0_i32 = arith.constant 0 : i32
    %c0_i32_0 = arith.constant 0 : i32
    %c0_i32_1 = arith.constant 0 : i32
    return %c0_i32, %c0_i32_0 : i32, i32
  }
  func.func @transform_4(%arg0: i32) -> (i32, i32) {
    %c0_i32 = arith.constant 0 : i32
    %c0_i32_0 = arith.constant 0 : i32
    return %arg0, %c0_i32 : i32, i32
  }
}

module attributes {stable_mosaic.version = 11 : i64} {
  func.func @kernel(%arg0: i32, %arg1: memref<8x16xbf16, #tpu.memory_space<vmem>>, %arg2: memref<16x32xbf16, #tpu.memory_space<vmem>>, %arg3: memref<1x16xf32, #tpu.memory_space<vmem>>, %arg4: memref<1x16xf32, #tpu.memory_space<vmem>>, %arg5: memref<1x32xf32, #tpu.memory_space<vmem>>, %arg6: memref<1x32xf32, #tpu.memory_space<vmem>>, %arg7: memref<8x32xbf16, #tpu.memory_space<vmem>>) attributes {dimension_semantics = [#tpu.dimension_semantics<parallel>], iteration_bounds = array<i64: 1>, scalar_prefetch = 0 : i64, scratch_operands = 0 : i64, tpu.core_type = #tpu.core_type<tc>, window_params = [{transform_indices = @transform_0, window_bounds = array<i64: 8, 16>}, {pipeline_mode = #tpu.pipeline_mode<synchronous>, transform_indices = @transform_1, window_bounds = array<i64: 16, 32>}, {pipeline_mode = #tpu.pipeline_mode<synchronous>, transform_indices = @transform_2, window_bounds = array<i64: 1, 16>}, {pipeline_mode = #tpu.pipeline_mode<synchronous>, transform_indices = @transform_3, window_bounds = array<i64: 1, 16>}, {pipeline_mode = #tpu.pipeline_mode<synchronous>, transform_indices = @transform_4, window_bounds = array<i64: 1, 32>}, {pipeline_mode = #tpu.pipeline_mode<synchronous>, transform_indices = @transform_5, window_bounds = array<i64: 1, 32>}, {transform_indices = @transform_6, window_bounds = array<i64: 8, 32>}]} {
    %c0 = arith.constant 0 : index
    %c0_0 = arith.constant 0 : index
    %0 = vector.load %arg1[%c0, %c0_0] : memref<8x16xbf16, #tpu.memory_space<vmem>>, vector<8x16xbf16>
    %1 = arith.extf %0 : vector<8x16xbf16> to vector<8x16xf32>
    %c0_1 = arith.constant 0 : index
    %c0_2 = arith.constant 0 : index
    %2 = vector.load %arg3[%c0_1, %c0_2] : memref<1x16xf32, #tpu.memory_space<vmem>>, vector<1x16xf32>
    %3 = vector.broadcast %2 : vector<1x16xf32> to vector<8x16xf32>
    %4 = arith.mulf %1, %3 : vector<8x16xf32>
    %c0_3 = arith.constant 0 : index
    %c0_4 = arith.constant 0 : index
    %5 = vector.load %arg4[%c0_3, %c0_4] : memref<1x16xf32, #tpu.memory_space<vmem>>, vector<1x16xf32>
    %6 = vector.broadcast %5 : vector<1x16xf32> to vector<8x16xf32>
    %7 = arith.addf %4, %6 : vector<8x16xf32>
    %cst = arith.constant 0.000000e+00 : f32
    %8 = vector.broadcast %cst : f32 to vector<8x16xf32>
    %9 = arith.maximumf %7, %8 : vector<8x16xf32>
    %10 = arith.truncf %9 : vector<8x16xf32> to vector<8x16xbf16>
    %c0_5 = arith.constant 0 : index
    %c0_6 = arith.constant 0 : index
    %11 = vector.load %arg2[%c0_5, %c0_6] : memref<16x32xbf16, #tpu.memory_space<vmem>>, vector<16x32xbf16>
    %cst_7 = arith.constant dense<0.000000e+00> : vector<8x32xf32>
    %12 = tpu.matmul %10, %11, %cst_7 {dimension_numbers = #tpu.dot_dimension_numbers<[1], [0], [0], [1], [0, 0, 1, 1], [], []>} : vector<8x16xbf16>, vector<16x32xbf16>, vector<8x32xf32> -> vector<8x32xf32>
    %c0_8 = arith.constant 0 : index
    %c0_9 = arith.constant 0 : index
    %13 = vector.load %arg5[%c0_8, %c0_9] : memref<1x32xf32, #tpu.memory_space<vmem>>, vector<1x32xf32>
    %14 = vector.broadcast %13 : vector<1x32xf32> to vector<8x32xf32>
    %15 = arith.mulf %12, %14 : vector<8x32xf32>
    %c0_10 = arith.constant 0 : index
    %c0_11 = arith.constant 0 : index
    %16 = vector.load %arg6[%c0_10, %c0_11] : memref<1x32xf32, #tpu.memory_space<vmem>>, vector<1x32xf32>
    %17 = vector.broadcast %16 : vector<1x32xf32> to vector<8x32xf32>
    %18 = arith.addf %15, %17 : vector<8x32xf32>
    %cst_12 = arith.constant 0.000000e+00 : f32
    %19 = vector.broadcast %cst_12 : f32 to vector<8x32xf32>
    %20 = arith.maximumf %18, %19 : vector<8x32xf32>
    %21 = arith.truncf %20 : vector<8x32xf32> to vector<8x32xbf16>
    %c0_13 = arith.constant 0 : index
    %c0_14 = arith.constant 0 : index
    %22 = vector.load %arg7[%c0_13, %c0_14] : memref<8x32xbf16, #tpu.memory_space<vmem>>, vector<8x32xbf16>
    tpu.vector_store %arg7[%c0_13, %c0_14], %21 {strides = array<i32>} : memref<8x32xbf16, #tpu.memory_space<vmem>>, vector<8x32xbf16>,
    return
  }
  func.func @transform_0(%arg0: i32) -> (i32, i32) {
    %c0_i32 = arith.constant 0 : i32
    %c0_i32_0 = arith.constant 0 : i32
    return %arg0, %c0_i32 : i32, i32
  }
  func.func @transform_1(%arg0: i32) -> (i32, i32) {
    %c0_i32 = arith.constant 0 : i32
    %c0_i32_0 = arith.constant 0 : i32
    %c0_i32_1 = arith.constant 0 : i32
    return %c0_i32, %c0_i32_0 : i32, i32
  }
  func.func @transform_2(%arg0: i32) -> (i32, i32) {
    %c0_i32 = arith.constant 0 : i32
    %c0_i32_0 = arith.constant 0 : i32
    %c0_i32_1 = arith.constant 0 : i32
    return %c0_i32, %c0_i32_0 : i32, i32
  }
  func.func @transform_3(%arg0: i32) -> (i32, i32) {
    %c0_i32 = arith.constant 0 : i32
    %c0_i32_0 = arith.constant 0 : i32
    %c0_i32_1 = arith.constant 0 : i32
    return %c0_i32, %c0_i32_0 : i32, i32
  }
  func.func @transform_4(%arg0: i32) -> (i32, i32) {
    %c0_i32 = arith.constant 0 : i32
    %c0_i32_0 = arith.constant 0 : i32
    %c0_i32_1 = arith.constant 0 : i32
    return %c0_i32, %c0_i32_0 : i32, i32
  }
  func.func @transform_5(%arg0: i32) -> (i32, i32) {
    %c0_i32 = arith.constant 0 : i32
    %c0_i32_0 = arith.constant 0 : i32
    %c0_i32_1 = arith.constant 0 : i32
    return %c0_i32, %c0_i32_0 : i32, i32
  }
  func.func @transform_6(%arg0: i32) -> (i32, i32) {
    %c0_i32 = arith.constant 0 : i32
    %c0_i32_0 = arith.constant 0 : i32
    return %arg0, %c0_i32 : i32, i32
  }
}

module attributes {stable_mosaic.version = 11 : i64} {
  func.func @kernel(%arg0: i32, %arg1: memref<8x288xbf16, #tpu.memory_space<vmem>>, %arg2: memref<288x8xbf16, #tpu.memory_space<vmem>>, %arg3: memref<8x8xbf16, #tpu.memory_space<vmem>>) attributes {dimension_semantics = [#tpu.dimension_semantics<parallel>], iteration_bounds = array<i64: 1>, scalar_prefetch = 0 : i64, scratch_operands = 0 : i64, tpu.core_type = #tpu.core_type<tc>, window_params = [{transform_indices = @transform_0, window_bounds = array<i64: 8, 288>}, {pipeline_mode = #tpu.pipeline_mode<synchronous>, transform_indices = @transform_1, window_bounds = array<i64: 288, 8>}, {transform_indices = @transform_2, window_bounds = array<i64: 8, 8>}]} {
    %c0 = arith.constant 0 : index
    %c0_0 = arith.constant 0 : index
    %0 = vector.load %arg1[%c0, %c0_0] : memref<8x288xbf16, #tpu.memory_space<vmem>>, vector<8x288xbf16>
    %c0_1 = arith.constant 0 : index
    %c0_2 = arith.constant 0 : index
    %1 = vector.load %arg2[%c0_1, %c0_2] : memref<288x8xbf16, #tpu.memory_space<vmem>>, vector<288x8xbf16>
    %cst = arith.constant dense<0.000000e+00> : vector<8x8xf32>
    %2 = tpu.matmul %0, %1, %cst {dimension_numbers = #tpu.dot_dimension_numbers<[1], [0], [0], [1], [0, 0, 1, 1], [], []>} : vector<8x288xbf16>, vector<288x8xbf16>, vector<8x8xf32> -> vector<8x8xf32>
    %3 = arith.truncf %2 : vector<8x8xf32> to vector<8x8xbf16>
    %c0_3 = arith.constant 0 : index
    %c0_4 = arith.constant 0 : index
    %4 = vector.load %arg3[%c0_3, %c0_4] : memref<8x8xbf16, #tpu.memory_space<vmem>>, vector<8x8xbf16>
    tpu.vector_store %arg3[%c0_3, %c0_4], %3 {strides = array<i32>} : memref<8x8xbf16, #tpu.memory_space<vmem>>, vector<8x8xbf16>,
    return
  }
  func.func @transform_0(%arg0: i32) -> (i32, i32) {
    %c0_i32 = arith.constant 0 : i32
    %c0_i32_0 = arith.constant 0 : i32
    return %arg0, %c0_i32 : i32, i32
  }
  func.func @transform_1(%arg0: i32) -> (i32, i32) {
    %c0_i32 = arith.constant 0 : i32
    %c0_i32_0 = arith.constant 0 : i32
    %c0_i32_1 = arith.constant 0 : i32
    return %c0_i32, %c0_i32_0 : i32, i32
  }
  func.func @transform_2(%arg0: i32) -> (i32, i32) {
    %c0_i32 = arith.constant 0 : i32
    %c0_i32_0 = arith.constant 0 : i32
    return %arg0, %c0_i32 : i32, i32
  }
}

module attributes {stable_mosaic.version = 11 : i64} {
  func.func @kernel(%arg0: i32, %arg1: memref<8x24xbf16, #tpu.memory_space<vmem>>, %arg2: memref<24x32xbf16, #tpu.memory_space<vmem>>, %arg3: memref<1x24xf32, #tpu.memory_space<vmem>>, %arg4: memref<1x24xf32, #tpu.memory_space<vmem>>, %arg5: memref<1x32xf32, #tpu.memory_space<vmem>>, %arg6: memref<1x32xf32, #tpu.memory_space<vmem>>, %arg7: memref<8x32xbf16, #tpu.memory_space<vmem>>) attributes {dimension_semantics = [#tpu.dimension_semantics<parallel>], iteration_bounds = array<i64: 1>, scalar_prefetch = 0 : i64, scratch_operands = 0 : i64, tpu.core_type = #tpu.core_type<tc>, window_params = [{transform_indices = @transform_0, window_bounds = array<i64: 8, 24>}, {pipeline_mode = #tpu.pipeline_mode<synchronous>, transform_indices = @transform_1, window_bounds = array<i64: 24, 32>}, {pipeline_mode = #tpu.pipeline_mode<synchronous>, transform_indices = @transform_2, window_bounds = array<i64: 1, 24>}, {pipeline_mode = #tpu.pipeline_mode<synchronous>, transform_indices = @transform_3, window_bounds = array<i64: 1, 24>}, {pipeline_mode = #tpu.pipeline_mode<synchronous>, transform_indices = @transform_4, window_bounds = array<i64: 1, 32>}, {pipeline_mode = #tpu.pipeline_mode<synchronous>, transform_indices = @transform_5, window_bounds = array<i64: 1, 32>}, {transform_indices = @transform_6, window_bounds = array<i64: 8, 32>}]} {
    %c0 = arith.constant 0 : index
    %c0_0 = arith.constant 0 : index
    %0 = vector.load %arg1[%c0, %c0_0] : memref<8x24xbf16, #tpu.memory_space<vmem>>, vector<8x24xbf16>
    %1 = arith.extf %0 : vector<8x24xbf16> to vector<8x24xf32>
    %c0_1 = arith.constant 0 : index
    %c0_2 = arith.constant 0 : index
    %2 = vector.load %arg3[%c0_1, %c0_2] : memref<1x24xf32, #tpu.memory_space<vmem>>, vector<1x24xf32>
    %3 = vector.broadcast %2 : vector<1x24xf32> to vector<8x24xf32>
    %4 = arith.mulf %1, %3 : vector<8x24xf32>
    %c0_3 = arith.constant 0 : index
    %c0_4 = arith.constant 0 : index
    %5 = vector.load %arg4[%c0_3, %c0_4] : memref<1x24xf32, #tpu.memory_space<vmem>>, vector<1x24xf32>
    %6 = vector.broadcast %5 : vector<1x24xf32> to vector<8x24xf32>
    %7 = arith.addf %4, %6 : vector<8x24xf32>
    %cst = arith.constant 0.000000e+00 : f32
    %8 = vector.broadcast %cst : f32 to vector<8x24xf32>
    %9 = arith.maximumf %7, %8 : vector<8x24xf32>
    %10 = arith.truncf %9 : vector<8x24xf32> to vector<8x24xbf16>
    %c0_5 = arith.constant 0 : index
    %c0_6 = arith.constant 0 : index
    %11 = vector.load %arg2[%c0_5, %c0_6] : memref<24x32xbf16, #tpu.memory_space<vmem>>, vector<24x32xbf16>
    %cst_7 = arith.constant dense<0.000000e+00> : vector<8x32xf32>
    %12 = tpu.matmul %10, %11, %cst_7 {dimension_numbers = #tpu.dot_dimension_numbers<[1], [0], [0], [1], [0, 0, 1, 1], [], []>} : vector<8x24xbf16>, vector<24x32xbf16>, vector<8x32xf32> -> vector<8x32xf32>
    %c0_8 = arith.constant 0 : index
    %c0_9 = arith.constant 0 : index
    %13 = vector.load %arg5[%c0_8, %c0_9] : memref<1x32xf32, #tpu.memory_space<vmem>>, vector<1x32xf32>
    %14 = vector.broadcast %13 : vector<1x32xf32> to vector<8x32xf32>
    %15 = arith.mulf %12, %14 : vector<8x32xf32>
    %c0_10 = arith.constant 0 : index
    %c0_11 = arith.constant 0 : index
    %16 = vector.load %arg6[%c0_10, %c0_11] : memref<1x32xf32, #tpu.memory_space<vmem>>, vector<1x32xf32>
    %17 = vector.broadcast %16 : vector<1x32xf32> to vector<8x32xf32>
    %18 = arith.addf %15, %17 : vector<8x32xf32>
    %cst_12 = arith.constant 0.000000e+00 : f32
    %19 = vector.broadcast %cst_12 : f32 to vector<8x32xf32>
    %20 = arith.maximumf %18, %19 : vector<8x32xf32>
    %21 = arith.truncf %20 : vector<8x32xf32> to vector<8x32xbf16>
    %c0_13 = arith.constant 0 : index
    %c0_14 = arith.constant 0 : index
    %22 = vector.load %arg7[%c0_13, %c0_14] : memref<8x32xbf16, #tpu.memory_space<vmem>>, vector<8x32xbf16>
    tpu.vector_store %arg7[%c0_13, %c0_14], %21 {strides = array<i32>} : memref<8x32xbf16, #tpu.memory_space<vmem>>, vector<8x32xbf16>,
    return
  }
  func.func @transform_0(%arg0: i32) -> (i32, i32) {
    %c0_i32 = arith.constant 0 : i32
    %c0_i32_0 = arith.constant 0 : i32
    return %arg0, %c0_i32 : i32, i32
  }
  func.func @transform_1(%arg0: i32) -> (i32, i32) {
    %c0_i32 = arith.constant 0 : i32
    %c0_i32_0 = arith.constant 0 : i32
    %c0_i32_1 = arith.constant 0 : i32
    return %c0_i32, %c0_i32_0 : i32, i32
  }
  func.func @transform_2(%arg0: i32) -> (i32, i32) {
    %c0_i32 = arith.constant 0 : i32
    %c0_i32_0 = arith.constant 0 : i32
    %c0_i32_1 = arith.constant 0 : i32
    return %c0_i32, %c0_i32_0 : i32, i32
  }
  func.func @transform_3(%arg0: i32) -> (i32, i32) {
    %c0_i32 = arith.constant 0 : i32
    %c0_i32_0 = arith.constant 0 : i32
    %c0_i32_1 = arith.constant 0 : i32
    return %c0_i32, %c0_i32_0 : i32, i32
  }
  func.func @transform_4(%arg0: i32) -> (i32, i32) {
    %c0_i32 = arith.constant 0 : i32
    %c0_i32_0 = arith.constant 0 : i32
    %c0_i32_1 = arith.constant 0 : i32
    return %c0_i32, %c0_i32_0 : i32, i32
  }
  func.func @transform_5(%arg0: i32) -> (i32, i32) {
    %c0_i32 = arith.constant 0 : i32
    %c0_i32_0 = arith.constant 0 : i32
    %c0_i32_1 = arith.constant 0 : i32
    return %c0_i32, %c0_i32_0 : i32, i32
  }
  func.func @transform_6(%arg0: i32) -> (i32, i32) {
    %c0_i32 = arith.constant 0 : i32
    %c0_i32_0 = arith.constant 0 : i32
    return %arg0, %c0_i32 : i32, i32
  }
}

module attributes {stable_mosaic.version = 11 : i64} {
  func.func @kernel(%arg0: i32, %arg1: memref<8x32xbf16, #tpu.memory_space<vmem>>, %arg2: memref<32x16xbf16, #tpu.memory_space<vmem>>, %arg3: memref<1x32xf32, #tpu.memory_space<vmem>>, %arg4: memref<1x32xf32, #tpu.memory_space<vmem>>, %arg5: memref<8x16xbf16, #tpu.memory_space<vmem>>) attributes {dimension_semantics = [#tpu.dimension_semantics<parallel>], iteration_bounds = array<i64: 1>, scalar_prefetch = 0 : i64, scratch_operands = 0 : i64, tpu.core_type = #tpu.core_type<tc>, window_params = [{transform_indices = @transform_0, window_bounds = array<i64: 8, 32>}, {pipeline_mode = #tpu.pipeline_mode<synchronous>, transform_indices = @transform_1, window_bounds = array<i64: 32, 16>}, {pipeline_mode = #tpu.pipeline_mode<synchronous>, transform_indices = @transform_2, window_bounds = array<i64: 1, 32>}, {pipeline_mode = #tpu.pipeline_mode<synchronous>, transform_indices = @transform_3, window_bounds = array<i64: 1, 32>}, {transform_indices = @transform_4, window_bounds = array<i64: 8, 16>}]} {
    %c0 = arith.constant 0 : index
    %c0_0 = arith.constant 0 : index
    %0 = vector.load %arg1[%c0, %c0_0] : memref<8x32xbf16, #tpu.memory_space<vmem>>, vector<8x32xbf16>
    %1 = arith.extf %0 : vector<8x32xbf16> to vector<8x32xf32>
    %c0_1 = arith.constant 0 : index
    %c0_2 = arith.constant 0 : index
    %2 = vector.load %arg3[%c0_1, %c0_2] : memref<1x32xf32, #tpu.memory_space<vmem>>, vector<1x32xf32>
    %3 = vector.broadcast %2 : vector<1x32xf32> to vector<8x32xf32>
    %4 = arith.mulf %1, %3 : vector<8x32xf32>
    %c0_3 = arith.constant 0 : index
    %c0_4 = arith.constant 0 : index
    %5 = vector.load %arg4[%c0_3, %c0_4] : memref<1x32xf32, #tpu.memory_space<vmem>>, vector<1x32xf32>
    %6 = vector.broadcast %5 : vector<1x32xf32> to vector<8x32xf32>
    %7 = arith.addf %4, %6 : vector<8x32xf32>
    %cst = arith.constant 0.000000e+00 : f32
    %8 = vector.broadcast %cst : f32 to vector<8x32xf32>
    %9 = arith.maximumf %7, %8 : vector<8x32xf32>
    %10 = arith.truncf %9 : vector<8x32xf32> to vector<8x32xbf16>
    %c0_5 = arith.constant 0 : index
    %c0_6 = arith.constant 0 : index
    %11 = vector.load %arg2[%c0_5, %c0_6] : memref<32x16xbf16, #tpu.memory_space<vmem>>, vector<32x16xbf16>
    %cst_7 = arith.constant dense<0.000000e+00> : vector<8x16xf32>
    %12 = tpu.matmul %10, %11, %cst_7 {dimension_numbers = #tpu.dot_dimension_numbers<[1], [0], [0], [1], [0, 0, 1, 1], [], []>} : vector<8x32xbf16>, vector<32x16xbf16>, vector<8x16xf32> -> vector<8x16xf32>
    %13 = arith.truncf %12 : vector<8x16xf32> to vector<8x16xbf16>
    %c0_8 = arith.constant 0 : index
    %c0_9 = arith.constant 0 : index
    %14 = vector.load %arg5[%c0_8, %c0_9] : memref<8x16xbf16, #tpu.memory_space<vmem>>, vector<8x16xbf16>
    tpu.vector_store %arg5[%c0_8, %c0_9], %13 {strides = array<i32>} : memref<8x16xbf16, #tpu.memory_space<vmem>>, vector<8x16xbf16>,
    return
  }
  func.func @transform_0(%arg0: i32) -> (i32, i32) {
    %c0_i32 = arith.constant 0 : i32
    %c0_i32_0 = arith.constant 0 : i32
    return %arg0, %c0_i32 : i32, i32
  }
  func.func @transform_1(%arg0: i32) -> (i32, i32) {
    %c0_i32 = arith.constant 0 : i32
    %c0_i32_0 = arith.constant 0 : i32
    %c0_i32_1 = arith.constant 0 : i32
    return %c0_i32, %c0_i32_0 : i32, i32
  }
  func.func @transform_2(%arg0: i32) -> (i32, i32) {
    %c0_i32 = arith.constant 0 : i32
    %c0_i32_0 = arith.constant 0 : i32
    %c0_i32_1 = arith.constant 0 : i32
    return %c0_i32, %c0_i32_0 : i32, i32
  }
  func.func @transform_3(%arg0: i32) -> (i32, i32) {
    %c0_i32 = arith.constant 0 : i32
    %c0_i32_0 = arith.constant 0 : i32
    %c0_i32_1 = arith.constant 0 : i32
    return %c0_i32, %c0_i32_0 : i32, i32
  }
  func.func @transform_4(%arg0: i32) -> (i32, i32) {
    %c0_i32 = arith.constant 0 : i32
    %c0_i32_0 = arith.constant 0 : i32
    return %arg0, %c0_i32 : i32, i32
  }
}

module attributes {stable_mosaic.version = 11 : i64} {
  func.func @kernel(%arg0: i32, %arg1: memref<2x16xbf16, #tpu.memory_space<vmem>>, %arg2: memref<16x32xbf16, #tpu.memory_space<vmem>>, %arg3: memref<1x16xf32, #tpu.memory_space<vmem>>, %arg4: memref<1x16xf32, #tpu.memory_space<vmem>>, %arg5: memref<1x32xf32, #tpu.memory_space<vmem>>, %arg6: memref<1x32xf32, #tpu.memory_space<vmem>>, %arg7: memref<2x32xbf16, #tpu.memory_space<vmem>>) attributes {dimension_semantics = [#tpu.dimension_semantics<parallel>], iteration_bounds = array<i64: 1>, scalar_prefetch = 0 : i64, scratch_operands = 0 : i64, tpu.core_type = #tpu.core_type<tc>, window_params = [{transform_indices = @transform_0, window_bounds = array<i64: 2, 16>}, {pipeline_mode = #tpu.pipeline_mode<synchronous>, transform_indices = @transform_1, window_bounds = array<i64: 16, 32>}, {pipeline_mode = #tpu.pipeline_mode<synchronous>, transform_indices = @transform_2, window_bounds = array<i64: 1, 16>}, {pipeline_mode = #tpu.pipeline_mode<synchronous>, transform_indices = @transform_3, window_bounds = array<i64: 1, 16>}, {pipeline_mode = #tpu.pipeline_mode<synchronous>, transform_indices = @transform_4, window_bounds = array<i64: 1, 32>}, {pipeline_mode = #tpu.pipeline_mode<synchronous>, transform_indices = @transform_5, window_bounds = array<i64: 1, 32>}, {transform_indices = @transform_6, window_bounds = array<i64: 2, 32>}]} {
    %c0 = arith.constant 0 : index
    %c0_0 = arith.constant 0 : index
    %0 = vector.load %arg1[%c0, %c0_0] : memref<2x16xbf16, #tpu.memory_space<vmem>>, vector<2x16xbf16>
    %1 = arith.extf %0 : vector<2x16xbf16> to vector<2x16xf32>
    %c0_1 = arith.constant 0 : index
    %c0_2 = arith.constant 0 : index
    %2 = vector.load %arg3[%c0_1, %c0_2] : memref<1x16xf32, #tpu.memory_space<vmem>>, vector<1x16xf32>
    %3 = vector.broadcast %2 : vector<1x16xf32> to vector<2x16xf32>
    %4 = arith.mulf %1, %3 : vector<2x16xf32>
    %c0_3 = arith.constant 0 : index
    %c0_4 = arith.constant 0 : index
    %5 = vector.load %arg4[%c0_3, %c0_4] : memref<1x16xf32, #tpu.memory_space<vmem>>, vector<1x16xf32>
    %6 = vector.broadcast %5 : vector<1x16xf32> to vector<2x16xf32>
    %7 = arith.addf %4, %6 : vector<2x16xf32>
    %cst = arith.constant 0.000000e+00 : f32
    %8 = vector.broadcast %cst : f32 to vector<2x16xf32>
    %9 = arith.maximumf %7, %8 : vector<2x16xf32>
    %10 = arith.truncf %9 : vector<2x16xf32> to vector<2x16xbf16>
    %c0_5 = arith.constant 0 : index
    %c0_6 = arith.constant 0 : index
    %11 = vector.load %arg2[%c0_5, %c0_6] : memref<16x32xbf16, #tpu.memory_space<vmem>>, vector<16x32xbf16>
    %cst_7 = arith.constant dense<0.000000e+00> : vector<2x32xf32>
    %12 = tpu.matmul %10, %11, %cst_7 {dimension_numbers = #tpu.dot_dimension_numbers<[1], [0], [0], [1], [0, 0, 1, 1], [], []>} : vector<2x16xbf16>, vector<16x32xbf16>, vector<2x32xf32> -> vector<2x32xf32>
    %c0_8 = arith.constant 0 : index
    %c0_9 = arith.constant 0 : index
    %13 = vector.load %arg5[%c0_8, %c0_9] : memref<1x32xf32, #tpu.memory_space<vmem>>, vector<1x32xf32>
    %14 = vector.broadcast %13 : vector<1x32xf32> to vector<2x32xf32>
    %15 = arith.mulf %12, %14 : vector<2x32xf32>
    %c0_10 = arith.constant 0 : index
    %c0_11 = arith.constant 0 : index
    %16 = vector.load %arg6[%c0_10, %c0_11] : memref<1x32xf32, #tpu.memory_space<vmem>>, vector<1x32xf32>
    %17 = vector.broadcast %16 : vector<1x32xf32> to vector<2x32xf32>
    %18 = arith.addf %15, %17 : vector<2x32xf32>
    %cst_12 = arith.constant 0.000000e+00 : f32
    %19 = vector.broadcast %cst_12 : f32 to vector<2x32xf32>
    %20 = arith.maximumf %18, %19 : vector<2x32xf32>
    %21 = arith.truncf %20 : vector<2x32xf32> to vector<2x32xbf16>
    %c0_13 = arith.constant 0 : index
    %c0_14 = arith.constant 0 : index
    %22 = vector.load %arg7[%c0_13, %c0_14] : memref<2x32xbf16, #tpu.memory_space<vmem>>, vector<2x32xbf16>
    tpu.vector_store %arg7[%c0_13, %c0_14], %21 {strides = array<i32>} : memref<2x32xbf16, #tpu.memory_space<vmem>>, vector<2x32xbf16>,
    return
  }
  func.func @transform_0(%arg0: i32) -> (i32, i32) {
    %c0_i32 = arith.constant 0 : i32
    %c0_i32_0 = arith.constant 0 : i32
    return %arg0, %c0_i32 : i32, i32
  }
  func.func @transform_1(%arg0: i32) -> (i32, i32) {
    %c0_i32 = arith.constant 0 : i32
    %c0_i32_0 = arith.constant 0 : i32
    %c0_i32_1 = arith.constant 0 : i32
    return %c0_i32, %c0_i32_0 : i32, i32
  }
  func.func @transform_2(%arg0: i32) -> (i32, i32) {
    %c0_i32 = arith.constant 0 : i32
    %c0_i32_0 = arith.constant 0 : i32
    %c0_i32_1 = arith.constant 0 : i32
    return %c0_i32, %c0_i32_0 : i32, i32
  }
  func.func @transform_3(%arg0: i32) -> (i32, i32) {
    %c0_i32 = arith.constant 0 : i32
    %c0_i32_0 = arith.constant 0 : i32
    %c0_i32_1 = arith.constant 0 : i32
    return %c0_i32, %c0_i32_0 : i32, i32
  }
  func.func @transform_4(%arg0: i32) -> (i32, i32) {
    %c0_i32 = arith.constant 0 : i32
    %c0_i32_0 = arith.constant 0 : i32
    %c0_i32_1 = arith.constant 0 : i32
    return %c0_i32, %c0_i32_0 : i32, i32
  }
  func.func @transform_5(%arg0: i32) -> (i32, i32) {
    %c0_i32 = arith.constant 0 : i32
    %c0_i32_0 = arith.constant 0 : i32
    %c0_i32_1 = arith.constant 0 : i32
    return %c0_i32, %c0_i32_0 : i32, i32
  }
  func.func @transform_6(%arg0: i32) -> (i32, i32) {
    %c0_i32 = arith.constant 0 : i32
    %c0_i32_0 = arith.constant 0 : i32
    return %arg0, %c0_i32 : i32, i32
  }
}

module attributes {stable_mosaic.version = 11 : i64} {
  func.func @kernel(%arg0: i32, %arg1: memref<2x288xbf16, #tpu.memory_space<vmem>>, %arg2: memref<288x8xbf16, #tpu.memory_space<vmem>>, %arg3: memref<2x8xbf16, #tpu.memory_space<vmem>>) attributes {dimension_semantics = [#tpu.dimension_semantics<parallel>], iteration_bounds = array<i64: 1>, scalar_prefetch = 0 : i64, scratch_operands = 0 : i64, tpu.core_type = #tpu.core_type<tc>, window_params = [{transform_indices = @transform_0, window_bounds = array<i64: 2, 288>}, {pipeline_mode = #tpu.pipeline_mode<synchronous>, transform_indices = @transform_1, window_bounds = array<i64: 288, 8>}, {transform_indices = @transform_2, window_bounds = array<i64: 2, 8>}]} {
    %c0 = arith.constant 0 : index
    %c0_0 = arith.constant 0 : index
    %0 = vector.load %arg1[%c0, %c0_0] : memref<2x288xbf16, #tpu.memory_space<vmem>>, vector<2x288xbf16>
    %c0_1 = arith.constant 0 : index
    %c0_2 = arith.constant 0 : index
    %1 = vector.load %arg2[%c0_1, %c0_2] : memref<288x8xbf16, #tpu.memory_space<vmem>>, vector<288x8xbf16>
    %cst = arith.constant dense<0.000000e+00> : vector<2x8xf32>
    %2 = tpu.matmul %0, %1, %cst {dimension_numbers = #tpu.dot_dimension_numbers<[1], [0], [0], [1], [0, 0, 1, 1], [], []>} : vector<2x288xbf16>, vector<288x8xbf16>, vector<2x8xf32> -> vector<2x8xf32>
    %3 = arith.truncf %2 : vector<2x8xf32> to vector<2x8xbf16>
    %c0_3 = arith.constant 0 : index
    %c0_4 = arith.constant 0 : index
    %4 = vector.load %arg3[%c0_3, %c0_4] : memref<2x8xbf16, #tpu.memory_space<vmem>>, vector<2x8xbf16>
    tpu.vector_store %arg3[%c0_3, %c0_4], %3 {strides = array<i32>} : memref<2x8xbf16, #tpu.memory_space<vmem>>, vector<2x8xbf16>,
    return
  }
  func.func @transform_0(%arg0: i32) -> (i32, i32) {
    %c0_i32 = arith.constant 0 : i32
    %c0_i32_0 = arith.constant 0 : i32
    return %arg0, %c0_i32 : i32, i32
  }
  func.func @transform_1(%arg0: i32) -> (i32, i32) {
    %c0_i32 = arith.constant 0 : i32
    %c0_i32_0 = arith.constant 0 : i32
    %c0_i32_1 = arith.constant 0 : i32
    return %c0_i32, %c0_i32_0 : i32, i32
  }
  func.func @transform_2(%arg0: i32) -> (i32, i32) {
    %c0_i32 = arith.constant 0 : i32
    %c0_i32_0 = arith.constant 0 : i32
    return %arg0, %c0_i32 : i32, i32
  }
}

module attributes {stable_mosaic.version = 11 : i64} {
  func.func @kernel(%arg0: i32, %arg1: memref<2x24xbf16, #tpu.memory_space<vmem>>, %arg2: memref<24x32xbf16, #tpu.memory_space<vmem>>, %arg3: memref<1x24xf32, #tpu.memory_space<vmem>>, %arg4: memref<1x24xf32, #tpu.memory_space<vmem>>, %arg5: memref<1x32xf32, #tpu.memory_space<vmem>>, %arg6: memref<1x32xf32, #tpu.memory_space<vmem>>, %arg7: memref<2x32xbf16, #tpu.memory_space<vmem>>) attributes {dimension_semantics = [#tpu.dimension_semantics<parallel>], iteration_bounds = array<i64: 1>, scalar_prefetch = 0 : i64, scratch_operands = 0 : i64, tpu.core_type = #tpu.core_type<tc>, window_params = [{transform_indices = @transform_0, window_bounds = array<i64: 2, 24>}, {pipeline_mode = #tpu.pipeline_mode<synchronous>, transform_indices = @transform_1, window_bounds = array<i64: 24, 32>}, {pipeline_mode = #tpu.pipeline_mode<synchronous>, transform_indices = @transform_2, window_bounds = array<i64: 1, 24>}, {pipeline_mode = #tpu.pipeline_mode<synchronous>, transform_indices = @transform_3, window_bounds = array<i64: 1, 24>}, {pipeline_mode = #tpu.pipeline_mode<synchronous>, transform_indices = @transform_4, window_bounds = array<i64: 1, 32>}, {pipeline_mode = #tpu.pipeline_mode<synchronous>, transform_indices = @transform_5, window_bounds = array<i64: 1, 32>}, {transform_indices = @transform_6, window_bounds = array<i64: 2, 32>}]} {
    %c0 = arith.constant 0 : index
    %c0_0 = arith.constant 0 : index
    %0 = vector.load %arg1[%c0, %c0_0] : memref<2x24xbf16, #tpu.memory_space<vmem>>, vector<2x24xbf16>
    %1 = arith.extf %0 : vector<2x24xbf16> to vector<2x24xf32>
    %c0_1 = arith.constant 0 : index
    %c0_2 = arith.constant 0 : index
    %2 = vector.load %arg3[%c0_1, %c0_2] : memref<1x24xf32, #tpu.memory_space<vmem>>, vector<1x24xf32>
    %3 = vector.broadcast %2 : vector<1x24xf32> to vector<2x24xf32>
    %4 = arith.mulf %1, %3 : vector<2x24xf32>
    %c0_3 = arith.constant 0 : index
    %c0_4 = arith.constant 0 : index
    %5 = vector.load %arg4[%c0_3, %c0_4] : memref<1x24xf32, #tpu.memory_space<vmem>>, vector<1x24xf32>
    %6 = vector.broadcast %5 : vector<1x24xf32> to vector<2x24xf32>
    %7 = arith.addf %4, %6 : vector<2x24xf32>
    %cst = arith.constant 0.000000e+00 : f32
    %8 = vector.broadcast %cst : f32 to vector<2x24xf32>
    %9 = arith.maximumf %7, %8 : vector<2x24xf32>
    %10 = arith.truncf %9 : vector<2x24xf32> to vector<2x24xbf16>
    %c0_5 = arith.constant 0 : index
    %c0_6 = arith.constant 0 : index
    %11 = vector.load %arg2[%c0_5, %c0_6] : memref<24x32xbf16, #tpu.memory_space<vmem>>, vector<24x32xbf16>
    %cst_7 = arith.constant dense<0.000000e+00> : vector<2x32xf32>
    %12 = tpu.matmul %10, %11, %cst_7 {dimension_numbers = #tpu.dot_dimension_numbers<[1], [0], [0], [1], [0, 0, 1, 1], [], []>} : vector<2x24xbf16>, vector<24x32xbf16>, vector<2x32xf32> -> vector<2x32xf32>
    %c0_8 = arith.constant 0 : index
    %c0_9 = arith.constant 0 : index
    %13 = vector.load %arg5[%c0_8, %c0_9] : memref<1x32xf32, #tpu.memory_space<vmem>>, vector<1x32xf32>
    %14 = vector.broadcast %13 : vector<1x32xf32> to vector<2x32xf32>
    %15 = arith.mulf %12, %14 : vector<2x32xf32>
    %c0_10 = arith.constant 0 : index
    %c0_11 = arith.constant 0 : index
    %16 = vector.load %arg6[%c0_10, %c0_11] : memref<1x32xf32, #tpu.memory_space<vmem>>, vector<1x32xf32>
    %17 = vector.broadcast %16 : vector<1x32xf32> to vector<2x32xf32>
    %18 = arith.addf %15, %17 : vector<2x32xf32>
    %cst_12 = arith.constant 0.000000e+00 : f32
    %19 = vector.broadcast %cst_12 : f32 to vector<2x32xf32>
    %20 = arith.maximumf %18, %19 : vector<2x32xf32>
    %21 = arith.truncf %20 : vector<2x32xf32> to vector<2x32xbf16>
    %c0_13 = arith.constant 0 : index
    %c0_14 = arith.constant 0 : index
    %22 = vector.load %arg7[%c0_13, %c0_14] : memref<2x32xbf16, #tpu.memory_space<vmem>>, vector<2x32xbf16>
    tpu.vector_store %arg7[%c0_13, %c0_14], %21 {strides = array<i32>} : memref<2x32xbf16, #tpu.memory_space<vmem>>, vector<2x32xbf16>,
    return
  }
  func.func @transform_0(%arg0: i32) -> (i32, i32) {
    %c0_i32 = arith.constant 0 : i32
    %c0_i32_0 = arith.constant 0 : i32
    return %arg0, %c0_i32 : i32, i32
  }
  func.func @transform_1(%arg0: i32) -> (i32, i32) {
    %c0_i32 = arith.constant 0 : i32
    %c0_i32_0 = arith.constant 0 : i32
    %c0_i32_1 = arith.constant 0 : i32
    return %c0_i32, %c0_i32_0 : i32, i32
  }
  func.func @transform_2(%arg0: i32) -> (i32, i32) {
    %c0_i32 = arith.constant 0 : i32
    %c0_i32_0 = arith.constant 0 : i32
    %c0_i32_1 = arith.constant 0 : i32
    return %c0_i32, %c0_i32_0 : i32, i32
  }
  func.func @transform_3(%arg0: i32) -> (i32, i32) {
    %c0_i32 = arith.constant 0 : i32
    %c0_i32_0 = arith.constant 0 : i32
    %c0_i32_1 = arith.constant 0 : i32
    return %c0_i32, %c0_i32_0 : i32, i32
  }
  func.func @transform_4(%arg0: i32) -> (i32, i32) {
    %c0_i32 = arith.constant 0 : i32
    %c0_i32_0 = arith.constant 0 : i32
    %c0_i32_1 = arith.constant 0 : i32
    return %c0_i32, %c0_i32_0 : i32, i32
  }
  func.func @transform_5(%arg0: i32) -> (i32, i32) {
    %c0_i32 = arith.constant 0 : i32
    %c0_i32_0 = arith.constant 0 : i32
    %c0_i32_1 = arith.constant 0 : i32
    return %c0_i32, %c0_i32_0 : i32, i32
  }
  func.func @transform_6(%arg0: i32) -> (i32, i32) {
    %c0_i32 = arith.constant 0 : i32
    %c0_i32_0 = arith.constant 0 : i32
    return %arg0, %c0_i32 : i32, i32
  }
}

module attributes {stable_mosaic.version = 11 : i64} {
  func.func @_fc_logsoftmax_kernel(%arg0: memref<2x32xbf16, #tpu.memory_space<vmem>>, %arg1: memref<32x10xbf16, #tpu.memory_space<vmem>>, %arg2: memref<1x32xf32, #tpu.memory_space<vmem>>, %arg3: memref<1x32xf32, #tpu.memory_space<vmem>>, %arg4: memref<1x10xf32, #tpu.memory_space<vmem>>, %arg5: memref<2x10xf32, #tpu.memory_space<vmem>>) attributes {dimension_semantics = [], scalar_prefetch = 0 : i64, scratch_operands = 0 : i64, tpu.core_type = #tpu.core_type<tc>} {
    %c0 = arith.constant 0 : index
    %c0_0 = arith.constant 0 : index
    %0 = vector.load %arg0[%c0, %c0_0] : memref<2x32xbf16, #tpu.memory_space<vmem>>, vector<2x32xbf16>
    %1 = arith.extf %0 : vector<2x32xbf16> to vector<2x32xf32>
    %c0_1 = arith.constant 0 : index
    %c0_2 = arith.constant 0 : index
    %2 = vector.load %arg2[%c0_1, %c0_2] : memref<1x32xf32, #tpu.memory_space<vmem>>, vector<1x32xf32>
    %3 = vector.broadcast %2 : vector<1x32xf32> to vector<2x32xf32>
    %4 = arith.mulf %1, %3 : vector<2x32xf32>
    %c0_3 = arith.constant 0 : index
    %c0_4 = arith.constant 0 : index
    %5 = vector.load %arg3[%c0_3, %c0_4] : memref<1x32xf32, #tpu.memory_space<vmem>>, vector<1x32xf32>
    %6 = vector.broadcast %5 : vector<1x32xf32> to vector<2x32xf32>
    %7 = arith.addf %4, %6 : vector<2x32xf32>
    %cst = arith.constant 0.000000e+00 : f32
    %8 = vector.broadcast %cst : f32 to vector<2x32xf32>
    %9 = arith.maximumf %7, %8 : vector<2x32xf32>
    %10 = arith.truncf %9 : vector<2x32xf32> to vector<2x32xbf16>
    %c0_5 = arith.constant 0 : index
    %c0_6 = arith.constant 0 : index
    %11 = vector.load %arg1[%c0_5, %c0_6] : memref<32x10xbf16, #tpu.memory_space<vmem>>, vector<32x10xbf16>
    %cst_7 = arith.constant dense<0.000000e+00> : vector<2x10xf32>
    %12 = tpu.matmul %10, %11, %cst_7 {dimension_numbers = #tpu.dot_dimension_numbers<[1], [0], [0], [1], [0, 0, 1, 1], [], []>} : vector<2x32xbf16>, vector<32x10xbf16>, vector<2x10xf32> -> vector<2x10xf32>
    %c0_8 = arith.constant 0 : index
    %c0_9 = arith.constant 0 : index
    %13 = vector.load %arg4[%c0_8, %c0_9] : memref<1x10xf32, #tpu.memory_space<vmem>>, vector<1x10xf32>
    %14 = vector.broadcast %13 : vector<1x10xf32> to vector<2x10xf32>
    %15 = arith.addf %12, %14 : vector<2x10xf32>
    %cst_10 = arith.constant dense<0xFF800000> : vector<2xf32>
    %16 = vector.multi_reduction <maximumf>, %15, %cst_10 [1] : vector<2x10xf32> to vector<2xf32>
    %17 = vector.shape_cast %16 : vector<2xf32> to vector<2x1xf32>
    %18 = vector.broadcast %17 : vector<2x1xf32> to vector<2x10xf32>
    %19 = arith.subf %15, %18 : vector<2x10xf32>
    %20 = math.exp %19 : vector<2x10xf32>
    %21 = vector.broadcast %17 : vector<2x1xf32> to vector<2x10xf32>
    %22 = arith.subf %15, %21 : vector<2x10xf32>
    %cst_11 = arith.constant dense<0.000000e+00> : vector<2xf32>
    %23 = vector.multi_reduction <add>, %20, %cst_11 [1] : vector<2x10xf32> to vector<2xf32>
    %24 = vector.shape_cast %23 : vector<2xf32> to vector<2x1xf32>
    %25 = math.log %24 : vector<2x1xf32>
    %26 = vector.broadcast %25 : vector<2x1xf32> to vector<2x10xf32>
    %27 = arith.subf %22, %26 : vector<2x10xf32>
    %c0_12 = arith.constant 0 : index
    %c0_13 = arith.constant 0 : index
    %28 = vector.load %arg5[%c0_12, %c0_13] : memref<2x10xf32, #tpu.memory_space<vmem>>, vector<2x10xf32>
    tpu.vector_store %arg5[%c0_12, %c0_13], %27 {strides = array<i32>} : memref<2x10xf32, #tpu.memory_space<vmem>>, vector<2x10xf32>,
    return
  }
}

</mosaic_0001>

<llo_original>
// kernel: densenet_forward.21
$region0: #{densenet_forward.21}
  #allocation0 [shape = 'u32[]', space=smem, size = 0x4, offset = 0x4, fixed_abs, tag = 'smem constant byte address 0x4 - core index']
  #allocation1 [shape = 'u32[144,128]{1,0:T(1,128)}', space=vmem, size = 0x12000, scoped, tag = 'internal scratch']
  %s0 = inlined_call_operand.vmem [shape: bf16[512,147], index: 0, kind: input, shape index: {}]
  %s1 = inlined_call_operand.vmem [shape: bf16[147,16], index: 1, kind: input, shape index: {}]
  %s2 = inlined_call_operand.vmem [shape: f32[1,16], index: 2, kind: input, shape index: {}]
  %s3 = inlined_call_operand.vmem [shape: f32[1,16], index: 3, kind: input, shape index: {}]
  %s4 = inlined_call_operand.vmem [shape: bf16[512,16], index: 4, kind: output, shape index: {}]
  %s5 = sld [smem:[#allocation0]]
  $region49: #{densenet_forward.21} parent=0
    _
  %s7 = ssub.s32 1, %s5
  %s8 = scalar_select 0, %s7, %s5
  loop: start=0, step=1, limit=6
  $region2: #{densenet_forward.21} parent=0 // loop_pre_header
    _
  $region3: #{densenet_forward.21} parent=0 // loop_header
    %s10 = sphi 0, %s14
    %p11 = scmp.ge.s32.totalorder %s10, 6
    %s20 = sphi 0, %s22
    %s23 = sphi 0, %s20
    %s24 = sphi 0, %s23
    %s40 = sphi 0, %s24
    %s44 = sphi 0, %s44
    %s46 = sphi 0, %s44
    %s47 = sphi 0, %s46
    %s61 = sphi 0, %s47
    %s65 = sphi 0, %s65
    %s67 = sphi 0, %s65
    %s68 = sphi 0, %s67
    %s82 = sphi 0, %s68
    %s86 = sphi 0, %s86
    %s88 = sphi 0, %s86
    %s89 = sphi 0, %s88
    %s103 = sphi 0, %s89
    %s109 = sphi 0, %s111
    %s112 = sphi 0, %s109
    %s113 = sphi 0, %s112
    %s129 = sphi 0, %s113
  $region4: #{densenet_forward.21} parent=0 // loop_header_branch
    %13 = sbr.rel (%p11) target = $region8
  $region5: #{densenet_forward.21} parent=0 // loop_body
    %s15 = ssub.s32 %s10, 1
    %s16 = ssub.s32 %s10, 2
    %s17 = sadd.s32 %s10, 1
    %s18 = ssub.s32 %s10, %s17
    %p19 = scmp.eq.s32.totalorder %s18, 0
    %s21 = sadd.s32 %s20, 1
    %s22 = scalar_select %p19, %s20, %s21
    %p25 = pneg %p19
    %p26 = scmp.eq.s32.totalorder %s10, 3
    %p27 = por %p25, %p26
    %p28 = scmp.ne.s32.totalorder %s20, %s23
    %p29 = scmp.eq.s32.totalorder %s10, 0
    %p30 = por %p28, %p29
    %p31 = scmp.ne.s32.totalorder %s20, %s23
    %p32 = scmp.eq.s32.totalorder %s15, 3
    %p33 = por %p31, %p32
    %p34 = scmp.ne.s32.totalorder %s23, %s24
    %p35 = scmp.eq.s32.totalorder %s15, 0
    %p36 = por %p34, %p35
    %p37 = scmp.ne.s32.totalorder %s23, %s24
    %p38 = scmp.eq.s32.totalorder %s16, 3
    %p39 = por %p37, %p38
    %p41 = scmp.ne.s32.totalorder %s24, %s40
    %p42 = scmp.eq.s32.totalorder %s16, 0
    %p43 = por %p41, %p42
    %s45 = sadd.s32 %s44, 1
    %p48 = scmp.eq.s32.totalorder %s10, 3
    %p49 = scmp.ne.s32.totalorder %s44, %s46
    %p50 = scmp.eq.s32.totalorder %s10, 0
    %p51 = por %p49, %p50
    %p52 = scmp.ne.s32.totalorder %s44, %s46
    %p53 = scmp.eq.s32.totalorder %s15, 3
    %p54 = por %p52, %p53
    %p55 = scmp.ne.s32.totalorder %s46, %s47
    %p56 = scmp.eq.s32.totalorder %s15, 0
    %p57 = por %p55, %p56
    %p58 = scmp.ne.s32.totalorder %s46, %s47
    %p59 = scmp.eq.s32.totalorder %s16, 3
    %p60 = por %p58, %p59
    %p62 = scmp.ne.s32.totalorder %s47, %s61
    %p63 = scmp.eq.s32.totalorder %s16, 0
    %p64 = por %p62, %p63
    %s66 = sadd.s32 %s65, 1
    %p69 = scmp.eq.s32.totalorder %s10, 3
    %p70 = scmp.ne.s32.totalorder %s65, %s67
    %p71 = scmp.eq.s32.totalorder %s10, 0
    %p72 = por %p70, %p71
    %p73 = scmp.ne.s32.totalorder %s65, %s67
    %p74 = scmp.eq.s32.totalorder %s15, 3
    %p75 = por %p73, %p74
    %p76 = scmp.ne.s32.totalorder %s67, %s68
    %p77 = scmp.eq.s32.totalorder %s15, 0
    %p78 = por %p76, %p77
    %p79 = scmp.ne.s32.totalorder %s67, %s68
    %p80 = scmp.eq.s32.totalorder %s16, 3
    %p81 = por %p79, %p80
    %p83 = scmp.ne.s32.totalorder %s68, %s82
    %p84 = scmp.eq.s32.totalorder %s16, 0
    %p85 = por %p83, %p84
    %s87 = sadd.s32 %s86, 1
    %p90 = scmp.eq.s32.totalorder %s10, 3
    %p91 = scmp.ne.s32.totalorder %s86, %s88
    %p92 = scmp.eq.s32.totalorder %s10, 0
    %p93 = por %p91, %p92
    %p94 = scmp.ne.s32.totalorder %s86, %s88
    %p95 = scmp.eq.s32.totalorder %s15, 3
    %p96 = por %p94, %p95
    %p97 = scmp.ne.s32.totalorder %s88, %s89
    %p98 = scmp.eq.s32.totalorder %s15, 0
    %p99 = por %p97, %p98
    %p100 = scmp.ne.s32.totalorder %s88, %s89
    %p101 = scmp.eq.s32.totalorder %s16, 3
    %p102 = por %p100, %p101
    %p104 = scmp.ne.s32.totalorder %s89, %s103
    %p105 = scmp.eq.s32.totalorder %s16, 0
    %p106 = por %p104, %p105
    %s107 = ssub.s32 %s10, %s17
    %p108 = scmp.eq.s32.totalorder %s107, 0
    %s110 = sadd.s32 %s109, 1
    %s111 = scalar_select %p108, %s109, %s110
    %p114 = pneg %p108
    %p115 = scmp.eq.s32.totalorder %s10, 3
    %p116 = por %p114, %p115
    %p117 = scmp.ne.s32.totalorder %s109, %s112
    %p118 = scmp.eq.s32.totalorder %s10, 0
    %p119 = por %p117, %p118
    %p120 = scmp.ne.s32.totalorder %s109, %s112
    %p121 = scmp.eq.s32.totalorder %s15, 3
    %p122 = por %p120, %p121
    %p123 = scmp.ne.s32.totalorder %s112, %s113
    %p124 = scmp.eq.s32.totalorder %s15, 0
    %p125 = por %p123, %p124
    %p126 = scmp.ne.s32.totalorder %s112, %s113
    %p127 = scmp.eq.s32.totalorder %s16, 3
    %p128 = por %p126, %p127
    %p130 = scmp.ne.s32.totalorder %s113, %s129
    %p131 = scmp.eq.s32.totalorder %s16, 0
    %p132 = por %p130, %p131
    %p133 = scmp.le.s32.totalorder 1, %s10
    %p134 = scmp.lt.s32.totalorder %s10, 5
    %p135 = pnand %p133, %p134
    %p136 = pneg %p135
    // Predicated region
    $region9: #{densenet_forward.21} parent=5 // pred_check
      _
    $region10: #{densenet_forward.21} parent=5 // pred_check_branch
      %138 = sbr.rel (%p135) target = $region12
    $region11: #{densenet_forward.21} parent=5 // pred_region
      %s139 = ssub.s32 %s10, 1
      // Predicated region
      $region13: #{densenet_forward.21} parent=11 // pred_check
        %p140 = pneg %p57
      $region14: #{densenet_forward.21} parent=11 // pred_check_branch
        %142 = sbr.rel (%p140) target = $region16
      $region15: #{densenet_forward.21} parent=11 // pred_region
        _
      $region16: #{densenet_forward.21} parent=11 // pred_fallthru
        _
      // Predicated region
      $region17: #{densenet_forward.21} parent=11 // pred_check
        %p143 = pneg %p78
      $region18: #{densenet_forward.21} parent=11 // pred_check_branch
        %145 = sbr.rel (%p143) target = $region20
      $region19: #{densenet_forward.21} parent=11 // pred_region
        _
      $region20: #{densenet_forward.21} parent=11 // pred_fallthru
        _
      // Predicated region
      $region21: #{densenet_forward.21} parent=11 // pred_check
        %p146 = pneg %p99
      $region22: #{densenet_forward.21} parent=11 // pred_check_branch
        %148 = sbr.rel (%p146) target = $region24
      $region23: #{densenet_forward.21} parent=11 // pred_region
        _
      $region24: #{densenet_forward.21} parent=11 // pred_fallthru
        _
    $region12: #{densenet_forward.21} parent=5 // pred_fallthru
      _
    %p149 = scmp.lt.s32.totalorder %s10, 4
    // Predicated region
    $region25: #{densenet_forward.21} parent=5 // pred_check
      %p150 = pneg %p149
    $region26: #{densenet_forward.21} parent=5 // pred_check_branch
      %152 = sbr.rel (%p150) target = $region28
    $region27: #{densenet_forward.21} parent=5 // pred_region
      // Predicated region
      $region29: #{densenet_forward.21} parent=27 // pred_check
        %p153 = pneg %p30
      $region30: #{densenet_forward.21} parent=27 // pred_check_branch
        %155 = sbr.rel (%p153) target = $region32
      $region31: #{densenet_forward.21} parent=27 // pred_region
        %s156 = smul.u32 16, %s10
        %p157 = scmp.lt.s32.totalorder %s156, 63
        %s158 = scalar_select %p157, %s156, 63
        %s159 = smul.addr %s158, 2
        %s160 = smul.addr %s159, 4
        %s161 = scalar_lea.vmem %s0, %s160
        %s162 = smul.u32 16, %s10
      $region32: #{densenet_forward.21} parent=27 // pred_fallthru
        _
    $region28: #{densenet_forward.21} parent=5 // pred_fallthru
      _
    %p163 = scmp.le.s32.totalorder 1, %s10
    %p164 = scmp.lt.s32.totalorder %s10, 5
    %p165 = pnand %p163, %p164
    %p166 = pneg %p165
    // Predicated region
    $region33: #{densenet_forward.21} parent=5 // pred_check
      _
    $region34: #{densenet_forward.21} parent=5 // pred_check_branch
      %168 = sbr.rel (%p165) target = $region36
    $region35: #{densenet_forward.21} parent=5 // pred_region
      %s169 = ssub.s32 %s10, 1
      %s170 = smul.u32 16, %s15
      %p171 = scmp.lt.s32.totalorder %s170, 63
      %s172 = scalar_select %p171, %s170, 63
      %s173 = smul.addr %s172, 2
      %s174 = smul.addr %s173, 4
      %s175 = scalar_lea.vmem %s0, %s174
      %p176 = pneg %p36
      %p177 = pneg %p33
      %p178 = pneg %p57
      %p179 = pneg %p54
      %p180 = pneg %p78
      %p181 = pneg %p75
      %p182 = pneg %p99
      %p183 = pneg %p96
      %p184 = pneg %p125
      %p185 = pneg %p122
      %s186 = smul.u32 16, %s15
      %p187 = scmp.lt.s32.totalorder %s186, 63
      %s188 = scalar_select %p187, %s186, 63
      %s189 = smul.addr %s188, 4
      %s190 = scalar_lea.vmem %s4, %s189
      %s191 = smul.u32 16, %s15
      %p192 = scmp.lt.s32.totalorder %s191, 63
      %s193 = scalar_select %p192, %s191, 63
      %s194 = smul.addr %s193, 2
      %s195 = smul.addr %s194, 4
      %s196 = scalar_lea.vmem %s0, %s195
      %s197 = smul.u32 16, %s15
      %s198 = smul.u32 16, %s15
      %p199 = scmp.lt.s32.totalorder %s198, 63
      %s200 = scalar_select %p199, %s198, 63
      %s201 = smul.addr %s200, 4
      %s202 = scalar_lea.vmem %s4, %s201
      %s203 = smul.u32 16, %s15
      %v205 = vld [vmem:[%s196] sm:$0xff]
      %v206 = vld [vmem:[%s196 + $0x8] sm:$0xff]
      %v207 = vld [vmem:[%s196 + $0x10] sm:$0xff]
      %v208 = vld [vmem:[%s196 + $0x18] sm:$0xff]
      %v209 = vld [vmem:[%s196 + $0x20] sm:$0xff]
      %v210 = vld [vmem:[%s196 + $0x28] sm:$0xff]
      %v211 = vld [vmem:[%s196 + $0x30] sm:$0xff]
      %v212 = vld [vmem:[%s196 + $0x38] sm:$0xff]
      %v213 = vld [vmem:[%s196 + $0x40] sm:$0xff]
      %v214 = vld [vmem:[%s196 + $0x48] sm:$0xff]
      %v215 = vld [vmem:[%s196 + $0x50] sm:$0xff]
      %v216 = vld [vmem:[%s196 + $0x58] sm:$0xff]
      %v217 = vld [vmem:[%s196 + $0x60] sm:$0xff]
      %v218 = vld [vmem:[%s196 + $0x68] sm:$0xff]
      %v219 = vld [vmem:[%s196 + $0x70] sm:$0xff]
      %v220 = vld [vmem:[%s196 + $0x78] sm:$0xff]
      %v221 = vld [vmem:[%s1] sm:$0xf]
      %v222 = vld [vmem:[%s1 + $0x4] sm:$0xf]
      %v223 = vld [vmem:[%s1 + $0x8] sm:$0xf]
      %v224 = vld [vmem:[%s1 + $0xc] sm:$0xf]
      %v225 = vld [vmem:[%s1 + $0x10] sm:$0xf]
      %v226 = vld [vmem:[%s1 + $0x14] sm:$0xf]
      %v227 = vld [vmem:[%s1 + $0x18] sm:$0xf]
      %v228 = vld [vmem:[%s1 + $0x1c] sm:$0xf]
      %v229 = vld [vmem:[%s1 + $0x20] sm:$0xf]
      %v230 = vld [vmem:[%s1 + $0x24] sm:$0xf]
      %v231 = vld [vmem:[%s1 + $0x28] sm:$0xf]
      %v232 = vld [vmem:[%s1 + $0x2c] sm:$0xf]
      %v233 = vld [vmem:[%s1 + $0x30] sm:$0xf]
      %v234 = vld [vmem:[%s1 + $0x34] sm:$0xf]
      %v235 = vld [vmem:[%s1 + $0x38] sm:$0xf]
      %v236 = vld [vmem:[%s1 + $0x3c] sm:$0xf]
      %v237 = vld [vmem:[%s1 + $0x40] sm:$0xf]
      %v238 = vld [vmem:[%s1 + $0x44] sm:$0xf]
      %v239 = vld [vmem:[%s1 + $0x48] sm:$0x3]
      %v256 = vunpack.c.l.b16 %v205
      %v257 = vunpack.c.h.b16 %v205
      %v258 = vunpack.c.l.b16 %v206
      %v259 = vunpack.c.h.b16 %v206
      %v260 = vunpack.c.l.b16 %v207
      %v261 = vunpack.c.h.b16 %v207
      %v262 = vunpack.c.l.b16 %v208
      %v263 = vunpack.c.h.b16 %v208
      %v264 = vunpack.c.l.b16 %v209
      %v265 = vunpack.c.h.b16 %v209
      %v266 = vunpack.c.l.b16 %v210
      %v267 = vunpack.c.h.b16 %v210
      %v268 = vunpack.c.l.b16 %v211
      %v269 = vunpack.c.h.b16 %v211
      %v270 = vunpack.c.l.b16 %v212
      %v271 = vunpack.c.h.b16 %v212
      %v272 = vunpack.c.l.b16 %v213
      %v273 = vunpack.c.h.b16 %v213
      %v274 = vunpack.c.l.b16 %v214
      %v275 = vunpack.c.h.b16 %v214
      %v276 = vunpack.c.l.b16 %v215
      %v277 = vunpack.c.h.b16 %v215
      %v278 = vunpack.c.l.b16 %v216
      %v279 = vunpack.c.h.b16 %v216
      %v280 = vunpack.c.l.b16 %v217
      %v281 = vunpack.c.h.b16 %v217
      %v282 = vunpack.c.l.b16 %v218
      %v283 = vunpack.c.h.b16 %v218
      %v284 = vunpack.c.l.b16 %v219
      %v285 = vunpack.c.h.b16 %v219
      %v286 = vunpack.c.l.b16 %v220
      %v287 = vunpack.c.h.b16 %v220
      %v288 = vpack.c.b16 %v258, %v256
      %v289 = vpack.c.b16 %v259, %v257
      %v290 = vpack.c.b16 %v262, %v260
      %v291 = vpack.c.b16 %v263, %v261
      %v292 = vpack.c.b16 %v266, %v264
      %v293 = vpack.c.b16 %v267, %v265
      %v294 = vpack.c.b16 %v270, %v268
      %v295 = vpack.c.b16 %v271, %v269
      %v296 = vpack.c.b16 %v274, %v272
      %v297 = vpack.c.b16 %v275, %v273
      %v298 = vpack.c.b16 %v278, %v276
      %v299 = vpack.c.b16 %v279, %v277
      %v300 = vpack.c.b16 %v282, %v280
      %v301 = vpack.c.b16 %v283, %v281
      %v302 = vpack.c.b16 %v286, %v284
      %v303 = vpack.c.b16 %v287, %v285
      %v331 = vunpack.c.l.b16 %v221
      %v332 = vunpack.c.l.b16 %v222
      %v333 = vunpack.c.l.b16 %v223
      %v334 = vunpack.c.l.b16 %v224
      %v335 = vunpack.c.l.b16 %v225
      %v336 = vunpack.c.l.b16 %v226
      %v337 = vunpack.c.l.b16 %v227
      %v338 = vunpack.c.l.b16 %v228
      %v339 = vunpack.c.l.b16 %v229
      %v340 = vunpack.c.l.b16 %v230
      %v341 = vunpack.c.l.b16 %v231
      %v342 = vunpack.c.l.b16 %v232
      %v343 = vunpack.c.l.b16 %v233
      %v344 = vunpack.c.l.b16 %v234
      %v345 = vunpack.c.l.b16 %v235
      %v346 = vunpack.c.l.b16 %v236
      %v347 = vunpack.c.l.b16 %v237
      %v348 = vunpack.c.l.b16 %v238
      %v349 = vunpack.c.l.b16 %v239
      %v350 = vpack.c.b16 %v332, %v331
      %v351 = vpack.c.b16 %v334, %v333
      %v352 = vpack.c.b16 %v336, %v335
      %v353 = vpack.c.b16 %v338, %v337
      %v354 = vpack.c.b16 %v340, %v339
      %v355 = vpack.c.b16 %v342, %v341
      %v356 = vpack.c.b16 %v344, %v343
      %v357 = vpack.c.b16 %v346, %v345
      %v358 = vpack.c.b16 %v348, %v347
      %v359 = vpack.c.b16 %v349, %v349
      %vm369 = vcmask 154624
      %v371 = vsel %vm369, %v289, 0
      %v374 = vsel %vm369, %v291, 0
      %v377 = vsel %vm369, %v293, 0
      %v380 = vsel %vm369, %v295, 0
      %v383 = vsel %vm369, %v297, 0
      %v386 = vsel %vm369, %v299, 0
      %v389 = vsel %vm369, %v301, 0
      %v392 = vsel %vm369, %v303, 0
      %vm394 = vcmask 1040384
      %vm395 = vcmask 1041408
      %v396 = vsel %vm394, 4294967295, 65535
      %v397 = vsel %vm395, %v396, 0
      %v399 = vand.u32 %v359, %v397
      %401 = vmatprep.subr.bf16.mxu0 0
      %402 = vmatpush1.bf16.msra.mxu0 %v350
      %403 = vmatprep.subr.bf16.mxu0 0
      %404 = vmatpush1.bf16.msra.mxu0 %v351
      %405 = vmatprep.subr.bf16.mxu0 0
      %406 = vmatpush1.bf16.msra.mxu0 %v352
      %407 = vmatprep.subr.bf16.mxu0 0
      %408 = vmatpush1.bf16.msra.mxu0 %v353
      %409 = vmatprep.subr.bf16.mxu0 0
      %410 = vmatpush1.bf16.msra.mxu0 %v354
      %411 = vmatprep.subr.bf16.mxu0 0
      %412 = vmatpush1.bf16.msra.mxu0 %v355
      %413 = vmatprep.subr.bf16.mxu0 0
      %414 = vmatpush1.bf16.msra.mxu0 %v356
      %415 = vmatprep.subr.bf16.mxu0 0
      %416 = vmatpush1.bf16.msra.mxu0 %v357
      %417 = vmatprep.subr.bf16.mxu0 0
      %418 = vmatpush1.bf16.msra.mxu0 %v358
      %419 = vmatprep.subr.bf16.mxu0 0
      %420 = vmatpush1.bf16.msra.mxu0 %v399
      %421 = vmatprep.subr.bf16.mxu0 0
      %422 = vmatpush1.bf16.msra.mxu0 0
      %423 = vmatprep.subr.bf16.mxu0 0
      %424 = vmatpush1.bf16.msra.mxu0 0
      %425 = vmatprep.subr.bf16.mxu0 0
      %426 = vmatpush1.bf16.msra.mxu0 0
      %427 = vmatprep.subr.bf16.mxu0 0
      %428 = vmatpush1.bf16.msra.mxu0 0
      %429 = vmatprep.subr.bf16.mxu0 0
      %430 = vmatpush1.bf16.msra.mxu0 0
      %431 = vmatprep.subr.bf16.mxu0 0
      %432 = vmatpush1.bf16.msra.mxu0 0
      %433 = vmatprep.mubr.bf16.mxu0 %v371
      %434 = vmatmul.mubr.bf16.gmra.mrb[0].mxu0 %v288
      %v435 = vpop.f32.mrb[0].mxu0
      %v436 = vadd.f32 0.0, %v435
      %v437 = vpop.f32.mrb[0].mxu0
      %v438 = vpop.f32.mrb[0].mxu0
      %v439 = vadd.f32 0.0, %v438
      %v440 = vpop.f32.mrb[0].mxu0
      %441 = vmatprep.mubr.bf16.mxu0 %v374
      %442 = vmatmul.mubr.bf16.gmra.mrb[0].mxu0 %v290
      %v443 = vpop.f32.mrb[0].mxu0
      %v444 = vadd.f32 0.0, %v443
      %v445 = vpop.f32.mrb[0].mxu0
      %v446 = vpop.f32.mrb[0].mxu0
      %v447 = vadd.f32 0.0, %v446
      %v448 = vpop.f32.mrb[0].mxu0
      %449 = vmatprep.mubr.bf16.mxu0 %v377
      %450 = vmatmul.mubr.bf16.gmra.mrb[0].mxu0 %v292
      %v451 = vpop.f32.mrb[0].mxu0
      %v452 = vadd.f32 0.0, %v451
      %v453 = vpop.f32.mrb[0].mxu0
      %v454 = vpop.f32.mrb[0].mxu0
      %v455 = vadd.f32 0.0, %v454
      %v456 = vpop.f32.mrb[0].mxu0
      %457 = vmatprep.mubr.bf16.mxu0 %v380
      %458 = vmatmul.mubr.bf16.gmra.mrb[0].mxu0 %v294
      %v459 = vpop.f32.mrb[0].mxu0
      %v460 = vadd.f32 0.0, %v459
      %v461 = vpop.f32.mrb[0].mxu0
      %v462 = vpop.f32.mrb[0].mxu0
      %v463 = vadd.f32 0.0, %v462
      %v464 = vpop.f32.mrb[0].mxu0
      %465 = vmatprep.mubr.bf16.mxu0 %v383
      %466 = vmatmul.mubr.bf16.gmra.mrb[0].mxu0 %v296
      %v467 = vpop.f32.mrb[0].mxu0
      %v468 = vadd.f32 0.0, %v467
      %v469 = vpop.f32.mrb[0].mxu0
      %v470 = vpop.f32.mrb[0].mxu0
      %v471 = vadd.f32 0.0, %v470
      %v472 = vpop.f32.mrb[0].mxu0
      %473 = vmatprep.mubr.bf16.mxu0 %v386
      %474 = vmatmul.mubr.bf16.gmra.mrb[0].mxu0 %v298
      %v475 = vpop.f32.mrb[0].mxu0
      %v476 = vadd.f32 0.0, %v475
      %v477 = vpop.f32.mrb[0].mxu0
      %v478 = vpop.f32.mrb[0].mxu0
      %v479 = vadd.f32 0.0, %v478
      %v480 = vpop.f32.mrb[0].mxu0
      %481 = vmatprep.mubr.bf16.mxu0 %v389
      %482 = vmatmul.mubr.bf16.gmra.mrb[0].mxu0 %v300
      %v483 = vpop.f32.mrb[0].mxu0
      %v484 = vadd.f32 0.0, %v483
      %v485 = vpop.f32.mrb[0].mxu0
      %v486 = vpop.f32.mrb[0].mxu0
      %v487 = vadd.f32 0.0, %v486
      %v488 = vpop.f32.mrb[0].mxu0
      %489 = vmatprep.mubr.bf16.mxu0 %v392
      %490 = vmatmul.mubr.bf16.gmra.mrb[0].mxu0 %v302
      %v491 = vpop.f32.mrb[0].mxu0
      %v492 = vadd.f32 0.0, %v491
      %v493 = vpop.f32.mrb[0].mxu0
      %v494 = vpop.f32.mrb[0].mxu0
      %v495 = vadd.f32 0.0, %v494
      %v496 = vpop.f32.mrb[0].mxu0
      %497 = vdwg.mxu0
      %v498 = vld [vmem:[%s2] sm:$0x1]
      %v500 = vlaneseq
      %v501 = vshrl.u32 %v500, 7
      %v502 = vsub.s32 0, %v501
      %v503 = vrot.slane %v498, %v502
      %v505 = vmul.f32 %v436, %v503
      %v506 = vmul.f32 %v439, %v503
      %v507 = vmul.f32 %v444, %v503
      %v508 = vmul.f32 %v447, %v503
      %v509 = vmul.f32 %v452, %v503
      %v510 = vmul.f32 %v455, %v503
      %v511 = vmul.f32 %v460, %v503
      %v512 = vmul.f32 %v463, %v503
      %v513 = vmul.f32 %v468, %v503
      %v514 = vmul.f32 %v471, %v503
      %v515 = vmul.f32 %v476, %v503
      %v516 = vmul.f32 %v479, %v503
      %v517 = vmul.f32 %v484, %v503
      %v518 = vmul.f32 %v487, %v503
      %v519 = vmul.f32 %v492, %v503
      %v520 = vmul.f32 %v495, %v503
      %v521 = vld [vmem:[%s3] sm:$0x1]
      %v523 = vlaneseq
      %v524 = vshrl.u32 %v523, 7
      %v525 = vsub.s32 0, %v524
      %v526 = vrot.slane %v521, %v525
      %v528 = vadd.f32 %v505, %v526
      %v529 = vadd.f32 %v506, %v526
      %v530 = vadd.f32 %v507, %v526
      %v531 = vadd.f32 %v508, %v526
      %v532 = vadd.f32 %v509, %v526
      %v533 = vadd.f32 %v510, %v526
      %v534 = vadd.f32 %v511, %v526
      %v535 = vadd.f32 %v512, %v526
      %v536 = vadd.f32 %v513, %v526
      %v537 = vadd.f32 %v514, %v526
      %v538 = vadd.f32 %v515, %v526
      %v539 = vadd.f32 %v516, %v526
      %v540 = vadd.f32 %v517, %v526
      %v541 = vadd.f32 %v518, %v526
      %v542 = vadd.f32 %v519, %v526
      %v543 = vadd.f32 %v520, %v526
      %v544 = vmax.f32 %v528, 0.0
      %v545 = vmax.f32 %v529, 0.0
      %v546 = vmax.f32 %v530, 0.0
      %v547 = vmax.f32 %v531, 0.0
      %v548 = vmax.f32 %v532, 0.0
      %v549 = vmax.f32 %v533, 0.0
      %v550 = vmax.f32 %v534, 0.0
      %v551 = vmax.f32 %v535, 0.0
      %v552 = vmax.f32 %v536, 0.0
      %v553 = vmax.f32 %v537, 0.0
      %v554 = vmax.f32 %v538, 0.0
      %v555 = vmax.f32 %v539, 0.0
      %v556 = vmax.f32 %v540, 0.0
      %v557 = vmax.f32 %v541, 0.0
      %v558 = vmax.f32 %v542, 0.0
      %v559 = vmax.f32 %v543, 0.0
      %v560 = vpack.c.bf16 %v545, %v544
      %v561 = vpack.c.bf16 %v547, %v546
      %v562 = vpack.c.bf16 %v549, %v548
      %v563 = vpack.c.bf16 %v551, %v550
      %v564 = vpack.c.bf16 %v553, %v552
      %v565 = vpack.c.bf16 %v555, %v554
      %v566 = vpack.c.bf16 %v557, %v556
      %v567 = vpack.c.bf16 %v559, %v558
      %v576 = vunpack.c.l.b16 %v560
      %v577 = vunpack.c.h.b16 %v560
      %v578 = vunpack.c.l.b16 %v561
      %v579 = vunpack.c.h.b16 %v561
      %v580 = vunpack.c.l.b16 %v562
      %v581 = vunpack.c.h.b16 %v562
      %v582 = vunpack.c.l.b16 %v563
      %v583 = vunpack.c.h.b16 %v563
      %v584 = vunpack.c.l.b16 %v564
      %v585 = vunpack.c.h.b16 %v564
      %v586 = vunpack.c.l.b16 %v565
      %v587 = vunpack.c.h.b16 %v565
      %v588 = vunpack.c.l.b16 %v566
      %v589 = vunpack.c.h.b16 %v566
      %v590 = vunpack.c.l.b16 %v567
      %v591 = vunpack.c.h.b16 %v567
      %v592 = vpack.c.b16 %v576, %v576
      %v593 = vpack.c.b16 %v577, %v577
      %v594 = vpack.c.b16 %v578, %v578
      %v595 = vpack.c.b16 %v579, %v579
      %v596 = vpack.c.b16 %v580, %v580
      %v597 = vpack.c.b16 %v581, %v581
      %v598 = vpack.c.b16 %v582, %v582
      %v599 = vpack.c.b16 %v583, %v583
      %v600 = vpack.c.b16 %v584, %v584
      %v601 = vpack.c.b16 %v585, %v585
      %v602 = vpack.c.b16 %v586, %v586
      %v603 = vpack.c.b16 %v587, %v587
      %v604 = vpack.c.b16 %v588, %v588
      %v605 = vpack.c.b16 %v589, %v589
      %v606 = vpack.c.b16 %v590, %v590
      %v607 = vpack.c.b16 %v591, %v591
      %vm624 = vcmask 125952
      %625 = vst.msk [vmem:[%s202] sm:$0xf] %vm624, %v592
      %626 = vst.msk [vmem:[%s202 + $0x4] sm:$0xf] %vm624, %v593
      %627 = vst.msk [vmem:[%s202 + $0x8] sm:$0xf] %vm624, %v594
      %628 = vst.msk [vmem:[%s202 + $0xc] sm:$0xf] %vm624, %v595
      %629 = vst.msk [vmem:[%s202 + $0x10] sm:$0xf] %vm624, %v596
      %630 = vst.msk [vmem:[%s202 + $0x14] sm:$0xf] %vm624, %v597
      %631 = vst.msk [vmem:[%s202 + $0x18] sm:$0xf] %vm624, %v598
      %632 = vst.msk [vmem:[%s202 + $0x1c] sm:$0xf] %vm624, %v599
      %633 = vst.msk [vmem:[%s202 + $0x20] sm:$0xf] %vm624, %v600
      %634 = vst.msk [vmem:[%s202 + $0x24] sm:$0xf] %vm624, %v601
      %635 = vst.msk [vmem:[%s202 + $0x28] sm:$0xf] %vm624, %v602
      %636 = vst.msk [vmem:[%s202 + $0x2c] sm:$0xf] %vm624, %v603
      %637 = vst.msk [vmem:[%s202 + $0x30] sm:$0xf] %vm624, %v604
      %638 = vst.msk [vmem:[%s202 + $0x34] sm:$0xf] %vm624, %v605
      %639 = vst.msk [vmem:[%s202 + $0x38] sm:$0xf] %vm624, %v606
      %640 = vst.msk [vmem:[%s202 + $0x3c] sm:$0xf] %vm624, %v607
      %s641 = smul.u32 16, %s15
      %p642 = scmp.lt.s32.totalorder %s641, 63
      %s643 = scalar_select %p642, %s641, 63
      %s644 = smul.addr %s643, 4
      %s645 = scalar_lea.vmem %s4, %s644
      // Predicated region
      $region37: #{densenet_forward.21} parent=35 // pred_check
        %p646 = pneg %p122
      $region38: #{densenet_forward.21} parent=35 // pred_check_branch
        %648 = sbr.rel (%p646) target = $region40
      $region39: #{densenet_forward.21} parent=35 // pred_region
        %s649 = smul.u32 16, %s15
      $region40: #{densenet_forward.21} parent=35 // pred_fallthru
        _
    $region36: #{densenet_forward.21} parent=5 // pred_fallthru
      _
    %p650 = scmp.le.s32.totalorder 2, %s10
    // Predicated region
    $region41: #{densenet_forward.21} parent=5 // pred_check
      %p651 = pneg %p650
    $region42: #{densenet_forward.21} parent=5 // pred_check_branch
      %653 = sbr.rel (%p651) target = $region44
    $region43: #{densenet_forward.21} parent=5 // pred_region
      %s654 = ssub.s32 %s10, 2
      // Predicated region
      $region45: #{densenet_forward.21} parent=43 // pred_check
        %p655 = pneg %p128
      $region46: #{densenet_forward.21} parent=43 // pred_check_branch
        %657 = sbr.rel (%p655) target = $region48
      $region47: #{densenet_forward.21} parent=43 // pred_region
        %s658 = smul.u32 16, %s16
        %p659 = scmp.lt.s32.totalorder %s658, 63
        %s660 = scalar_select %p659, %s658, 63
        %s661 = smul.addr %s660, 4
        %s662 = scalar_lea.vmem %s4, %s661
      $region48: #{densenet_forward.21} parent=43 // pred_fallthru
        _
    $region44: #{densenet_forward.21} parent=5 // pred_fallthru
      _
  $region6: #{densenet_forward.21} parent=0 // loop_footer
    %s14 = sadd.s32 1, %s10
  $region7: #{densenet_forward.21} parent=0 // loop_footer_branch
    %9 = sbr.rel target = $region3
  $region8: #{densenet_forward.21} parent=0 // loop_exit
    _

// kernel: densenet_forward.22
$region0: #{densenet_forward.22}
  #allocation0 [shape = 'u32[]', space=smem, size = 0x4, offset = 0x4, fixed_abs, tag = 'smem constant byte address 0x4 - core index']
  #allocation1 [shape = 'u32[144,128]{1,0:T(1,128)}', space=vmem, size = 0x12000, scoped, tag = 'internal scratch']
  %s0 = inlined_call_operand.vmem [shape: bf16[128,16], index: 0, kind: input, shape index: {}]
  %s1 = inlined_call_operand.vmem [shape: bf16[16,32], index: 1, kind: input, shape index: {}]
  %s2 = inlined_call_operand.vmem [shape: f32[1,16], index: 2, kind: input, shape index: {}]
  %s3 = inlined_call_operand.vmem [shape: f32[1,16], index: 3, kind: input, shape index: {}]
  %s4 = inlined_call_operand.vmem [shape: f32[1,32], index: 4, kind: input, shape index: {}]
  %s5 = inlined_call_operand.vmem [shape: f32[1,32], index: 5, kind: input, shape index: {}]
  %s6 = inlined_call_operand.vmem [shape: bf16[128,32], index: 6, kind: output, shape index: {}]
  %s7 = sld [smem:[#allocation0]]
  $region57: #{densenet_forward.22} parent=0
    _
  %s9 = ssub.s32 1, %s7
  %s10 = scalar_select 0, %s9, %s7
  loop: start=0, step=1, limit=4
  $region2: #{densenet_forward.22} parent=0 // loop_pre_header
    _
  $region3: #{densenet_forward.22} parent=0 // loop_header
    %s12 = sphi 0, %s16
    %p13 = scmp.ge.s32.totalorder %s12, 4
    %s22 = sphi 0, %s24
    %s25 = sphi 0, %s22
    %s26 = sphi 0, %s25
    %s42 = sphi 0, %s26
    %s46 = sphi 0, %s46
    %s48 = sphi 0, %s46
    %s49 = sphi 0, %s48
    %s63 = sphi 0, %s49
    %s67 = sphi 0, %s67
    %s69 = sphi 0, %s67
    %s70 = sphi 0, %s69
    %s84 = sphi 0, %s70
    %s88 = sphi 0, %s88
    %s90 = sphi 0, %s88
    %s91 = sphi 0, %s90
    %s105 = sphi 0, %s91
    %s109 = sphi 0, %s109
    %s111 = sphi 0, %s109
    %s112 = sphi 0, %s111
    %s126 = sphi 0, %s112
    %s130 = sphi 0, %s130
    %s132 = sphi 0, %s130
    %s133 = sphi 0, %s132
    %s147 = sphi 0, %s133
    %s153 = sphi 0, %s155
    %s156 = sphi 0, %s153
    %s157 = sphi 0, %s156
    %s173 = sphi 0, %s157
  $region4: #{densenet_forward.22} parent=0 // loop_header_branch
    %15 = sbr.rel (%p13) target = $region8
  $region5: #{densenet_forward.22} parent=0 // loop_body
    %s17 = ssub.s32 %s12, 1
    %s18 = ssub.s32 %s12, 2
    %s19 = sadd.s32 %s12, 1
    %s20 = ssub.s32 %s12, %s19
    %p21 = scmp.eq.s32.totalorder %s20, 0
    %s23 = sadd.s32 %s22, 1
    %s24 = scalar_select %p21, %s22, %s23
    %p27 = pneg %p21
    %p28 = scmp.eq.s32.totalorder %s12, 1
    %p29 = por %p27, %p28
    %p30 = scmp.ne.s32.totalorder %s22, %s25
    %p31 = scmp.eq.s32.totalorder %s12, 0
    %p32 = por %p30, %p31
    %p33 = scmp.ne.s32.totalorder %s22, %s25
    %p34 = scmp.eq.s32.totalorder %s17, 1
    %p35 = por %p33, %p34
    %p36 = scmp.ne.s32.totalorder %s25, %s26
    %p37 = scmp.eq.s32.totalorder %s17, 0
    %p38 = por %p36, %p37
    %p39 = scmp.ne.s32.totalorder %s25, %s26
    %p40 = scmp.eq.s32.totalorder %s18, 1
    %p41 = por %p39, %p40
    %p43 = scmp.ne.s32.totalorder %s26, %s42
    %p44 = scmp.eq.s32.totalorder %s18, 0
    %p45 = por %p43, %p44
    %s47 = sadd.s32 %s46, 1
    %p50 = scmp.eq.s32.totalorder %s12, 1
    %p51 = scmp.ne.s32.totalorder %s46, %s48
    %p52 = scmp.eq.s32.totalorder %s12, 0
    %p53 = por %p51, %p52
    %p54 = scmp.ne.s32.totalorder %s46, %s48
    %p55 = scmp.eq.s32.totalorder %s17, 1
    %p56 = por %p54, %p55
    %p57 = scmp.ne.s32.totalorder %s48, %s49
    %p58 = scmp.eq.s32.totalorder %s17, 0
    %p59 = por %p57, %p58
    %p60 = scmp.ne.s32.totalorder %s48, %s49
    %p61 = scmp.eq.s32.totalorder %s18, 1
    %p62 = por %p60, %p61
    %p64 = scmp.ne.s32.totalorder %s49, %s63
    %p65 = scmp.eq.s32.totalorder %s18, 0
    %p66 = por %p64, %p65
    %s68 = sadd.s32 %s67, 1
    %p71 = scmp.eq.s32.totalorder %s12, 1
    %p72 = scmp.ne.s32.totalorder %s67, %s69
    %p73 = scmp.eq.s32.totalorder %s12, 0
    %p74 = por %p72, %p73
    %p75 = scmp.ne.s32.totalorder %s67, %s69
    %p76 = scmp.eq.s32.totalorder %s17, 1
    %p77 = por %p75, %p76
    %p78 = scmp.ne.s32.totalorder %s69, %s70
    %p79 = scmp.eq.s32.totalorder %s17, 0
    %p80 = por %p78, %p79
    %p81 = scmp.ne.s32.totalorder %s69, %s70
    %p82 = scmp.eq.s32.totalorder %s18, 1
    %p83 = por %p81, %p82
    %p85 = scmp.ne.s32.totalorder %s70, %s84
    %p86 = scmp.eq.s32.totalorder %s18, 0
    %p87 = por %p85, %p86
    %s89 = sadd.s32 %s88, 1
    %p92 = scmp.eq.s32.totalorder %s12, 1
    %p93 = scmp.ne.s32.totalorder %s88, %s90
    %p94 = scmp.eq.s32.totalorder %s12, 0
    %p95 = por %p93, %p94
    %p96 = scmp.ne.s32.totalorder %s88, %s90
    %p97 = scmp.eq.s32.totalorder %s17, 1
    %p98 = por %p96, %p97
    %p99 = scmp.ne.s32.totalorder %s90, %s91
    %p100 = scmp.eq.s32.totalorder %s17, 0
    %p101 = por %p99, %p100
    %p102 = scmp.ne.s32.totalorder %s90, %s91
    %p103 = scmp.eq.s32.totalorder %s18, 1
    %p104 = por %p102, %p103
    %p106 = scmp.ne.s32.totalorder %s91, %s105
    %p107 = scmp.eq.s32.totalorder %s18, 0
    %p108 = por %p106, %p107
    %s110 = sadd.s32 %s109, 1
    %p113 = scmp.eq.s32.totalorder %s12, 1
    %p114 = scmp.ne.s32.totalorder %s109, %s111
    %p115 = scmp.eq.s32.totalorder %s12, 0
    %p116 = por %p114, %p115
    %p117 = scmp.ne.s32.totalorder %s109, %s111
    %p118 = scmp.eq.s32.totalorder %s17, 1
    %p119 = por %p117, %p118
    %p120 = scmp.ne.s32.totalorder %s111, %s112
    %p121 = scmp.eq.s32.totalorder %s17, 0
    %p122 = por %p120, %p121
    %p123 = scmp.ne.s32.totalorder %s111, %s112
    %p124 = scmp.eq.s32.totalorder %s18, 1
    %p125 = por %p123, %p124
    %p127 = scmp.ne.s32.totalorder %s112, %s126
    %p128 = scmp.eq.s32.totalorder %s18, 0
    %p129 = por %p127, %p128
    %s131 = sadd.s32 %s130, 1
    %p134 = scmp.eq.s32.totalorder %s12, 1
    %p135 = scmp.ne.s32.totalorder %s130, %s132
    %p136 = scmp.eq.s32.totalorder %s12, 0
    %p137 = por %p135, %p136
    %p138 = scmp.ne.s32.totalorder %s130, %s132
    %p139 = scmp.eq.s32.totalorder %s17, 1
    %p140 = por %p138, %p139
    %p141 = scmp.ne.s32.totalorder %s132, %s133
    %p142 = scmp.eq.s32.totalorder %s17, 0
    %p143 = por %p141, %p142
    %p144 = scmp.ne.s32.totalorder %s132, %s133
    %p145 = scmp.eq.s32.totalorder %s18, 1
    %p146 = por %p144, %p145
    %p148 = scmp.ne.s32.totalorder %s133, %s147
    %p149 = scmp.eq.s32.totalorder %s18, 0
    %p150 = por %p148, %p149
    %s151 = ssub.s32 %s12, %s19
    %p152 = scmp.eq.s32.totalorder %s151, 0
    %s154 = sadd.s32 %s153, 1
    %s155 = scalar_select %p152, %s153, %s154
    %p158 = pneg %p152
    %p159 = scmp.eq.s32.totalorder %s12, 1
    %p160 = por %p158, %p159
    %p161 = scmp.ne.s32.totalorder %s153, %s156
    %p162 = scmp.eq.s32.totalorder %s12, 0
    %p163 = por %p161, %p162
    %p164 = scmp.ne.s32.totalorder %s153, %s156
    %p165 = scmp.eq.s32.totalorder %s17, 1
    %p166 = por %p164, %p165
    %p167 = scmp.ne.s32.totalorder %s156, %s157
    %p168 = scmp.eq.s32.totalorder %s17, 0
    %p169 = por %p167, %p168
    %p170 = scmp.ne.s32.totalorder %s156, %s157
    %p171 = scmp.eq.s32.totalorder %s18, 1
    %p172 = por %p170, %p171
    %p174 = scmp.ne.s32.totalorder %s157, %s173
    %p175 = scmp.eq.s32.totalorder %s18, 0
    %p176 = por %p174, %p175
    %p177 = scmp.le.s32.totalorder 1, %s12
    %p178 = scmp.lt.s32.totalorder %s12, 3
    %p179 = pnand %p177, %p178
    %p180 = pneg %p179
    // Predicated region
    $region9: #{densenet_forward.22} parent=5 // pred_check
      _
    $region10: #{densenet_forward.22} parent=5 // pred_check_branch
      %182 = sbr.rel (%p179) target = $region12
    $region11: #{densenet_forward.22} parent=5 // pred_region
      %s183 = ssub.s32 %s12, 1
      // Predicated region
      $region13: #{densenet_forward.22} parent=11 // pred_check
        %p184 = pneg %p59
      $region14: #{densenet_forward.22} parent=11 // pred_check_branch
        %186 = sbr.rel (%p184) target = $region16
      $region15: #{densenet_forward.22} parent=11 // pred_region
        _
      $region16: #{densenet_forward.22} parent=11 // pred_fallthru
        _
      // Predicated region
      $region17: #{densenet_forward.22} parent=11 // pred_check
        %p187 = pneg %p80
      $region18: #{densenet_forward.22} parent=11 // pred_check_branch
        %189 = sbr.rel (%p187) target = $region20
      $region19: #{densenet_forward.22} parent=11 // pred_region
        _
      $region20: #{densenet_forward.22} parent=11 // pred_fallthru
        _
      // Predicated region
      $region21: #{densenet_forward.22} parent=11 // pred_check
        %p190 = pneg %p101
      $region22: #{densenet_forward.22} parent=11 // pred_check_branch
        %192 = sbr.rel (%p190) target = $region24
      $region23: #{densenet_forward.22} parent=11 // pred_region
        _
      $region24: #{densenet_forward.22} parent=11 // pred_fallthru
        _
      // Predicated region
      $region25: #{densenet_forward.22} parent=11 // pred_check
        %p193 = pneg %p122
      $region26: #{densenet_forward.22} parent=11 // pred_check_branch
        %195 = sbr.rel (%p193) target = $region28
      $region27: #{densenet_forward.22} parent=11 // pred_region
        _
      $region28: #{densenet_forward.22} parent=11 // pred_fallthru
        _
      // Predicated region
      $region29: #{densenet_forward.22} parent=11 // pred_check
        %p196 = pneg %p143
      $region30: #{densenet_forward.22} parent=11 // pred_check_branch
        %198 = sbr.rel (%p196) target = $region32
      $region31: #{densenet_forward.22} parent=11 // pred_region
        _
      $region32: #{densenet_forward.22} parent=11 // pred_fallthru
        _
    $region12: #{densenet_forward.22} parent=5 // pred_fallthru
      _
    %p199 = scmp.lt.s32.totalorder %s12, 2
    // Predicated region
    $region33: #{densenet_forward.22} parent=5 // pred_check
      %p200 = pneg %p199
    $region34: #{densenet_forward.22} parent=5 // pred_check_branch
      %202 = sbr.rel (%p200) target = $region36
    $region35: #{densenet_forward.22} parent=5 // pred_region
      // Predicated region
      $region37: #{densenet_forward.22} parent=35 // pred_check
        %p203 = pneg %p32
      $region38: #{densenet_forward.22} parent=35 // pred_check_branch
        %205 = sbr.rel (%p203) target = $region40
      $region39: #{densenet_forward.22} parent=35 // pred_region
        %s206 = smul.u32 8, %s12
        %p207 = scmp.lt.s32.totalorder %s206, 15
        %s208 = scalar_select %p207, %s206, 15
        %s209 = smul.addr %s208, 4
        %s210 = scalar_lea.vmem %s0, %s209
        %s211 = smul.u32 8, %s12
      $region40: #{densenet_forward.22} parent=35 // pred_fallthru
        _
    $region36: #{densenet_forward.22} parent=5 // pred_fallthru
      _
    %p212 = scmp.le.s32.totalorder 1, %s12
    %p213 = scmp.lt.s32.totalorder %s12, 3
    %p214 = pnand %p212, %p213
    %p215 = pneg %p214
    // Predicated region
    $region41: #{densenet_forward.22} parent=5 // pred_check
      _
    $region42: #{densenet_forward.22} parent=5 // pred_check_branch
      %217 = sbr.rel (%p214) target = $region44
    $region43: #{densenet_forward.22} parent=5 // pred_region
      %s218 = ssub.s32 %s12, 1
      %s219 = smul.u32 8, %s17
      %p220 = scmp.lt.s32.totalorder %s219, 15
      %s221 = scalar_select %p220, %s219, 15
      %s222 = smul.addr %s221, 4
      %s223 = scalar_lea.vmem %s0, %s222
      %p224 = pneg %p38
      %p225 = pneg %p35
      %p226 = pneg %p59
      %p227 = pneg %p56
      %p228 = pneg %p80
      %p229 = pneg %p77
      %p230 = pneg %p101
      %p231 = pneg %p98
      %p232 = pneg %p122
      %p233 = pneg %p119
      %p234 = pneg %p143
      %p235 = pneg %p140
      %p236 = pneg %p169
      %p237 = pneg %p166
      %s238 = smul.u32 8, %s17
      %p239 = scmp.lt.s32.totalorder %s238, 15
      %s240 = scalar_select %p239, %s238, 15
      %s241 = smul.addr %s240, 4
      %s242 = scalar_lea.vmem %s6, %s241
      %s243 = smul.u32 8, %s17
      %p244 = scmp.lt.s32.totalorder %s243, 15
      %s245 = scalar_select %p244, %s243, 15
      %s246 = smul.addr %s245, 4
      %s247 = scalar_lea.vmem %s0, %s246
      %s248 = smul.u32 8, %s17
      %s249 = smul.u32 8, %s17
      %p250 = scmp.lt.s32.totalorder %s249, 15
      %s251 = scalar_select %p250, %s249, 15
      %s252 = smul.addr %s251, 4
      %s253 = scalar_lea.vmem %s6, %s252
      %s254 = smul.u32 8, %s17
      %v256 = vld [vmem:[%s247] sm:$0xf]
      %v257 = vld [vmem:[%s247 + $0x4] sm:$0xf]
      %v258 = vld [vmem:[%s247 + $0x8] sm:$0xf]
      %v259 = vld [vmem:[%s247 + $0xc] sm:$0xf]
      %v260 = vld [vmem:[%s247 + $0x10] sm:$0xf]
      %v261 = vld [vmem:[%s247 + $0x14] sm:$0xf]
      %v262 = vld [vmem:[%s247 + $0x18] sm:$0xf]
      %v263 = vld [vmem:[%s247 + $0x1c] sm:$0xf]
      %v264 = vunpack.c.l.bf16 %v256
      %v265 = vunpack.c.l.bf16 %v257
      %v266 = vunpack.c.l.bf16 %v258
      %v267 = vunpack.c.l.bf16 %v259
      %v268 = vunpack.c.l.bf16 %v260
      %v269 = vunpack.c.l.bf16 %v261
      %v270 = vunpack.c.l.bf16 %v262
      %v271 = vunpack.c.l.bf16 %v263
      %v272 = vld [vmem:[%s2] sm:$0x1]
      %v274 = vlaneseq
      %v275 = vshrl.u32 %v274, 7
      %v276 = vsub.s32 0, %v275
      %v277 = vrot.slane %v272, %v276
      %v279 = vmul.f32 %v264, %v277
      %v280 = vmul.f32 %v265, %v277
      %v281 = vmul.f32 %v266, %v277
      %v282 = vmul.f32 %v267, %v277
      %v283 = vmul.f32 %v268, %v277
      %v284 = vmul.f32 %v269, %v277
      %v285 = vmul.f32 %v270, %v277
      %v286 = vmul.f32 %v271, %v277
      %v287 = vld [vmem:[%s3] sm:$0x1]
      %v289 = vlaneseq
      %v290 = vshrl.u32 %v289, 7
      %v291 = vsub.s32 0, %v290
      %v292 = vrot.slane %v287, %v291
      %v294 = vadd.f32 %v279, %v292
      %v295 = vadd.f32 %v280, %v292
      %v296 = vadd.f32 %v281, %v292
      %v297 = vadd.f32 %v282, %v292
      %v298 = vadd.f32 %v283, %v292
      %v299 = vadd.f32 %v284, %v292
      %v300 = vadd.f32 %v285, %v292
      %v301 = vadd.f32 %v286, %v292
      %v302 = vmax.f32 %v294, 0.0
      %v303 = vmax.f32 %v295, 0.0
      %v304 = vmax.f32 %v296, 0.0
      %v305 = vmax.f32 %v297, 0.0
      %v306 = vmax.f32 %v298, 0.0
      %v307 = vmax.f32 %v299, 0.0
      %v308 = vmax.f32 %v300, 0.0
      %v309 = vmax.f32 %v301, 0.0
      %v310 = vpack.c.bf16 %v303, %v302
      %v311 = vpack.c.bf16 %v305, %v304
      %v312 = vpack.c.bf16 %v307, %v306
      %v313 = vpack.c.bf16 %v309, %v308
      %v314 = vld [vmem:[%s1] sm:$0xf]
      %v315 = vld [vmem:[%s1 + $0x4] sm:$0xf]
      %v318 = vunpack.c.l.b16 %v314
      %v319 = vunpack.c.l.b16 %v315
      %v320 = vpack.c.b16 %v319, %v318
      %vm322 = vcmask 130048
      %v324 = vsel %vm322, %v310, 0
      %v327 = vsel %vm322, %v311, 0
      %v330 = vsel %vm322, %v312, 0
      %v333 = vsel %vm322, %v313, 0
      %335 = vmatprep.subr.bf16.mxu0 0
      %336 = vmatpush1.bf16.msra.mxu0 %v320
      %337 = vmatprep.subr.bf16.mxu0 0
      %338 = vmatpush1.bf16.msra.mxu0 0
      %339 = vmatprep.subr.bf16.mxu0 0
      %340 = vmatpush1.bf16.msra.mxu0 0
      %341 = vmatprep.subr.bf16.mxu0 0
      %342 = vmatpush1.bf16.msra.mxu0 0
      %343 = vmatprep.subr.bf16.mxu0 0
      %344 = vmatpush1.bf16.msra.mxu0 0
      %345 = vmatprep.subr.bf16.mxu0 0
      %346 = vmatpush1.bf16.msra.mxu0 0
      %347 = vmatprep.subr.bf16.mxu0 0
      %348 = vmatpush1.bf16.msra.mxu0 0
      %349 = vmatprep.subr.bf16.mxu0 0
      %350 = vmatpush1.bf16.msra.mxu0 0
      %351 = vmatprep.subr.bf16.mxu0 0
      %352 = vmatpush1.bf16.msra.mxu0 0
      %353 = vmatprep.subr.bf16.mxu0 0
      %354 = vmatpush1.bf16.msra.mxu0 0
      %355 = vmatprep.subr.bf16.mxu0 0
      %356 = vmatpush1.bf16.msra.mxu0 0
      %357 = vmatprep.subr.bf16.mxu0 0
      %358 = vmatpush1.bf16.msra.mxu0 0
      %359 = vmatprep.subr.bf16.mxu0 0
      %360 = vmatpush1.bf16.msra.mxu0 0
      %361 = vmatprep.subr.bf16.mxu0 0
      %362 = vmatpush1.bf16.msra.mxu0 0
      %363 = vmatprep.subr.bf16.mxu0 0
      %364 = vmatpush1.bf16.msra.mxu0 0
      %365 = vmatprep.subr.bf16.mxu0 0
      %366 = vmatpush1.bf16.msra.mxu0 0
      %367 = vmatprep.mubr.bf16.mxu0 0
      %368 = vmatmul.mubr.bf16.gmra.mrb[0].mxu0 %v324
      %v369 = vpop.f32.mrb[0].mxu0
      %v370 = vadd.f32 0.0, %v369
      %v371 = vpop.f32.mrb[0].mxu0
      %v372 = vpop.f32.mrb[0].mxu0
      %v373 = vadd.f32 0.0, %v372
      %v374 = vpop.f32.mrb[0].mxu0
      %375 = vmatprep.mubr.bf16.mxu0 0
      %376 = vmatmul.mubr.bf16.gmra.mrb[0].mxu0 %v327
      %v377 = vpop.f32.mrb[0].mxu0
      %v378 = vadd.f32 0.0, %v377
      %v379 = vpop.f32.mrb[0].mxu0
      %v380 = vpop.f32.mrb[0].mxu0
      %v381 = vadd.f32 0.0, %v380
      %v382 = vpop.f32.mrb[0].mxu0
      %383 = vmatprep.mubr.bf16.mxu0 0
      %384 = vmatmul.mubr.bf16.gmra.mrb[0].mxu0 %v330
      %v385 = vpop.f32.mrb[0].mxu0
      %v386 = vadd.f32 0.0, %v385
      %v387 = vpop.f32.mrb[0].mxu0
      %v388 = vpop.f32.mrb[0].mxu0
      %v389 = vadd.f32 0.0, %v388
      %v390 = vpop.f32.mrb[0].mxu0
      %391 = vmatprep.mubr.bf16.mxu0 0
      %392 = vmatmul.mubr.bf16.gmra.mrb[0].mxu0 %v333
      %v393 = vpop.f32.mrb[0].mxu0
      %v394 = vadd.f32 0.0, %v393
      %v395 = vpop.f32.mrb[0].mxu0
      %v396 = vpop.f32.mrb[0].mxu0
      %v397 = vadd.f32 0.0, %v396
      %v398 = vpop.f32.mrb[0].mxu0
      %399 = vdwg.mxu0
      %v400 = vld [vmem:[%s4] sm:$0x1]
      %v402 = vlaneseq
      %v403 = vshrl.u32 %v402, 7
      %v404 = vsub.s32 0, %v403
      %v405 = vrot.slane %v400, %v404
      %v407 = vmul.f32 %v370, %v405
      %v408 = vmul.f32 %v373, %v405
      %v409 = vmul.f32 %v378, %v405
      %v410 = vmul.f32 %v381, %v405
      %v411 = vmul.f32 %v386, %v405
      %v412 = vmul.f32 %v389, %v405
      %v413 = vmul.f32 %v394, %v405
      %v414 = vmul.f32 %v397, %v405
      %v415 = vld [vmem:[%s5] sm:$0x1]
      %v417 = vlaneseq
      %v418 = vshrl.u32 %v417, 7
      %v419 = vsub.s32 0, %v418
      %v420 = vrot.slane %v415, %v419
      %v422 = vadd.f32 %v407, %v420
      %v423 = vadd.f32 %v408, %v420
      %v424 = vadd.f32 %v409, %v420
      %v425 = vadd.f32 %v410, %v420
      %v426 = vadd.f32 %v411, %v420
      %v427 = vadd.f32 %v412, %v420
      %v428 = vadd.f32 %v413, %v420
      %v429 = vadd.f32 %v414, %v420
      %v430 = vmax.f32 %v422, 0.0
      %v431 = vmax.f32 %v423, 0.0
      %v432 = vmax.f32 %v424, 0.0
      %v433 = vmax.f32 %v425, 0.0
      %v434 = vmax.f32 %v426, 0.0
      %v435 = vmax.f32 %v427, 0.0
      %v436 = vmax.f32 %v428, 0.0
      %v437 = vmax.f32 %v429, 0.0
      %v438 = vpack.c.bf16 %v431, %v430
      %v439 = vpack.c.bf16 %v433, %v432
      %v440 = vpack.c.bf16 %v435, %v434
      %v441 = vpack.c.bf16 %v437, %v436
      %v446 = vunpack.c.l.b16 %v438
      %v447 = vunpack.c.h.b16 %v438
      %v448 = vunpack.c.l.b16 %v439
      %v449 = vunpack.c.h.b16 %v439
      %v450 = vunpack.c.l.b16 %v440
      %v451 = vunpack.c.h.b16 %v440
      %v452 = vunpack.c.l.b16 %v441
      %v453 = vunpack.c.h.b16 %v441
      %v454 = vpack.c.b16 %v446, %v446
      %v455 = vpack.c.b16 %v447, %v447
      %v456 = vpack.c.b16 %v448, %v448
      %v457 = vpack.c.b16 %v449, %v449
      %v458 = vpack.c.b16 %v450, %v450
      %v459 = vpack.c.b16 %v451, %v451
      %v460 = vpack.c.b16 %v452, %v452
      %v461 = vpack.c.b16 %v453, %v453
      %vm470 = vcmask 257024
      %471 = vst.msk [vmem:[%s253] sm:$0xf] %vm470, %v454
      %472 = vst.msk [vmem:[%s253 + $0x4] sm:$0xf] %vm470, %v455
      %473 = vst.msk [vmem:[%s253 + $0x8] sm:$0xf] %vm470, %v456
      %474 = vst.msk [vmem:[%s253 + $0xc] sm:$0xf] %vm470, %v457
      %475 = vst.msk [vmem:[%s253 + $0x10] sm:$0xf] %vm470, %v458
      %476 = vst.msk [vmem:[%s253 + $0x14] sm:$0xf] %vm470, %v459
      %477 = vst.msk [vmem:[%s253 + $0x18] sm:$0xf] %vm470, %v460
      %478 = vst.msk [vmem:[%s253 + $0x1c] sm:$0xf] %vm470, %v461
      %s479 = smul.u32 8, %s17
      %p480 = scmp.lt.s32.totalorder %s479, 15
      %s481 = scalar_select %p480, %s479, 15
      %s482 = smul.addr %s481, 4
      %s483 = scalar_lea.vmem %s6, %s482
      // Predicated region
      $region45: #{densenet_forward.22} parent=43 // pred_check
        %p484 = pneg %p166
      $region46: #{densenet_forward.22} parent=43 // pred_check_branch
        %486 = sbr.rel (%p484) target = $region48
      $region47: #{densenet_forward.22} parent=43 // pred_region
        %s487 = smul.u32 8, %s17
      $region48: #{densenet_forward.22} parent=43 // pred_fallthru
        _
    $region44: #{densenet_forward.22} parent=5 // pred_fallthru
      _
    %p488 = scmp.le.s32.totalorder 2, %s12
    // Predicated region
    $region49: #{densenet_forward.22} parent=5 // pred_check
      %p489 = pneg %p488
    $region50: #{densenet_forward.22} parent=5 // pred_check_branch
      %491 = sbr.rel (%p489) target = $region52
    $region51: #{densenet_forward.22} parent=5 // pred_region
      %s492 = ssub.s32 %s12, 2
      // Predicated region
      $region53: #{densenet_forward.22} parent=51 // pred_check
        %p493 = pneg %p172
      $region54: #{densenet_forward.22} parent=51 // pred_check_branch
        %495 = sbr.rel (%p493) target = $region56
      $region55: #{densenet_forward.22} parent=51 // pred_region
        %s496 = smul.u32 8, %s18
        %p497 = scmp.lt.s32.totalorder %s496, 15
        %s498 = scalar_select %p497, %s496, 15
        %s499 = smul.addr %s498, 4
        %s500 = scalar_lea.vmem %s6, %s499
      $region56: #{densenet_forward.22} parent=51 // pred_fallthru
        _
    $region52: #{densenet_forward.22} parent=5 // pred_fallthru
      _
  $region6: #{densenet_forward.22} parent=0 // loop_footer
    %s16 = sadd.s32 1, %s12
  $region7: #{densenet_forward.22} parent=0 // loop_footer_branch
    %11 = sbr.rel target = $region3
  $region8: #{densenet_forward.22} parent=0 // loop_exit
    _

// kernel: densenet_forward.23
$region0: #{densenet_forward.23}
  #allocation0 [shape = 'u32[]', space=smem, size = 0x4, offset = 0x4, fixed_abs, tag = 'smem constant byte address 0x4 - core index']
  #allocation1 [shape = 'u32[144,128]{1,0:T(1,128)}', space=vmem, size = 0x12000, scoped, tag = 'internal scratch']
  %s0 = inlined_call_operand.vmem [shape: bf16[128,288], index: 0, kind: input, shape index: {}]
  %s1 = inlined_call_operand.vmem [shape: bf16[288,8], index: 1, kind: input, shape index: {}]
  %s2 = inlined_call_operand.vmem [shape: bf16[128,8], index: 2, kind: output, shape index: {}]
  %s3 = sld [smem:[#allocation0]]
  $region41: #{densenet_forward.23} parent=0
    _
  %s5 = ssub.s32 1, %s3
  %s6 = scalar_select 0, %s5, %s3
  loop: start=0, step=1, limit=4
  $region2: #{densenet_forward.23} parent=0 // loop_pre_header
    _
  $region3: #{densenet_forward.23} parent=0 // loop_header
    %s8 = sphi 0, %s12
    %p9 = scmp.ge.s32.totalorder %s8, 4
    %s18 = sphi 0, %s20
    %s21 = sphi 0, %s18
    %s22 = sphi 0, %s21
    %s38 = sphi 0, %s22
    %s42 = sphi 0, %s42
    %s44 = sphi 0, %s42
    %s45 = sphi 0, %s44
    %s59 = sphi 0, %s45
    %s65 = sphi 0, %s67
    %s68 = sphi 0, %s65
    %s69 = sphi 0, %s68
    %s85 = sphi 0, %s69
  $region4: #{densenet_forward.23} parent=0 // loop_header_branch
    %11 = sbr.rel (%p9) target = $region8
  $region5: #{densenet_forward.23} parent=0 // loop_body
    %s13 = ssub.s32 %s8, 1
    %s14 = ssub.s32 %s8, 2
    %s15 = sadd.s32 %s8, 1
    %s16 = ssub.s32 %s8, %s15
    %p17 = scmp.eq.s32.totalorder %s16, 0
    %s19 = sadd.s32 %s18, 1
    %s20 = scalar_select %p17, %s18, %s19
    %p23 = pneg %p17
    %p24 = scmp.eq.s32.totalorder %s8, 1
    %p25 = por %p23, %p24
    %p26 = scmp.ne.s32.totalorder %s18, %s21
    %p27 = scmp.eq.s32.totalorder %s8, 0
    %p28 = por %p26, %p27
    %p29 = scmp.ne.s32.totalorder %s18, %s21
    %p30 = scmp.eq.s32.totalorder %s13, 1
    %p31 = por %p29, %p30
    %p32 = scmp.ne.s32.totalorder %s21, %s22
    %p33 = scmp.eq.s32.totalorder %s13, 0
    %p34 = por %p32, %p33
    %p35 = scmp.ne.s32.totalorder %s21, %s22
    %p36 = scmp.eq.s32.totalorder %s14, 1
    %p37 = por %p35, %p36
    %p39 = scmp.ne.s32.totalorder %s22, %s38
    %p40 = scmp.eq.s32.totalorder %s14, 0
    %p41 = por %p39, %p40
    %s43 = sadd.s32 %s42, 1
    %p46 = scmp.eq.s32.totalorder %s8, 1
    %p47 = scmp.ne.s32.totalorder %s42, %s44
    %p48 = scmp.eq.s32.totalorder %s8, 0
    %p49 = por %p47, %p48
    %p50 = scmp.ne.s32.totalorder %s42, %s44
    %p51 = scmp.eq.s32.totalorder %s13, 1
    %p52 = por %p50, %p51
    %p53 = scmp.ne.s32.totalorder %s44, %s45
    %p54 = scmp.eq.s32.totalorder %s13, 0
    %p55 = por %p53, %p54
    %p56 = scmp.ne.s32.totalorder %s44, %s45
    %p57 = scmp.eq.s32.totalorder %s14, 1
    %p58 = por %p56, %p57
    %p60 = scmp.ne.s32.totalorder %s45, %s59
    %p61 = scmp.eq.s32.totalorder %s14, 0
    %p62 = por %p60, %p61
    %s63 = ssub.s32 %s8, %s15
    %p64 = scmp.eq.s32.totalorder %s63, 0
    %s66 = sadd.s32 %s65, 1
    %s67 = scalar_select %p64, %s65, %s66
    %p70 = pneg %p64
    %p71 = scmp.eq.s32.totalorder %s8, 1
    %p72 = por %p70, %p71
    %p73 = scmp.ne.s32.totalorder %s65, %s68
    %p74 = scmp.eq.s32.totalorder %s8, 0
    %p75 = por %p73, %p74
    %p76 = scmp.ne.s32.totalorder %s65, %s68
    %p77 = scmp.eq.s32.totalorder %s13, 1
    %p78 = por %p76, %p77
    %p79 = scmp.ne.s32.totalorder %s68, %s69
    %p80 = scmp.eq.s32.totalorder %s13, 0
    %p81 = por %p79, %p80
    %p82 = scmp.ne.s32.totalorder %s68, %s69
    %p83 = scmp.eq.s32.totalorder %s14, 1
    %p84 = por %p82, %p83
    %p86 = scmp.ne.s32.totalorder %s69, %s85
    %p87 = scmp.eq.s32.totalorder %s14, 0
    %p88 = por %p86, %p87
    %p89 = scmp.le.s32.totalorder 1, %s8
    %p90 = scmp.lt.s32.totalorder %s8, 3
    %p91 = pnand %p89, %p90
    %p92 = pneg %p91
    // Predicated region
    $region9: #{densenet_forward.23} parent=5 // pred_check
      _
    $region10: #{densenet_forward.23} parent=5 // pred_check_branch
      %94 = sbr.rel (%p91) target = $region12
    $region11: #{densenet_forward.23} parent=5 // pred_region
      %s95 = ssub.s32 %s8, 1
      // Predicated region
      $region13: #{densenet_forward.23} parent=11 // pred_check
        %p96 = pneg %p55
      $region14: #{densenet_forward.23} parent=11 // pred_check_branch
        %98 = sbr.rel (%p96) target = $region16
      $region15: #{densenet_forward.23} parent=11 // pred_region
        _
      $region16: #{densenet_forward.23} parent=11 // pred_fallthru
        _
    $region12: #{densenet_forward.23} parent=5 // pred_fallthru
      _
    %p99 = scmp.lt.s32.totalorder %s8, 2
    // Predicated region
    $region17: #{densenet_forward.23} parent=5 // pred_check
      %p100 = pneg %p99
    $region18: #{densenet_forward.23} parent=5 // pred_check_branch
      %102 = sbr.rel (%p100) target = $region20
    $region19: #{densenet_forward.23} parent=5 // pred_region
      // Predicated region
      $region21: #{densenet_forward.23} parent=19 // pred_check
        %p103 = pneg %p28
      $region22: #{densenet_forward.23} parent=19 // pred_check_branch
        %105 = sbr.rel (%p103) target = $region24
      $region23: #{densenet_forward.23} parent=19 // pred_region
        %s106 = smul.u32 8, %s8
        %p107 = scmp.lt.s32.totalorder %s106, 15
        %s108 = scalar_select %p107, %s106, 15
        %s109 = smul.addr %s108, 3
        %s110 = smul.addr %s109, 4
        %s111 = scalar_lea.vmem %s0, %s110
        %s112 = smul.u32 8, %s8
      $region24: #{densenet_forward.23} parent=19 // pred_fallthru
        _
    $region20: #{densenet_forward.23} parent=5 // pred_fallthru
      _
    %p113 = scmp.le.s32.totalorder 1, %s8
    %p114 = scmp.lt.s32.totalorder %s8, 3
    %p115 = pnand %p113, %p114
    %p116 = pneg %p115
    // Predicated region
    $region25: #{densenet_forward.23} parent=5 // pred_check
      _
    $region26: #{densenet_forward.23} parent=5 // pred_check_branch
      %118 = sbr.rel (%p115) target = $region28
    $region27: #{densenet_forward.23} parent=5 // pred_region
      %s119 = ssub.s32 %s8, 1
      %s120 = smul.u32 8, %s13
      %p121 = scmp.lt.s32.totalorder %s120, 15
      %s122 = scalar_select %p121, %s120, 15
      %s123 = smul.addr %s122, 3
      %s124 = smul.addr %s123, 4
      %s125 = scalar_lea.vmem %s0, %s124
      %p126 = pneg %p34
      %p127 = pneg %p31
      %p128 = pneg %p55
      %p129 = pneg %p52
      %p130 = pneg %p81
      %p131 = pneg %p78
      %s132 = smul.u32 8, %s13
      %p133 = scmp.lt.s32.totalorder %s132, 15
      %s134 = scalar_select %p133, %s132, 15
      %s135 = smul.addr %s134, 4
      %s136 = scalar_lea.vmem %s2, %s135
      %s137 = smul.u32 8, %s13
      %p138 = scmp.lt.s32.totalorder %s137, 15
      %s139 = scalar_select %p138, %s137, 15
      %s140 = smul.addr %s139, 3
      %s141 = smul.addr %s140, 4
      %s142 = scalar_lea.vmem %s0, %s141
      %s143 = smul.u32 8, %s13
      %s144 = smul.u32 8, %s13
      %p145 = scmp.lt.s32.totalorder %s144, 15
      %s146 = scalar_select %p145, %s144, 15
      %s147 = smul.addr %s146, 4
      %s148 = scalar_lea.vmem %s2, %s147
      %s149 = smul.u32 8, %s13
      %v151 = vld [vmem:[%s142] sm:$0xff]
      %v152 = vld [vmem:[%s142 + $0x8] sm:$0xf]
      %v153 = vld [vmem:[%s142 + $0xc] sm:$0xff]
      %v154 = vld [vmem:[%s142 + $0x14] sm:$0xf]
      %v155 = vld [vmem:[%s142 + $0x18] sm:$0xff]
      %v156 = vld [vmem:[%s142 + $0x20] sm:$0xf]
      %v157 = vld [vmem:[%s142 + $0x24] sm:$0xff]
      %v158 = vld [vmem:[%s142 + $0x2c] sm:$0xf]
      %v159 = vld [vmem:[%s142 + $0x30] sm:$0xff]
      %v160 = vld [vmem:[%s142 + $0x38] sm:$0xf]
      %v161 = vld [vmem:[%s142 + $0x3c] sm:$0xff]
      %v162 = vld [vmem:[%s142 + $0x44] sm:$0xf]
      %v163 = vld [vmem:[%s142 + $0x48] sm:$0xff]
      %v164 = vld [vmem:[%s142 + $0x50] sm:$0xf]
      %v165 = vld [vmem:[%s142 + $0x54] sm:$0xff]
      %v166 = vld [vmem:[%s142 + $0x5c] sm:$0xf]
      %v167 = vld [vmem:[%s1] sm:$0xf]
      %v168 = vld [vmem:[%s1 + $0x4] sm:$0xf]
      %v169 = vld [vmem:[%s1 + $0x8] sm:$0xf]
      %v170 = vld [vmem:[%s1 + $0xc] sm:$0xf]
      %v171 = vld [vmem:[%s1 + $0x10] sm:$0xf]
      %v172 = vld [vmem:[%s1 + $0x14] sm:$0xf]
      %v173 = vld [vmem:[%s1 + $0x18] sm:$0xf]
      %v174 = vld [vmem:[%s1 + $0x1c] sm:$0xf]
      %v175 = vld [vmem:[%s1 + $0x20] sm:$0xf]
      %v176 = vld [vmem:[%s1 + $0x24] sm:$0xf]
      %v177 = vld [vmem:[%s1 + $0x28] sm:$0xf]
      %v178 = vld [vmem:[%s1 + $0x2c] sm:$0xf]
      %v179 = vld [vmem:[%s1 + $0x30] sm:$0xf]
      %v180 = vld [vmem:[%s1 + $0x34] sm:$0xf]
      %v181 = vld [vmem:[%s1 + $0x38] sm:$0xf]
      %v182 = vld [vmem:[%s1 + $0x3c] sm:$0xf]
      %v183 = vld [vmem:[%s1 + $0x40] sm:$0xf]
      %v184 = vld [vmem:[%s1 + $0x44] sm:$0xf]
      %v185 = vld [vmem:[%s1 + $0x48] sm:$0xf]
      %v186 = vld [vmem:[%s1 + $0x4c] sm:$0xf]
      %v187 = vld [vmem:[%s1 + $0x50] sm:$0xf]
      %v188 = vld [vmem:[%s1 + $0x54] sm:$0xf]
      %v189 = vld [vmem:[%s1 + $0x58] sm:$0xf]
      %v190 = vld [vmem:[%s1 + $0x5c] sm:$0xf]
      %v191 = vld [vmem:[%s1 + $0x60] sm:$0xf]
      %v192 = vld [vmem:[%s1 + $0x64] sm:$0xf]
      %v193 = vld [vmem:[%s1 + $0x68] sm:$0xf]
      %v194 = vld [vmem:[%s1 + $0x6c] sm:$0xf]
      %v195 = vld [vmem:[%s1 + $0x70] sm:$0xf]
      %v196 = vld [vmem:[%s1 + $0x74] sm:$0xf]
      %v197 = vld [vmem:[%s1 + $0x78] sm:$0xf]
      %v198 = vld [vmem:[%s1 + $0x7c] sm:$0xf]
      %v199 = vld [vmem:[%s1 + $0x80] sm:$0xf]
      %v200 = vld [vmem:[%s1 + $0x84] sm:$0xf]
      %v201 = vld [vmem:[%s1 + $0x88] sm:$0xf]
      %v202 = vld [vmem:[%s1 + $0x8c] sm:$0xf]
      %v219 = vunpack.c.l.b16 %v151
      %v220 = vunpack.c.h.b16 %v151
      %v221 = vunpack.c.l.b16 %v152
      %v222 = vunpack.c.l.b16 %v153
      %v223 = vunpack.c.h.b16 %v153
      %v224 = vunpack.c.l.b16 %v154
      %v225 = vunpack.c.l.b16 %v155
      %v226 = vunpack.c.h.b16 %v155
      %v227 = vunpack.c.l.b16 %v156
      %v228 = vunpack.c.l.b16 %v157
      %v229 = vunpack.c.h.b16 %v157
      %v230 = vunpack.c.l.b16 %v158
      %v231 = vunpack.c.l.b16 %v159
      %v232 = vunpack.c.h.b16 %v159
      %v233 = vunpack.c.l.b16 %v160
      %v234 = vunpack.c.l.b16 %v161
      %v235 = vunpack.c.h.b16 %v161
      %v236 = vunpack.c.l.b16 %v162
      %v237 = vunpack.c.l.b16 %v163
      %v238 = vunpack.c.h.b16 %v163
      %v239 = vunpack.c.l.b16 %v164
      %v240 = vunpack.c.l.b16 %v165
      %v241 = vunpack.c.h.b16 %v165
      %v242 = vunpack.c.l.b16 %v166
      %v243 = vpack.c.b16 %v222, %v219
      %v244 = vpack.c.b16 %v223, %v220
      %v245 = vpack.c.b16 %v224, %v221
      %v246 = vpack.c.b16 %v228, %v225
      %v247 = vpack.c.b16 %v229, %v226
      %v248 = vpack.c.b16 %v230, %v227
      %v249 = vpack.c.b16 %v234, %v231
      %v250 = vpack.c.b16 %v235, %v232
      %v251 = vpack.c.b16 %v236, %v233
      %v252 = vpack.c.b16 %v240, %v237
      %v253 = vpack.c.b16 %v241, %v238
      %v254 = vpack.c.b16 %v242, %v239
      %v299 = vunpack.c.l.b16 %v167
      %v300 = vunpack.c.l.b16 %v168
      %v301 = vunpack.c.l.b16 %v169
      %v302 = vunpack.c.l.b16 %v170
      %v303 = vunpack.c.l.b16 %v171
      %v304 = vunpack.c.l.b16 %v172
      %v305 = vunpack.c.l.b16 %v173
      %v306 = vunpack.c.l.b16 %v174
      %v307 = vunpack.c.l.b16 %v175
      %v308 = vunpack.c.l.b16 %v176
      %v309 = vunpack.c.l.b16 %v177
      %v310 = vunpack.c.l.b16 %v178
      %v311 = vunpack.c.l.b16 %v179
      %v312 = vunpack.c.l.b16 %v180
      %v313 = vunpack.c.l.b16 %v181
      %v314 = vunpack.c.l.b16 %v182
      %v315 = vunpack.c.l.b16 %v183
      %v316 = vunpack.c.l.b16 %v184
      %v317 = vunpack.c.l.b16 %v185
      %v318 = vunpack.c.l.b16 %v186
      %v319 = vunpack.c.l.b16 %v187
      %v320 = vunpack.c.l.b16 %v188
      %v321 = vunpack.c.l.b16 %v189
      %v322 = vunpack.c.l.b16 %v190
      %v323 = vunpack.c.l.b16 %v191
      %v324 = vunpack.c.l.b16 %v192
      %v325 = vunpack.c.l.b16 %v193
      %v326 = vunpack.c.l.b16 %v194
      %v327 = vunpack.c.l.b16 %v195
      %v328 = vunpack.c.l.b16 %v196
      %v329 = vunpack.c.l.b16 %v197
      %v330 = vunpack.c.l.b16 %v198
      %v331 = vunpack.c.l.b16 %v199
      %v332 = vunpack.c.l.b16 %v200
      %v333 = vunpack.c.l.b16 %v201
      %v334 = vunpack.c.l.b16 %v202
      %v335 = vpack.c.b16 %v300, %v299
      %v336 = vpack.c.b16 %v302, %v301
      %v337 = vpack.c.b16 %v304, %v303
      %v338 = vpack.c.b16 %v306, %v305
      %v339 = vpack.c.b16 %v308, %v307
      %v340 = vpack.c.b16 %v310, %v309
      %v341 = vpack.c.b16 %v312, %v311
      %v342 = vpack.c.b16 %v314, %v313
      %v343 = vpack.c.b16 %v316, %v315
      %v344 = vpack.c.b16 %v318, %v317
      %v345 = vpack.c.b16 %v320, %v319
      %v346 = vpack.c.b16 %v322, %v321
      %v347 = vpack.c.b16 %v324, %v323
      %v348 = vpack.c.b16 %v326, %v325
      %v349 = vpack.c.b16 %v328, %v327
      %v350 = vpack.c.b16 %v330, %v329
      %v351 = vpack.c.b16 %v332, %v331
      %v352 = vpack.c.b16 %v334, %v333
      %vm371 = vcmask 261120
      %v373 = vsel %vm371, %v245, 0
      %v376 = vsel %vm371, %v248, 0
      %v379 = vsel %vm371, %v251, 0
      %v382 = vsel %vm371, %v254, 0
      %384 = vmatprep.subr.bf16.mxu0 0
      %385 = vmatpush1.bf16.msra.mxu0 %v335
      %386 = vmatprep.subr.bf16.mxu0 0
      %387 = vmatpush1.bf16.msra.mxu0 %v336
      %388 = vmatprep.subr.bf16.mxu0 0
      %389 = vmatpush1.bf16.msra.mxu0 %v337
      %390 = vmatprep.subr.bf16.mxu0 0
      %391 = vmatpush1.bf16.msra.mxu0 %v338
      %392 = vmatprep.subr.bf16.mxu0 0
      %393 = vmatpush1.bf16.msra.mxu0 %v339
      %394 = vmatprep.subr.bf16.mxu0 0
      %395 = vmatpush1.bf16.msra.mxu0 %v340
      %396 = vmatprep.subr.bf16.mxu0 0
      %397 = vmatpush1.bf16.msra.mxu0 %v341
      %398 = vmatprep.subr.bf16.mxu0 0
      %399 = vmatpush1.bf16.msra.mxu0 %v342
      %400 = vmatprep.subr.bf16.mxu0 0
      %401 = vmatpush1.bf16.msra.mxu0 %v343
      %402 = vmatprep.subr.bf16.mxu0 0
      %403 = vmatpush1.bf16.msra.mxu0 %v344
      %404 = vmatprep.subr.bf16.mxu0 0
      %405 = vmatpush1.bf16.msra.mxu0 %v345
      %406 = vmatprep.subr.bf16.mxu0 0
      %407 = vmatpush1.bf16.msra.mxu0 %v346
      %408 = vmatprep.subr.bf16.mxu0 0
      %409 = vmatpush1.bf16.msra.mxu0 %v347
      %410 = vmatprep.subr.bf16.mxu0 0
      %411 = vmatpush1.bf16.msra.mxu0 %v348
      %412 = vmatprep.subr.bf16.mxu0 0
      %413 = vmatpush1.bf16.msra.mxu0 %v349
      %414 = vmatprep.subr.bf16.mxu0 0
      %415 = vmatpush1.bf16.msra.mxu0 %v350
      %416 = vmatprep.mubr.bf16.mxu0 %v244
      %417 = vmatmul.mubr.bf16.gmra.mrb[0].mxu0 %v243
      %v418 = vpop.f32.mrb[0].mxu0
      %v419 = vadd.f32 0.0, %v418
      %v420 = vpop.f32.mrb[0].mxu0
      %v421 = vpop.f32.mrb[0].mxu0
      %v422 = vadd.f32 0.0, %v421
      %v423 = vpop.f32.mrb[0].mxu0
      %424 = vmatprep.mubr.bf16.mxu0 %v247
      %425 = vmatmul.mubr.bf16.gmra.mrb[0].mxu0 %v246
      %v426 = vpop.f32.mrb[0].mxu0
      %v427 = vadd.f32 0.0, %v426
      %v428 = vpop.f32.mrb[0].mxu0
      %v429 = vpop.f32.mrb[0].mxu0
      %v430 = vadd.f32 0.0, %v429
      %v431 = vpop.f32.mrb[0].mxu0
      %432 = vmatprep.mubr.bf16.mxu0 %v250
      %433 = vmatmul.mubr.bf16.gmra.mrb[0].mxu0 %v249
      %v434 = vpop.f32.mrb[0].mxu0
      %v435 = vadd.f32 0.0, %v434
      %v436 = vpop.f32.mrb[0].mxu0
      %v437 = vpop.f32.mrb[0].mxu0
      %v438 = vadd.f32 0.0, %v437
      %v439 = vpop.f32.mrb[0].mxu0
      %440 = vmatprep.mubr.bf16.mxu0 %v253
      %441 = vmatmul.mubr.bf16.gmra.mrb[0].mxu0 %v252
      %v442 = vpop.f32.mrb[0].mxu0
      %v443 = vadd.f32 0.0, %v442
      %v444 = vpop.f32.mrb[0].mxu0
      %v445 = vpop.f32.mrb[0].mxu0
      %v446 = vadd.f32 0.0, %v445
      %v447 = vpop.f32.mrb[0].mxu0
      %448 = vdwg.mxu0
      %449 = vmatprep.subr.bf16.mxu0 0
      %450 = vmatpush1.bf16.msra.mxu0 %v351
      %451 = vmatprep.subr.bf16.mxu0 0
      %452 = vmatpush1.bf16.msra.mxu0 %v352
      %453 = vmatprep.subr.bf16.mxu0 0
      %454 = vmatpush1.bf16.msra.mxu0 0
      %455 = vmatprep.subr.bf16.mxu0 0
      %456 = vmatpush1.bf16.msra.mxu0 0
      %457 = vmatprep.subr.bf16.mxu0 0
      %458 = vmatpush1.bf16.msra.mxu0 0
      %459 = vmatprep.subr.bf16.mxu0 0
      %460 = vmatpush1.bf16.msra.mxu0 0
      %461 = vmatprep.subr.bf16.mxu0 0
      %462 = vmatpush1.bf16.msra.mxu0 0
      %463 = vmatprep.subr.bf16.mxu0 0
      %464 = vmatpush1.bf16.msra.mxu0 0
      %465 = vmatprep.subr.bf16.mxu0 0
      %466 = vmatpush1.bf16.msra.mxu0 0
      %467 = vmatprep.subr.bf16.mxu0 0
      %468 = vmatpush1.bf16.msra.mxu0 0
      %469 = vmatprep.subr.bf16.mxu0 0
      %470 = vmatpush1.bf16.msra.mxu0 0
      %471 = vmatprep.subr.bf16.mxu0 0
      %472 = vmatpush1.bf16.msra.mxu0 0
      %473 = vmatprep.subr.bf16.mxu0 0
      %474 = vmatpush1.bf16.msra.mxu0 0
      %475 = vmatprep.subr.bf16.mxu0 0
      %476 = vmatpush1.bf16.msra.mxu0 0
      %477 = vmatprep.subr.bf16.mxu0 0
      %478 = vmatpush1.bf16.msra.mxu0 0
      %479 = vmatprep.subr.bf16.mxu0 0
      %480 = vmatpush1.bf16.msra.mxu0 0
      %481 = vmatprep.mubr.bf16.mxu0 0
      %482 = vmatmul.mubr.bf16.gmra.mrb[0].mxu0 %v373
      %v483 = vpop.f32.mrb[0].mxu0
      %v484 = vadd.f32 %v419, %v483
      %v485 = vpop.f32.mrb[0].mxu0
      %v486 = vpop.f32.mrb[0].mxu0
      %v487 = vadd.f32 %v422, %v486
      %v488 = vpop.f32.mrb[0].mxu0
      %489 = vmatprep.mubr.bf16.mxu0 0
      %490 = vmatmul.mubr.bf16.gmra.mrb[0].mxu0 %v376
      %v491 = vpop.f32.mrb[0].mxu0
      %v492 = vadd.f32 %v427, %v491
      %v493 = vpop.f32.mrb[0].mxu0
      %v494 = vpop.f32.mrb[0].mxu0
      %v495 = vadd.f32 %v430, %v494
      %v496 = vpop.f32.mrb[0].mxu0
      %497 = vmatprep.mubr.bf16.mxu0 0
      %498 = vmatmul.mubr.bf16.gmra.mrb[0].mxu0 %v379
      %v499 = vpop.f32.mrb[0].mxu0
      %v500 = vadd.f32 %v435, %v499
      %v501 = vpop.f32.mrb[0].mxu0
      %v502 = vpop.f32.mrb[0].mxu0
      %v503 = vadd.f32 %v438, %v502
      %v504 = vpop.f32.mrb[0].mxu0
      %505 = vmatprep.mubr.bf16.mxu0 0
      %506 = vmatmul.mubr.bf16.gmra.mrb[0].mxu0 %v382
      %v507 = vpop.f32.mrb[0].mxu0
      %v508 = vadd.f32 %v443, %v507
      %v509 = vpop.f32.mrb[0].mxu0
      %v510 = vpop.f32.mrb[0].mxu0
      %v511 = vadd.f32 %v446, %v510
      %v512 = vpop.f32.mrb[0].mxu0
      %513 = vdwg.mxu0
      %v514 = vpack.c.bf16 %v487, %v484
      %v515 = vpack.c.bf16 %v495, %v492
      %v516 = vpack.c.bf16 %v503, %v500
      %v517 = vpack.c.bf16 %v511, %v508
      %v522 = vunpack.c.l.b16 %v514
      %v523 = vunpack.c.h.b16 %v514
      %v524 = vunpack.c.l.b16 %v515
      %v525 = vunpack.c.h.b16 %v515
      %v526 = vunpack.c.l.b16 %v516
      %v527 = vunpack.c.h.b16 %v516
      %v528 = vunpack.c.l.b16 %v517
      %v529 = vunpack.c.h.b16 %v517
      %v530 = vpack.c.b16 %v522, %v522
      %v531 = vpack.c.b16 %v523, %v523
      %v532 = vpack.c.b16 %v524, %v524
      %v533 = vpack.c.b16 %v525, %v525
      %v534 = vpack.c.b16 %v526, %v526
      %v535 = vpack.c.b16 %v527, %v527
      %v536 = vpack.c.b16 %v528, %v528
      %v537 = vpack.c.b16 %v529, %v529
      %vm546 = vcmask 60416
      %547 = vst.msk [vmem:[%s148] sm:$0xf] %vm546, %v530
      %548 = vst.msk [vmem:[%s148 + $0x4] sm:$0xf] %vm546, %v531
      %549 = vst.msk [vmem:[%s148 + $0x8] sm:$0xf] %vm546, %v532
      %550 = vst.msk [vmem:[%s148 + $0xc] sm:$0xf] %vm546, %v533
      %551 = vst.msk [vmem:[%s148 + $0x10] sm:$0xf] %vm546, %v534
      %552 = vst.msk [vmem:[%s148 + $0x14] sm:$0xf] %vm546, %v535
      %553 = vst.msk [vmem:[%s148 + $0x18] sm:$0xf] %vm546, %v536
      %554 = vst.msk [vmem:[%s148 + $0x1c] sm:$0xf] %vm546, %v537
      %s555 = smul.u32 8, %s13
      %p556 = scmp.lt.s32.totalorder %s555, 15
      %s557 = scalar_select %p556, %s555, 15
      %s558 = smul.addr %s557, 4
      %s559 = scalar_lea.vmem %s2, %s558
      // Predicated region
      $region29: #{densenet_forward.23} parent=27 // pred_check
        %p560 = pneg %p78
      $region30: #{densenet_forward.23} parent=27 // pred_check_branch
        %562 = sbr.rel (%p560) target = $region32
      $region31: #{densenet_forward.23} parent=27 // pred_region
        %s563 = smul.u32 8, %s13
      $region32: #{densenet_forward.23} parent=27 // pred_fallthru
        _
    $region28: #{densenet_forward.23} parent=5 // pred_fallthru
      _
    %p564 = scmp.le.s32.totalorder 2, %s8
    // Predicated region
    $region33: #{densenet_forward.23} parent=5 // pred_check
      %p565 = pneg %p564
    $region34: #{densenet_forward.23} parent=5 // pred_check_branch
      %567 = sbr.rel (%p565) target = $region36
    $region35: #{densenet_forward.23} parent=5 // pred_region
      %s568 = ssub.s32 %s8, 2
      // Predicated region
      $region37: #{densenet_forward.23} parent=35 // pred_check
        %p569 = pneg %p84
      $region38: #{densenet_forward.23} parent=35 // pred_check_branch
        %571 = sbr.rel (%p569) target = $region40
      $region39: #{densenet_forward.23} parent=35 // pred_region
        %s572 = smul.u32 8, %s14
        %p573 = scmp.lt.s32.totalorder %s572, 15
        %s574 = scalar_select %p573, %s572, 15
        %s575 = smul.addr %s574, 4
        %s576 = scalar_lea.vmem %s2, %s575
      $region40: #{densenet_forward.23} parent=35 // pred_fallthru
        _
    $region36: #{densenet_forward.23} parent=5 // pred_fallthru
      _
  $region6: #{densenet_forward.23} parent=0 // loop_footer
    %s12 = sadd.s32 1, %s8
  $region7: #{densenet_forward.23} parent=0 // loop_footer_branch
    %7 = sbr.rel target = $region3
  $region8: #{densenet_forward.23} parent=0 // loop_exit
    _

// kernel: densenet_forward.24
$region0: #{densenet_forward.24}
  #allocation0 [shape = 'u32[]', space=smem, size = 0x4, offset = 0x4, fixed_abs, tag = 'smem constant byte address 0x4 - core index']
  #allocation1 [shape = 'u32[144,128]{1,0:T(1,128)}', space=vmem, size = 0x12000, scoped, tag = 'internal scratch']
  %s0 = inlined_call_operand.vmem [shape: bf16[128,24], index: 0, kind: input, shape index: {}]
  %s1 = inlined_call_operand.vmem [shape: bf16[24,32], index: 1, kind: input, shape index: {}]
  %s2 = inlined_call_operand.vmem [shape: f32[1,24], index: 2, kind: input, shape index: {}]
  %s3 = inlined_call_operand.vmem [shape: f32[1,24], index: 3, kind: input, shape index: {}]
  %s4 = inlined_call_operand.vmem [shape: f32[1,32], index: 4, kind: input, shape index: {}]
  %s5 = inlined_call_operand.vmem [shape: f32[1,32], index: 5, kind: input, shape index: {}]
  %s6 = inlined_call_operand.vmem [shape: bf16[128,32], index: 6, kind: output, shape index: {}]
  %s7 = sld [smem:[#allocation0]]
  $region57: #{densenet_forward.24} parent=0
    _
  %s9 = ssub.s32 1, %s7
  %s10 = scalar_select 0, %s9, %s7
  loop: start=0, step=1, limit=4
  $region2: #{densenet_forward.24} parent=0 // loop_pre_header
    _
  $region3: #{densenet_forward.24} parent=0 // loop_header
    %s12 = sphi 0, %s16
    %p13 = scmp.ge.s32.totalorder %s12, 4
    %s22 = sphi 0, %s24
    %s25 = sphi 0, %s22
    %s26 = sphi 0, %s25
    %s42 = sphi 0, %s26
    %s46 = sphi 0, %s46
    %s48 = sphi 0, %s46
    %s49 = sphi 0, %s48
    %s63 = sphi 0, %s49
    %s67 = sphi 0, %s67
    %s69 = sphi 0, %s67
    %s70 = sphi 0, %s69
    %s84 = sphi 0, %s70
    %s88 = sphi 0, %s88
    %s90 = sphi 0, %s88
    %s91 = sphi 0, %s90
    %s105 = sphi 0, %s91
    %s109 = sphi 0, %s109
    %s111 = sphi 0, %s109
    %s112 = sphi 0, %s111
    %s126 = sphi 0, %s112
    %s130 = sphi 0, %s130
    %s132 = sphi 0, %s130
    %s133 = sphi 0, %s132
    %s147 = sphi 0, %s133
    %s153 = sphi 0, %s155
    %s156 = sphi 0, %s153
    %s157 = sphi 0, %s156
    %s173 = sphi 0, %s157
  $region4: #{densenet_forward.24} parent=0 // loop_header_branch
    %15 = sbr.rel (%p13) target = $region8
  $region5: #{densenet_forward.24} parent=0 // loop_body
    %s17 = ssub.s32 %s12, 1
    %s18 = ssub.s32 %s12, 2
    %s19 = sadd.s32 %s12, 1
    %s20 = ssub.s32 %s12, %s19
    %p21 = scmp.eq.s32.totalorder %s20, 0
    %s23 = sadd.s32 %s22, 1
    %s24 = scalar_select %p21, %s22, %s23
    %p27 = pneg %p21
    %p28 = scmp.eq.s32.totalorder %s12, 1
    %p29 = por %p27, %p28
    %p30 = scmp.ne.s32.totalorder %s22, %s25
    %p31 = scmp.eq.s32.totalorder %s12, 0
    %p32 = por %p30, %p31
    %p33 = scmp.ne.s32.totalorder %s22, %s25
    %p34 = scmp.eq.s32.totalorder %s17, 1
    %p35 = por %p33, %p34
    %p36 = scmp.ne.s32.totalorder %s25, %s26
    %p37 = scmp.eq.s32.totalorder %s17, 0
    %p38 = por %p36, %p37
    %p39 = scmp.ne.s32.totalorder %s25, %s26
    %p40 = scmp.eq.s32.totalorder %s18, 1
    %p41 = por %p39, %p40
    %p43 = scmp.ne.s32.totalorder %s26, %s42
    %p44 = scmp.eq.s32.totalorder %s18, 0
    %p45 = por %p43, %p44
    %s47 = sadd.s32 %s46, 1
    %p50 = scmp.eq.s32.totalorder %s12, 1
    %p51 = scmp.ne.s32.totalorder %s46, %s48
    %p52 = scmp.eq.s32.totalorder %s12, 0
    %p53 = por %p51, %p52
    %p54 = scmp.ne.s32.totalorder %s46, %s48
    %p55 = scmp.eq.s32.totalorder %s17, 1
    %p56 = por %p54, %p55
    %p57 = scmp.ne.s32.totalorder %s48, %s49
    %p58 = scmp.eq.s32.totalorder %s17, 0
    %p59 = por %p57, %p58
    %p60 = scmp.ne.s32.totalorder %s48, %s49
    %p61 = scmp.eq.s32.totalorder %s18, 1
    %p62 = por %p60, %p61
    %p64 = scmp.ne.s32.totalorder %s49, %s63
    %p65 = scmp.eq.s32.totalorder %s18, 0
    %p66 = por %p64, %p65
    %s68 = sadd.s32 %s67, 1
    %p71 = scmp.eq.s32.totalorder %s12, 1
    %p72 = scmp.ne.s32.totalorder %s67, %s69
    %p73 = scmp.eq.s32.totalorder %s12, 0
    %p74 = por %p72, %p73
    %p75 = scmp.ne.s32.totalorder %s67, %s69
    %p76 = scmp.eq.s32.totalorder %s17, 1
    %p77 = por %p75, %p76
    %p78 = scmp.ne.s32.totalorder %s69, %s70
    %p79 = scmp.eq.s32.totalorder %s17, 0
    %p80 = por %p78, %p79
    %p81 = scmp.ne.s32.totalorder %s69, %s70
    %p82 = scmp.eq.s32.totalorder %s18, 1
    %p83 = por %p81, %p82
    %p85 = scmp.ne.s32.totalorder %s70, %s84
    %p86 = scmp.eq.s32.totalorder %s18, 0
    %p87 = por %p85, %p86
    %s89 = sadd.s32 %s88, 1
    %p92 = scmp.eq.s32.totalorder %s12, 1
    %p93 = scmp.ne.s32.totalorder %s88, %s90
    %p94 = scmp.eq.s32.totalorder %s12, 0
    %p95 = por %p93, %p94
    %p96 = scmp.ne.s32.totalorder %s88, %s90
    %p97 = scmp.eq.s32.totalorder %s17, 1
    %p98 = por %p96, %p97
    %p99 = scmp.ne.s32.totalorder %s90, %s91
    %p100 = scmp.eq.s32.totalorder %s17, 0
    %p101 = por %p99, %p100
    %p102 = scmp.ne.s32.totalorder %s90, %s91
    %p103 = scmp.eq.s32.totalorder %s18, 1
    %p104 = por %p102, %p103
    %p106 = scmp.ne.s32.totalorder %s91, %s105
    %p107 = scmp.eq.s32.totalorder %s18, 0
    %p108 = por %p106, %p107
    %s110 = sadd.s32 %s109, 1
    %p113 = scmp.eq.s32.totalorder %s12, 1
    %p114 = scmp.ne.s32.totalorder %s109, %s111
    %p115 = scmp.eq.s32.totalorder %s12, 0
    %p116 = por %p114, %p115
    %p117 = scmp.ne.s32.totalorder %s109, %s111
    %p118 = scmp.eq.s32.totalorder %s17, 1
    %p119 = por %p117, %p118
    %p120 = scmp.ne.s32.totalorder %s111, %s112
    %p121 = scmp.eq.s32.totalorder %s17, 0
    %p122 = por %p120, %p121
    %p123 = scmp.ne.s32.totalorder %s111, %s112
    %p124 = scmp.eq.s32.totalorder %s18, 1
    %p125 = por %p123, %p124
    %p127 = scmp.ne.s32.totalorder %s112, %s126
    %p128 = scmp.eq.s32.totalorder %s18, 0
    %p129 = por %p127, %p128
    %s131 = sadd.s32 %s130, 1
    %p134 = scmp.eq.s32.totalorder %s12, 1
    %p135 = scmp.ne.s32.totalorder %s130, %s132
    %p136 = scmp.eq.s32.totalorder %s12, 0
    %p137 = por %p135, %p136
    %p138 = scmp.ne.s32.totalorder %s130, %s132
    %p139 = scmp.eq.s32.totalorder %s17, 1
    %p140 = por %p138, %p139
    %p141 = scmp.ne.s32.totalorder %s132, %s133
    %p142 = scmp.eq.s32.totalorder %s17, 0
    %p143 = por %p141, %p142
    %p144 = scmp.ne.s32.totalorder %s132, %s133
    %p145 = scmp.eq.s32.totalorder %s18, 1
    %p146 = por %p144, %p145
    %p148 = scmp.ne.s32.totalorder %s133, %s147
    %p149 = scmp.eq.s32.totalorder %s18, 0
    %p150 = por %p148, %p149
    %s151 = ssub.s32 %s12, %s19
    %p152 = scmp.eq.s32.totalorder %s151, 0
    %s154 = sadd.s32 %s153, 1
    %s155 = scalar_select %p152, %s153, %s154
    %p158 = pneg %p152
    %p159 = scmp.eq.s32.totalorder %s12, 1
    %p160 = por %p158, %p159
    %p161 = scmp.ne.s32.totalorder %s153, %s156
    %p162 = scmp.eq.s32.totalorder %s12, 0
    %p163 = por %p161, %p162
    %p164 = scmp.ne.s32.totalorder %s153, %s156
    %p165 = scmp.eq.s32.totalorder %s17, 1
    %p166 = por %p164, %p165
    %p167 = scmp.ne.s32.totalorder %s156, %s157
    %p168 = scmp.eq.s32.totalorder %s17, 0
    %p169 = por %p167, %p168
    %p170 = scmp.ne.s32.totalorder %s156, %s157
    %p171 = scmp.eq.s32.totalorder %s18, 1
    %p172 = por %p170, %p171
    %p174 = scmp.ne.s32.totalorder %s157, %s173
    %p175 = scmp.eq.s32.totalorder %s18, 0
    %p176 = por %p174, %p175
    %p177 = scmp.le.s32.totalorder 1, %s12
    %p178 = scmp.lt.s32.totalorder %s12, 3
    %p179 = pnand %p177, %p178
    %p180 = pneg %p179
    // Predicated region
    $region9: #{densenet_forward.24} parent=5 // pred_check
      _
    $region10: #{densenet_forward.24} parent=5 // pred_check_branch
      %182 = sbr.rel (%p179) target = $region12
    $region11: #{densenet_forward.24} parent=5 // pred_region
      %s183 = ssub.s32 %s12, 1
      // Predicated region
      $region13: #{densenet_forward.24} parent=11 // pred_check
        %p184 = pneg %p59
      $region14: #{densenet_forward.24} parent=11 // pred_check_branch
        %186 = sbr.rel (%p184) target = $region16
      $region15: #{densenet_forward.24} parent=11 // pred_region
        _
      $region16: #{densenet_forward.24} parent=11 // pred_fallthru
        _
      // Predicated region
      $region17: #{densenet_forward.24} parent=11 // pred_check
        %p187 = pneg %p80
      $region18: #{densenet_forward.24} parent=11 // pred_check_branch
        %189 = sbr.rel (%p187) target = $region20
      $region19: #{densenet_forward.24} parent=11 // pred_region
        _
      $region20: #{densenet_forward.24} parent=11 // pred_fallthru
        _
      // Predicated region
      $region21: #{densenet_forward.24} parent=11 // pred_check
        %p190 = pneg %p101
      $region22: #{densenet_forward.24} parent=11 // pred_check_branch
        %192 = sbr.rel (%p190) target = $region24
      $region23: #{densenet_forward.24} parent=11 // pred_region
        _
      $region24: #{densenet_forward.24} parent=11 // pred_fallthru
        _
      // Predicated region
      $region25: #{densenet_forward.24} parent=11 // pred_check
        %p193 = pneg %p122
      $region26: #{densenet_forward.24} parent=11 // pred_check_branch
        %195 = sbr.rel (%p193) target = $region28
      $region27: #{densenet_forward.24} parent=11 // pred_region
        _
      $region28: #{densenet_forward.24} parent=11 // pred_fallthru
        _
      // Predicated region
      $region29: #{densenet_forward.24} parent=11 // pred_check
        %p196 = pneg %p143
      $region30: #{densenet_forward.24} parent=11 // pred_check_branch
        %198 = sbr.rel (%p196) target = $region32
      $region31: #{densenet_forward.24} parent=11 // pred_region
        _
      $region32: #{densenet_forward.24} parent=11 // pred_fallthru
        _
    $region12: #{densenet_forward.24} parent=5 // pred_fallthru
      _
    %p199 = scmp.lt.s32.totalorder %s12, 2
    // Predicated region
    $region33: #{densenet_forward.24} parent=5 // pred_check
      %p200 = pneg %p199
    $region34: #{densenet_forward.24} parent=5 // pred_check_branch
      %202 = sbr.rel (%p200) target = $region36
    $region35: #{densenet_forward.24} parent=5 // pred_region
      // Predicated region
      $region37: #{densenet_forward.24} parent=35 // pred_check
        %p203 = pneg %p32
      $region38: #{densenet_forward.24} parent=35 // pred_check_branch
        %205 = sbr.rel (%p203) target = $region40
      $region39: #{densenet_forward.24} parent=35 // pred_region
        %s206 = smul.u32 8, %s12
        %p207 = scmp.lt.s32.totalorder %s206, 15
        %s208 = scalar_select %p207, %s206, 15
        %s209 = smul.addr %s208, 4
        %s210 = scalar_lea.vmem %s0, %s209
        %s211 = smul.u32 8, %s12
      $region40: #{densenet_forward.24} parent=35 // pred_fallthru
        _
    $region36: #{densenet_forward.24} parent=5 // pred_fallthru
      _
    %p212 = scmp.le.s32.totalorder 1, %s12
    %p213 = scmp.lt.s32.totalorder %s12, 3
    %p214 = pnand %p212, %p213
    %p215 = pneg %p214
    // Predicated region
    $region41: #{densenet_forward.24} parent=5 // pred_check
      _
    $region42: #{densenet_forward.24} parent=5 // pred_check_branch
      %217 = sbr.rel (%p214) target = $region44
    $region43: #{densenet_forward.24} parent=5 // pred_region
      %s218 = ssub.s32 %s12, 1
      %s219 = smul.u32 8, %s17
      %p220 = scmp.lt.s32.totalorder %s219, 15
      %s221 = scalar_select %p220, %s219, 15
      %s222 = smul.addr %s221, 4
      %s223 = scalar_lea.vmem %s0, %s222
      %p224 = pneg %p38
      %p225 = pneg %p35
      %p226 = pneg %p59
      %p227 = pneg %p56
      %p228 = pneg %p80
      %p229 = pneg %p77
      %p230 = pneg %p101
      %p231 = pneg %p98
      %p232 = pneg %p122
      %p233 = pneg %p119
      %p234 = pneg %p143
      %p235 = pneg %p140
      %p236 = pneg %p169
      %p237 = pneg %p166
      %s238 = smul.u32 8, %s17
      %p239 = scmp.lt.s32.totalorder %s238, 15
      %s240 = scalar_select %p239, %s238, 15
      %s241 = smul.addr %s240, 4
      %s242 = scalar_lea.vmem %s6, %s241
      %s243 = smul.u32 8, %s17
      %p244 = scmp.lt.s32.totalorder %s243, 15
      %s245 = scalar_select %p244, %s243, 15
      %s246 = smul.addr %s245, 4
      %s247 = scalar_lea.vmem %s0, %s246
      %s248 = smul.u32 8, %s17
      %s249 = smul.u32 8, %s17
      %p250 = scmp.lt.s32.totalorder %s249, 15
      %s251 = scalar_select %p250, %s249, 15
      %s252 = smul.addr %s251, 4
      %s253 = scalar_lea.vmem %s6, %s252
      %s254 = smul.u32 8, %s17
      %v256 = vld [vmem:[%s247] sm:$0xf]
      %v257 = vld [vmem:[%s247 + $0x4] sm:$0xf]
      %v258 = vld [vmem:[%s247 + $0x8] sm:$0xf]
      %v259 = vld [vmem:[%s247 + $0xc] sm:$0xf]
      %v260 = vld [vmem:[%s247 + $0x10] sm:$0xf]
      %v261 = vld [vmem:[%s247 + $0x14] sm:$0xf]
      %v262 = vld [vmem:[%s247 + $0x18] sm:$0xf]
      %v263 = vld [vmem:[%s247 + $0x1c] sm:$0xf]
      %v264 = vunpack.c.l.bf16 %v256
      %v265 = vunpack.c.l.bf16 %v257
      %v266 = vunpack.c.l.bf16 %v258
      %v267 = vunpack.c.l.bf16 %v259
      %v268 = vunpack.c.l.bf16 %v260
      %v269 = vunpack.c.l.bf16 %v261
      %v270 = vunpack.c.l.bf16 %v262
      %v271 = vunpack.c.l.bf16 %v263
      %v272 = vld [vmem:[%s2] sm:$0x1]
      %v274 = vlaneseq
      %v275 = vshrl.u32 %v274, 7
      %v276 = vsub.s32 0, %v275
      %v277 = vrot.slane %v272, %v276
      %v279 = vmul.f32 %v264, %v277
      %v280 = vmul.f32 %v265, %v277
      %v281 = vmul.f32 %v266, %v277
      %v282 = vmul.f32 %v267, %v277
      %v283 = vmul.f32 %v268, %v277
      %v284 = vmul.f32 %v269, %v277
      %v285 = vmul.f32 %v270, %v277
      %v286 = vmul.f32 %v271, %v277
      %v287 = vld [vmem:[%s3] sm:$0x1]
      %v289 = vlaneseq
      %v290 = vshrl.u32 %v289, 7
      %v291 = vsub.s32 0, %v290
      %v292 = vrot.slane %v287, %v291
      %v294 = vadd.f32 %v279, %v292
      %v295 = vadd.f32 %v280, %v292
      %v296 = vadd.f32 %v281, %v292
      %v297 = vadd.f32 %v282, %v292
      %v298 = vadd.f32 %v283, %v292
      %v299 = vadd.f32 %v284, %v292
      %v300 = vadd.f32 %v285, %v292
      %v301 = vadd.f32 %v286, %v292
      %v302 = vmax.f32 %v294, 0.0
      %v303 = vmax.f32 %v295, 0.0
      %v304 = vmax.f32 %v296, 0.0
      %v305 = vmax.f32 %v297, 0.0
      %v306 = vmax.f32 %v298, 0.0
      %v307 = vmax.f32 %v299, 0.0
      %v308 = vmax.f32 %v300, 0.0
      %v309 = vmax.f32 %v301, 0.0
      %v310 = vpack.c.bf16 %v303, %v302
      %v311 = vpack.c.bf16 %v305, %v304
      %v312 = vpack.c.bf16 %v307, %v306
      %v313 = vpack.c.bf16 %v309, %v308
      %v314 = vld [vmem:[%s1] sm:$0xf]
      %v315 = vld [vmem:[%s1 + $0x4] sm:$0xf]
      %v316 = vld [vmem:[%s1 + $0x8] sm:$0xf]
      %v320 = vunpack.c.l.b16 %v314
      %v321 = vunpack.c.l.b16 %v315
      %v322 = vunpack.c.l.b16 %v316
      %v323 = vpack.c.b16 %v321, %v320
      %v324 = vpack.c.b16 %v322, %v322
      %vm326 = vcmask 195584
      %v328 = vsel %vm326, %v310, 0
      %v331 = vsel %vm326, %v311, 0
      %v334 = vsel %vm326, %v312, 0
      %v337 = vsel %vm326, %v313, 0
      %vm339 = vcmask 1043456
      %v341 = vsel %vm339, %v324, 0
      %343 = vmatprep.subr.bf16.mxu0 0
      %344 = vmatpush1.bf16.msra.mxu0 %v323
      %345 = vmatprep.subr.bf16.mxu0 0
      %346 = vmatpush1.bf16.msra.mxu0 %v341
      %347 = vmatprep.subr.bf16.mxu0 0
      %348 = vmatpush1.bf16.msra.mxu0 0
      %349 = vmatprep.subr.bf16.mxu0 0
      %350 = vmatpush1.bf16.msra.mxu0 0
      %351 = vmatprep.subr.bf16.mxu0 0
      %352 = vmatpush1.bf16.msra.mxu0 0
      %353 = vmatprep.subr.bf16.mxu0 0
      %354 = vmatpush1.bf16.msra.mxu0 0
      %355 = vmatprep.subr.bf16.mxu0 0
      %356 = vmatpush1.bf16.msra.mxu0 0
      %357 = vmatprep.subr.bf16.mxu0 0
      %358 = vmatpush1.bf16.msra.mxu0 0
      %359 = vmatprep.subr.bf16.mxu0 0
      %360 = vmatpush1.bf16.msra.mxu0 0
      %361 = vmatprep.subr.bf16.mxu0 0
      %362 = vmatpush1.bf16.msra.mxu0 0
      %363 = vmatprep.subr.bf16.mxu0 0
      %364 = vmatpush1.bf16.msra.mxu0 0
      %365 = vmatprep.subr.bf16.mxu0 0
      %366 = vmatpush1.bf16.msra.mxu0 0
      %367 = vmatprep.subr.bf16.mxu0 0
      %368 = vmatpush1.bf16.msra.mxu0 0
      %369 = vmatprep.subr.bf16.mxu0 0
      %370 = vmatpush1.bf16.msra.mxu0 0
      %371 = vmatprep.subr.bf16.mxu0 0
      %372 = vmatpush1.bf16.msra.mxu0 0
      %373 = vmatprep.subr.bf16.mxu0 0
      %374 = vmatpush1.bf16.msra.mxu0 0
      %375 = vmatprep.mubr.bf16.mxu0 0
      %376 = vmatmul.mubr.bf16.gmra.mrb[0].mxu0 %v328
      %v377 = vpop.f32.mrb[0].mxu0
      %v378 = vadd.f32 0.0, %v377
      %v379 = vpop.f32.mrb[0].mxu0
      %v380 = vpop.f32.mrb[0].mxu0
      %v381 = vadd.f32 0.0, %v380
      %v382 = vpop.f32.mrb[0].mxu0
      %383 = vmatprep.mubr.bf16.mxu0 0
      %384 = vmatmul.mubr.bf16.gmra.mrb[0].mxu0 %v331
      %v385 = vpop.f32.mrb[0].mxu0
      %v386 = vadd.f32 0.0, %v385
      %v387 = vpop.f32.mrb[0].mxu0
      %v388 = vpop.f32.mrb[0].mxu0
      %v389 = vadd.f32 0.0, %v388
      %v390 = vpop.f32.mrb[0].mxu0
      %391 = vmatprep.mubr.bf16.mxu0 0
      %392 = vmatmul.mubr.bf16.gmra.mrb[0].mxu0 %v334
      %v393 = vpop.f32.mrb[0].mxu0
      %v394 = vadd.f32 0.0, %v393
      %v395 = vpop.f32.mrb[0].mxu0
      %v396 = vpop.f32.mrb[0].mxu0
      %v397 = vadd.f32 0.0, %v396
      %v398 = vpop.f32.mrb[0].mxu0
      %399 = vmatprep.mubr.bf16.mxu0 0
      %400 = vmatmul.mubr.bf16.gmra.mrb[0].mxu0 %v337
      %v401 = vpop.f32.mrb[0].mxu0
      %v402 = vadd.f32 0.0, %v401
      %v403 = vpop.f32.mrb[0].mxu0
      %v404 = vpop.f32.mrb[0].mxu0
      %v405 = vadd.f32 0.0, %v404
      %v406 = vpop.f32.mrb[0].mxu0
      %407 = vdwg.mxu0
      %v408 = vld [vmem:[%s4] sm:$0x1]
      %v410 = vlaneseq
      %v411 = vshrl.u32 %v410, 7
      %v412 = vsub.s32 0, %v411
      %v413 = vrot.slane %v408, %v412
      %v415 = vmul.f32 %v378, %v413
      %v416 = vmul.f32 %v381, %v413
      %v417 = vmul.f32 %v386, %v413
      %v418 = vmul.f32 %v389, %v413
      %v419 = vmul.f32 %v394, %v413
      %v420 = vmul.f32 %v397, %v413
      %v421 = vmul.f32 %v402, %v413
      %v422 = vmul.f32 %v405, %v413
      %v423 = vld [vmem:[%s5] sm:$0x1]
      %v425 = vlaneseq
      %v426 = vshrl.u32 %v425, 7
      %v427 = vsub.s32 0, %v426
      %v428 = vrot.slane %v423, %v427
      %v430 = vadd.f32 %v415, %v428
      %v431 = vadd.f32 %v416, %v428
      %v432 = vadd.f32 %v417, %v428
      %v433 = vadd.f32 %v418, %v428
      %v434 = vadd.f32 %v419, %v428
      %v435 = vadd.f32 %v420, %v428
      %v436 = vadd.f32 %v421, %v428
      %v437 = vadd.f32 %v422, %v428
      %v438 = vmax.f32 %v430, 0.0
      %v439 = vmax.f32 %v431, 0.0
      %v440 = vmax.f32 %v432, 0.0
      %v441 = vmax.f32 %v433, 0.0
      %v442 = vmax.f32 %v434, 0.0
      %v443 = vmax.f32 %v435, 0.0
      %v444 = vmax.f32 %v436, 0.0
      %v445 = vmax.f32 %v437, 0.0
      %v446 = vpack.c.bf16 %v439, %v438
      %v447 = vpack.c.bf16 %v441, %v440
      %v448 = vpack.c.bf16 %v443, %v442
      %v449 = vpack.c.bf16 %v445, %v444
      %v454 = vunpack.c.l.b16 %v446
      %v455 = vunpack.c.h.b16 %v446
      %v456 = vunpack.c.l.b16 %v447
      %v457 = vunpack.c.h.b16 %v447
      %v458 = vunpack.c.l.b16 %v448
      %v459 = vunpack.c.h.b16 %v448
      %v460 = vunpack.c.l.b16 %v449
      %v461 = vunpack.c.h.b16 %v449
      %v462 = vpack.c.b16 %v454, %v454
      %v463 = vpack.c.b16 %v455, %v455
      %v464 = vpack.c.b16 %v456, %v456
      %v465 = vpack.c.b16 %v457, %v457
      %v466 = vpack.c.b16 %v458, %v458
      %v467 = vpack.c.b16 %v459, %v459
      %v468 = vpack.c.b16 %v460, %v460
      %v469 = vpack.c.b16 %v461, %v461
      %vm478 = vcmask 257024
      %479 = vst.msk [vmem:[%s253] sm:$0xf] %vm478, %v462
      %480 = vst.msk [vmem:[%s253 + $0x4] sm:$0xf] %vm478, %v463
      %481 = vst.msk [vmem:[%s253 + $0x8] sm:$0xf] %vm478, %v464
      %482 = vst.msk [vmem:[%s253 + $0xc] sm:$0xf] %vm478, %v465
      %483 = vst.msk [vmem:[%s253 + $0x10] sm:$0xf] %vm478, %v466
      %484 = vst.msk [vmem:[%s253 + $0x14] sm:$0xf] %vm478, %v467
      %485 = vst.msk [vmem:[%s253 + $0x18] sm:$0xf] %vm478, %v468
      %486 = vst.msk [vmem:[%s253 + $0x1c] sm:$0xf] %vm478, %v469
      %s487 = smul.u32 8, %s17
      %p488 = scmp.lt.s32.totalorder %s487, 15
      %s489 = scalar_select %p488, %s487, 15
      %s490 = smul.addr %s489, 4
      %s491 = scalar_lea.vmem %s6, %s490
      // Predicated region
      $region45: #{densenet_forward.24} parent=43 // pred_check
        %p492 = pneg %p166
      $region46: #{densenet_forward.24} parent=43 // pred_check_branch
        %494 = sbr.rel (%p492) target = $region48
      $region47: #{densenet_forward.24} parent=43 // pred_region
        %s495 = smul.u32 8, %s17
      $region48: #{densenet_forward.24} parent=43 // pred_fallthru
        _
    $region44: #{densenet_forward.24} parent=5 // pred_fallthru
      _
    %p496 = scmp.le.s32.totalorder 2, %s12
    // Predicated region
    $region49: #{densenet_forward.24} parent=5 // pred_check
      %p497 = pneg %p496
    $region50: #{densenet_forward.24} parent=5 // pred_check_branch
      %499 = sbr.rel (%p497) target = $region52
    $region51: #{densenet_forward.24} parent=5 // pred_region
      %s500 = ssub.s32 %s12, 2
      // Predicated region
      $region53: #{densenet_forward.24} parent=51 // pred_check
        %p501 = pneg %p172
      $region54: #{densenet_forward.24} parent=51 // pred_check_branch
        %503 = sbr.rel (%p501) target = $region56
      $region55: #{densenet_forward.24} parent=51 // pred_region
        %s504 = smul.u32 8, %s18
        %p505 = scmp.lt.s32.totalorder %s504, 15
        %s506 = scalar_select %p505, %s504, 15
        %s507 = smul.addr %s506, 4
        %s508 = scalar_lea.vmem %s6, %s507
      $region56: #{densenet_forward.24} parent=51 // pred_fallthru
        _
    $region52: #{densenet_forward.24} parent=5 // pred_fallthru
      _
  $region6: #{densenet_forward.24} parent=0 // loop_footer
    %s16 = sadd.s32 1, %s12
  $region7: #{densenet_forward.24} parent=0 // loop_footer_branch
    %11 = sbr.rel target = $region3
  $region8: #{densenet_forward.24} parent=0 // loop_exit
    _

// kernel: densenet_forward.26
$region0: #{densenet_forward.26}
  #allocation0 [shape = 'u32[]', space=smem, size = 0x4, offset = 0x4, fixed_abs, tag = 'smem constant byte address 0x4 - core index']
  #allocation1 [shape = 'u32[144,128]{1,0:T(1,128)}', space=vmem, size = 0x12000, scoped, tag = 'internal scratch']
  %s0 = inlined_call_operand.vmem [shape: bf16[128,32], index: 0, kind: input, shape index: {}]
  %s1 = inlined_call_operand.vmem [shape: bf16[32,16], index: 1, kind: input, shape index: {}]
  %s2 = inlined_call_operand.vmem [shape: f32[1,32], index: 2, kind: input, shape index: {}]
  %s3 = inlined_call_operand.vmem [shape: f32[1,32], index: 3, kind: input, shape index: {}]
  %s4 = inlined_call_operand.vmem [shape: bf16[128,16], index: 4, kind: output, shape index: {}]
  %s5 = sld [smem:[#allocation0]]
  $region49: #{densenet_forward.26} parent=0
    _
  %s7 = ssub.s32 1, %s5
  %s8 = scalar_select 0, %s7, %s5
  loop: start=0, step=1, limit=4
  $region2: #{densenet_forward.26} parent=0 // loop_pre_header
    _
  $region3: #{densenet_forward.26} parent=0 // loop_header
    %s10 = sphi 0, %s14
    %p11 = scmp.ge.s32.totalorder %s10, 4
    %s20 = sphi 0, %s22
    %s23 = sphi 0, %s20
    %s24 = sphi 0, %s23
    %s40 = sphi 0, %s24
    %s44 = sphi 0, %s44
    %s46 = sphi 0, %s44
    %s47 = sphi 0, %s46
    %s61 = sphi 0, %s47
    %s65 = sphi 0, %s65
    %s67 = sphi 0, %s65
    %s68 = sphi 0, %s67
    %s82 = sphi 0, %s68
    %s86 = sphi 0, %s86
    %s88 = sphi 0, %s86
    %s89 = sphi 0, %s88
    %s103 = sphi 0, %s89
    %s109 = sphi 0, %s111
    %s112 = sphi 0, %s109
    %s113 = sphi 0, %s112
    %s129 = sphi 0, %s113
  $region4: #{densenet_forward.26} parent=0 // loop_header_branch
    %13 = sbr.rel (%p11) target = $region8
  $region5: #{densenet_forward.26} parent=0 // loop_body
    %s15 = ssub.s32 %s10, 1
    %s16 = ssub.s32 %s10, 2
    %s17 = sadd.s32 %s10, 1
    %s18 = ssub.s32 %s10, %s17
    %p19 = scmp.eq.s32.totalorder %s18, 0
    %s21 = sadd.s32 %s20, 1
    %s22 = scalar_select %p19, %s20, %s21
    %p25 = pneg %p19
    %p26 = scmp.eq.s32.totalorder %s10, 1
    %p27 = por %p25, %p26
    %p28 = scmp.ne.s32.totalorder %s20, %s23
    %p29 = scmp.eq.s32.totalorder %s10, 0
    %p30 = por %p28, %p29
    %p31 = scmp.ne.s32.totalorder %s20, %s23
    %p32 = scmp.eq.s32.totalorder %s15, 1
    %p33 = por %p31, %p32
    %p34 = scmp.ne.s32.totalorder %s23, %s24
    %p35 = scmp.eq.s32.totalorder %s15, 0
    %p36 = por %p34, %p35
    %p37 = scmp.ne.s32.totalorder %s23, %s24
    %p38 = scmp.eq.s32.totalorder %s16, 1
    %p39 = por %p37, %p38
    %p41 = scmp.ne.s32.totalorder %s24, %s40
    %p42 = scmp.eq.s32.totalorder %s16, 0
    %p43 = por %p41, %p42
    %s45 = sadd.s32 %s44, 1
    %p48 = scmp.eq.s32.totalorder %s10, 1
    %p49 = scmp.ne.s32.totalorder %s44, %s46
    %p50 = scmp.eq.s32.totalorder %s10, 0
    %p51 = por %p49, %p50
    %p52 = scmp.ne.s32.totalorder %s44, %s46
    %p53 = scmp.eq.s32.totalorder %s15, 1
    %p54 = por %p52, %p53
    %p55 = scmp.ne.s32.totalorder %s46, %s47
    %p56 = scmp.eq.s32.totalorder %s15, 0
    %p57 = por %p55, %p56
    %p58 = scmp.ne.s32.totalorder %s46, %s47
    %p59 = scmp.eq.s32.totalorder %s16, 1
    %p60 = por %p58, %p59
    %p62 = scmp.ne.s32.totalorder %s47, %s61
    %p63 = scmp.eq.s32.totalorder %s16, 0
    %p64 = por %p62, %p63
    %s66 = sadd.s32 %s65, 1
    %p69 = scmp.eq.s32.totalorder %s10, 1
    %p70 = scmp.ne.s32.totalorder %s65, %s67
    %p71 = scmp.eq.s32.totalorder %s10, 0
    %p72 = por %p70, %p71
    %p73 = scmp.ne.s32.totalorder %s65, %s67
    %p74 = scmp.eq.s32.totalorder %s15, 1
    %p75 = por %p73, %p74
    %p76 = scmp.ne.s32.totalorder %s67, %s68
    %p77 = scmp.eq.s32.totalorder %s15, 0
    %p78 = por %p76, %p77
    %p79 = scmp.ne.s32.totalorder %s67, %s68
    %p80 = scmp.eq.s32.totalorder %s16, 1
    %p81 = por %p79, %p80
    %p83 = scmp.ne.s32.totalorder %s68, %s82
    %p84 = scmp.eq.s32.totalorder %s16, 0
    %p85 = por %p83, %p84
    %s87 = sadd.s32 %s86, 1
    %p90 = scmp.eq.s32.totalorder %s10, 1
    %p91 = scmp.ne.s32.totalorder %s86, %s88
    %p92 = scmp.eq.s32.totalorder %s10, 0
    %p93 = por %p91, %p92
    %p94 = scmp.ne.s32.totalorder %s86, %s88
    %p95 = scmp.eq.s32.totalorder %s15, 1
    %p96 = por %p94, %p95
    %p97 = scmp.ne.s32.totalorder %s88, %s89
    %p98 = scmp.eq.s32.totalorder %s15, 0
    %p99 = por %p97, %p98
    %p100 = scmp.ne.s32.totalorder %s88, %s89
    %p101 = scmp.eq.s32.totalorder %s16, 1
    %p102 = por %p100, %p101
    %p104 = scmp.ne.s32.totalorder %s89, %s103
    %p105 = scmp.eq.s32.totalorder %s16, 0
    %p106 = por %p104, %p105
    %s107 = ssub.s32 %s10, %s17
    %p108 = scmp.eq.s32.totalorder %s107, 0
    %s110 = sadd.s32 %s109, 1
    %s111 = scalar_select %p108, %s109, %s110
    %p114 = pneg %p108
    %p115 = scmp.eq.s32.totalorder %s10, 1
    %p116 = por %p114, %p115
    %p117 = scmp.ne.s32.totalorder %s109, %s112
    %p118 = scmp.eq.s32.totalorder %s10, 0
    %p119 = por %p117, %p118
    %p120 = scmp.ne.s32.totalorder %s109, %s112
    %p121 = scmp.eq.s32.totalorder %s15, 1
    %p122 = por %p120, %p121
    %p123 = scmp.ne.s32.totalorder %s112, %s113
    %p124 = scmp.eq.s32.totalorder %s15, 0
    %p125 = por %p123, %p124
    %p126 = scmp.ne.s32.totalorder %s112, %s113
    %p127 = scmp.eq.s32.totalorder %s16, 1
    %p128 = por %p126, %p127
    %p130 = scmp.ne.s32.totalorder %s113, %s129
    %p131 = scmp.eq.s32.totalorder %s16, 0
    %p132 = por %p130, %p131
    %p133 = scmp.le.s32.totalorder 1, %s10
    %p134 = scmp.lt.s32.totalorder %s10, 3
    %p135 = pnand %p133, %p134
    %p136 = pneg %p135
    // Predicated region
    $region9: #{densenet_forward.26} parent=5 // pred_check
      _
    $region10: #{densenet_forward.26} parent=5 // pred_check_branch
      %138 = sbr.rel (%p135) target = $region12
    $region11: #{densenet_forward.26} parent=5 // pred_region
      %s139 = ssub.s32 %s10, 1
      // Predicated region
      $region13: #{densenet_forward.26} parent=11 // pred_check
        %p140 = pneg %p57
      $region14: #{densenet_forward.26} parent=11 // pred_check_branch
        %142 = sbr.rel (%p140) target = $region16
      $region15: #{densenet_forward.26} parent=11 // pred_region
        _
      $region16: #{densenet_forward.26} parent=11 // pred_fallthru
        _
      // Predicated region
      $region17: #{densenet_forward.26} parent=11 // pred_check
        %p143 = pneg %p78
      $region18: #{densenet_forward.26} parent=11 // pred_check_branch
        %145 = sbr.rel (%p143) target = $region20
      $region19: #{densenet_forward.26} parent=11 // pred_region
        _
      $region20: #{densenet_forward.26} parent=11 // pred_fallthru
        _
      // Predicated region
      $region21: #{densenet_forward.26} parent=11 // pred_check
        %p146 = pneg %p99
      $region22: #{densenet_forward.26} parent=11 // pred_check_branch
        %148 = sbr.rel (%p146) target = $region24
      $region23: #{densenet_forward.26} parent=11 // pred_region
        _
      $region24: #{densenet_forward.26} parent=11 // pred_fallthru
        _
    $region12: #{densenet_forward.26} parent=5 // pred_fallthru
      _
    %p149 = scmp.lt.s32.totalorder %s10, 2
    // Predicated region
    $region25: #{densenet_forward.26} parent=5 // pred_check
      %p150 = pneg %p149
    $region26: #{densenet_forward.26} parent=5 // pred_check_branch
      %152 = sbr.rel (%p150) target = $region28
    $region27: #{densenet_forward.26} parent=5 // pred_region
      // Predicated region
      $region29: #{densenet_forward.26} parent=27 // pred_check
        %p153 = pneg %p30
      $region30: #{densenet_forward.26} parent=27 // pred_check_branch
        %155 = sbr.rel (%p153) target = $region32
      $region31: #{densenet_forward.26} parent=27 // pred_region
        %s156 = smul.u32 8, %s10
        %p157 = scmp.lt.s32.totalorder %s156, 15
        %s158 = scalar_select %p157, %s156, 15
        %s159 = smul.addr %s158, 4
        %s160 = scalar_lea.vmem %s0, %s159
        %s161 = smul.u32 8, %s10
      $region32: #{densenet_forward.26} parent=27 // pred_fallthru
        _
    $region28: #{densenet_forward.26} parent=5 // pred_fallthru
      _
    %p162 = scmp.le.s32.totalorder 1, %s10
    %p163 = scmp.lt.s32.totalorder %s10, 3
    %p164 = pnand %p162, %p163
    %p165 = pneg %p164
    // Predicated region
    $region33: #{densenet_forward.26} parent=5 // pred_check
      _
    $region34: #{densenet_forward.26} parent=5 // pred_check_branch
      %167 = sbr.rel (%p164) target = $region36
    $region35: #{densenet_forward.26} parent=5 // pred_region
      %s168 = ssub.s32 %s10, 1
      %s169 = smul.u32 8, %s15
      %p170 = scmp.lt.s32.totalorder %s169, 15
      %s171 = scalar_select %p170, %s169, 15
      %s172 = smul.addr %s171, 4
      %s173 = scalar_lea.vmem %s0, %s172
      %p174 = pneg %p36
      %p175 = pneg %p33
      %p176 = pneg %p57
      %p177 = pneg %p54
      %p178 = pneg %p78
      %p179 = pneg %p75
      %p180 = pneg %p99
      %p181 = pneg %p96
      %p182 = pneg %p125
      %p183 = pneg %p122
      %s184 = smul.u32 8, %s15
      %p185 = scmp.lt.s32.totalorder %s184, 15
      %s186 = scalar_select %p185, %s184, 15
      %s187 = smul.addr %s186, 4
      %s188 = scalar_lea.vmem %s4, %s187
      %s189 = smul.u32 8, %s15
      %p190 = scmp.lt.s32.totalorder %s189, 15
      %s191 = scalar_select %p190, %s189, 15
      %s192 = smul.addr %s191, 4
      %s193 = scalar_lea.vmem %s0, %s192
      %s194 = smul.u32 8, %s15
      %s195 = smul.u32 8, %s15
      %p196 = scmp.lt.s32.totalorder %s195, 15
      %s197 = scalar_select %p196, %s195, 15
      %s198 = smul.addr %s197, 4
      %s199 = scalar_lea.vmem %s4, %s198
      %s200 = smul.u32 8, %s15
      %v202 = vld [vmem:[%s193] sm:$0xf]
      %v203 = vld [vmem:[%s193 + $0x4] sm:$0xf]
      %v204 = vld [vmem:[%s193 + $0x8] sm:$0xf]
      %v205 = vld [vmem:[%s193 + $0xc] sm:$0xf]
      %v206 = vld [vmem:[%s193 + $0x10] sm:$0xf]
      %v207 = vld [vmem:[%s193 + $0x14] sm:$0xf]
      %v208 = vld [vmem:[%s193 + $0x18] sm:$0xf]
      %v209 = vld [vmem:[%s193 + $0x1c] sm:$0xf]
      %v210 = vunpack.c.l.bf16 %v202
      %v211 = vunpack.c.l.bf16 %v203
      %v212 = vunpack.c.l.bf16 %v204
      %v213 = vunpack.c.l.bf16 %v205
      %v214 = vunpack.c.l.bf16 %v206
      %v215 = vunpack.c.l.bf16 %v207
      %v216 = vunpack.c.l.bf16 %v208
      %v217 = vunpack.c.l.bf16 %v209
      %v218 = vld [vmem:[%s2] sm:$0x1]
      %v220 = vlaneseq
      %v221 = vshrl.u32 %v220, 7
      %v222 = vsub.s32 0, %v221
      %v223 = vrot.slane %v218, %v222
      %v225 = vmul.f32 %v210, %v223
      %v226 = vmul.f32 %v211, %v223
      %v227 = vmul.f32 %v212, %v223
      %v228 = vmul.f32 %v213, %v223
      %v229 = vmul.f32 %v214, %v223
      %v230 = vmul.f32 %v215, %v223
      %v231 = vmul.f32 %v216, %v223
      %v232 = vmul.f32 %v217, %v223
      %v233 = vld [vmem:[%s3] sm:$0x1]
      %v235 = vlaneseq
      %v236 = vshrl.u32 %v235, 7
      %v237 = vsub.s32 0, %v236
      %v238 = vrot.slane %v233, %v237
      %v240 = vadd.f32 %v225, %v238
      %v241 = vadd.f32 %v226, %v238
      %v242 = vadd.f32 %v227, %v238
      %v243 = vadd.f32 %v228, %v238
      %v244 = vadd.f32 %v229, %v238
      %v245 = vadd.f32 %v230, %v238
      %v246 = vadd.f32 %v231, %v238
      %v247 = vadd.f32 %v232, %v238
      %v248 = vmax.f32 %v240, 0.0
      %v249 = vmax.f32 %v241, 0.0
      %v250 = vmax.f32 %v242, 0.0
      %v251 = vmax.f32 %v243, 0.0
      %v252 = vmax.f32 %v244, 0.0
      %v253 = vmax.f32 %v245, 0.0
      %v254 = vmax.f32 %v246, 0.0
      %v255 = vmax.f32 %v247, 0.0
      %v256 = vpack.c.bf16 %v249, %v248
      %v257 = vpack.c.bf16 %v251, %v250
      %v258 = vpack.c.bf16 %v253, %v252
      %v259 = vpack.c.bf16 %v255, %v254
      %v260 = vld [vmem:[%s1] sm:$0xf]
      %v261 = vld [vmem:[%s1 + $0x4] sm:$0xf]
      %v262 = vld [vmem:[%s1 + $0x8] sm:$0xf]
      %v263 = vld [vmem:[%s1 + $0xc] sm:$0xf]
      %v268 = vunpack.c.l.b16 %v260
      %v269 = vunpack.c.l.b16 %v261
      %v270 = vunpack.c.l.b16 %v262
      %v271 = vunpack.c.l.b16 %v263
      %v272 = vpack.c.b16 %v269, %v268
      %v273 = vpack.c.b16 %v271, %v270
      %vm276 = vcmask 261120
      %v278 = vsel %vm276, %v256, 0
      %v281 = vsel %vm276, %v257, 0
      %v284 = vsel %vm276, %v258, 0
      %v287 = vsel %vm276, %v259, 0
      %289 = vmatprep.subr.bf16.mxu0 0
      %290 = vmatpush1.bf16.msra.mxu0 %v272
      %291 = vmatprep.subr.bf16.mxu0 0
      %292 = vmatpush1.bf16.msra.mxu0 %v273
      %293 = vmatprep.subr.bf16.mxu0 0
      %294 = vmatpush1.bf16.msra.mxu0 0
      %295 = vmatprep.subr.bf16.mxu0 0
      %296 = vmatpush1.bf16.msra.mxu0 0
      %297 = vmatprep.subr.bf16.mxu0 0
      %298 = vmatpush1.bf16.msra.mxu0 0
      %299 = vmatprep.subr.bf16.mxu0 0
      %300 = vmatpush1.bf16.msra.mxu0 0
      %301 = vmatprep.subr.bf16.mxu0 0
      %302 = vmatpush1.bf16.msra.mxu0 0
      %303 = vmatprep.subr.bf16.mxu0 0
      %304 = vmatpush1.bf16.msra.mxu0 0
      %305 = vmatprep.subr.bf16.mxu0 0
      %306 = vmatpush1.bf16.msra.mxu0 0
      %307 = vmatprep.subr.bf16.mxu0 0
      %308 = vmatpush1.bf16.msra.mxu0 0
      %309 = vmatprep.subr.bf16.mxu0 0
      %310 = vmatpush1.bf16.msra.mxu0 0
      %311 = vmatprep.subr.bf16.mxu0 0
      %312 = vmatpush1.bf16.msra.mxu0 0
      %313 = vmatprep.subr.bf16.mxu0 0
      %314 = vmatpush1.bf16.msra.mxu0 0
      %315 = vmatprep.subr.bf16.mxu0 0
      %316 = vmatpush1.bf16.msra.mxu0 0
      %317 = vmatprep.subr.bf16.mxu0 0
      %318 = vmatpush1.bf16.msra.mxu0 0
      %319 = vmatprep.subr.bf16.mxu0 0
      %320 = vmatpush1.bf16.msra.mxu0 0
      %321 = vmatprep.mubr.bf16.mxu0 0
      %322 = vmatmul.mubr.bf16.gmra.mrb[0].mxu0 %v278
      %v323 = vpop.f32.mrb[0].mxu0
      %v324 = vadd.f32 0.0, %v323
      %v325 = vpop.f32.mrb[0].mxu0
      %v326 = vpop.f32.mrb[0].mxu0
      %v327 = vadd.f32 0.0, %v326
      %v328 = vpop.f32.mrb[0].mxu0
      %329 = vmatprep.mubr.bf16.mxu0 0
      %330 = vmatmul.mubr.bf16.gmra.mrb[0].mxu0 %v281
      %v331 = vpop.f32.mrb[0].mxu0
      %v332 = vadd.f32 0.0, %v331
      %v333 = vpop.f32.mrb[0].mxu0
      %v334 = vpop.f32.mrb[0].mxu0
      %v335 = vadd.f32 0.0, %v334
      %v336 = vpop.f32.mrb[0].mxu0
      %337 = vmatprep.mubr.bf16.mxu0 0
      %338 = vmatmul.mubr.bf16.gmra.mrb[0].mxu0 %v284
      %v339 = vpop.f32.mrb[0].mxu0
      %v340 = vadd.f32 0.0, %v339
      %v341 = vpop.f32.mrb[0].mxu0
      %v342 = vpop.f32.mrb[0].mxu0
      %v343 = vadd.f32 0.0, %v342
      %v344 = vpop.f32.mrb[0].mxu0
      %345 = vmatprep.mubr.bf16.mxu0 0
      %346 = vmatmul.mubr.bf16.gmra.mrb[0].mxu0 %v287
      %v347 = vpop.f32.mrb[0].mxu0
      %v348 = vadd.f32 0.0, %v347
      %v349 = vpop.f32.mrb[0].mxu0
      %v350 = vpop.f32.mrb[0].mxu0
      %v351 = vadd.f32 0.0, %v350
      %v352 = vpop.f32.mrb[0].mxu0
      %353 = vdwg.mxu0
      %v354 = vpack.c.bf16 %v327, %v324
      %v355 = vpack.c.bf16 %v335, %v332
      %v356 = vpack.c.bf16 %v343, %v340
      %v357 = vpack.c.bf16 %v351, %v348
      %v362 = vunpack.c.l.b16 %v354
      %v363 = vunpack.c.h.b16 %v354
      %v364 = vunpack.c.l.b16 %v355
      %v365 = vunpack.c.h.b16 %v355
      %v366 = vunpack.c.l.b16 %v356
      %v367 = vunpack.c.h.b16 %v356
      %v368 = vunpack.c.l.b16 %v357
      %v369 = vunpack.c.h.b16 %v357
      %v370 = vpack.c.b16 %v362, %v362
      %v371 = vpack.c.b16 %v363, %v363
      %v372 = vpack.c.b16 %v364, %v364
      %v373 = vpack.c.b16 %v365, %v365
      %v374 = vpack.c.b16 %v366, %v366
      %v375 = vpack.c.b16 %v367, %v367
      %v376 = vpack.c.b16 %v368, %v368
      %v377 = vpack.c.b16 %v369, %v369
      %vm386 = vcmask 125952
      %387 = vst.msk [vmem:[%s199] sm:$0xf] %vm386, %v370
      %388 = vst.msk [vmem:[%s199 + $0x4] sm:$0xf] %vm386, %v371
      %389 = vst.msk [vmem:[%s199 + $0x8] sm:$0xf] %vm386, %v372
      %390 = vst.msk [vmem:[%s199 + $0xc] sm:$0xf] %vm386, %v373
      %391 = vst.msk [vmem:[%s199 + $0x10] sm:$0xf] %vm386, %v374
      %392 = vst.msk [vmem:[%s199 + $0x14] sm:$0xf] %vm386, %v375
      %393 = vst.msk [vmem:[%s199 + $0x18] sm:$0xf] %vm386, %v376
      %394 = vst.msk [vmem:[%s199 + $0x1c] sm:$0xf] %vm386, %v377
      %s395 = smul.u32 8, %s15
      %p396 = scmp.lt.s32.totalorder %s395, 15
      %s397 = scalar_select %p396, %s395, 15
      %s398 = smul.addr %s397, 4
      %s399 = scalar_lea.vmem %s4, %s398
      // Predicated region
      $region37: #{densenet_forward.26} parent=35 // pred_check
        %p400 = pneg %p122
      $region38: #{densenet_forward.26} parent=35 // pred_check_branch
        %402 = sbr.rel (%p400) target = $region40
      $region39: #{densenet_forward.26} parent=35 // pred_region
        %s403 = smul.u32 8, %s15
      $region40: #{densenet_forward.26} parent=35 // pred_fallthru
        _
    $region36: #{densenet_forward.26} parent=5 // pred_fallthru
      _
    %p404 = scmp.le.s32.totalorder 2, %s10
    // Predicated region
    $region41: #{densenet_forward.26} parent=5 // pred_check
      %p405 = pneg %p404
    $region42: #{densenet_forward.26} parent=5 // pred_check_branch
      %407 = sbr.rel (%p405) target = $region44
    $region43: #{densenet_forward.26} parent=5 // pred_region
      %s408 = ssub.s32 %s10, 2
      // Predicated region
      $region45: #{densenet_forward.26} parent=43 // pred_check
        %p409 = pneg %p128
      $region46: #{densenet_forward.26} parent=43 // pred_check_branch
        %411 = sbr.rel (%p409) target = $region48
      $region47: #{densenet_forward.26} parent=43 // pred_region
        %s412 = smul.u32 8, %s16
        %p413 = scmp.lt.s32.totalorder %s412, 15
        %s414 = scalar_select %p413, %s412, 15
        %s415 = smul.addr %s414, 4
        %s416 = scalar_lea.vmem %s4, %s415
      $region48: #{densenet_forward.26} parent=43 // pred_fallthru
        _
    $region44: #{densenet_forward.26} parent=5 // pred_fallthru
      _
  $region6: #{densenet_forward.26} parent=0 // loop_footer
    %s14 = sadd.s32 1, %s10
  $region7: #{densenet_forward.26} parent=0 // loop_footer_branch
    %9 = sbr.rel target = $region3
  $region8: #{densenet_forward.26} parent=0 // loop_exit
    _

// kernel: densenet_forward.27
$region0: #{densenet_forward.27}
  #allocation0 [shape = 'u32[]', space=smem, size = 0x4, offset = 0x4, fixed_abs, tag = 'smem constant byte address 0x4 - core index']
  #allocation1 [shape = 'u32[144,128]{1,0:T(1,128)}', space=vmem, size = 0x12000, scoped, tag = 'internal scratch']
  %s0 = inlined_call_operand.vmem [shape: bf16[32,16], index: 0, kind: input, shape index: {}]
  %s1 = inlined_call_operand.vmem [shape: bf16[16,32], index: 1, kind: input, shape index: {}]
  %s2 = inlined_call_operand.vmem [shape: f32[1,16], index: 2, kind: input, shape index: {}]
  %s3 = inlined_call_operand.vmem [shape: f32[1,16], index: 3, kind: input, shape index: {}]
  %s4 = inlined_call_operand.vmem [shape: f32[1,32], index: 4, kind: input, shape index: {}]
  %s5 = inlined_call_operand.vmem [shape: f32[1,32], index: 5, kind: input, shape index: {}]
  %s6 = inlined_call_operand.vmem [shape: bf16[32,32], index: 6, kind: output, shape index: {}]
  %s7 = sld [smem:[#allocation0]]
  $region57: #{densenet_forward.27} parent=0
    _
  %s9 = ssub.s32 1, %s7
  %s10 = scalar_select 0, %s9, %s7
  loop: start=0, step=1, limit=4
  $region2: #{densenet_forward.27} parent=0 // loop_pre_header
    _
  $region3: #{densenet_forward.27} parent=0 // loop_header
    %s12 = sphi 0, %s16
    %p13 = scmp.ge.s32.totalorder %s12, 4
    %s22 = sphi 0, %s24
    %s25 = sphi 0, %s22
    %s26 = sphi 0, %s25
    %s42 = sphi 0, %s26
    %s46 = sphi 0, %s46
    %s48 = sphi 0, %s46
    %s49 = sphi 0, %s48
    %s63 = sphi 0, %s49
    %s67 = sphi 0, %s67
    %s69 = sphi 0, %s67
    %s70 = sphi 0, %s69
    %s84 = sphi 0, %s70
    %s88 = sphi 0, %s88
    %s90 = sphi 0, %s88
    %s91 = sphi 0, %s90
    %s105 = sphi 0, %s91
    %s109 = sphi 0, %s109
    %s111 = sphi 0, %s109
    %s112 = sphi 0, %s111
    %s126 = sphi 0, %s112
    %s130 = sphi 0, %s130
    %s132 = sphi 0, %s130
    %s133 = sphi 0, %s132
    %s147 = sphi 0, %s133
    %s153 = sphi 0, %s155
    %s156 = sphi 0, %s153
    %s157 = sphi 0, %s156
    %s173 = sphi 0, %s157
  $region4: #{densenet_forward.27} parent=0 // loop_header_branch
    %15 = sbr.rel (%p13) target = $region8
  $region5: #{densenet_forward.27} parent=0 // loop_body
    %s17 = ssub.s32 %s12, 1
    %s18 = ssub.s32 %s12, 2
    %s19 = sadd.s32 %s12, 1
    %s20 = ssub.s32 %s12, %s19
    %p21 = scmp.eq.s32.totalorder %s20, 0
    %s23 = sadd.s32 %s22, 1
    %s24 = scalar_select %p21, %s22, %s23
    %p27 = pneg %p21
    %p28 = scmp.eq.s32.totalorder %s12, 1
    %p29 = por %p27, %p28
    %p30 = scmp.ne.s32.totalorder %s22, %s25
    %p31 = scmp.eq.s32.totalorder %s12, 0
    %p32 = por %p30, %p31
    %p33 = scmp.ne.s32.totalorder %s22, %s25
    %p34 = scmp.eq.s32.totalorder %s17, 1
    %p35 = por %p33, %p34
    %p36 = scmp.ne.s32.totalorder %s25, %s26
    %p37 = scmp.eq.s32.totalorder %s17, 0
    %p38 = por %p36, %p37
    %p39 = scmp.ne.s32.totalorder %s25, %s26
    %p40 = scmp.eq.s32.totalorder %s18, 1
    %p41 = por %p39, %p40
    %p43 = scmp.ne.s32.totalorder %s26, %s42
    %p44 = scmp.eq.s32.totalorder %s18, 0
    %p45 = por %p43, %p44
    %s47 = sadd.s32 %s46, 1
    %p50 = scmp.eq.s32.totalorder %s12, 1
    %p51 = scmp.ne.s32.totalorder %s46, %s48
    %p52 = scmp.eq.s32.totalorder %s12, 0
    %p53 = por %p51, %p52
    %p54 = scmp.ne.s32.totalorder %s46, %s48
    %p55 = scmp.eq.s32.totalorder %s17, 1
    %p56 = por %p54, %p55
    %p57 = scmp.ne.s32.totalorder %s48, %s49
    %p58 = scmp.eq.s32.totalorder %s17, 0
    %p59 = por %p57, %p58
    %p60 = scmp.ne.s32.totalorder %s48, %s49
    %p61 = scmp.eq.s32.totalorder %s18, 1
    %p62 = por %p60, %p61
    %p64 = scmp.ne.s32.totalorder %s49, %s63
    %p65 = scmp.eq.s32.totalorder %s18, 0
    %p66 = por %p64, %p65
    %s68 = sadd.s32 %s67, 1
    %p71 = scmp.eq.s32.totalorder %s12, 1
    %p72 = scmp.ne.s32.totalorder %s67, %s69
    %p73 = scmp.eq.s32.totalorder %s12, 0
    %p74 = por %p72, %p73
    %p75 = scmp.ne.s32.totalorder %s67, %s69
    %p76 = scmp.eq.s32.totalorder %s17, 1
    %p77 = por %p75, %p76
    %p78 = scmp.ne.s32.totalorder %s69, %s70
    %p79 = scmp.eq.s32.totalorder %s17, 0
    %p80 = por %p78, %p79
    %p81 = scmp.ne.s32.totalorder %s69, %s70
    %p82 = scmp.eq.s32.totalorder %s18, 1
    %p83 = por %p81, %p82
    %p85 = scmp.ne.s32.totalorder %s70, %s84
    %p86 = scmp.eq.s32.totalorder %s18, 0
    %p87 = por %p85, %p86
    %s89 = sadd.s32 %s88, 1
    %p92 = scmp.eq.s32.totalorder %s12, 1
    %p93 = scmp.ne.s32.totalorder %s88, %s90
    %p94 = scmp.eq.s32.totalorder %s12, 0
    %p95 = por %p93, %p94
    %p96 = scmp.ne.s32.totalorder %s88, %s90
    %p97 = scmp.eq.s32.totalorder %s17, 1
    %p98 = por %p96, %p97
    %p99 = scmp.ne.s32.totalorder %s90, %s91
    %p100 = scmp.eq.s32.totalorder %s17, 0
    %p101 = por %p99, %p100
    %p102 = scmp.ne.s32.totalorder %s90, %s91
    %p103 = scmp.eq.s32.totalorder %s18, 1
    %p104 = por %p102, %p103
    %p106 = scmp.ne.s32.totalorder %s91, %s105
    %p107 = scmp.eq.s32.totalorder %s18, 0
    %p108 = por %p106, %p107
    %s110 = sadd.s32 %s109, 1
    %p113 = scmp.eq.s32.totalorder %s12, 1
    %p114 = scmp.ne.s32.totalorder %s109, %s111
    %p115 = scmp.eq.s32.totalorder %s12, 0
    %p116 = por %p114, %p115
    %p117 = scmp.ne.s32.totalorder %s109, %s111
    %p118 = scmp.eq.s32.totalorder %s17, 1
    %p119 = por %p117, %p118
    %p120 = scmp.ne.s32.totalorder %s111, %s112
    %p121 = scmp.eq.s32.totalorder %s17, 0
    %p122 = por %p120, %p121
    %p123 = scmp.ne.s32.totalorder %s111, %s112
    %p124 = scmp.eq.s32.totalorder %s18, 1
    %p125 = por %p123, %p124
    %p127 = scmp.ne.s32.totalorder %s112, %s126
    %p128 = scmp.eq.s32.totalorder %s18, 0
    %p129 = por %p127, %p128
    %s131 = sadd.s32 %s130, 1
    %p134 = scmp.eq.s32.totalorder %s12, 1
    %p135 = scmp.ne.s32.totalorder %s130, %s132
    %p136 = scmp.eq.s32.totalorder %s12, 0
    %p137 = por %p135, %p136
    %p138 = scmp.ne.s32.totalorder %s130, %s132
    %p139 = scmp.eq.s32.totalorder %s17, 1
    %p140 = por %p138, %p139
    %p141 = scmp.ne.s32.totalorder %s132, %s133
    %p142 = scmp.eq.s32.totalorder %s17, 0
    %p143 = por %p141, %p142
    %p144 = scmp.ne.s32.totalorder %s132, %s133
    %p145 = scmp.eq.s32.totalorder %s18, 1
    %p146 = por %p144, %p145
    %p148 = scmp.ne.s32.totalorder %s133, %s147
    %p149 = scmp.eq.s32.totalorder %s18, 0
    %p150 = por %p148, %p149
    %s151 = ssub.s32 %s12, %s19
    %p152 = scmp.eq.s32.totalorder %s151, 0
    %s154 = sadd.s32 %s153, 1
    %s155 = scalar_select %p152, %s153, %s154
    %p158 = pneg %p152
    %p159 = scmp.eq.s32.totalorder %s12, 1
    %p160 = por %p158, %p159
    %p161 = scmp.ne.s32.totalorder %s153, %s156
    %p162 = scmp.eq.s32.totalorder %s12, 0
    %p163 = por %p161, %p162
    %p164 = scmp.ne.s32.totalorder %s153, %s156
    %p165 = scmp.eq.s32.totalorder %s17, 1
    %p166 = por %p164, %p165
    %p167 = scmp.ne.s32.totalorder %s156, %s157
    %p168 = scmp.eq.s32.totalorder %s17, 0
    %p169 = por %p167, %p168
    %p170 = scmp.ne.s32.totalorder %s156, %s157
    %p171 = scmp.eq.s32.totalorder %s18, 1
    %p172 = por %p170, %p171
    %p174 = scmp.ne.s32.totalorder %s157, %s173
    %p175 = scmp.eq.s32.totalorder %s18, 0
    %p176 = por %p174, %p175
    %p177 = scmp.le.s32.totalorder 1, %s12
    %p178 = scmp.lt.s32.totalorder %s12, 3
    %p179 = pnand %p177, %p178
    %p180 = pneg %p179
    // Predicated region
    $region9: #{densenet_forward.27} parent=5 // pred_check
      _
    $region10: #{densenet_forward.27} parent=5 // pred_check_branch
      %182 = sbr.rel (%p179) target = $region12
    $region11: #{densenet_forward.27} parent=5 // pred_region
      %s183 = ssub.s32 %s12, 1
      // Predicated region
      $region13: #{densenet_forward.27} parent=11 // pred_check
        %p184 = pneg %p59
      $region14: #{densenet_forward.27} parent=11 // pred_check_branch
        %186 = sbr.rel (%p184) target = $region16
      $region15: #{densenet_forward.27} parent=11 // pred_region
        _
      $region16: #{densenet_forward.27} parent=11 // pred_fallthru
        _
      // Predicated region
      $region17: #{densenet_forward.27} parent=11 // pred_check
        %p187 = pneg %p80
      $region18: #{densenet_forward.27} parent=11 // pred_check_branch
        %189 = sbr.rel (%p187) target = $region20
      $region19: #{densenet_forward.27} parent=11 // pred_region
        _
      $region20: #{densenet_forward.27} parent=11 // pred_fallthru
        _
      // Predicated region
      $region21: #{densenet_forward.27} parent=11 // pred_check
        %p190 = pneg %p101
      $region22: #{densenet_forward.27} parent=11 // pred_check_branch
        %192 = sbr.rel (%p190) target = $region24
      $region23: #{densenet_forward.27} parent=11 // pred_region
        _
      $region24: #{densenet_forward.27} parent=11 // pred_fallthru
        _
      // Predicated region
      $region25: #{densenet_forward.27} parent=11 // pred_check
        %p193 = pneg %p122
      $region26: #{densenet_forward.27} parent=11 // pred_check_branch
        %195 = sbr.rel (%p193) target = $region28
      $region27: #{densenet_forward.27} parent=11 // pred_region
        _
      $region28: #{densenet_forward.27} parent=11 // pred_fallthru
        _
      // Predicated region
      $region29: #{densenet_forward.27} parent=11 // pred_check
        %p196 = pneg %p143
      $region30: #{densenet_forward.27} parent=11 // pred_check_branch
        %198 = sbr.rel (%p196) target = $region32
      $region31: #{densenet_forward.27} parent=11 // pred_region
        _
      $region32: #{densenet_forward.27} parent=11 // pred_fallthru
        _
    $region12: #{densenet_forward.27} parent=5 // pred_fallthru
      _
    %p199 = scmp.lt.s32.totalorder %s12, 2
    // Predicated region
    $region33: #{densenet_forward.27} parent=5 // pred_check
      %p200 = pneg %p199
    $region34: #{densenet_forward.27} parent=5 // pred_check_branch
      %202 = sbr.rel (%p200) target = $region36
    $region35: #{densenet_forward.27} parent=5 // pred_region
      // Predicated region
      $region37: #{densenet_forward.27} parent=35 // pred_check
        %p203 = pneg %p32
      $region38: #{densenet_forward.27} parent=35 // pred_check_branch
        %205 = sbr.rel (%p203) target = $region40
      $region39: #{densenet_forward.27} parent=35 // pred_region
        %s206 = smul.u32 2, %s12
        %p207 = scmp.lt.s32.totalorder %s206, 3
        %s208 = scalar_select %p207, %s206, 3
        %s209 = smul.addr %s208, 4
        %s210 = scalar_lea.vmem %s0, %s209
        %s211 = smul.u32 2, %s12
      $region40: #{densenet_forward.27} parent=35 // pred_fallthru
        _
    $region36: #{densenet_forward.27} parent=5 // pred_fallthru
      _
    %p212 = scmp.le.s32.totalorder 1, %s12
    %p213 = scmp.lt.s32.totalorder %s12, 3
    %p214 = pnand %p212, %p213
    %p215 = pneg %p214
    // Predicated region
    $region41: #{densenet_forward.27} parent=5 // pred_check
      _
    $region42: #{densenet_forward.27} parent=5 // pred_check_branch
      %217 = sbr.rel (%p214) target = $region44
    $region43: #{densenet_forward.27} parent=5 // pred_region
      %s218 = ssub.s32 %s12, 1
      %s219 = smul.u32 2, %s17
      %p220 = scmp.lt.s32.totalorder %s219, 3
      %s221 = scalar_select %p220, %s219, 3
      %s222 = smul.addr %s221, 4
      %s223 = scalar_lea.vmem %s0, %s222
      %p224 = pneg %p38
      %p225 = pneg %p35
      %p226 = pneg %p59
      %p227 = pneg %p56
      %p228 = pneg %p80
      %p229 = pneg %p77
      %p230 = pneg %p101
      %p231 = pneg %p98
      %p232 = pneg %p122
      %p233 = pneg %p119
      %p234 = pneg %p143
      %p235 = pneg %p140
      %p236 = pneg %p169
      %p237 = pneg %p166
      %s238 = smul.u32 2, %s17
      %p239 = scmp.lt.s32.totalorder %s238, 3
      %s240 = scalar_select %p239, %s238, 3
      %s241 = smul.addr %s240, 4
      %s242 = scalar_lea.vmem %s6, %s241
      %s243 = smul.u32 2, %s17
      %p244 = scmp.lt.s32.totalorder %s243, 3
      %s245 = scalar_select %p244, %s243, 3
      %s246 = smul.addr %s245, 4
      %s247 = scalar_lea.vmem %s0, %s246
      %s248 = smul.u32 2, %s17
      %s249 = smul.u32 2, %s17
      %p250 = scmp.lt.s32.totalorder %s249, 3
      %s251 = scalar_select %p250, %s249, 3
      %s252 = smul.addr %s251, 4
      %s253 = scalar_lea.vmem %s6, %s252
      %s254 = smul.u32 2, %s17
      %v256 = vld [vmem:[%s247] sm:$0xf]
      %v257 = vld [vmem:[%s247 + $0x4] sm:$0xf]
      %v258 = vunpack.c.l.bf16 %v256
      %v259 = vunpack.c.l.bf16 %v257
      %v260 = vld [vmem:[%s2] sm:$0x1]
      %v262 = vlaneseq
      %v263 = vshrl.u32 %v262, 7
      %v264 = vsub.s32 0, %v263
      %v265 = vrot.slane %v260, %v264
      %v267 = vmul.f32 %v258, %v265
      %v268 = vmul.f32 %v259, %v265
      %v269 = vld [vmem:[%s3] sm:$0x1]
      %v271 = vlaneseq
      %v272 = vshrl.u32 %v271, 7
      %v273 = vsub.s32 0, %v272
      %v274 = vrot.slane %v269, %v273
      %v276 = vadd.f32 %v267, %v274
      %v277 = vadd.f32 %v268, %v274
      %v278 = vmax.f32 %v276, 0.0
      %v279 = vmax.f32 %v277, 0.0
      %v280 = vpack.c.bf16 %v279, %v278
      %v281 = vld [vmem:[%s1] sm:$0xf]
      %v282 = vld [vmem:[%s1 + $0x4] sm:$0xf]
      %v285 = vunpack.c.l.b16 %v281
      %v286 = vunpack.c.l.b16 %v282
      %v287 = vpack.c.b16 %v286, %v285
      %vm289 = vcmask 130048
      %v291 = vsel %vm289, %v280, 0
      %293 = vmatprep.subr.bf16.mxu0 0
      %294 = vmatpush1.bf16.msra.mxu0 %v287
      %295 = vmatprep.subr.bf16.mxu0 0
      %296 = vmatpush1.bf16.msra.mxu0 0
      %297 = vmatprep.subr.bf16.mxu0 0
      %298 = vmatpush1.bf16.msra.mxu0 0
      %299 = vmatprep.subr.bf16.mxu0 0
      %300 = vmatpush1.bf16.msra.mxu0 0
      %301 = vmatprep.subr.bf16.mxu0 0
      %302 = vmatpush1.bf16.msra.mxu0 0
      %303 = vmatprep.subr.bf16.mxu0 0
      %304 = vmatpush1.bf16.msra.mxu0 0
      %305 = vmatprep.subr.bf16.mxu0 0
      %306 = vmatpush1.bf16.msra.mxu0 0
      %307 = vmatprep.subr.bf16.mxu0 0
      %308 = vmatpush1.bf16.msra.mxu0 0
      %309 = vmatprep.subr.bf16.mxu0 0
      %310 = vmatpush1.bf16.msra.mxu0 0
      %311 = vmatprep.subr.bf16.mxu0 0
      %312 = vmatpush1.bf16.msra.mxu0 0
      %313 = vmatprep.subr.bf16.mxu0 0
      %314 = vmatpush1.bf16.msra.mxu0 0
      %315 = vmatprep.subr.bf16.mxu0 0
      %316 = vmatpush1.bf16.msra.mxu0 0
      %317 = vmatprep.subr.bf16.mxu0 0
      %318 = vmatpush1.bf16.msra.mxu0 0
      %319 = vmatprep.subr.bf16.mxu0 0
      %320 = vmatpush1.bf16.msra.mxu0 0
      %321 = vmatprep.subr.bf16.mxu0 0
      %322 = vmatpush1.bf16.msra.mxu0 0
      %323 = vmatprep.subr.bf16.mxu0 0
      %324 = vmatpush1.bf16.msra.mxu0 0
      %325 = vmatprep.mubr.bf16.mxu0 0
      %326 = vmatmul.mubr.bf16.gmra.mrb[0].mxu0 %v291
      %v327 = vpop.f32.mrb[0].mxu0
      %v328 = vadd.f32 0.0, %v327
      %v329 = vpop.f32.mrb[0].mxu0
      %v330 = vpop.f32.mrb[0].mxu0
      %v331 = vadd.f32 0.0, %v330
      %v332 = vpop.f32.mrb[0].mxu0
      %333 = vdwg.mxu0
      %v334 = vld [vmem:[%s4] sm:$0x1]
      %v336 = vlaneseq
      %v337 = vshrl.u32 %v336, 7
      %v338 = vsub.s32 0, %v337
      %v339 = vrot.slane %v334, %v338
      %v341 = vmul.f32 %v328, %v339
      %v342 = vmul.f32 %v331, %v339
      %v343 = vld [vmem:[%s5] sm:$0x1]
      %v345 = vlaneseq
      %v346 = vshrl.u32 %v345, 7
      %v347 = vsub.s32 0, %v346
      %v348 = vrot.slane %v343, %v347
      %v350 = vadd.f32 %v341, %v348
      %v351 = vadd.f32 %v342, %v348
      %v352 = vmax.f32 %v350, 0.0
      %v353 = vmax.f32 %v351, 0.0
      %v354 = vpack.c.bf16 %v353, %v352
      %v356 = vunpack.c.l.b16 %v354
      %v357 = vunpack.c.h.b16 %v354
      %v358 = vpack.c.b16 %v356, %v356
      %v359 = vpack.c.b16 %v357, %v357
      %vm362 = vcmask 257024
      %363 = vst.msk [vmem:[%s253] sm:$0xf] %vm362, %v358
      %364 = vst.msk [vmem:[%s253 + $0x4] sm:$0xf] %vm362, %v359
      %s365 = smul.u32 2, %s17
      %p366 = scmp.lt.s32.totalorder %s365, 3
      %s367 = scalar_select %p366, %s365, 3
      %s368 = smul.addr %s367, 4
      %s369 = scalar_lea.vmem %s6, %s368
      // Predicated region
      $region45: #{densenet_forward.27} parent=43 // pred_check
        %p370 = pneg %p166
      $region46: #{densenet_forward.27} parent=43 // pred_check_branch
        %372 = sbr.rel (%p370) target = $region48
      $region47: #{densenet_forward.27} parent=43 // pred_region
        %s373 = smul.u32 2, %s17
      $region48: #{densenet_forward.27} parent=43 // pred_fallthru
        _
    $region44: #{densenet_forward.27} parent=5 // pred_fallthru
      _
    %p374 = scmp.le.s32.totalorder 2, %s12
    // Predicated region
    $region49: #{densenet_forward.27} parent=5 // pred_check
      %p375 = pneg %p374
    $region50: #{densenet_forward.27} parent=5 // pred_check_branch
      %377 = sbr.rel (%p375) target = $region52
    $region51: #{densenet_forward.27} parent=5 // pred_region
      %s378 = ssub.s32 %s12, 2
      // Predicated region
      $region53: #{densenet_forward.27} parent=51 // pred_check
        %p379 = pneg %p172
      $region54: #{densenet_forward.27} parent=51 // pred_check_branch
        %381 = sbr.rel (%p379) target = $region56
      $region55: #{densenet_forward.27} parent=51 // pred_region
        %s382 = smul.u32 2, %s18
        %p383 = scmp.lt.s32.totalorder %s382, 3
        %s384 = scalar_select %p383, %s382, 3
        %s385 = smul.addr %s384, 4
        %s386 = scalar_lea.vmem %s6, %s385
      $region56: #{densenet_forward.27} parent=51 // pred_fallthru
        _
    $region52: #{densenet_forward.27} parent=5 // pred_fallthru
      _
  $region6: #{densenet_forward.27} parent=0 // loop_footer
    %s16 = sadd.s32 1, %s12
  $region7: #{densenet_forward.27} parent=0 // loop_footer_branch
    %11 = sbr.rel target = $region3
  $region8: #{densenet_forward.27} parent=0 // loop_exit
    _

// kernel: densenet_forward.28
$region0: #{densenet_forward.28}
  #allocation0 [shape = 'u32[]', space=smem, size = 0x4, offset = 0x4, fixed_abs, tag = 'smem constant byte address 0x4 - core index']
  #allocation1 [shape = 'u32[144,128]{1,0:T(1,128)}', space=vmem, size = 0x12000, scoped, tag = 'internal scratch']
  %s0 = inlined_call_operand.vmem [shape: bf16[32,288], index: 0, kind: input, shape index: {}]
  %s1 = inlined_call_operand.vmem [shape: bf16[288,8], index: 1, kind: input, shape index: {}]
  %s2 = inlined_call_operand.vmem [shape: bf16[32,8], index: 2, kind: output, shape index: {}]
  %s3 = sld [smem:[#allocation0]]
  $region41: #{densenet_forward.28} parent=0
    _
  %s5 = ssub.s32 1, %s3
  %s6 = scalar_select 0, %s5, %s3
  loop: start=0, step=1, limit=4
  $region2: #{densenet_forward.28} parent=0 // loop_pre_header
    _
  $region3: #{densenet_forward.28} parent=0 // loop_header
    %s8 = sphi 0, %s12
    %p9 = scmp.ge.s32.totalorder %s8, 4
    %s18 = sphi 0, %s20
    %s21 = sphi 0, %s18
    %s22 = sphi 0, %s21
    %s38 = sphi 0, %s22
    %s42 = sphi 0, %s42
    %s44 = sphi 0, %s42
    %s45 = sphi 0, %s44
    %s59 = sphi 0, %s45
    %s65 = sphi 0, %s67
    %s68 = sphi 0, %s65
    %s69 = sphi 0, %s68
    %s85 = sphi 0, %s69
  $region4: #{densenet_forward.28} parent=0 // loop_header_branch
    %11 = sbr.rel (%p9) target = $region8
  $region5: #{densenet_forward.28} parent=0 // loop_body
    %s13 = ssub.s32 %s8, 1
    %s14 = ssub.s32 %s8, 2
    %s15 = sadd.s32 %s8, 1
    %s16 = ssub.s32 %s8, %s15
    %p17 = scmp.eq.s32.totalorder %s16, 0
    %s19 = sadd.s32 %s18, 1
    %s20 = scalar_select %p17, %s18, %s19
    %p23 = pneg %p17
    %p24 = scmp.eq.s32.totalorder %s8, 1
    %p25 = por %p23, %p24
    %p26 = scmp.ne.s32.totalorder %s18, %s21
    %p27 = scmp.eq.s32.totalorder %s8, 0
    %p28 = por %p26, %p27
    %p29 = scmp.ne.s32.totalorder %s18, %s21
    %p30 = scmp.eq.s32.totalorder %s13, 1
    %p31 = por %p29, %p30
    %p32 = scmp.ne.s32.totalorder %s21, %s22
    %p33 = scmp.eq.s32.totalorder %s13, 0
    %p34 = por %p32, %p33
    %p35 = scmp.ne.s32.totalorder %s21, %s22
    %p36 = scmp.eq.s32.totalorder %s14, 1
    %p37 = por %p35, %p36
    %p39 = scmp.ne.s32.totalorder %s22, %s38
    %p40 = scmp.eq.s32.totalorder %s14, 0
    %p41 = por %p39, %p40
    %s43 = sadd.s32 %s42, 1
    %p46 = scmp.eq.s32.totalorder %s8, 1
    %p47 = scmp.ne.s32.totalorder %s42, %s44
    %p48 = scmp.eq.s32.totalorder %s8, 0
    %p49 = por %p47, %p48
    %p50 = scmp.ne.s32.totalorder %s42, %s44
    %p51 = scmp.eq.s32.totalorder %s13, 1
    %p52 = por %p50, %p51
    %p53 = scmp.ne.s32.totalorder %s44, %s45
    %p54 = scmp.eq.s32.totalorder %s13, 0
    %p55 = por %p53, %p54
    %p56 = scmp.ne.s32.totalorder %s44, %s45
    %p57 = scmp.eq.s32.totalorder %s14, 1
    %p58 = por %p56, %p57
    %p60 = scmp.ne.s32.totalorder %s45, %s59
    %p61 = scmp.eq.s32.totalorder %s14, 0
    %p62 = por %p60, %p61
    %s63 = ssub.s32 %s8, %s15
    %p64 = scmp.eq.s32.totalorder %s63, 0
    %s66 = sadd.s32 %s65, 1
    %s67 = scalar_select %p64, %s65, %s66
    %p70 = pneg %p64
    %p71 = scmp.eq.s32.totalorder %s8, 1
    %p72 = por %p70, %p71
    %p73 = scmp.ne.s32.totalorder %s65, %s68
    %p74 = scmp.eq.s32.totalorder %s8, 0
    %p75 = por %p73, %p74
    %p76 = scmp.ne.s32.totalorder %s65, %s68
    %p77 = scmp.eq.s32.totalorder %s13, 1
    %p78 = por %p76, %p77
    %p79 = scmp.ne.s32.totalorder %s68, %s69
    %p80 = scmp.eq.s32.totalorder %s13, 0
    %p81 = por %p79, %p80
    %p82 = scmp.ne.s32.totalorder %s68, %s69
    %p83 = scmp.eq.s32.totalorder %s14, 1
    %p84 = por %p82, %p83
    %p86 = scmp.ne.s32.totalorder %s69, %s85
    %p87 = scmp.eq.s32.totalorder %s14, 0
    %p88 = por %p86, %p87
    %p89 = scmp.le.s32.totalorder 1, %s8
    %p90 = scmp.lt.s32.totalorder %s8, 3
    %p91 = pnand %p89, %p90
    %p92 = pneg %p91
    // Predicated region
    $region9: #{densenet_forward.28} parent=5 // pred_check
      _
    $region10: #{densenet_forward.28} parent=5 // pred_check_branch
      %94 = sbr.rel (%p91) target = $region12
    $region11: #{densenet_forward.28} parent=5 // pred_region
      %s95 = ssub.s32 %s8, 1
      // Predicated region
      $region13: #{densenet_forward.28} parent=11 // pred_check
        %p96 = pneg %p55
      $region14: #{densenet_forward.28} parent=11 // pred_check_branch
        %98 = sbr.rel (%p96) target = $region16
      $region15: #{densenet_forward.28} parent=11 // pred_region
        _
      $region16: #{densenet_forward.28} parent=11 // pred_fallthru
        _
    $region12: #{densenet_forward.28} parent=5 // pred_fallthru
      _
    %p99 = scmp.lt.s32.totalorder %s8, 2
    // Predicated region
    $region17: #{densenet_forward.28} parent=5 // pred_check
      %p100 = pneg %p99
    $region18: #{densenet_forward.28} parent=5 // pred_check_branch
      %102 = sbr.rel (%p100) target = $region20
    $region19: #{densenet_forward.28} parent=5 // pred_region
      // Predicated region
      $region21: #{densenet_forward.28} parent=19 // pred_check
        %p103 = pneg %p28
      $region22: #{densenet_forward.28} parent=19 // pred_check_branch
        %105 = sbr.rel (%p103) target = $region24
      $region23: #{densenet_forward.28} parent=19 // pred_region
        %s106 = smul.u32 2, %s8
        %p107 = scmp.lt.s32.totalorder %s106, 3
        %s108 = scalar_select %p107, %s106, 3
        %s109 = smul.addr %s108, 3
        %s110 = smul.addr %s109, 4
        %s111 = scalar_lea.vmem %s0, %s110
        %s112 = smul.u32 2, %s8
      $region24: #{densenet_forward.28} parent=19 // pred_fallthru
        _
    $region20: #{densenet_forward.28} parent=5 // pred_fallthru
      _
    %p113 = scmp.le.s32.totalorder 1, %s8
    %p114 = scmp.lt.s32.totalorder %s8, 3
    %p115 = pnand %p113, %p114
    %p116 = pneg %p115
    // Predicated region
    $region25: #{densenet_forward.28} parent=5 // pred_check
      _
    $region26: #{densenet_forward.28} parent=5 // pred_check_branch
      %118 = sbr.rel (%p115) target = $region28
    $region27: #{densenet_forward.28} parent=5 // pred_region
      %s119 = ssub.s32 %s8, 1
      %s120 = smul.u32 2, %s13
      %p121 = scmp.lt.s32.totalorder %s120, 3
      %s122 = scalar_select %p121, %s120, 3
      %s123 = smul.addr %s122, 3
      %s124 = smul.addr %s123, 4
      %s125 = scalar_lea.vmem %s0, %s124
      %p126 = pneg %p34
      %p127 = pneg %p31
      %p128 = pneg %p55
      %p129 = pneg %p52
      %p130 = pneg %p81
      %p131 = pneg %p78
      %s132 = smul.u32 2, %s13
      %p133 = scmp.lt.s32.totalorder %s132, 3
      %s134 = scalar_select %p133, %s132, 3
      %s135 = smul.addr %s134, 4
      %s136 = scalar_lea.vmem %s2, %s135
      %s137 = smul.u32 2, %s13
      %p138 = scmp.lt.s32.totalorder %s137, 3
      %s139 = scalar_select %p138, %s137, 3
      %s140 = smul.addr %s139, 3
      %s141 = smul.addr %s140, 4
      %s142 = scalar_lea.vmem %s0, %s141
      %s143 = smul.u32 2, %s13
      %s144 = smul.u32 2, %s13
      %p145 = scmp.lt.s32.totalorder %s144, 3
      %s146 = scalar_select %p145, %s144, 3
      %s147 = smul.addr %s146, 4
      %s148 = scalar_lea.vmem %s2, %s147
      %s149 = smul.u32 2, %s13
      %v151 = vld [vmem:[%s142] sm:$0xff]
      %v152 = vld [vmem:[%s142 + $0x8] sm:$0xf]
      %v153 = vld [vmem:[%s142 + $0xc] sm:$0xff]
      %v154 = vld [vmem:[%s142 + $0x14] sm:$0xf]
      %v155 = vld [vmem:[%s1] sm:$0xf]
      %v156 = vld [vmem:[%s1 + $0x4] sm:$0xf]
      %v157 = vld [vmem:[%s1 + $0x8] sm:$0xf]
      %v158 = vld [vmem:[%s1 + $0xc] sm:$0xf]
      %v159 = vld [vmem:[%s1 + $0x10] sm:$0xf]
      %v160 = vld [vmem:[%s1 + $0x14] sm:$0xf]
      %v161 = vld [vmem:[%s1 + $0x18] sm:$0xf]
      %v162 = vld [vmem:[%s1 + $0x1c] sm:$0xf]
      %v163 = vld [vmem:[%s1 + $0x20] sm:$0xf]
      %v164 = vld [vmem:[%s1 + $0x24] sm:$0xf]
      %v165 = vld [vmem:[%s1 + $0x28] sm:$0xf]
      %v166 = vld [vmem:[%s1 + $0x2c] sm:$0xf]
      %v167 = vld [vmem:[%s1 + $0x30] sm:$0xf]
      %v168 = vld [vmem:[%s1 + $0x34] sm:$0xf]
      %v169 = vld [vmem:[%s1 + $0x38] sm:$0xf]
      %v170 = vld [vmem:[%s1 + $0x3c] sm:$0xf]
      %v171 = vld [vmem:[%s1 + $0x40] sm:$0xf]
      %v172 = vld [vmem:[%s1 + $0x44] sm:$0xf]
      %v173 = vld [vmem:[%s1 + $0x48] sm:$0xf]
      %v174 = vld [vmem:[%s1 + $0x4c] sm:$0xf]
      %v175 = vld [vmem:[%s1 + $0x50] sm:$0xf]
      %v176 = vld [vmem:[%s1 + $0x54] sm:$0xf]
      %v177 = vld [vmem:[%s1 + $0x58] sm:$0xf]
      %v178 = vld [vmem:[%s1 + $0x5c] sm:$0xf]
      %v179 = vld [vmem:[%s1 + $0x60] sm:$0xf]
      %v180 = vld [vmem:[%s1 + $0x64] sm:$0xf]
      %v181 = vld [vmem:[%s1 + $0x68] sm:$0xf]
      %v182 = vld [vmem:[%s1 + $0x6c] sm:$0xf]
      %v183 = vld [vmem:[%s1 + $0x70] sm:$0xf]
      %v184 = vld [vmem:[%s1 + $0x74] sm:$0xf]
      %v185 = vld [vmem:[%s1 + $0x78] sm:$0xf]
      %v186 = vld [vmem:[%s1 + $0x7c] sm:$0xf]
      %v187 = vld [vmem:[%s1 + $0x80] sm:$0xf]
      %v188 = vld [vmem:[%s1 + $0x84] sm:$0xf]
      %v189 = vld [vmem:[%s1 + $0x88] sm:$0xf]
      %v190 = vld [vmem:[%s1 + $0x8c] sm:$0xf]
      %v195 = vunpack.c.l.b16 %v151
      %v196 = vunpack.c.h.b16 %v151
      %v197 = vunpack.c.l.b16 %v152
      %v198 = vunpack.c.l.b16 %v153
      %v199 = vunpack.c.h.b16 %v153
      %v200 = vunpack.c.l.b16 %v154
      %v201 = vpack.c.b16 %v198, %v195
      %v202 = vpack.c.b16 %v199, %v196
      %v203 = vpack.c.b16 %v200, %v197
      %v242 = vunpack.c.l.b16 %v155
      %v243 = vunpack.c.l.b16 %v156
      %v244 = vunpack.c.l.b16 %v157
      %v245 = vunpack.c.l.b16 %v158
      %v246 = vunpack.c.l.b16 %v159
      %v247 = vunpack.c.l.b16 %v160
      %v248 = vunpack.c.l.b16 %v161
      %v249 = vunpack.c.l.b16 %v162
      %v250 = vunpack.c.l.b16 %v163
      %v251 = vunpack.c.l.b16 %v164
      %v252 = vunpack.c.l.b16 %v165
      %v253 = vunpack.c.l.b16 %v166
      %v254 = vunpack.c.l.b16 %v167
      %v255 = vunpack.c.l.b16 %v168
      %v256 = vunpack.c.l.b16 %v169
      %v257 = vunpack.c.l.b16 %v170
      %v258 = vunpack.c.l.b16 %v171
      %v259 = vunpack.c.l.b16 %v172
      %v260 = vunpack.c.l.b16 %v173
      %v261 = vunpack.c.l.b16 %v174
      %v262 = vunpack.c.l.b16 %v175
      %v263 = vunpack.c.l.b16 %v176
      %v264 = vunpack.c.l.b16 %v177
      %v265 = vunpack.c.l.b16 %v178
      %v266 = vunpack.c.l.b16 %v179
      %v267 = vunpack.c.l.b16 %v180
      %v268 = vunpack.c.l.b16 %v181
      %v269 = vunpack.c.l.b16 %v182
      %v270 = vunpack.c.l.b16 %v183
      %v271 = vunpack.c.l.b16 %v184
      %v272 = vunpack.c.l.b16 %v185
      %v273 = vunpack.c.l.b16 %v186
      %v274 = vunpack.c.l.b16 %v187
      %v275 = vunpack.c.l.b16 %v188
      %v276 = vunpack.c.l.b16 %v189
      %v277 = vunpack.c.l.b16 %v190
      %v278 = vpack.c.b16 %v243, %v242
      %v279 = vpack.c.b16 %v245, %v244
      %v280 = vpack.c.b16 %v247, %v246
      %v281 = vpack.c.b16 %v249, %v248
      %v282 = vpack.c.b16 %v251, %v250
      %v283 = vpack.c.b16 %v253, %v252
      %v284 = vpack.c.b16 %v255, %v254
      %v285 = vpack.c.b16 %v257, %v256
      %v286 = vpack.c.b16 %v259, %v258
      %v287 = vpack.c.b16 %v261, %v260
      %v288 = vpack.c.b16 %v263, %v262
      %v289 = vpack.c.b16 %v265, %v264
      %v290 = vpack.c.b16 %v267, %v266
      %v291 = vpack.c.b16 %v269, %v268
      %v292 = vpack.c.b16 %v271, %v270
      %v293 = vpack.c.b16 %v273, %v272
      %v294 = vpack.c.b16 %v275, %v274
      %v295 = vpack.c.b16 %v277, %v276
      %vm314 = vcmask 261120
      %v316 = vsel %vm314, %v203, 0
      %318 = vmatprep.subr.bf16.mxu0 0
      %319 = vmatpush1.bf16.msra.mxu0 %v278
      %320 = vmatprep.subr.bf16.mxu0 0
      %321 = vmatpush1.bf16.msra.mxu0 %v279
      %322 = vmatprep.subr.bf16.mxu0 0
      %323 = vmatpush1.bf16.msra.mxu0 %v280
      %324 = vmatprep.subr.bf16.mxu0 0
      %325 = vmatpush1.bf16.msra.mxu0 %v281
      %326 = vmatprep.subr.bf16.mxu0 0
      %327 = vmatpush1.bf16.msra.mxu0 %v282
      %328 = vmatprep.subr.bf16.mxu0 0
      %329 = vmatpush1.bf16.msra.mxu0 %v283
      %330 = vmatprep.subr.bf16.mxu0 0
      %331 = vmatpush1.bf16.msra.mxu0 %v284
      %332 = vmatprep.subr.bf16.mxu0 0
      %333 = vmatpush1.bf16.msra.mxu0 %v285
      %334 = vmatprep.subr.bf16.mxu0 0
      %335 = vmatpush1.bf16.msra.mxu0 %v286
      %336 = vmatprep.subr.bf16.mxu0 0
      %337 = vmatpush1.bf16.msra.mxu0 %v287
      %338 = vmatprep.subr.bf16.mxu0 0
      %339 = vmatpush1.bf16.msra.mxu0 %v288
      %340 = vmatprep.subr.bf16.mxu0 0
      %341 = vmatpush1.bf16.msra.mxu0 %v289
      %342 = vmatprep.subr.bf16.mxu0 0
      %343 = vmatpush1.bf16.msra.mxu0 %v290
      %344 = vmatprep.subr.bf16.mxu0 0
      %345 = vmatpush1.bf16.msra.mxu0 %v291
      %346 = vmatprep.subr.bf16.mxu0 0
      %347 = vmatpush1.bf16.msra.mxu0 %v292
      %348 = vmatprep.subr.bf16.mxu0 0
      %349 = vmatpush1.bf16.msra.mxu0 %v293
      %350 = vmatprep.mubr.bf16.mxu0 %v202
      %351 = vmatmul.mubr.bf16.gmra.mrb[0].mxu0 %v201
      %v352 = vpop.f32.mrb[0].mxu0
      %v353 = vadd.f32 0.0, %v352
      %v354 = vpop.f32.mrb[0].mxu0
      %v355 = vpop.f32.mrb[0].mxu0
      %v356 = vadd.f32 0.0, %v355
      %v357 = vpop.f32.mrb[0].mxu0
      %358 = vdwg.mxu0
      %359 = vmatprep.subr.bf16.mxu0 0
      %360 = vmatpush1.bf16.msra.mxu0 %v294
      %361 = vmatprep.subr.bf16.mxu0 0
      %362 = vmatpush1.bf16.msra.mxu0 %v295
      %363 = vmatprep.subr.bf16.mxu0 0
      %364 = vmatpush1.bf16.msra.mxu0 0
      %365 = vmatprep.subr.bf16.mxu0 0
      %366 = vmatpush1.bf16.msra.mxu0 0
      %367 = vmatprep.subr.bf16.mxu0 0
      %368 = vmatpush1.bf16.msra.mxu0 0
      %369 = vmatprep.subr.bf16.mxu0 0
      %370 = vmatpush1.bf16.msra.mxu0 0
      %371 = vmatprep.subr.bf16.mxu0 0
      %372 = vmatpush1.bf16.msra.mxu0 0
      %373 = vmatprep.subr.bf16.mxu0 0
      %374 = vmatpush1.bf16.msra.mxu0 0
      %375 = vmatprep.subr.bf16.mxu0 0
      %376 = vmatpush1.bf16.msra.mxu0 0
      %377 = vmatprep.subr.bf16.mxu0 0
      %378 = vmatpush1.bf16.msra.mxu0 0
      %379 = vmatprep.subr.bf16.mxu0 0
      %380 = vmatpush1.bf16.msra.mxu0 0
      %381 = vmatprep.subr.bf16.mxu0 0
      %382 = vmatpush1.bf16.msra.mxu0 0
      %383 = vmatprep.subr.bf16.mxu0 0
      %384 = vmatpush1.bf16.msra.mxu0 0
      %385 = vmatprep.subr.bf16.mxu0 0
      %386 = vmatpush1.bf16.msra.mxu0 0
      %387 = vmatprep.subr.bf16.mxu0 0
      %388 = vmatpush1.bf16.msra.mxu0 0
      %389 = vmatprep.subr.bf16.mxu0 0
      %390 = vmatpush1.bf16.msra.mxu0 0
      %391 = vmatprep.mubr.bf16.mxu0 0
      %392 = vmatmul.mubr.bf16.gmra.mrb[0].mxu0 %v316
      %v393 = vpop.f32.mrb[0].mxu0
      %v394 = vadd.f32 %v353, %v393
      %v395 = vpop.f32.mrb[0].mxu0
      %v396 = vpop.f32.mrb[0].mxu0
      %v397 = vadd.f32 %v356, %v396
      %v398 = vpop.f32.mrb[0].mxu0
      %399 = vdwg.mxu0
      %v400 = vpack.c.bf16 %v397, %v394
      %v402 = vunpack.c.l.b16 %v400
      %v403 = vunpack.c.h.b16 %v400
      %v404 = vpack.c.b16 %v402, %v402
      %v405 = vpack.c.b16 %v403, %v403
      %vm408 = vcmask 60416
      %409 = vst.msk [vmem:[%s148] sm:$0xf] %vm408, %v404
      %410 = vst.msk [vmem:[%s148 + $0x4] sm:$0xf] %vm408, %v405
      %s411 = smul.u32 2, %s13
      %p412 = scmp.lt.s32.totalorder %s411, 3
      %s413 = scalar_select %p412, %s411, 3
      %s414 = smul.addr %s413, 4
      %s415 = scalar_lea.vmem %s2, %s414
      // Predicated region
      $region29: #{densenet_forward.28} parent=27 // pred_check
        %p416 = pneg %p78
      $region30: #{densenet_forward.28} parent=27 // pred_check_branch
        %418 = sbr.rel (%p416) target = $region32
      $region31: #{densenet_forward.28} parent=27 // pred_region
        %s419 = smul.u32 2, %s13
      $region32: #{densenet_forward.28} parent=27 // pred_fallthru
        _
    $region28: #{densenet_forward.28} parent=5 // pred_fallthru
      _
    %p420 = scmp.le.s32.totalorder 2, %s8
    // Predicated region
    $region33: #{densenet_forward.28} parent=5 // pred_check
      %p421 = pneg %p420
    $region34: #{densenet_forward.28} parent=5 // pred_check_branch
      %423 = sbr.rel (%p421) target = $region36
    $region35: #{densenet_forward.28} parent=5 // pred_region
      %s424 = ssub.s32 %s8, 2
      // Predicated region
      $region37: #{densenet_forward.28} parent=35 // pred_check
        %p425 = pneg %p84
      $region38: #{densenet_forward.28} parent=35 // pred_check_branch
        %427 = sbr.rel (%p425) target = $region40
      $region39: #{densenet_forward.28} parent=35 // pred_region
        %s428 = smul.u32 2, %s14
        %p429 = scmp.lt.s32.totalorder %s428, 3
        %s430 = scalar_select %p429, %s428, 3
        %s431 = smul.addr %s430, 4
        %s432 = scalar_lea.vmem %s2, %s431
      $region40: #{densenet_forward.28} parent=35 // pred_fallthru
        _
    $region36: #{densenet_forward.28} parent=5 // pred_fallthru
      _
  $region6: #{densenet_forward.28} parent=0 // loop_footer
    %s12 = sadd.s32 1, %s8
  $region7: #{densenet_forward.28} parent=0 // loop_footer_branch
    %7 = sbr.rel target = $region3
  $region8: #{densenet_forward.28} parent=0 // loop_exit
    _

// kernel: densenet_forward.29
$region0: #{densenet_forward.29}
  #allocation0 [shape = 'u32[]', space=smem, size = 0x4, offset = 0x4, fixed_abs, tag = 'smem constant byte address 0x4 - core index']
  #allocation1 [shape = 'u32[144,128]{1,0:T(1,128)}', space=vmem, size = 0x12000, scoped, tag = 'internal scratch']
  %s0 = inlined_call_operand.vmem [shape: bf16[32,24], index: 0, kind: input, shape index: {}]
  %s1 = inlined_call_operand.vmem [shape: bf16[24,32], index: 1, kind: input, shape index: {}]
  %s2 = inlined_call_operand.vmem [shape: f32[1,24], index: 2, kind: input, shape index: {}]
  %s3 = inlined_call_operand.vmem [shape: f32[1,24], index: 3, kind: input, shape index: {}]
  %s4 = inlined_call_operand.vmem [shape: f32[1,32], index: 4, kind: input, shape index: {}]
  %s5 = inlined_call_operand.vmem [shape: f32[1,32], index: 5, kind: input, shape index: {}]
  %s6 = inlined_call_operand.vmem [shape: bf16[32,32], index: 6, kind: output, shape index: {}]
  %s7 = sld [smem:[#allocation0]]
  $region57: #{densenet_forward.29} parent=0
    _
  %s9 = ssub.s32 1, %s7
  %s10 = scalar_select 0, %s9, %s7
  loop: start=0, step=1, limit=4
  $region2: #{densenet_forward.29} parent=0 // loop_pre_header
    _
  $region3: #{densenet_forward.29} parent=0 // loop_header
    %s12 = sphi 0, %s16
    %p13 = scmp.ge.s32.totalorder %s12, 4
    %s22 = sphi 0, %s24
    %s25 = sphi 0, %s22
    %s26 = sphi 0, %s25
    %s42 = sphi 0, %s26
    %s46 = sphi 0, %s46
    %s48 = sphi 0, %s46
    %s49 = sphi 0, %s48
    %s63 = sphi 0, %s49
    %s67 = sphi 0, %s67
    %s69 = sphi 0, %s67
    %s70 = sphi 0, %s69
    %s84 = sphi 0, %s70
    %s88 = sphi 0, %s88
    %s90 = sphi 0, %s88
    %s91 = sphi 0, %s90
    %s105 = sphi 0, %s91
    %s109 = sphi 0, %s109
    %s111 = sphi 0, %s109
    %s112 = sphi 0, %s111
    %s126 = sphi 0, %s112
    %s130 = sphi 0, %s130
    %s132 = sphi 0, %s130
    %s133 = sphi 0, %s132
    %s147 = sphi 0, %s133
    %s153 = sphi 0, %s155
    %s156 = sphi 0, %s153
    %s157 = sphi 0, %s156
    %s173 = sphi 0, %s157
  $region4: #{densenet_forward.29} parent=0 // loop_header_branch
    %15 = sbr.rel (%p13) target = $region8
  $region5: #{densenet_forward.29} parent=0 // loop_body
    %s17 = ssub.s32 %s12, 1
    %s18 = ssub.s32 %s12, 2
    %s19 = sadd.s32 %s12, 1
    %s20 = ssub.s32 %s12, %s19
    %p21 = scmp.eq.s32.totalorder %s20, 0
    %s23 = sadd.s32 %s22, 1
    %s24 = scalar_select %p21, %s22, %s23
    %p27 = pneg %p21
    %p28 = scmp.eq.s32.totalorder %s12, 1
    %p29 = por %p27, %p28
    %p30 = scmp.ne.s32.totalorder %s22, %s25
    %p31 = scmp.eq.s32.totalorder %s12, 0
    %p32 = por %p30, %p31
    %p33 = scmp.ne.s32.totalorder %s22, %s25
    %p34 = scmp.eq.s32.totalorder %s17, 1
    %p35 = por %p33, %p34
    %p36 = scmp.ne.s32.totalorder %s25, %s26
    %p37 = scmp.eq.s32.totalorder %s17, 0
    %p38 = por %p36, %p37
    %p39 = scmp.ne.s32.totalorder %s25, %s26
    %p40 = scmp.eq.s32.totalorder %s18, 1
    %p41 = por %p39, %p40
    %p43 = scmp.ne.s32.totalorder %s26, %s42
    %p44 = scmp.eq.s32.totalorder %s18, 0
    %p45 = por %p43, %p44
    %s47 = sadd.s32 %s46, 1
    %p50 = scmp.eq.s32.totalorder %s12, 1
    %p51 = scmp.ne.s32.totalorder %s46, %s48
    %p52 = scmp.eq.s32.totalorder %s12, 0
    %p53 = por %p51, %p52
    %p54 = scmp.ne.s32.totalorder %s46, %s48
    %p55 = scmp.eq.s32.totalorder %s17, 1
    %p56 = por %p54, %p55
    %p57 = scmp.ne.s32.totalorder %s48, %s49
    %p58 = scmp.eq.s32.totalorder %s17, 0
    %p59 = por %p57, %p58
    %p60 = scmp.ne.s32.totalorder %s48, %s49
    %p61 = scmp.eq.s32.totalorder %s18, 1
    %p62 = por %p60, %p61
    %p64 = scmp.ne.s32.totalorder %s49, %s63
    %p65 = scmp.eq.s32.totalorder %s18, 0
    %p66 = por %p64, %p65
    %s68 = sadd.s32 %s67, 1
    %p71 = scmp.eq.s32.totalorder %s12, 1
    %p72 = scmp.ne.s32.totalorder %s67, %s69
    %p73 = scmp.eq.s32.totalorder %s12, 0
    %p74 = por %p72, %p73
    %p75 = scmp.ne.s32.totalorder %s67, %s69
    %p76 = scmp.eq.s32.totalorder %s17, 1
    %p77 = por %p75, %p76
    %p78 = scmp.ne.s32.totalorder %s69, %s70
    %p79 = scmp.eq.s32.totalorder %s17, 0
    %p80 = por %p78, %p79
    %p81 = scmp.ne.s32.totalorder %s69, %s70
    %p82 = scmp.eq.s32.totalorder %s18, 1
    %p83 = por %p81, %p82
    %p85 = scmp.ne.s32.totalorder %s70, %s84
    %p86 = scmp.eq.s32.totalorder %s18, 0
    %p87 = por %p85, %p86
    %s89 = sadd.s32 %s88, 1
    %p92 = scmp.eq.s32.totalorder %s12, 1
    %p93 = scmp.ne.s32.totalorder %s88, %s90
    %p94 = scmp.eq.s32.totalorder %s12, 0
    %p95 = por %p93, %p94
    %p96 = scmp.ne.s32.totalorder %s88, %s90
    %p97 = scmp.eq.s32.totalorder %s17, 1
    %p98 = por %p96, %p97
    %p99 = scmp.ne.s32.totalorder %s90, %s91
    %p100 = scmp.eq.s32.totalorder %s17, 0
    %p101 = por %p99, %p100
    %p102 = scmp.ne.s32.totalorder %s90, %s91
    %p103 = scmp.eq.s32.totalorder %s18, 1
    %p104 = por %p102, %p103
    %p106 = scmp.ne.s32.totalorder %s91, %s105
    %p107 = scmp.eq.s32.totalorder %s18, 0
    %p108 = por %p106, %p107
    %s110 = sadd.s32 %s109, 1
    %p113 = scmp.eq.s32.totalorder %s12, 1
    %p114 = scmp.ne.s32.totalorder %s109, %s111
    %p115 = scmp.eq.s32.totalorder %s12, 0
    %p116 = por %p114, %p115
    %p117 = scmp.ne.s32.totalorder %s109, %s111
    %p118 = scmp.eq.s32.totalorder %s17, 1
    %p119 = por %p117, %p118
    %p120 = scmp.ne.s32.totalorder %s111, %s112
    %p121 = scmp.eq.s32.totalorder %s17, 0
    %p122 = por %p120, %p121
    %p123 = scmp.ne.s32.totalorder %s111, %s112
    %p124 = scmp.eq.s32.totalorder %s18, 1
    %p125 = por %p123, %p124
    %p127 = scmp.ne.s32.totalorder %s112, %s126
    %p128 = scmp.eq.s32.totalorder %s18, 0
    %p129 = por %p127, %p128
    %s131 = sadd.s32 %s130, 1
    %p134 = scmp.eq.s32.totalorder %s12, 1
    %p135 = scmp.ne.s32.totalorder %s130, %s132
    %p136 = scmp.eq.s32.totalorder %s12, 0
    %p137 = por %p135, %p136
    %p138 = scmp.ne.s32.totalorder %s130, %s132
    %p139 = scmp.eq.s32.totalorder %s17, 1
    %p140 = por %p138, %p139
    %p141 = scmp.ne.s32.totalorder %s132, %s133
    %p142 = scmp.eq.s32.totalorder %s17, 0
    %p143 = por %p141, %p142
    %p144 = scmp.ne.s32.totalorder %s132, %s133
    %p145 = scmp.eq.s32.totalorder %s18, 1
    %p146 = por %p144, %p145
    %p148 = scmp.ne.s32.totalorder %s133, %s147
    %p149 = scmp.eq.s32.totalorder %s18, 0
    %p150 = por %p148, %p149
    %s151 = ssub.s32 %s12, %s19
    %p152 = scmp.eq.s32.totalorder %s151, 0
    %s154 = sadd.s32 %s153, 1
    %s155 = scalar_select %p152, %s153, %s154
    %p158 = pneg %p152
    %p159 = scmp.eq.s32.totalorder %s12, 1
    %p160 = por %p158, %p159
    %p161 = scmp.ne.s32.totalorder %s153, %s156
    %p162 = scmp.eq.s32.totalorder %s12, 0
    %p163 = por %p161, %p162
    %p164 = scmp.ne.s32.totalorder %s153, %s156
    %p165 = scmp.eq.s32.totalorder %s17, 1
    %p166 = por %p164, %p165
    %p167 = scmp.ne.s32.totalorder %s156, %s157
    %p168 = scmp.eq.s32.totalorder %s17, 0
    %p169 = por %p167, %p168
    %p170 = scmp.ne.s32.totalorder %s156, %s157
    %p171 = scmp.eq.s32.totalorder %s18, 1
    %p172 = por %p170, %p171
    %p174 = scmp.ne.s32.totalorder %s157, %s173
    %p175 = scmp.eq.s32.totalorder %s18, 0
    %p176 = por %p174, %p175
    %p177 = scmp.le.s32.totalorder 1, %s12
    %p178 = scmp.lt.s32.totalorder %s12, 3
    %p179 = pnand %p177, %p178
    %p180 = pneg %p179
    // Predicated region
    $region9: #{densenet_forward.29} parent=5 // pred_check
      _
    $region10: #{densenet_forward.29} parent=5 // pred_check_branch
      %182 = sbr.rel (%p179) target = $region12
    $region11: #{densenet_forward.29} parent=5 // pred_region
      %s183 = ssub.s32 %s12, 1
      // Predicated region
      $region13: #{densenet_forward.29} parent=11 // pred_check
        %p184 = pneg %p59
      $region14: #{densenet_forward.29} parent=11 // pred_check_branch
        %186 = sbr.rel (%p184) target = $region16
      $region15: #{densenet_forward.29} parent=11 // pred_region
        _
      $region16: #{densenet_forward.29} parent=11 // pred_fallthru
        _
      // Predicated region
      $region17: #{densenet_forward.29} parent=11 // pred_check
        %p187 = pneg %p80
      $region18: #{densenet_forward.29} parent=11 // pred_check_branch
        %189 = sbr.rel (%p187) target = $region20
      $region19: #{densenet_forward.29} parent=11 // pred_region
        _
      $region20: #{densenet_forward.29} parent=11 // pred_fallthru
        _
      // Predicated region
      $region21: #{densenet_forward.29} parent=11 // pred_check
        %p190 = pneg %p101
      $region22: #{densenet_forward.29} parent=11 // pred_check_branch
        %192 = sbr.rel (%p190) target = $region24
      $region23: #{densenet_forward.29} parent=11 // pred_region
        _
      $region24: #{densenet_forward.29} parent=11 // pred_fallthru
        _
      // Predicated region
      $region25: #{densenet_forward.29} parent=11 // pred_check
        %p193 = pneg %p122
      $region26: #{densenet_forward.29} parent=11 // pred_check_branch
        %195 = sbr.rel (%p193) target = $region28
      $region27: #{densenet_forward.29} parent=11 // pred_region
        _
      $region28: #{densenet_forward.29} parent=11 // pred_fallthru
        _
      // Predicated region
      $region29: #{densenet_forward.29} parent=11 // pred_check
        %p196 = pneg %p143
      $region30: #{densenet_forward.29} parent=11 // pred_check_branch
        %198 = sbr.rel (%p196) target = $region32
      $region31: #{densenet_forward.29} parent=11 // pred_region
        _
      $region32: #{densenet_forward.29} parent=11 // pred_fallthru
        _
    $region12: #{densenet_forward.29} parent=5 // pred_fallthru
      _
    %p199 = scmp.lt.s32.totalorder %s12, 2
    // Predicated region
    $region33: #{densenet_forward.29} parent=5 // pred_check
      %p200 = pneg %p199
    $region34: #{densenet_forward.29} parent=5 // pred_check_branch
      %202 = sbr.rel (%p200) target = $region36
    $region35: #{densenet_forward.29} parent=5 // pred_region
      // Predicated region
      $region37: #{densenet_forward.29} parent=35 // pred_check
        %p203 = pneg %p32
      $region38: #{densenet_forward.29} parent=35 // pred_check_branch
        %205 = sbr.rel (%p203) target = $region40
      $region39: #{densenet_forward.29} parent=35 // pred_region
        %s206 = smul.u32 2, %s12
        %p207 = scmp.lt.s32.totalorder %s206, 3
        %s208 = scalar_select %p207, %s206, 3
        %s209 = smul.addr %s208, 4
        %s210 = scalar_lea.vmem %s0, %s209
        %s211 = smul.u32 2, %s12
      $region40: #{densenet_forward.29} parent=35 // pred_fallthru
        _
    $region36: #{densenet_forward.29} parent=5 // pred_fallthru
      _
    %p212 = scmp.le.s32.totalorder 1, %s12
    %p213 = scmp.lt.s32.totalorder %s12, 3
    %p214 = pnand %p212, %p213
    %p215 = pneg %p214
    // Predicated region
    $region41: #{densenet_forward.29} parent=5 // pred_check
      _
    $region42: #{densenet_forward.29} parent=5 // pred_check_branch
      %217 = sbr.rel (%p214) target = $region44
    $region43: #{densenet_forward.29} parent=5 // pred_region
      %s218 = ssub.s32 %s12, 1
      %s219 = smul.u32 2, %s17
      %p220 = scmp.lt.s32.totalorder %s219, 3
      %s221 = scalar_select %p220, %s219, 3
      %s222 = smul.addr %s221, 4
      %s223 = scalar_lea.vmem %s0, %s222
      %p224 = pneg %p38
      %p225 = pneg %p35
      %p226 = pneg %p59
      %p227 = pneg %p56
      %p228 = pneg %p80
      %p229 = pneg %p77
      %p230 = pneg %p101
      %p231 = pneg %p98
      %p232 = pneg %p122
      %p233 = pneg %p119
      %p234 = pneg %p143
      %p235 = pneg %p140
      %p236 = pneg %p169
      %p237 = pneg %p166
      %s238 = smul.u32 2, %s17
      %p239 = scmp.lt.s32.totalorder %s238, 3
      %s240 = scalar_select %p239, %s238, 3
      %s241 = smul.addr %s240, 4
      %s242 = scalar_lea.vmem %s6, %s241
      %s243 = smul.u32 2, %s17
      %p244 = scmp.lt.s32.totalorder %s243, 3
      %s245 = scalar_select %p244, %s243, 3
      %s246 = smul.addr %s245, 4
      %s247 = scalar_lea.vmem %s0, %s246
      %s248 = smul.u32 2, %s17
      %s249 = smul.u32 2, %s17
      %p250 = scmp.lt.s32.totalorder %s249, 3
      %s251 = scalar_select %p250, %s249, 3
      %s252 = smul.addr %s251, 4
      %s253 = scalar_lea.vmem %s6, %s252
      %s254 = smul.u32 2, %s17
      %v256 = vld [vmem:[%s247] sm:$0xf]
      %v257 = vld [vmem:[%s247 + $0x4] sm:$0xf]
      %v258 = vunpack.c.l.bf16 %v256
      %v259 = vunpack.c.l.bf16 %v257
      %v260 = vld [vmem:[%s2] sm:$0x1]
      %v262 = vlaneseq
      %v263 = vshrl.u32 %v262, 7
      %v264 = vsub.s32 0, %v263
      %v265 = vrot.slane %v260, %v264
      %v267 = vmul.f32 %v258, %v265
      %v268 = vmul.f32 %v259, %v265
      %v269 = vld [vmem:[%s3] sm:$0x1]
      %v271 = vlaneseq
      %v272 = vshrl.u32 %v271, 7
      %v273 = vsub.s32 0, %v272
      %v274 = vrot.slane %v269, %v273
      %v276 = vadd.f32 %v267, %v274
      %v277 = vadd.f32 %v268, %v274
      %v278 = vmax.f32 %v276, 0.0
      %v279 = vmax.f32 %v277, 0.0
      %v280 = vpack.c.bf16 %v279, %v278
      %v281 = vld [vmem:[%s1] sm:$0xf]
      %v282 = vld [vmem:[%s1 + $0x4] sm:$0xf]
      %v283 = vld [vmem:[%s1 + $0x8] sm:$0xf]
      %v287 = vunpack.c.l.b16 %v281
      %v288 = vunpack.c.l.b16 %v282
      %v289 = vunpack.c.l.b16 %v283
      %v290 = vpack.c.b16 %v288, %v287
      %v291 = vpack.c.b16 %v289, %v289
      %vm293 = vcmask 195584
      %v295 = vsel %vm293, %v280, 0
      %vm297 = vcmask 1043456
      %v299 = vsel %vm297, %v291, 0
      %301 = vmatprep.subr.bf16.mxu0 0
      %302 = vmatpush1.bf16.msra.mxu0 %v290
      %303 = vmatprep.subr.bf16.mxu0 0
      %304 = vmatpush1.bf16.msra.mxu0 %v299
      %305 = vmatprep.subr.bf16.mxu0 0
      %306 = vmatpush1.bf16.msra.mxu0 0
      %307 = vmatprep.subr.bf16.mxu0 0
      %308 = vmatpush1.bf16.msra.mxu0 0
      %309 = vmatprep.subr.bf16.mxu0 0
      %310 = vmatpush1.bf16.msra.mxu0 0
      %311 = vmatprep.subr.bf16.mxu0 0
      %312 = vmatpush1.bf16.msra.mxu0 0
      %313 = vmatprep.subr.bf16.mxu0 0
      %314 = vmatpush1.bf16.msra.mxu0 0
      %315 = vmatprep.subr.bf16.mxu0 0
      %316 = vmatpush1.bf16.msra.mxu0 0
      %317 = vmatprep.subr.bf16.mxu0 0
      %318 = vmatpush1.bf16.msra.mxu0 0
      %319 = vmatprep.subr.bf16.mxu0 0
      %320 = vmatpush1.bf16.msra.mxu0 0
      %321 = vmatprep.subr.bf16.mxu0 0
      %322 = vmatpush1.bf16.msra.mxu0 0
      %323 = vmatprep.subr.bf16.mxu0 0
      %324 = vmatpush1.bf16.msra.mxu0 0
      %325 = vmatprep.subr.bf16.mxu0 0
      %326 = vmatpush1.bf16.msra.mxu0 0
      %327 = vmatprep.subr.bf16.mxu0 0
      %328 = vmatpush1.bf16.msra.mxu0 0
      %329 = vmatprep.subr.bf16.mxu0 0
      %330 = vmatpush1.bf16.msra.mxu0 0
      %331 = vmatprep.subr.bf16.mxu0 0
      %332 = vmatpush1.bf16.msra.mxu0 0
      %333 = vmatprep.mubr.bf16.mxu0 0
      %334 = vmatmul.mubr.bf16.gmra.mrb[0].mxu0 %v295
      %v335 = vpop.f32.mrb[0].mxu0
      %v336 = vadd.f32 0.0, %v335
      %v337 = vpop.f32.mrb[0].mxu0
      %v338 = vpop.f32.mrb[0].mxu0
      %v339 = vadd.f32 0.0, %v338
      %v340 = vpop.f32.mrb[0].mxu0
      %341 = vdwg.mxu0
      %v342 = vld [vmem:[%s4] sm:$0x1]
      %v344 = vlaneseq
      %v345 = vshrl.u32 %v344, 7
      %v346 = vsub.s32 0, %v345
      %v347 = vrot.slane %v342, %v346
      %v349 = vmul.f32 %v336, %v347
      %v350 = vmul.f32 %v339, %v347
      %v351 = vld [vmem:[%s5] sm:$0x1]
      %v353 = vlaneseq
      %v354 = vshrl.u32 %v353, 7
      %v355 = vsub.s32 0, %v354
      %v356 = vrot.slane %v351, %v355
      %v358 = vadd.f32 %v349, %v356
      %v359 = vadd.f32 %v350, %v356
      %v360 = vmax.f32 %v358, 0.0
      %v361 = vmax.f32 %v359, 0.0
      %v362 = vpack.c.bf16 %v361, %v360
      %v364 = vunpack.c.l.b16 %v362
      %v365 = vunpack.c.h.b16 %v362
      %v366 = vpack.c.b16 %v364, %v364
      %v367 = vpack.c.b16 %v365, %v365
      %vm370 = vcmask 257024
      %371 = vst.msk [vmem:[%s253] sm:$0xf] %vm370, %v366
      %372 = vst.msk [vmem:[%s253 + $0x4] sm:$0xf] %vm370, %v367
      %s373 = smul.u32 2, %s17
      %p374 = scmp.lt.s32.totalorder %s373, 3
      %s375 = scalar_select %p374, %s373, 3
      %s376 = smul.addr %s375, 4
      %s377 = scalar_lea.vmem %s6, %s376
      // Predicated region
      $region45: #{densenet_forward.29} parent=43 // pred_check
        %p378 = pneg %p166
      $region46: #{densenet_forward.29} parent=43 // pred_check_branch
        %380 = sbr.rel (%p378) target = $region48
      $region47: #{densenet_forward.29} parent=43 // pred_region
        %s381 = smul.u32 2, %s17
      $region48: #{densenet_forward.29} parent=43 // pred_fallthru
        _
    $region44: #{densenet_forward.29} parent=5 // pred_fallthru
      _
    %p382 = scmp.le.s32.totalorder 2, %s12
    // Predicated region
    $region49: #{densenet_forward.29} parent=5 // pred_check
      %p383 = pneg %p382
    $region50: #{densenet_forward.29} parent=5 // pred_check_branch
      %385 = sbr.rel (%p383) target = $region52
    $region51: #{densenet_forward.29} parent=5 // pred_region
      %s386 = ssub.s32 %s12, 2
      // Predicated region
      $region53: #{densenet_forward.29} parent=51 // pred_check
        %p387 = pneg %p172
      $region54: #{densenet_forward.29} parent=51 // pred_check_branch
        %389 = sbr.rel (%p387) target = $region56
      $region55: #{densenet_forward.29} parent=51 // pred_region
        %s390 = smul.u32 2, %s18
        %p391 = scmp.lt.s32.totalorder %s390, 3
        %s392 = scalar_select %p391, %s390, 3
        %s393 = smul.addr %s392, 4
        %s394 = scalar_lea.vmem %s6, %s393
      $region56: #{densenet_forward.29} parent=51 // pred_fallthru
        _
    $region52: #{densenet_forward.29} parent=5 // pred_fallthru
      _
  $region6: #{densenet_forward.29} parent=0 // loop_footer
    %s16 = sadd.s32 1, %s12
  $region7: #{densenet_forward.29} parent=0 // loop_footer_branch
    %11 = sbr.rel target = $region3
  $region8: #{densenet_forward.29} parent=0 // loop_exit
    _

// kernel: densenet_forward.31
$region0: #{densenet_forward.31}
  #allocation0 [shape = 'u32[]', space=smem, size = 0x4, offset = 0x4, fixed_abs, tag = 'smem constant byte address 0x4 - core index']
  #allocation1 [shape = 'u32[144,128]{1,0:T(1,128)}', space=vmem, size = 0x12000, scoped, tag = 'internal scratch']
  %s0 = inlined_call_operand.vmem [shape: bf16[32,32], index: 0, kind: input, shape index: {}]
  %s1 = inlined_call_operand.vmem [shape: bf16[32,16], index: 1, kind: input, shape index: {}]
  %s2 = inlined_call_operand.vmem [shape: f32[1,32], index: 2, kind: input, shape index: {}]
  %s3 = inlined_call_operand.vmem [shape: f32[1,32], index: 3, kind: input, shape index: {}]
  %s4 = inlined_call_operand.vmem [shape: bf16[32,16], index: 4, kind: output, shape index: {}]
  %s5 = sld [smem:[#allocation0]]
  $region49: #{densenet_forward.31} parent=0
    _
  %s7 = ssub.s32 1, %s5
  %s8 = scalar_select 0, %s7, %s5
  loop: start=0, step=1, limit=4
  $region2: #{densenet_forward.31} parent=0 // loop_pre_header
    _
  $region3: #{densenet_forward.31} parent=0 // loop_header
    %s10 = sphi 0, %s14
    %p11 = scmp.ge.s32.totalorder %s10, 4
    %s20 = sphi 0, %s22
    %s23 = sphi 0, %s20
    %s24 = sphi 0, %s23
    %s40 = sphi 0, %s24
    %s44 = sphi 0, %s44
    %s46 = sphi 0, %s44
    %s47 = sphi 0, %s46
    %s61 = sphi 0, %s47
    %s65 = sphi 0, %s65
    %s67 = sphi 0, %s65
    %s68 = sphi 0, %s67
    %s82 = sphi 0, %s68
    %s86 = sphi 0, %s86
    %s88 = sphi 0, %s86
    %s89 = sphi 0, %s88
    %s103 = sphi 0, %s89
    %s109 = sphi 0, %s111
    %s112 = sphi 0, %s109
    %s113 = sphi 0, %s112
    %s129 = sphi 0, %s113
  $region4: #{densenet_forward.31} parent=0 // loop_header_branch
    %13 = sbr.rel (%p11) target = $region8
  $region5: #{densenet_forward.31} parent=0 // loop_body
    %s15 = ssub.s32 %s10, 1
    %s16 = ssub.s32 %s10, 2
    %s17 = sadd.s32 %s10, 1
    %s18 = ssub.s32 %s10, %s17
    %p19 = scmp.eq.s32.totalorder %s18, 0
    %s21 = sadd.s32 %s20, 1
    %s22 = scalar_select %p19, %s20, %s21
    %p25 = pneg %p19
    %p26 = scmp.eq.s32.totalorder %s10, 1
    %p27 = por %p25, %p26
    %p28 = scmp.ne.s32.totalorder %s20, %s23
    %p29 = scmp.eq.s32.totalorder %s10, 0
    %p30 = por %p28, %p29
    %p31 = scmp.ne.s32.totalorder %s20, %s23
    %p32 = scmp.eq.s32.totalorder %s15, 1
    %p33 = por %p31, %p32
    %p34 = scmp.ne.s32.totalorder %s23, %s24
    %p35 = scmp.eq.s32.totalorder %s15, 0
    %p36 = por %p34, %p35
    %p37 = scmp.ne.s32.totalorder %s23, %s24
    %p38 = scmp.eq.s32.totalorder %s16, 1
    %p39 = por %p37, %p38
    %p41 = scmp.ne.s32.totalorder %s24, %s40
    %p42 = scmp.eq.s32.totalorder %s16, 0
    %p43 = por %p41, %p42
    %s45 = sadd.s32 %s44, 1
    %p48 = scmp.eq.s32.totalorder %s10, 1
    %p49 = scmp.ne.s32.totalorder %s44, %s46
    %p50 = scmp.eq.s32.totalorder %s10, 0
    %p51 = por %p49, %p50
    %p52 = scmp.ne.s32.totalorder %s44, %s46
    %p53 = scmp.eq.s32.totalorder %s15, 1
    %p54 = por %p52, %p53
    %p55 = scmp.ne.s32.totalorder %s46, %s47
    %p56 = scmp.eq.s32.totalorder %s15, 0
    %p57 = por %p55, %p56
    %p58 = scmp.ne.s32.totalorder %s46, %s47
    %p59 = scmp.eq.s32.totalorder %s16, 1
    %p60 = por %p58, %p59
    %p62 = scmp.ne.s32.totalorder %s47, %s61
    %p63 = scmp.eq.s32.totalorder %s16, 0
    %p64 = por %p62, %p63
    %s66 = sadd.s32 %s65, 1
    %p69 = scmp.eq.s32.totalorder %s10, 1
    %p70 = scmp.ne.s32.totalorder %s65, %s67
    %p71 = scmp.eq.s32.totalorder %s10, 0
    %p72 = por %p70, %p71
    %p73 = scmp.ne.s32.totalorder %s65, %s67
    %p74 = scmp.eq.s32.totalorder %s15, 1
    %p75 = por %p73, %p74
    %p76 = scmp.ne.s32.totalorder %s67, %s68
    %p77 = scmp.eq.s32.totalorder %s15, 0
    %p78 = por %p76, %p77
    %p79 = scmp.ne.s32.totalorder %s67, %s68
    %p80 = scmp.eq.s32.totalorder %s16, 1
    %p81 = por %p79, %p80
    %p83 = scmp.ne.s32.totalorder %s68, %s82
    %p84 = scmp.eq.s32.totalorder %s16, 0
    %p85 = por %p83, %p84
    %s87 = sadd.s32 %s86, 1
    %p90 = scmp.eq.s32.totalorder %s10, 1
    %p91 = scmp.ne.s32.totalorder %s86, %s88
    %p92 = scmp.eq.s32.totalorder %s10, 0
    %p93 = por %p91, %p92
    %p94 = scmp.ne.s32.totalorder %s86, %s88
    %p95 = scmp.eq.s32.totalorder %s15, 1
    %p96 = por %p94, %p95
    %p97 = scmp.ne.s32.totalorder %s88, %s89
    %p98 = scmp.eq.s32.totalorder %s15, 0
    %p99 = por %p97, %p98
    %p100 = scmp.ne.s32.totalorder %s88, %s89
    %p101 = scmp.eq.s32.totalorder %s16, 1
    %p102 = por %p100, %p101
    %p104 = scmp.ne.s32.totalorder %s89, %s103
    %p105 = scmp.eq.s32.totalorder %s16, 0
    %p106 = por %p104, %p105
    %s107 = ssub.s32 %s10, %s17
    %p108 = scmp.eq.s32.totalorder %s107, 0
    %s110 = sadd.s32 %s109, 1
    %s111 = scalar_select %p108, %s109, %s110
    %p114 = pneg %p108
    %p115 = scmp.eq.s32.totalorder %s10, 1
    %p116 = por %p114, %p115
    %p117 = scmp.ne.s32.totalorder %s109, %s112
    %p118 = scmp.eq.s32.totalorder %s10, 0
    %p119 = por %p117, %p118
    %p120 = scmp.ne.s32.totalorder %s109, %s112
    %p121 = scmp.eq.s32.totalorder %s15, 1
    %p122 = por %p120, %p121
    %p123 = scmp.ne.s32.totalorder %s112, %s113
    %p124 = scmp.eq.s32.totalorder %s15, 0
    %p125 = por %p123, %p124
    %p126 = scmp.ne.s32.totalorder %s112, %s113
    %p127 = scmp.eq.s32.totalorder %s16, 1
    %p128 = por %p126, %p127
    %p130 = scmp.ne.s32.totalorder %s113, %s129
    %p131 = scmp.eq.s32.totalorder %s16, 0
    %p132 = por %p130, %p131
    %p133 = scmp.le.s32.totalorder 1, %s10
    %p134 = scmp.lt.s32.totalorder %s10, 3
    %p135 = pnand %p133, %p134
    %p136 = pneg %p135
    // Predicated region
    $region9: #{densenet_forward.31} parent=5 // pred_check
      _
    $region10: #{densenet_forward.31} parent=5 // pred_check_branch
      %138 = sbr.rel (%p135) target = $region12
    $region11: #{densenet_forward.31} parent=5 // pred_region
      %s139 = ssub.s32 %s10, 1
      // Predicated region
      $region13: #{densenet_forward.31} parent=11 // pred_check
        %p140 = pneg %p57
      $region14: #{densenet_forward.31} parent=11 // pred_check_branch
        %142 = sbr.rel (%p140) target = $region16
      $region15: #{densenet_forward.31} parent=11 // pred_region
        _
      $region16: #{densenet_forward.31} parent=11 // pred_fallthru
        _
      // Predicated region
      $region17: #{densenet_forward.31} parent=11 // pred_check
        %p143 = pneg %p78
      $region18: #{densenet_forward.31} parent=11 // pred_check_branch
        %145 = sbr.rel (%p143) target = $region20
      $region19: #{densenet_forward.31} parent=11 // pred_region
        _
      $region20: #{densenet_forward.31} parent=11 // pred_fallthru
        _
      // Predicated region
      $region21: #{densenet_forward.31} parent=11 // pred_check
        %p146 = pneg %p99
      $region22: #{densenet_forward.31} parent=11 // pred_check_branch
        %148 = sbr.rel (%p146) target = $region24
      $region23: #{densenet_forward.31} parent=11 // pred_region
        _
      $region24: #{densenet_forward.31} parent=11 // pred_fallthru
        _
    $region12: #{densenet_forward.31} parent=5 // pred_fallthru
      _
    %p149 = scmp.lt.s32.totalorder %s10, 2
    // Predicated region
    $region25: #{densenet_forward.31} parent=5 // pred_check
      %p150 = pneg %p149
    $region26: #{densenet_forward.31} parent=5 // pred_check_branch
      %152 = sbr.rel (%p150) target = $region28
    $region27: #{densenet_forward.31} parent=5 // pred_region
      // Predicated region
      $region29: #{densenet_forward.31} parent=27 // pred_check
        %p153 = pneg %p30
      $region30: #{densenet_forward.31} parent=27 // pred_check_branch
        %155 = sbr.rel (%p153) target = $region32
      $region31: #{densenet_forward.31} parent=27 // pred_region
        %s156 = smul.u32 2, %s10
        %p157 = scmp.lt.s32.totalorder %s156, 3
        %s158 = scalar_select %p157, %s156, 3
        %s159 = smul.addr %s158, 4
        %s160 = scalar_lea.vmem %s0, %s159
        %s161 = smul.u32 2, %s10
      $region32: #{densenet_forward.31} parent=27 // pred_fallthru
        _
    $region28: #{densenet_forward.31} parent=5 // pred_fallthru
      _
    %p162 = scmp.le.s32.totalorder 1, %s10
    %p163 = scmp.lt.s32.totalorder %s10, 3
    %p164 = pnand %p162, %p163
    %p165 = pneg %p164
    // Predicated region
    $region33: #{densenet_forward.31} parent=5 // pred_check
      _
    $region34: #{densenet_forward.31} parent=5 // pred_check_branch
      %167 = sbr.rel (%p164) target = $region36
    $region35: #{densenet_forward.31} parent=5 // pred_region
      %s168 = ssub.s32 %s10, 1
      %s169 = smul.u32 2, %s15
      %p170 = scmp.lt.s32.totalorder %s169, 3
      %s171 = scalar_select %p170, %s169, 3
      %s172 = smul.addr %s171, 4
      %s173 = scalar_lea.vmem %s0, %s172
      %p174 = pneg %p36
      %p175 = pneg %p33
      %p176 = pneg %p57
      %p177 = pneg %p54
      %p178 = pneg %p78
      %p179 = pneg %p75
      %p180 = pneg %p99
      %p181 = pneg %p96
      %p182 = pneg %p125
      %p183 = pneg %p122
      %s184 = smul.u32 2, %s15
      %p185 = scmp.lt.s32.totalorder %s184, 3
      %s186 = scalar_select %p185, %s184, 3
      %s187 = smul.addr %s186, 4
      %s188 = scalar_lea.vmem %s4, %s187
      %s189 = smul.u32 2, %s15
      %p190 = scmp.lt.s32.totalorder %s189, 3
      %s191 = scalar_select %p190, %s189, 3
      %s192 = smul.addr %s191, 4
      %s193 = scalar_lea.vmem %s0, %s192
      %s194 = smul.u32 2, %s15
      %s195 = smul.u32 2, %s15
      %p196 = scmp.lt.s32.totalorder %s195, 3
      %s197 = scalar_select %p196, %s195, 3
      %s198 = smul.addr %s197, 4
      %s199 = scalar_lea.vmem %s4, %s198
      %s200 = smul.u32 2, %s15
      %v202 = vld [vmem:[%s193] sm:$0xf]
      %v203 = vld [vmem:[%s193 + $0x4] sm:$0xf]
      %v204 = vunpack.c.l.bf16 %v202
      %v205 = vunpack.c.l.bf16 %v203
      %v206 = vld [vmem:[%s2] sm:$0x1]
      %v208 = vlaneseq
      %v209 = vshrl.u32 %v208, 7
      %v210 = vsub.s32 0, %v209
      %v211 = vrot.slane %v206, %v210
      %v213 = vmul.f32 %v204, %v211
      %v214 = vmul.f32 %v205, %v211
      %v215 = vld [vmem:[%s3] sm:$0x1]
      %v217 = vlaneseq
      %v218 = vshrl.u32 %v217, 7
      %v219 = vsub.s32 0, %v218
      %v220 = vrot.slane %v215, %v219
      %v222 = vadd.f32 %v213, %v220
      %v223 = vadd.f32 %v214, %v220
      %v224 = vmax.f32 %v222, 0.0
      %v225 = vmax.f32 %v223, 0.0
      %v226 = vpack.c.bf16 %v225, %v224
      %v227 = vld [vmem:[%s1] sm:$0xf]
      %v228 = vld [vmem:[%s1 + $0x4] sm:$0xf]
      %v229 = vld [vmem:[%s1 + $0x8] sm:$0xf]
      %v230 = vld [vmem:[%s1 + $0xc] sm:$0xf]
      %v235 = vunpack.c.l.b16 %v227
      %v236 = vunpack.c.l.b16 %v228
      %v237 = vunpack.c.l.b16 %v229
      %v238 = vunpack.c.l.b16 %v230
      %v239 = vpack.c.b16 %v236, %v235
      %v240 = vpack.c.b16 %v238, %v237
      %vm243 = vcmask 261120
      %v245 = vsel %vm243, %v226, 0
      %247 = vmatprep.subr.bf16.mxu0 0
      %248 = vmatpush1.bf16.msra.mxu0 %v239
      %249 = vmatprep.subr.bf16.mxu0 0
      %250 = vmatpush1.bf16.msra.mxu0 %v240
      %251 = vmatprep.subr.bf16.mxu0 0
      %252 = vmatpush1.bf16.msra.mxu0 0
      %253 = vmatprep.subr.bf16.mxu0 0
      %254 = vmatpush1.bf16.msra.mxu0 0
      %255 = vmatprep.subr.bf16.mxu0 0
      %256 = vmatpush1.bf16.msra.mxu0 0
      %257 = vmatprep.subr.bf16.mxu0 0
      %258 = vmatpush1.bf16.msra.mxu0 0
      %259 = vmatprep.subr.bf16.mxu0 0
      %260 = vmatpush1.bf16.msra.mxu0 0
      %261 = vmatprep.subr.bf16.mxu0 0
      %262 = vmatpush1.bf16.msra.mxu0 0
      %263 = vmatprep.subr.bf16.mxu0 0
      %264 = vmatpush1.bf16.msra.mxu0 0
      %265 = vmatprep.subr.bf16.mxu0 0
      %266 = vmatpush1.bf16.msra.mxu0 0
      %267 = vmatprep.subr.bf16.mxu0 0
      %268 = vmatpush1.bf16.msra.mxu0 0
      %269 = vmatprep.subr.bf16.mxu0 0
      %270 = vmatpush1.bf16.msra.mxu0 0
      %271 = vmatprep.subr.bf16.mxu0 0
      %272 = vmatpush1.bf16.msra.mxu0 0
      %273 = vmatprep.subr.bf16.mxu0 0
      %274 = vmatpush1.bf16.msra.mxu0 0
      %275 = vmatprep.subr.bf16.mxu0 0
      %276 = vmatpush1.bf16.msra.mxu0 0
      %277 = vmatprep.subr.bf16.mxu0 0
      %278 = vmatpush1.bf16.msra.mxu0 0
      %279 = vmatprep.mubr.bf16.mxu0 0
      %280 = vmatmul.mubr.bf16.gmra.mrb[0].mxu0 %v245
      %v281 = vpop.f32.mrb[0].mxu0
      %v282 = vadd.f32 0.0, %v281
      %v283 = vpop.f32.mrb[0].mxu0
      %v284 = vpop.f32.mrb[0].mxu0
      %v285 = vadd.f32 0.0, %v284
      %v286 = vpop.f32.mrb[0].mxu0
      %287 = vdwg.mxu0
      %v288 = vpack.c.bf16 %v285, %v282
      %v290 = vunpack.c.l.b16 %v288
      %v291 = vunpack.c.h.b16 %v288
      %v292 = vpack.c.b16 %v290, %v290
      %v293 = vpack.c.b16 %v291, %v291
      %vm296 = vcmask 125952
      %297 = vst.msk [vmem:[%s199] sm:$0xf] %vm296, %v292
      %298 = vst.msk [vmem:[%s199 + $0x4] sm:$0xf] %vm296, %v293
      %s299 = smul.u32 2, %s15
      %p300 = scmp.lt.s32.totalorder %s299, 3
      %s301 = scalar_select %p300, %s299, 3
      %s302 = smul.addr %s301, 4
      %s303 = scalar_lea.vmem %s4, %s302
      // Predicated region
      $region37: #{densenet_forward.31} parent=35 // pred_check
        %p304 = pneg %p122
      $region38: #{densenet_forward.31} parent=35 // pred_check_branch
        %306 = sbr.rel (%p304) target = $region40
      $region39: #{densenet_forward.31} parent=35 // pred_region
        %s307 = smul.u32 2, %s15
      $region40: #{densenet_forward.31} parent=35 // pred_fallthru
        _
    $region36: #{densenet_forward.31} parent=5 // pred_fallthru
      _
    %p308 = scmp.le.s32.totalorder 2, %s10
    // Predicated region
    $region41: #{densenet_forward.31} parent=5 // pred_check
      %p309 = pneg %p308
    $region42: #{densenet_forward.31} parent=5 // pred_check_branch
      %311 = sbr.rel (%p309) target = $region44
    $region43: #{densenet_forward.31} parent=5 // pred_region
      %s312 = ssub.s32 %s10, 2
      // Predicated region
      $region45: #{densenet_forward.31} parent=43 // pred_check
        %p313 = pneg %p128
      $region46: #{densenet_forward.31} parent=43 // pred_check_branch
        %315 = sbr.rel (%p313) target = $region48
      $region47: #{densenet_forward.31} parent=43 // pred_region
        %s316 = smul.u32 2, %s16
        %p317 = scmp.lt.s32.totalorder %s316, 3
        %s318 = scalar_select %p317, %s316, 3
        %s319 = smul.addr %s318, 4
        %s320 = scalar_lea.vmem %s4, %s319
      $region48: #{densenet_forward.31} parent=43 // pred_fallthru
        _
    $region44: #{densenet_forward.31} parent=5 // pred_fallthru
      _
  $region6: #{densenet_forward.31} parent=0 // loop_footer
    %s14 = sadd.s32 1, %s10
  $region7: #{densenet_forward.31} parent=0 // loop_footer_branch
    %9 = sbr.rel target = $region3
  $region8: #{densenet_forward.31} parent=0 // loop_exit
    _

// kernel: densenet_forward.32
$region0: #{densenet_forward.32}
  #allocation0 [shape = 'u32[]', space=smem, size = 0x4, offset = 0x4, fixed_abs, tag = 'smem constant byte address 0x4 - core index']
  #allocation1 [shape = 'u32[144,128]{1,0:T(1,128)}', space=vmem, size = 0x12000, scoped, tag = 'internal scratch']
  %s0 = inlined_call_operand.vmem [shape: bf16[8,16], index: 0, kind: input, shape index: {}]
  %s1 = inlined_call_operand.vmem [shape: bf16[16,32], index: 1, kind: input, shape index: {}]
  %s2 = inlined_call_operand.vmem [shape: f32[1,16], index: 2, kind: input, shape index: {}]
  %s3 = inlined_call_operand.vmem [shape: f32[1,16], index: 3, kind: input, shape index: {}]
  %s4 = inlined_call_operand.vmem [shape: f32[1,32], index: 4, kind: input, shape index: {}]
  %s5 = inlined_call_operand.vmem [shape: f32[1,32], index: 5, kind: input, shape index: {}]
  %s6 = inlined_call_operand.vmem [shape: bf16[8,32], index: 6, kind: output, shape index: {}]
  %s7 = sld [smem:[#allocation0]]
  $region34: #{densenet_forward.32} parent=0
    _
  %s9 = ssub.s32 1, %s7
  %s10 = scalar_select 0, %s9, %s7
  // Predicated region
  $region2: #{densenet_forward.32} parent=0 // pred_check
    _
  $region3: #{densenet_forward.32} parent=0 // pred_check_branch
    %12 = sbr.rel (0) target = $region5
  $region4: #{densenet_forward.32} parent=0 // pred_region
    _
  $region5: #{densenet_forward.32} parent=0 // pred_fallthru
    _
  // Predicated region
  $region6: #{densenet_forward.32} parent=0 // pred_check
    _
  $region7: #{densenet_forward.32} parent=0 // pred_check_branch
    %14 = sbr.rel (0) target = $region9
  $region8: #{densenet_forward.32} parent=0 // pred_region
    _
  $region9: #{densenet_forward.32} parent=0 // pred_fallthru
    _
  // Predicated region
  $region10: #{densenet_forward.32} parent=0 // pred_check
    _
  $region11: #{densenet_forward.32} parent=0 // pred_check_branch
    %16 = sbr.rel (0) target = $region13
  $region12: #{densenet_forward.32} parent=0 // pred_region
    _
  $region13: #{densenet_forward.32} parent=0 // pred_fallthru
    _
  // Predicated region
  $region14: #{densenet_forward.32} parent=0 // pred_check
    _
  $region15: #{densenet_forward.32} parent=0 // pred_check_branch
    %18 = sbr.rel (0) target = $region17
  $region16: #{densenet_forward.32} parent=0 // pred_region
    _
  $region17: #{densenet_forward.32} parent=0 // pred_fallthru
    _
  // Predicated region
  $region18: #{densenet_forward.32} parent=0 // pred_check
    _
  $region19: #{densenet_forward.32} parent=0 // pred_check_branch
    %20 = sbr.rel (0) target = $region21
  $region20: #{densenet_forward.32} parent=0 // pred_region
    _
  $region21: #{densenet_forward.32} parent=0 // pred_fallthru
    _
  // Predicated region
  $region22: #{densenet_forward.32} parent=0 // pred_check
    _
  $region23: #{densenet_forward.32} parent=0 // pred_check_branch
    %22 = sbr.rel (0) target = $region25
  $region24: #{densenet_forward.32} parent=0 // pred_region
    _
  $region25: #{densenet_forward.32} parent=0 // pred_fallthru
    _
  %v24 = vld [vmem:[%s0] sm:$0xf]
  %v25 = vunpack.c.l.bf16 %v24
  %v26 = vld [vmem:[%s2] sm:$0x1]
  %v28 = vlaneseq
  %v29 = vshrl.u32 %v28, 7
  %v30 = vsub.s32 0, %v29
  %v31 = vrot.slane %v26, %v30
  %v33 = vmul.f32 %v25, %v31
  %v34 = vld [vmem:[%s3] sm:$0x1]
  %v36 = vlaneseq
  %v37 = vshrl.u32 %v36, 7
  %v38 = vsub.s32 0, %v37
  %v39 = vrot.slane %v34, %v38
  %v41 = vadd.f32 %v33, %v39
  %v42 = vmax.f32 %v41, 0.0
  %v43 = vpack.c.bf16 %v42, %v42
  %v44 = vld [vmem:[%s1] sm:$0xf]
  %v45 = vld [vmem:[%s1 + $0x4] sm:$0xf]
  %v48 = vunpack.c.l.b16 %v44
  %v49 = vunpack.c.l.b16 %v45
  %v50 = vpack.c.b16 %v49, %v48
  %vm52 = vcmask 130048
  %v54 = vsel %vm52, %v43, 0
  %56 = vmatprep.subr.bf16.mxu0 0
  %57 = vmatpush1.bf16.msra.mxu0 %v50
  %58 = vmatprep.subr.bf16.mxu0 0
  %59 = vmatpush1.bf16.msra.mxu0 0
  %60 = vmatprep.subr.bf16.mxu0 0
  %61 = vmatpush1.bf16.msra.mxu0 0
  %62 = vmatprep.subr.bf16.mxu0 0
  %63 = vmatpush1.bf16.msra.mxu0 0
  %64 = vmatprep.subr.bf16.mxu0 0
  %65 = vmatpush1.bf16.msra.mxu0 0
  %66 = vmatprep.subr.bf16.mxu0 0
  %67 = vmatpush1.bf16.msra.mxu0 0
  %68 = vmatprep.subr.bf16.mxu0 0
  %69 = vmatpush1.bf16.msra.mxu0 0
  %70 = vmatprep.subr.bf16.mxu0 0
  %71 = vmatpush1.bf16.msra.mxu0 0
  %72 = vmatprep.subr.bf16.mxu0 0
  %73 = vmatpush1.bf16.msra.mxu0 0
  %74 = vmatprep.subr.bf16.mxu0 0
  %75 = vmatpush1.bf16.msra.mxu0 0
  %76 = vmatprep.subr.bf16.mxu0 0
  %77 = vmatpush1.bf16.msra.mxu0 0
  %78 = vmatprep.subr.bf16.mxu0 0
  %79 = vmatpush1.bf16.msra.mxu0 0
  %80 = vmatprep.subr.bf16.mxu0 0
  %81 = vmatpush1.bf16.msra.mxu0 0
  %82 = vmatprep.subr.bf16.mxu0 0
  %83 = vmatpush1.bf16.msra.mxu0 0
  %84 = vmatprep.subr.bf16.mxu0 0
  %85 = vmatpush1.bf16.msra.mxu0 0
  %86 = vmatprep.subr.bf16.mxu0 0
  %87 = vmatpush1.bf16.msra.mxu0 0
  %88 = vmatprep.mubr.bf16.mxu0 0
  %89 = vmatmul.mubr.bf16.gmra.mrb[0].mxu0 %v54
  %v90 = vpop.f32.mrb[0].mxu0
  %v91 = vadd.f32 0.0, %v90
  %v92 = vpop.f32.mrb[0].mxu0
  %v93 = vpop.f32.mrb[0].mxu0
  %v94 = vpop.f32.mrb[0].mxu0
  %95 = vdwg.mxu0
  %v96 = vld [vmem:[%s4] sm:$0x1]
  %v98 = vlaneseq
  %v99 = vshrl.u32 %v98, 7
  %v100 = vsub.s32 0, %v99
  %v101 = vrot.slane %v96, %v100
  %v103 = vmul.f32 %v91, %v101
  %v104 = vld [vmem:[%s5] sm:$0x1]
  %v106 = vlaneseq
  %v107 = vshrl.u32 %v106, 7
  %v108 = vsub.s32 0, %v107
  %v109 = vrot.slane %v104, %v108
  %v111 = vadd.f32 %v103, %v109
  %v112 = vmax.f32 %v111, 0.0
  %v113 = vpack.c.bf16 %v112, %v112
  %vm114 = vcmask 257024
  %115 = vst.msk [vmem:[%s6] sm:$0xf] %vm114, %v113
  // Predicated region
  $region26: #{densenet_forward.32} parent=0 // pred_check
    _
  $region27: #{densenet_forward.32} parent=0 // pred_check_branch
    %117 = sbr.rel (0) target = $region29
  $region28: #{densenet_forward.32} parent=0 // pred_region
    _
  $region29: #{densenet_forward.32} parent=0 // pred_fallthru
    _
  // Predicated region
  $region30: #{densenet_forward.32} parent=0 // pred_check
    _
  $region31: #{densenet_forward.32} parent=0 // pred_check_branch
    %119 = sbr.rel (0) target = $region33
  $region32: #{densenet_forward.32} parent=0 // pred_region
    _
  $region33: #{densenet_forward.32} parent=0 // pred_fallthru
    _

// kernel: densenet_forward.33
$region0: #{densenet_forward.33}
  #allocation0 [shape = 'u32[]', space=smem, size = 0x4, offset = 0x4, fixed_abs, tag = 'smem constant byte address 0x4 - core index']
  #allocation1 [shape = 'u32[144,128]{1,0:T(1,128)}', space=vmem, size = 0x12000, scoped, tag = 'internal scratch']
  %s0 = inlined_call_operand.vmem [shape: bf16[8,288], index: 0, kind: input, shape index: {}]
  %s1 = inlined_call_operand.vmem [shape: bf16[288,8], index: 1, kind: input, shape index: {}]
  %s2 = inlined_call_operand.vmem [shape: bf16[8,8], index: 2, kind: output, shape index: {}]
  %s3 = sld [smem:[#allocation0]]
  $region18: #{densenet_forward.33} parent=0
    _
  %s5 = ssub.s32 1, %s3
  %s6 = scalar_select 0, %s5, %s3
  // Predicated region
  $region2: #{densenet_forward.33} parent=0 // pred_check
    _
  $region3: #{densenet_forward.33} parent=0 // pred_check_branch
    %8 = sbr.rel (0) target = $region5
  $region4: #{densenet_forward.33} parent=0 // pred_region
    _
  $region5: #{densenet_forward.33} parent=0 // pred_fallthru
    _
  // Predicated region
  $region6: #{densenet_forward.33} parent=0 // pred_check
    _
  $region7: #{densenet_forward.33} parent=0 // pred_check_branch
    %10 = sbr.rel (0) target = $region9
  $region8: #{densenet_forward.33} parent=0 // pred_region
    _
  $region9: #{densenet_forward.33} parent=0 // pred_fallthru
    _
  %v12 = vld [vmem:[%s0] sm:$0xff]
  %v13 = vld [vmem:[%s0 + $0x8] sm:$0xf]
  %v14 = vld [vmem:[%s1] sm:$0xf]
  %v15 = vld [vmem:[%s1 + $0x4] sm:$0xf]
  %v16 = vld [vmem:[%s1 + $0x8] sm:$0xf]
  %v17 = vld [vmem:[%s1 + $0xc] sm:$0xf]
  %v18 = vld [vmem:[%s1 + $0x10] sm:$0xf]
  %v19 = vld [vmem:[%s1 + $0x14] sm:$0xf]
  %v20 = vld [vmem:[%s1 + $0x18] sm:$0xf]
  %v21 = vld [vmem:[%s1 + $0x1c] sm:$0xf]
  %v22 = vld [vmem:[%s1 + $0x20] sm:$0xf]
  %v23 = vld [vmem:[%s1 + $0x24] sm:$0xf]
  %v24 = vld [vmem:[%s1 + $0x28] sm:$0xf]
  %v25 = vld [vmem:[%s1 + $0x2c] sm:$0xf]
  %v26 = vld [vmem:[%s1 + $0x30] sm:$0xf]
  %v27 = vld [vmem:[%s1 + $0x34] sm:$0xf]
  %v28 = vld [vmem:[%s1 + $0x38] sm:$0xf]
  %v29 = vld [vmem:[%s1 + $0x3c] sm:$0xf]
  %v30 = vld [vmem:[%s1 + $0x40] sm:$0xf]
  %v31 = vld [vmem:[%s1 + $0x44] sm:$0xf]
  %v32 = vld [vmem:[%s1 + $0x48] sm:$0xf]
  %v33 = vld [vmem:[%s1 + $0x4c] sm:$0xf]
  %v34 = vld [vmem:[%s1 + $0x50] sm:$0xf]
  %v35 = vld [vmem:[%s1 + $0x54] sm:$0xf]
  %v36 = vld [vmem:[%s1 + $0x58] sm:$0xf]
  %v37 = vld [vmem:[%s1 + $0x5c] sm:$0xf]
  %v38 = vld [vmem:[%s1 + $0x60] sm:$0xf]
  %v39 = vld [vmem:[%s1 + $0x64] sm:$0xf]
  %v40 = vld [vmem:[%s1 + $0x68] sm:$0xf]
  %v41 = vld [vmem:[%s1 + $0x6c] sm:$0xf]
  %v42 = vld [vmem:[%s1 + $0x70] sm:$0xf]
  %v43 = vld [vmem:[%s1 + $0x74] sm:$0xf]
  %v44 = vld [vmem:[%s1 + $0x78] sm:$0xf]
  %v45 = vld [vmem:[%s1 + $0x7c] sm:$0xf]
  %v46 = vld [vmem:[%s1 + $0x80] sm:$0xf]
  %v47 = vld [vmem:[%s1 + $0x84] sm:$0xf]
  %v48 = vld [vmem:[%s1 + $0x88] sm:$0xf]
  %v49 = vld [vmem:[%s1 + $0x8c] sm:$0xf]
  %v52 = vunpack.c.l.b16 %v12
  %v53 = vunpack.c.h.b16 %v12
  %v54 = vunpack.c.l.b16 %v13
  %v55 = vpack.c.b16 %v52, %v52
  %v56 = vpack.c.b16 %v53, %v53
  %v57 = vpack.c.b16 %v54, %v54
  %v96 = vunpack.c.l.b16 %v14
  %v97 = vunpack.c.l.b16 %v15
  %v98 = vunpack.c.l.b16 %v16
  %v99 = vunpack.c.l.b16 %v17
  %v100 = vunpack.c.l.b16 %v18
  %v101 = vunpack.c.l.b16 %v19
  %v102 = vunpack.c.l.b16 %v20
  %v103 = vunpack.c.l.b16 %v21
  %v104 = vunpack.c.l.b16 %v22
  %v105 = vunpack.c.l.b16 %v23
  %v106 = vunpack.c.l.b16 %v24
  %v107 = vunpack.c.l.b16 %v25
  %v108 = vunpack.c.l.b16 %v26
  %v109 = vunpack.c.l.b16 %v27
  %v110 = vunpack.c.l.b16 %v28
  %v111 = vunpack.c.l.b16 %v29
  %v112 = vunpack.c.l.b16 %v30
  %v113 = vunpack.c.l.b16 %v31
  %v114 = vunpack.c.l.b16 %v32
  %v115 = vunpack.c.l.b16 %v33
  %v116 = vunpack.c.l.b16 %v34
  %v117 = vunpack.c.l.b16 %v35
  %v118 = vunpack.c.l.b16 %v36
  %v119 = vunpack.c.l.b16 %v37
  %v120 = vunpack.c.l.b16 %v38
  %v121 = vunpack.c.l.b16 %v39
  %v122 = vunpack.c.l.b16 %v40
  %v123 = vunpack.c.l.b16 %v41
  %v124 = vunpack.c.l.b16 %v42
  %v125 = vunpack.c.l.b16 %v43
  %v126 = vunpack.c.l.b16 %v44
  %v127 = vunpack.c.l.b16 %v45
  %v128 = vunpack.c.l.b16 %v46
  %v129 = vunpack.c.l.b16 %v47
  %v130 = vunpack.c.l.b16 %v48
  %v131 = vunpack.c.l.b16 %v49
  %v132 = vpack.c.b16 %v97, %v96
  %v133 = vpack.c.b16 %v99, %v98
  %v134 = vpack.c.b16 %v101, %v100
  %v135 = vpack.c.b16 %v103, %v102
  %v136 = vpack.c.b16 %v105, %v104
  %v137 = vpack.c.b16 %v107, %v106
  %v138 = vpack.c.b16 %v109, %v108
  %v139 = vpack.c.b16 %v111, %v110
  %v140 = vpack.c.b16 %v113, %v112
  %v141 = vpack.c.b16 %v115, %v114
  %v142 = vpack.c.b16 %v117, %v116
  %v143 = vpack.c.b16 %v119, %v118
  %v144 = vpack.c.b16 %v121, %v120
  %v145 = vpack.c.b16 %v123, %v122
  %v146 = vpack.c.b16 %v125, %v124
  %v147 = vpack.c.b16 %v127, %v126
  %v148 = vpack.c.b16 %v129, %v128
  %v149 = vpack.c.b16 %v131, %v130
  %vm168 = vcmask 261120
  %v170 = vsel %vm168, %v57, 0
  %172 = vmatprep.subr.bf16.mxu0 0
  %173 = vmatpush1.bf16.msra.mxu0 %v132
  %174 = vmatprep.subr.bf16.mxu0 0
  %175 = vmatpush1.bf16.msra.mxu0 %v133
  %176 = vmatprep.subr.bf16.mxu0 0
  %177 = vmatpush1.bf16.msra.mxu0 %v134
  %178 = vmatprep.subr.bf16.mxu0 0
  %179 = vmatpush1.bf16.msra.mxu0 %v135
  %180 = vmatprep.subr.bf16.mxu0 0
  %181 = vmatpush1.bf16.msra.mxu0 %v136
  %182 = vmatprep.subr.bf16.mxu0 0
  %183 = vmatpush1.bf16.msra.mxu0 %v137
  %184 = vmatprep.subr.bf16.mxu0 0
  %185 = vmatpush1.bf16.msra.mxu0 %v138
  %186 = vmatprep.subr.bf16.mxu0 0
  %187 = vmatpush1.bf16.msra.mxu0 %v139
  %188 = vmatprep.subr.bf16.mxu0 0
  %189 = vmatpush1.bf16.msra.mxu0 %v140
  %190 = vmatprep.subr.bf16.mxu0 0
  %191 = vmatpush1.bf16.msra.mxu0 %v141
  %192 = vmatprep.subr.bf16.mxu0 0
  %193 = vmatpush1.bf16.msra.mxu0 %v142
  %194 = vmatprep.subr.bf16.mxu0 0
  %195 = vmatpush1.bf16.msra.mxu0 %v143
  %196 = vmatprep.subr.bf16.mxu0 0
  %197 = vmatpush1.bf16.msra.mxu0 %v144
  %198 = vmatprep.subr.bf16.mxu0 0
  %199 = vmatpush1.bf16.msra.mxu0 %v145
  %200 = vmatprep.subr.bf16.mxu0 0
  %201 = vmatpush1.bf16.msra.mxu0 %v146
  %202 = vmatprep.subr.bf16.mxu0 0
  %203 = vmatpush1.bf16.msra.mxu0 %v147
  %204 = vmatprep.mubr.bf16.mxu0 %v56
  %205 = vmatmul.mubr.bf16.gmra.mrb[0].mxu0 %v55
  %v206 = vpop.f32.mrb[0].mxu0
  %v207 = vadd.f32 0.0, %v206
  %v208 = vpop.f32.mrb[0].mxu0
  %v209 = vpop.f32.mrb[0].mxu0
  %v210 = vpop.f32.mrb[0].mxu0
  %211 = vdwg.mxu0
  %212 = vmatprep.subr.bf16.mxu0 0
  %213 = vmatpush1.bf16.msra.mxu0 %v148
  %214 = vmatprep.subr.bf16.mxu0 0
  %215 = vmatpush1.bf16.msra.mxu0 %v149
  %216 = vmatprep.subr.bf16.mxu0 0
  %217 = vmatpush1.bf16.msra.mxu0 0
  %218 = vmatprep.subr.bf16.mxu0 0
  %219 = vmatpush1.bf16.msra.mxu0 0
  %220 = vmatprep.subr.bf16.mxu0 0
  %221 = vmatpush1.bf16.msra.mxu0 0
  %222 = vmatprep.subr.bf16.mxu0 0
  %223 = vmatpush1.bf16.msra.mxu0 0
  %224 = vmatprep.subr.bf16.mxu0 0
  %225 = vmatpush1.bf16.msra.mxu0 0
  %226 = vmatprep.subr.bf16.mxu0 0
  %227 = vmatpush1.bf16.msra.mxu0 0
  %228 = vmatprep.subr.bf16.mxu0 0
  %229 = vmatpush1.bf16.msra.mxu0 0
  %230 = vmatprep.subr.bf16.mxu0 0
  %231 = vmatpush1.bf16.msra.mxu0 0
  %232 = vmatprep.subr.bf16.mxu0 0
  %233 = vmatpush1.bf16.msra.mxu0 0
  %234 = vmatprep.subr.bf16.mxu0 0
  %235 = vmatpush1.bf16.msra.mxu0 0
  %236 = vmatprep.subr.bf16.mxu0 0
  %237 = vmatpush1.bf16.msra.mxu0 0
  %238 = vmatprep.subr.bf16.mxu0 0
  %239 = vmatpush1.bf16.msra.mxu0 0
  %240 = vmatprep.subr.bf16.mxu0 0
  %241 = vmatpush1.bf16.msra.mxu0 0
  %242 = vmatprep.subr.bf16.mxu0 0
  %243 = vmatpush1.bf16.msra.mxu0 0
  %244 = vmatprep.mubr.bf16.mxu0 0
  %245 = vmatmul.mubr.bf16.gmra.mrb[0].mxu0 %v170
  %v246 = vpop.f32.mrb[0].mxu0
  %v247 = vadd.f32 %v207, %v246
  %v248 = vpop.f32.mrb[0].mxu0
  %v249 = vpop.f32.mrb[0].mxu0
  %v250 = vpop.f32.mrb[0].mxu0
  %251 = vdwg.mxu0
  %v252 = vpack.c.bf16 %v247, %v247
  %vm253 = vcmask 60416
  %254 = vst.msk [vmem:[%s2] sm:$0xf] %vm253, %v252
  // Predicated region
  $region10: #{densenet_forward.33} parent=0 // pred_check
    _
  $region11: #{densenet_forward.33} parent=0 // pred_check_branch
    %256 = sbr.rel (0) target = $region13
  $region12: #{densenet_forward.33} parent=0 // pred_region
    _
  $region13: #{densenet_forward.33} parent=0 // pred_fallthru
    _
  // Predicated region
  $region14: #{densenet_forward.33} parent=0 // pred_check
    _
  $region15: #{densenet_forward.33} parent=0 // pred_check_branch
    %258 = sbr.rel (0) target = $region17
  $region16: #{densenet_forward.33} parent=0 // pred_region
    _
  $region17: #{densenet_forward.33} parent=0 // pred_fallthru
    _

// kernel: densenet_forward.34
$region0: #{densenet_forward.34}
  #allocation0 [shape = 'u32[]', space=smem, size = 0x4, offset = 0x4, fixed_abs, tag = 'smem constant byte address 0x4 - core index']
  #allocation1 [shape = 'u32[144,128]{1,0:T(1,128)}', space=vmem, size = 0x12000, scoped, tag = 'internal scratch']
  %s0 = inlined_call_operand.vmem [shape: bf16[8,24], index: 0, kind: input, shape index: {}]
  %s1 = inlined_call_operand.vmem [shape: bf16[24,32], index: 1, kind: input, shape index: {}]
  %s2 = inlined_call_operand.vmem [shape: f32[1,24], index: 2, kind: input, shape index: {}]
  %s3 = inlined_call_operand.vmem [shape: f32[1,24], index: 3, kind: input, shape index: {}]
  %s4 = inlined_call_operand.vmem [shape: f32[1,32], index: 4, kind: input, shape index: {}]
  %s5 = inlined_call_operand.vmem [shape: f32[1,32], index: 5, kind: input, shape index: {}]
  %s6 = inlined_call_operand.vmem [shape: bf16[8,32], index: 6, kind: output, shape index: {}]
  %s7 = sld [smem:[#allocation0]]
  $region34: #{densenet_forward.34} parent=0
    _
  %s9 = ssub.s32 1, %s7
  %s10 = scalar_select 0, %s9, %s7
  // Predicated region
  $region2: #{densenet_forward.34} parent=0 // pred_check
    _
  $region3: #{densenet_forward.34} parent=0 // pred_check_branch
    %12 = sbr.rel (0) target = $region5
  $region4: #{densenet_forward.34} parent=0 // pred_region
    _
  $region5: #{densenet_forward.34} parent=0 // pred_fallthru
    _
  // Predicated region
  $region6: #{densenet_forward.34} parent=0 // pred_check
    _
  $region7: #{densenet_forward.34} parent=0 // pred_check_branch
    %14 = sbr.rel (0) target = $region9
  $region8: #{densenet_forward.34} parent=0 // pred_region
    _
  $region9: #{densenet_forward.34} parent=0 // pred_fallthru
    _
  // Predicated region
  $region10: #{densenet_forward.34} parent=0 // pred_check
    _
  $region11: #{densenet_forward.34} parent=0 // pred_check_branch
    %16 = sbr.rel (0) target = $region13
  $region12: #{densenet_forward.34} parent=0 // pred_region
    _
  $region13: #{densenet_forward.34} parent=0 // pred_fallthru
    _
  // Predicated region
  $region14: #{densenet_forward.34} parent=0 // pred_check
    _
  $region15: #{densenet_forward.34} parent=0 // pred_check_branch
    %18 = sbr.rel (0) target = $region17
  $region16: #{densenet_forward.34} parent=0 // pred_region
    _
  $region17: #{densenet_forward.34} parent=0 // pred_fallthru
    _
  // Predicated region
  $region18: #{densenet_forward.34} parent=0 // pred_check
    _
  $region19: #{densenet_forward.34} parent=0 // pred_check_branch
    %20 = sbr.rel (0) target = $region21
  $region20: #{densenet_forward.34} parent=0 // pred_region
    _
  $region21: #{densenet_forward.34} parent=0 // pred_fallthru
    _
  // Predicated region
  $region22: #{densenet_forward.34} parent=0 // pred_check
    _
  $region23: #{densenet_forward.34} parent=0 // pred_check_branch
    %22 = sbr.rel (0) target = $region25
  $region24: #{densenet_forward.34} parent=0 // pred_region
    _
  $region25: #{densenet_forward.34} parent=0 // pred_fallthru
    _
  %v24 = vld [vmem:[%s0] sm:$0xf]
  %v25 = vunpack.c.l.bf16 %v24
  %v26 = vld [vmem:[%s2] sm:$0x1]
  %v28 = vlaneseq
  %v29 = vshrl.u32 %v28, 7
  %v30 = vsub.s32 0, %v29
  %v31 = vrot.slane %v26, %v30
  %v33 = vmul.f32 %v25, %v31
  %v34 = vld [vmem:[%s3] sm:$0x1]
  %v36 = vlaneseq
  %v37 = vshrl.u32 %v36, 7
  %v38 = vsub.s32 0, %v37
  %v39 = vrot.slane %v34, %v38
  %v41 = vadd.f32 %v33, %v39
  %v42 = vmax.f32 %v41, 0.0
  %v43 = vpack.c.bf16 %v42, %v42
  %v44 = vld [vmem:[%s1] sm:$0xf]
  %v45 = vld [vmem:[%s1 + $0x4] sm:$0xf]
  %v46 = vld [vmem:[%s1 + $0x8] sm:$0xf]
  %v50 = vunpack.c.l.b16 %v44
  %v51 = vunpack.c.l.b16 %v45
  %v52 = vunpack.c.l.b16 %v46
  %v53 = vpack.c.b16 %v51, %v50
  %v54 = vpack.c.b16 %v52, %v52
  %vm56 = vcmask 195584
  %v58 = vsel %vm56, %v43, 0
  %vm60 = vcmask 1043456
  %v62 = vsel %vm60, %v54, 0
  %64 = vmatprep.subr.bf16.mxu0 0
  %65 = vmatpush1.bf16.msra.mxu0 %v53
  %66 = vmatprep.subr.bf16.mxu0 0
  %67 = vmatpush1.bf16.msra.mxu0 %v62
  %68 = vmatprep.subr.bf16.mxu0 0
  %69 = vmatpush1.bf16.msra.mxu0 0
  %70 = vmatprep.subr.bf16.mxu0 0
  %71 = vmatpush1.bf16.msra.mxu0 0
  %72 = vmatprep.subr.bf16.mxu0 0
  %73 = vmatpush1.bf16.msra.mxu0 0
  %74 = vmatprep.subr.bf16.mxu0 0
  %75 = vmatpush1.bf16.msra.mxu0 0
  %76 = vmatprep.subr.bf16.mxu0 0
  %77 = vmatpush1.bf16.msra.mxu0 0
  %78 = vmatprep.subr.bf16.mxu0 0
  %79 = vmatpush1.bf16.msra.mxu0 0
  %80 = vmatprep.subr.bf16.mxu0 0
  %81 = vmatpush1.bf16.msra.mxu0 0
  %82 = vmatprep.subr.bf16.mxu0 0
  %83 = vmatpush1.bf16.msra.mxu0 0
  %84 = vmatprep.subr.bf16.mxu0 0
  %85 = vmatpush1.bf16.msra.mxu0 0
  %86 = vmatprep.subr.bf16.mxu0 0
  %87 = vmatpush1.bf16.msra.mxu0 0
  %88 = vmatprep.subr.bf16.mxu0 0
  %89 = vmatpush1.bf16.msra.mxu0 0
  %90 = vmatprep.subr.bf16.mxu0 0
  %91 = vmatpush1.bf16.msra.mxu0 0
  %92 = vmatprep.subr.bf16.mxu0 0
  %93 = vmatpush1.bf16.msra.mxu0 0
  %94 = vmatprep.subr.bf16.mxu0 0
  %95 = vmatpush1.bf16.msra.mxu0 0
  %96 = vmatprep.mubr.bf16.mxu0 0
  %97 = vmatmul.mubr.bf16.gmra.mrb[0].mxu0 %v58
  %v98 = vpop.f32.mrb[0].mxu0
  %v99 = vadd.f32 0.0, %v98
  %v100 = vpop.f32.mrb[0].mxu0
  %v101 = vpop.f32.mrb[0].mxu0
  %v102 = vpop.f32.mrb[0].mxu0
  %103 = vdwg.mxu0
  %v104 = vld [vmem:[%s4] sm:$0x1]
  %v106 = vlaneseq
  %v107 = vshrl.u32 %v106, 7
  %v108 = vsub.s32 0, %v107
  %v109 = vrot.slane %v104, %v108
  %v111 = vmul.f32 %v99, %v109
  %v112 = vld [vmem:[%s5] sm:$0x1]
  %v114 = vlaneseq
  %v115 = vshrl.u32 %v114, 7
  %v116 = vsub.s32 0, %v115
  %v117 = vrot.slane %v112, %v116
  %v119 = vadd.f32 %v111, %v117
  %v120 = vmax.f32 %v119, 0.0
  %v121 = vpack.c.bf16 %v120, %v120
  %vm122 = vcmask 257024
  %123 = vst.msk [vmem:[%s6] sm:$0xf] %vm122, %v121
  // Predicated region
  $region26: #{densenet_forward.34} parent=0 // pred_check
    _
  $region27: #{densenet_forward.34} parent=0 // pred_check_branch
    %125 = sbr.rel (0) target = $region29
  $region28: #{densenet_forward.34} parent=0 // pred_region
    _
  $region29: #{densenet_forward.34} parent=0 // pred_fallthru
    _
  // Predicated region
  $region30: #{densenet_forward.34} parent=0 // pred_check
    _
  $region31: #{densenet_forward.34} parent=0 // pred_check_branch
    %127 = sbr.rel (0) target = $region33
  $region32: #{densenet_forward.34} parent=0 // pred_region
    _
  $region33: #{densenet_forward.34} parent=0 // pred_fallthru
    _

// kernel: densenet_forward.36
$region0: #{densenet_forward.36}
  #allocation0 [shape = 'u32[]', space=smem, size = 0x4, offset = 0x4, fixed_abs, tag = 'smem constant byte address 0x4 - core index']
  #allocation1 [shape = 'u32[144,128]{1,0:T(1,128)}', space=vmem, size = 0x12000, scoped, tag = 'internal scratch']
  %s0 = inlined_call_operand.vmem [shape: bf16[8,32], index: 0, kind: input, shape index: {}]
  %s1 = inlined_call_operand.vmem [shape: bf16[32,16], index: 1, kind: input, shape index: {}]
  %s2 = inlined_call_operand.vmem [shape: f32[1,32], index: 2, kind: input, shape index: {}]
  %s3 = inlined_call_operand.vmem [shape: f32[1,32], index: 3, kind: input, shape index: {}]
  %s4 = inlined_call_operand.vmem [shape: bf16[8,16], index: 4, kind: output, shape index: {}]
  %s5 = sld [smem:[#allocation0]]
  $region26: #{densenet_forward.36} parent=0
    _
  %s7 = ssub.s32 1, %s5
  %s8 = scalar_select 0, %s7, %s5
  // Predicated region
  $region2: #{densenet_forward.36} parent=0 // pred_check
    _
  $region3: #{densenet_forward.36} parent=0 // pred_check_branch
    %10 = sbr.rel (0) target = $region5
  $region4: #{densenet_forward.36} parent=0 // pred_region
    _
  $region5: #{densenet_forward.36} parent=0 // pred_fallthru
    _
  // Predicated region
  $region6: #{densenet_forward.36} parent=0 // pred_check
    _
  $region7: #{densenet_forward.36} parent=0 // pred_check_branch
    %12 = sbr.rel (0) target = $region9
  $region8: #{densenet_forward.36} parent=0 // pred_region
    _
  $region9: #{densenet_forward.36} parent=0 // pred_fallthru
    _
  // Predicated region
  $region10: #{densenet_forward.36} parent=0 // pred_check
    _
  $region11: #{densenet_forward.36} parent=0 // pred_check_branch
    %14 = sbr.rel (0) target = $region13
  $region12: #{densenet_forward.36} parent=0 // pred_region
    _
  $region13: #{densenet_forward.36} parent=0 // pred_fallthru
    _
  // Predicated region
  $region14: #{densenet_forward.36} parent=0 // pred_check
    _
  $region15: #{densenet_forward.36} parent=0 // pred_check_branch
    %16 = sbr.rel (0) target = $region17
  $region16: #{densenet_forward.36} parent=0 // pred_region
    _
  $region17: #{densenet_forward.36} parent=0 // pred_fallthru
    _
  %v18 = vld [vmem:[%s0] sm:$0xf]
  %v19 = vunpack.c.l.bf16 %v18
  %v20 = vld [vmem:[%s2] sm:$0x1]
  %v22 = vlaneseq
  %v23 = vshrl.u32 %v22, 7
  %v24 = vsub.s32 0, %v23
  %v25 = vrot.slane %v20, %v24
  %v27 = vmul.f32 %v19, %v25
  %v28 = vld [vmem:[%s3] sm:$0x1]
  %v30 = vlaneseq
  %v31 = vshrl.u32 %v30, 7
  %v32 = vsub.s32 0, %v31
  %v33 = vrot.slane %v28, %v32
  %v35 = vadd.f32 %v27, %v33
  %v36 = vmax.f32 %v35, 0.0
  %v37 = vpack.c.bf16 %v36, %v36
  %v38 = vld [vmem:[%s1] sm:$0xf]
  %v39 = vld [vmem:[%s1 + $0x4] sm:$0xf]
  %v40 = vld [vmem:[%s1 + $0x8] sm:$0xf]
  %v41 = vld [vmem:[%s1 + $0xc] sm:$0xf]
  %v46 = vunpack.c.l.b16 %v38
  %v47 = vunpack.c.l.b16 %v39
  %v48 = vunpack.c.l.b16 %v40
  %v49 = vunpack.c.l.b16 %v41
  %v50 = vpack.c.b16 %v47, %v46
  %v51 = vpack.c.b16 %v49, %v48
  %vm54 = vcmask 261120
  %v56 = vsel %vm54, %v37, 0
  %58 = vmatprep.subr.bf16.mxu0 0
  %59 = vmatpush1.bf16.msra.mxu0 %v50
  %60 = vmatprep.subr.bf16.mxu0 0
  %61 = vmatpush1.bf16.msra.mxu0 %v51
  %62 = vmatprep.subr.bf16.mxu0 0
  %63 = vmatpush1.bf16.msra.mxu0 0
  %64 = vmatprep.subr.bf16.mxu0 0
  %65 = vmatpush1.bf16.msra.mxu0 0
  %66 = vmatprep.subr.bf16.mxu0 0
  %67 = vmatpush1.bf16.msra.mxu0 0
  %68 = vmatprep.subr.bf16.mxu0 0
  %69 = vmatpush1.bf16.msra.mxu0 0
  %70 = vmatprep.subr.bf16.mxu0 0
  %71 = vmatpush1.bf16.msra.mxu0 0
  %72 = vmatprep.subr.bf16.mxu0 0
  %73 = vmatpush1.bf16.msra.mxu0 0
  %74 = vmatprep.subr.bf16.mxu0 0
  %75 = vmatpush1.bf16.msra.mxu0 0
  %76 = vmatprep.subr.bf16.mxu0 0
  %77 = vmatpush1.bf16.msra.mxu0 0
  %78 = vmatprep.subr.bf16.mxu0 0
  %79 = vmatpush1.bf16.msra.mxu0 0
  %80 = vmatprep.subr.bf16.mxu0 0
  %81 = vmatpush1.bf16.msra.mxu0 0
  %82 = vmatprep.subr.bf16.mxu0 0
  %83 = vmatpush1.bf16.msra.mxu0 0
  %84 = vmatprep.subr.bf16.mxu0 0
  %85 = vmatpush1.bf16.msra.mxu0 0
  %86 = vmatprep.subr.bf16.mxu0 0
  %87 = vmatpush1.bf16.msra.mxu0 0
  %88 = vmatprep.subr.bf16.mxu0 0
  %89 = vmatpush1.bf16.msra.mxu0 0
  %90 = vmatprep.mubr.bf16.mxu0 0
  %91 = vmatmul.mubr.bf16.gmra.mrb[0].mxu0 %v56
  %v92 = vpop.f32.mrb[0].mxu0
  %v93 = vadd.f32 0.0, %v92
  %v94 = vpop.f32.mrb[0].mxu0
  %v95 = vpop.f32.mrb[0].mxu0
  %v96 = vpop.f32.mrb[0].mxu0
  %97 = vdwg.mxu0
  %v98 = vpack.c.bf16 %v93, %v93
  %vm99 = vcmask 125952
  %100 = vst.msk [vmem:[%s4] sm:$0xf] %vm99, %v98
  // Predicated region
  $region18: #{densenet_forward.36} parent=0 // pred_check
    _
  $region19: #{densenet_forward.36} parent=0 // pred_check_branch
    %102 = sbr.rel (0) target = $region21
  $region20: #{densenet_forward.36} parent=0 // pred_region
    _
  $region21: #{densenet_forward.36} parent=0 // pred_fallthru
    _
  // Predicated region
  $region22: #{densenet_forward.36} parent=0 // pred_check
    _
  $region23: #{densenet_forward.36} parent=0 // pred_check_branch
    %104 = sbr.rel (0) target = $region25
  $region24: #{densenet_forward.36} parent=0 // pred_region
    _
  $region25: #{densenet_forward.36} parent=0 // pred_fallthru
    _

// kernel: densenet_forward.37
$region0: #{densenet_forward.37}
  #allocation0 [shape = 'u32[]', space=smem, size = 0x4, offset = 0x4, fixed_abs, tag = 'smem constant byte address 0x4 - core index']
  #allocation1 [shape = 'u32[144,128]{1,0:T(1,128)}', space=vmem, size = 0x12000, scoped, tag = 'internal scratch']
  %s0 = inlined_call_operand.vmem [shape: bf16[2,16], index: 0, kind: input, shape index: {}]
  %s1 = inlined_call_operand.vmem [shape: bf16[16,32], index: 1, kind: input, shape index: {}]
  %s2 = inlined_call_operand.vmem [shape: f32[1,16], index: 2, kind: input, shape index: {}]
  %s3 = inlined_call_operand.vmem [shape: f32[1,16], index: 3, kind: input, shape index: {}]
  %s4 = inlined_call_operand.vmem [shape: f32[1,32], index: 4, kind: input, shape index: {}]
  %s5 = inlined_call_operand.vmem [shape: f32[1,32], index: 5, kind: input, shape index: {}]
  %s6 = inlined_call_operand.vmem [shape: bf16[2,32], index: 6, kind: output, shape index: {}]
  %s7 = sld [smem:[#allocation0]]
  $region34: #{densenet_forward.37} parent=0
    _
  %s9 = ssub.s32 1, %s7
  %s10 = scalar_select 0, %s9, %s7
  // Predicated region
  $region2: #{densenet_forward.37} parent=0 // pred_check
    _
  $region3: #{densenet_forward.37} parent=0 // pred_check_branch
    %12 = sbr.rel (0) target = $region5
  $region4: #{densenet_forward.37} parent=0 // pred_region
    _
  $region5: #{densenet_forward.37} parent=0 // pred_fallthru
    _
  // Predicated region
  $region6: #{densenet_forward.37} parent=0 // pred_check
    _
  $region7: #{densenet_forward.37} parent=0 // pred_check_branch
    %14 = sbr.rel (0) target = $region9
  $region8: #{densenet_forward.37} parent=0 // pred_region
    _
  $region9: #{densenet_forward.37} parent=0 // pred_fallthru
    _
  // Predicated region
  $region10: #{densenet_forward.37} parent=0 // pred_check
    _
  $region11: #{densenet_forward.37} parent=0 // pred_check_branch
    %16 = sbr.rel (0) target = $region13
  $region12: #{densenet_forward.37} parent=0 // pred_region
    _
  $region13: #{densenet_forward.37} parent=0 // pred_fallthru
    _
  // Predicated region
  $region14: #{densenet_forward.37} parent=0 // pred_check
    _
  $region15: #{densenet_forward.37} parent=0 // pred_check_branch
    %18 = sbr.rel (0) target = $region17
  $region16: #{densenet_forward.37} parent=0 // pred_region
    _
  $region17: #{densenet_forward.37} parent=0 // pred_fallthru
    _
  // Predicated region
  $region18: #{densenet_forward.37} parent=0 // pred_check
    _
  $region19: #{densenet_forward.37} parent=0 // pred_check_branch
    %20 = sbr.rel (0) target = $region21
  $region20: #{densenet_forward.37} parent=0 // pred_region
    _
  $region21: #{densenet_forward.37} parent=0 // pred_fallthru
    _
  // Predicated region
  $region22: #{densenet_forward.37} parent=0 // pred_check
    _
  $region23: #{densenet_forward.37} parent=0 // pred_check_branch
    %22 = sbr.rel (0) target = $region25
  $region24: #{densenet_forward.37} parent=0 // pred_region
    _
  $region25: #{densenet_forward.37} parent=0 // pred_fallthru
    _
  %v24 = vld [vmem:[%s0] sm:$0x1]
  %v25 = vunpack.c.l.bf16 %v24
  %v26 = vld [vmem:[%s2] sm:$0x1]
  %v28 = vlaneseq
  %v29 = vshrl.u32 %v28, 7
  %v30 = vsub.s32 0, %v29
  %v31 = vrot.slane %v26, %v30
  %v33 = vmul.f32 %v25, %v31
  %v34 = vld [vmem:[%s3] sm:$0x1]
  %v36 = vlaneseq
  %v37 = vshrl.u32 %v36, 7
  %v38 = vsub.s32 0, %v37
  %v39 = vrot.slane %v34, %v38
  %v41 = vadd.f32 %v33, %v39
  %v42 = vmax.f32 %v41, 0.0
  %v43 = vpack.c.bf16 %v42, %v42
  %v44 = vld [vmem:[%s1] sm:$0xf]
  %v45 = vld [vmem:[%s1 + $0x4] sm:$0xf]
  %v48 = vunpack.c.l.b16 %v44
  %v49 = vunpack.c.l.b16 %v45
  %v50 = vpack.c.b16 %v49, %v48
  %vm52 = vcmask 130048
  %v54 = vsel %vm52, %v43, 0
  %56 = vmatprep.subr.bf16.mxu0 0
  %57 = vmatpush1.bf16.msra.mxu0 %v50
  %58 = vmatprep.subr.bf16.mxu0 0
  %59 = vmatpush1.bf16.msra.mxu0 0
  %60 = vmatprep.subr.bf16.mxu0 0
  %61 = vmatpush1.bf16.msra.mxu0 0
  %62 = vmatprep.subr.bf16.mxu0 0
  %63 = vmatpush1.bf16.msra.mxu0 0
  %64 = vmatprep.subr.bf16.mxu0 0
  %65 = vmatpush1.bf16.msra.mxu0 0
  %66 = vmatprep.subr.bf16.mxu0 0
  %67 = vmatpush1.bf16.msra.mxu0 0
  %68 = vmatprep.subr.bf16.mxu0 0
  %69 = vmatpush1.bf16.msra.mxu0 0
  %70 = vmatprep.subr.bf16.mxu0 0
  %71 = vmatpush1.bf16.msra.mxu0 0
  %72 = vmatprep.subr.bf16.mxu0 0
  %73 = vmatpush1.bf16.msra.mxu0 0
  %74 = vmatprep.subr.bf16.mxu0 0
  %75 = vmatpush1.bf16.msra.mxu0 0
  %76 = vmatprep.subr.bf16.mxu0 0
  %77 = vmatpush1.bf16.msra.mxu0 0
  %78 = vmatprep.subr.bf16.mxu0 0
  %79 = vmatpush1.bf16.msra.mxu0 0
  %80 = vmatprep.subr.bf16.mxu0 0
  %81 = vmatpush1.bf16.msra.mxu0 0
  %82 = vmatprep.subr.bf16.mxu0 0
  %83 = vmatpush1.bf16.msra.mxu0 0
  %84 = vmatprep.subr.bf16.mxu0 0
  %85 = vmatpush1.bf16.msra.mxu0 0
  %86 = vmatprep.subr.bf16.mxu0 0
  %87 = vmatpush1.bf16.msra.mxu0 0
  %88 = vmatprep.mubr.bf16.mxu0 0
  %89 = vmatmul.mubr.bf16.gmra.mrb[0].mxu0 %v54
  %v90 = vpop.f32.mrb[0].mxu0
  %v91 = vadd.f32 0.0, %v90
  %v92 = vpop.f32.mrb[0].mxu0
  %v93 = vpop.f32.mrb[0].mxu0
  %v94 = vpop.f32.mrb[0].mxu0
  %95 = vdwg.mxu0
  %v96 = vld [vmem:[%s4] sm:$0x1]
  %v98 = vlaneseq
  %v99 = vshrl.u32 %v98, 7
  %v100 = vsub.s32 0, %v99
  %v101 = vrot.slane %v96, %v100
  %v103 = vmul.f32 %v91, %v101
  %v104 = vld [vmem:[%s5] sm:$0x1]
  %v106 = vlaneseq
  %v107 = vshrl.u32 %v106, 7
  %v108 = vsub.s32 0, %v107
  %v109 = vrot.slane %v104, %v108
  %v111 = vadd.f32 %v103, %v109
  %v112 = vmax.f32 %v111, 0.0
  %v113 = vpack.c.bf16 %v112, %v112
  %vm114 = vcmask 253952
  %115 = vst.msk [vmem:[%s6] sm:$0x1] %vm114, %v113
  // Predicated region
  $region26: #{densenet_forward.37} parent=0 // pred_check
    _
  $region27: #{densenet_forward.37} parent=0 // pred_check_branch
    %117 = sbr.rel (0) target = $region29
  $region28: #{densenet_forward.37} parent=0 // pred_region
    _
  $region29: #{densenet_forward.37} parent=0 // pred_fallthru
    _
  // Predicated region
  $region30: #{densenet_forward.37} parent=0 // pred_check
    _
  $region31: #{densenet_forward.37} parent=0 // pred_check_branch
    %119 = sbr.rel (0) target = $region33
  $region32: #{densenet_forward.37} parent=0 // pred_region
    _
  $region33: #{densenet_forward.37} parent=0 // pred_fallthru
    _

// kernel: densenet_forward.38
$region0: #{densenet_forward.38}
  #allocation0 [shape = 'u32[]', space=smem, size = 0x4, offset = 0x4, fixed_abs, tag = 'smem constant byte address 0x4 - core index']
  #allocation1 [shape = 'u32[144,128]{1,0:T(1,128)}', space=vmem, size = 0x12000, scoped, tag = 'internal scratch']
  %s0 = inlined_call_operand.vmem [shape: bf16[2,288], index: 0, kind: input, shape index: {}]
  %s1 = inlined_call_operand.vmem [shape: bf16[288,8], index: 1, kind: input, shape index: {}]
  %s2 = inlined_call_operand.vmem [shape: bf16[2,8], index: 2, kind: output, shape index: {}]
  %s3 = sld [smem:[#allocation0]]
  $region18: #{densenet_forward.38} parent=0
    _
  %s5 = ssub.s32 1, %s3
  %s6 = scalar_select 0, %s5, %s3
  // Predicated region
  $region2: #{densenet_forward.38} parent=0 // pred_check
    _
  $region3: #{densenet_forward.38} parent=0 // pred_check_branch
    %8 = sbr.rel (0) target = $region5
  $region4: #{densenet_forward.38} parent=0 // pred_region
    _
  $region5: #{densenet_forward.38} parent=0 // pred_fallthru
    _
  // Predicated region
  $region6: #{densenet_forward.38} parent=0 // pred_check
    _
  $region7: #{densenet_forward.38} parent=0 // pred_check_branch
    %10 = sbr.rel (0) target = $region9
  $region8: #{densenet_forward.38} parent=0 // pred_region
    _
  $region9: #{densenet_forward.38} parent=0 // pred_fallthru
    _
  %v12 = vld [vmem:[%s0] sm:$0x7]
  %v13 = vld [vmem:[%s1] sm:$0xf]
  %v14 = vld [vmem:[%s1 + $0x4] sm:$0xf]
  %v15 = vld [vmem:[%s1 + $0x8] sm:$0xf]
  %v16 = vld [vmem:[%s1 + $0xc] sm:$0xf]
  %v17 = vld [vmem:[%s1 + $0x10] sm:$0xf]
  %v18 = vld [vmem:[%s1 + $0x14] sm:$0xf]
  %v19 = vld [vmem:[%s1 + $0x18] sm:$0xf]
  %v20 = vld [vmem:[%s1 + $0x1c] sm:$0xf]
  %v21 = vld [vmem:[%s1 + $0x20] sm:$0xf]
  %v22 = vld [vmem:[%s1 + $0x24] sm:$0xf]
  %v23 = vld [vmem:[%s1 + $0x28] sm:$0xf]
  %v24 = vld [vmem:[%s1 + $0x2c] sm:$0xf]
  %v25 = vld [vmem:[%s1 + $0x30] sm:$0xf]
  %v26 = vld [vmem:[%s1 + $0x34] sm:$0xf]
  %v27 = vld [vmem:[%s1 + $0x38] sm:$0xf]
  %v28 = vld [vmem:[%s1 + $0x3c] sm:$0xf]
  %v29 = vld [vmem:[%s1 + $0x40] sm:$0xf]
  %v30 = vld [vmem:[%s1 + $0x44] sm:$0xf]
  %v31 = vld [vmem:[%s1 + $0x48] sm:$0xf]
  %v32 = vld [vmem:[%s1 + $0x4c] sm:$0xf]
  %v33 = vld [vmem:[%s1 + $0x50] sm:$0xf]
  %v34 = vld [vmem:[%s1 + $0x54] sm:$0xf]
  %v35 = vld [vmem:[%s1 + $0x58] sm:$0xf]
  %v36 = vld [vmem:[%s1 + $0x5c] sm:$0xf]
  %v37 = vld [vmem:[%s1 + $0x60] sm:$0xf]
  %v38 = vld [vmem:[%s1 + $0x64] sm:$0xf]
  %v39 = vld [vmem:[%s1 + $0x68] sm:$0xf]
  %v40 = vld [vmem:[%s1 + $0x6c] sm:$0xf]
  %v41 = vld [vmem:[%s1 + $0x70] sm:$0xf]
  %v42 = vld [vmem:[%s1 + $0x74] sm:$0xf]
  %v43 = vld [vmem:[%s1 + $0x78] sm:$0xf]
  %v44 = vld [vmem:[%s1 + $0x7c] sm:$0xf]
  %v45 = vld [vmem:[%s1 + $0x80] sm:$0xf]
  %v46 = vld [vmem:[%s1 + $0x84] sm:$0xf]
  %v47 = vld [vmem:[%s1 + $0x88] sm:$0xf]
  %v48 = vld [vmem:[%s1 + $0x8c] sm:$0xf]
  %v51 = vunpack.c.l.s4 1966171168
  %v52 = vunpack.c.0.s8 %v51
  %v53 = vlaneseq
  %v54 = vshrl.u32 %v53, 7
  %v55 = vsub.s32 %v52, %v54
  %v56 = vrot.slane %v12, %v55
  %v57 = vcombine.high %v56, %v56
  %v59 = vunpack.c.l.s4 1966171168
  %v60 = vunpack.c.0.s8 %v59
  %v61 = vlaneseq
  %v62 = vshrl.u32 %v61, 7
  %v63 = vsub.s32 %v60, %v62
  %v64 = vrot.slane %v56, %v63
  %v66 = vunpack.c.l.s4 1966171168
  %v67 = vunpack.c.0.s8 %v66
  %v68 = vlaneseq
  %v69 = vshrl.u32 %v68, 7
  %v70 = vsub.s32 %v67, %v69
  %v71 = vrot.slane %v57, %v70
  %v72 = vcombine.high %v64, %v64
  %v111 = vunpack.c.l.b16 %v13
  %v112 = vunpack.c.l.b16 %v14
  %v113 = vunpack.c.l.b16 %v15
  %v114 = vunpack.c.l.b16 %v16
  %v115 = vunpack.c.l.b16 %v17
  %v116 = vunpack.c.l.b16 %v18
  %v117 = vunpack.c.l.b16 %v19
  %v118 = vunpack.c.l.b16 %v20
  %v119 = vunpack.c.l.b16 %v21
  %v120 = vunpack.c.l.b16 %v22
  %v121 = vunpack.c.l.b16 %v23
  %v122 = vunpack.c.l.b16 %v24
  %v123 = vunpack.c.l.b16 %v25
  %v124 = vunpack.c.l.b16 %v26
  %v125 = vunpack.c.l.b16 %v27
  %v126 = vunpack.c.l.b16 %v28
  %v127 = vunpack.c.l.b16 %v29
  %v128 = vunpack.c.l.b16 %v30
  %v129 = vunpack.c.l.b16 %v31
  %v130 = vunpack.c.l.b16 %v32
  %v131 = vunpack.c.l.b16 %v33
  %v132 = vunpack.c.l.b16 %v34
  %v133 = vunpack.c.l.b16 %v35
  %v134 = vunpack.c.l.b16 %v36
  %v135 = vunpack.c.l.b16 %v37
  %v136 = vunpack.c.l.b16 %v38
  %v137 = vunpack.c.l.b16 %v39
  %v138 = vunpack.c.l.b16 %v40
  %v139 = vunpack.c.l.b16 %v41
  %v140 = vunpack.c.l.b16 %v42
  %v141 = vunpack.c.l.b16 %v43
  %v142 = vunpack.c.l.b16 %v44
  %v143 = vunpack.c.l.b16 %v45
  %v144 = vunpack.c.l.b16 %v46
  %v145 = vunpack.c.l.b16 %v47
  %v146 = vunpack.c.l.b16 %v48
  %v147 = vpack.c.b16 %v112, %v111
  %v148 = vpack.c.b16 %v114, %v113
  %v149 = vpack.c.b16 %v116, %v115
  %v150 = vpack.c.b16 %v118, %v117
  %v151 = vpack.c.b16 %v120, %v119
  %v152 = vpack.c.b16 %v122, %v121
  %v153 = vpack.c.b16 %v124, %v123
  %v154 = vpack.c.b16 %v126, %v125
  %v155 = vpack.c.b16 %v128, %v127
  %v156 = vpack.c.b16 %v130, %v129
  %v157 = vpack.c.b16 %v132, %v131
  %v158 = vpack.c.b16 %v134, %v133
  %v159 = vpack.c.b16 %v136, %v135
  %v160 = vpack.c.b16 %v138, %v137
  %v161 = vpack.c.b16 %v140, %v139
  %v162 = vpack.c.b16 %v142, %v141
  %v163 = vpack.c.b16 %v144, %v143
  %v164 = vpack.c.b16 %v146, %v145
  %vm183 = vcmask 261120
  %v185 = vsel %vm183, %v72, 0
  %187 = vmatprep.subr.bf16.mxu0 0
  %188 = vmatpush1.bf16.msra.mxu0 %v147
  %189 = vmatprep.subr.bf16.mxu0 0
  %190 = vmatpush1.bf16.msra.mxu0 %v148
  %191 = vmatprep.subr.bf16.mxu0 0
  %192 = vmatpush1.bf16.msra.mxu0 %v149
  %193 = vmatprep.subr.bf16.mxu0 0
  %194 = vmatpush1.bf16.msra.mxu0 %v150
  %195 = vmatprep.subr.bf16.mxu0 0
  %196 = vmatpush1.bf16.msra.mxu0 %v151
  %197 = vmatprep.subr.bf16.mxu0 0
  %198 = vmatpush1.bf16.msra.mxu0 %v152
  %199 = vmatprep.subr.bf16.mxu0 0
  %200 = vmatpush1.bf16.msra.mxu0 %v153
  %201 = vmatprep.subr.bf16.mxu0 0
  %202 = vmatpush1.bf16.msra.mxu0 %v154
  %203 = vmatprep.subr.bf16.mxu0 0
  %204 = vmatpush1.bf16.msra.mxu0 %v155
  %205 = vmatprep.subr.bf16.mxu0 0
  %206 = vmatpush1.bf16.msra.mxu0 %v156
  %207 = vmatprep.subr.bf16.mxu0 0
  %208 = vmatpush1.bf16.msra.mxu0 %v157
  %209 = vmatprep.subr.bf16.mxu0 0
  %210 = vmatpush1.bf16.msra.mxu0 %v158
  %211 = vmatprep.subr.bf16.mxu0 0
  %212 = vmatpush1.bf16.msra.mxu0 %v159
  %213 = vmatprep.subr.bf16.mxu0 0
  %214 = vmatpush1.bf16.msra.mxu0 %v160
  %215 = vmatprep.subr.bf16.mxu0 0
  %216 = vmatpush1.bf16.msra.mxu0 %v161
  %217 = vmatprep.subr.bf16.mxu0 0
  %218 = vmatpush1.bf16.msra.mxu0 %v162
  %219 = vmatprep.mubr.bf16.mxu0 %v71
  %220 = vmatmul.mubr.bf16.gmra.mrb[0].mxu0 %v64
  %v221 = vpop.f32.mrb[0].mxu0
  %v222 = vadd.f32 0.0, %v221
  %v223 = vpop.f32.mrb[0].mxu0
  %v224 = vpop.f32.mrb[0].mxu0
  %v225 = vpop.f32.mrb[0].mxu0
  %226 = vdwg.mxu0
  %227 = vmatprep.subr.bf16.mxu0 0
  %228 = vmatpush1.bf16.msra.mxu0 %v163
  %229 = vmatprep.subr.bf16.mxu0 0
  %230 = vmatpush1.bf16.msra.mxu0 %v164
  %231 = vmatprep.subr.bf16.mxu0 0
  %232 = vmatpush1.bf16.msra.mxu0 0
  %233 = vmatprep.subr.bf16.mxu0 0
  %234 = vmatpush1.bf16.msra.mxu0 0
  %235 = vmatprep.subr.bf16.mxu0 0
  %236 = vmatpush1.bf16.msra.mxu0 0
  %237 = vmatprep.subr.bf16.mxu0 0
  %238 = vmatpush1.bf16.msra.mxu0 0
  %239 = vmatprep.subr.bf16.mxu0 0
  %240 = vmatpush1.bf16.msra.mxu0 0
  %241 = vmatprep.subr.bf16.mxu0 0
  %242 = vmatpush1.bf16.msra.mxu0 0
  %243 = vmatprep.subr.bf16.mxu0 0
  %244 = vmatpush1.bf16.msra.mxu0 0
  %245 = vmatprep.subr.bf16.mxu0 0
  %246 = vmatpush1.bf16.msra.mxu0 0
  %247 = vmatprep.subr.bf16.mxu0 0
  %248 = vmatpush1.bf16.msra.mxu0 0
  %249 = vmatprep.subr.bf16.mxu0 0
  %250 = vmatpush1.bf16.msra.mxu0 0
  %251 = vmatprep.subr.bf16.mxu0 0
  %252 = vmatpush1.bf16.msra.mxu0 0
  %253 = vmatprep.subr.bf16.mxu0 0
  %254 = vmatpush1.bf16.msra.mxu0 0
  %255 = vmatprep.subr.bf16.mxu0 0
  %256 = vmatpush1.bf16.msra.mxu0 0
  %257 = vmatprep.subr.bf16.mxu0 0
  %258 = vmatpush1.bf16.msra.mxu0 0
  %259 = vmatprep.mubr.bf16.mxu0 0
  %260 = vmatmul.mubr.bf16.gmra.mrb[0].mxu0 %v185
  %v261 = vpop.f32.mrb[0].mxu0
  %v262 = vadd.f32 %v222, %v261
  %v263 = vpop.f32.mrb[0].mxu0
  %v264 = vpop.f32.mrb[0].mxu0
  %v265 = vpop.f32.mrb[0].mxu0
  %266 = vdwg.mxu0
  %v267 = vpack.c.bf16 %v262, %v262
  %vm268 = vcmask 57344
  %269 = vst.msk [vmem:[%s2] sm:$0x1] %vm268, %v267
  // Predicated region
  $region10: #{densenet_forward.38} parent=0 // pred_check
    _
  $region11: #{densenet_forward.38} parent=0 // pred_check_branch
    %271 = sbr.rel (0) target = $region13
  $region12: #{densenet_forward.38} parent=0 // pred_region
    _
  $region13: #{densenet_forward.38} parent=0 // pred_fallthru
    _
  // Predicated region
  $region14: #{densenet_forward.38} parent=0 // pred_check
    _
  $region15: #{densenet_forward.38} parent=0 // pred_check_branch
    %273 = sbr.rel (0) target = $region17
  $region16: #{densenet_forward.38} parent=0 // pred_region
    _
  $region17: #{densenet_forward.38} parent=0 // pred_fallthru
    _

// kernel: densenet_forward.39
$region0: #{densenet_forward.39}
  #allocation0 [shape = 'u32[]', space=smem, size = 0x4, offset = 0x4, fixed_abs, tag = 'smem constant byte address 0x4 - core index']
  #allocation1 [shape = 'u32[144,128]{1,0:T(1,128)}', space=vmem, size = 0x12000, scoped, tag = 'internal scratch']
  %s0 = inlined_call_operand.vmem [shape: bf16[2,24], index: 0, kind: input, shape index: {}]
  %s1 = inlined_call_operand.vmem [shape: bf16[24,32], index: 1, kind: input, shape index: {}]
  %s2 = inlined_call_operand.vmem [shape: f32[1,24], index: 2, kind: input, shape index: {}]
  %s3 = inlined_call_operand.vmem [shape: f32[1,24], index: 3, kind: input, shape index: {}]
  %s4 = inlined_call_operand.vmem [shape: f32[1,32], index: 4, kind: input, shape index: {}]
  %s5 = inlined_call_operand.vmem [shape: f32[1,32], index: 5, kind: input, shape index: {}]
  %s6 = inlined_call_operand.vmem [shape: bf16[2,32], index: 6, kind: output, shape index: {}]
  %s7 = sld [smem:[#allocation0]]
  $region34: #{densenet_forward.39} parent=0
    _
  %s9 = ssub.s32 1, %s7
  %s10 = scalar_select 0, %s9, %s7
  // Predicated region
  $region2: #{densenet_forward.39} parent=0 // pred_check
    _
  $region3: #{densenet_forward.39} parent=0 // pred_check_branch
    %12 = sbr.rel (0) target = $region5
  $region4: #{densenet_forward.39} parent=0 // pred_region
    _
  $region5: #{densenet_forward.39} parent=0 // pred_fallthru
    _
  // Predicated region
  $region6: #{densenet_forward.39} parent=0 // pred_check
    _
  $region7: #{densenet_forward.39} parent=0 // pred_check_branch
    %14 = sbr.rel (0) target = $region9
  $region8: #{densenet_forward.39} parent=0 // pred_region
    _
  $region9: #{densenet_forward.39} parent=0 // pred_fallthru
    _
  // Predicated region
  $region10: #{densenet_forward.39} parent=0 // pred_check
    _
  $region11: #{densenet_forward.39} parent=0 // pred_check_branch
    %16 = sbr.rel (0) target = $region13
  $region12: #{densenet_forward.39} parent=0 // pred_region
    _
  $region13: #{densenet_forward.39} parent=0 // pred_fallthru
    _
  // Predicated region
  $region14: #{densenet_forward.39} parent=0 // pred_check
    _
  $region15: #{densenet_forward.39} parent=0 // pred_check_branch
    %18 = sbr.rel (0) target = $region17
  $region16: #{densenet_forward.39} parent=0 // pred_region
    _
  $region17: #{densenet_forward.39} parent=0 // pred_fallthru
    _
  // Predicated region
  $region18: #{densenet_forward.39} parent=0 // pred_check
    _
  $region19: #{densenet_forward.39} parent=0 // pred_check_branch
    %20 = sbr.rel (0) target = $region21
  $region20: #{densenet_forward.39} parent=0 // pred_region
    _
  $region21: #{densenet_forward.39} parent=0 // pred_fallthru
    _
  // Predicated region
  $region22: #{densenet_forward.39} parent=0 // pred_check
    _
  $region23: #{densenet_forward.39} parent=0 // pred_check_branch
    %22 = sbr.rel (0) target = $region25
  $region24: #{densenet_forward.39} parent=0 // pred_region
    _
  $region25: #{densenet_forward.39} parent=0 // pred_fallthru
    _
  %v24 = vld [vmem:[%s0] sm:$0x1]
  %v25 = vunpack.c.l.bf16 %v24
  %v26 = vld [vmem:[%s2] sm:$0x1]
  %v28 = vlaneseq
  %v29 = vshrl.u32 %v28, 7
  %v30 = vsub.s32 0, %v29
  %v31 = vrot.slane %v26, %v30
  %v33 = vmul.f32 %v25, %v31
  %v34 = vld [vmem:[%s3] sm:$0x1]
  %v36 = vlaneseq
  %v37 = vshrl.u32 %v36, 7
  %v38 = vsub.s32 0, %v37
  %v39 = vrot.slane %v34, %v38
  %v41 = vadd.f32 %v33, %v39
  %v42 = vmax.f32 %v41, 0.0
  %v43 = vpack.c.bf16 %v42, %v42
  %v44 = vld [vmem:[%s1] sm:$0xf]
  %v45 = vld [vmem:[%s1 + $0x4] sm:$0xf]
  %v46 = vld [vmem:[%s1 + $0x8] sm:$0xf]
  %v50 = vunpack.c.l.b16 %v44
  %v51 = vunpack.c.l.b16 %v45
  %v52 = vunpack.c.l.b16 %v46
  %v53 = vpack.c.b16 %v51, %v50
  %v54 = vpack.c.b16 %v52, %v52
  %vm56 = vcmask 195584
  %v58 = vsel %vm56, %v43, 0
  %vm60 = vcmask 1043456
  %v62 = vsel %vm60, %v54, 0
  %64 = vmatprep.subr.bf16.mxu0 0
  %65 = vmatpush1.bf16.msra.mxu0 %v53
  %66 = vmatprep.subr.bf16.mxu0 0
  %67 = vmatpush1.bf16.msra.mxu0 %v62
  %68 = vmatprep.subr.bf16.mxu0 0
  %69 = vmatpush1.bf16.msra.mxu0 0
  %70 = vmatprep.subr.bf16.mxu0 0
  %71 = vmatpush1.bf16.msra.mxu0 0
  %72 = vmatprep.subr.bf16.mxu0 0
  %73 = vmatpush1.bf16.msra.mxu0 0
  %74 = vmatprep.subr.bf16.mxu0 0
  %75 = vmatpush1.bf16.msra.mxu0 0
  %76 = vmatprep.subr.bf16.mxu0 0
  %77 = vmatpush1.bf16.msra.mxu0 0
  %78 = vmatprep.subr.bf16.mxu0 0
  %79 = vmatpush1.bf16.msra.mxu0 0
  %80 = vmatprep.subr.bf16.mxu0 0
  %81 = vmatpush1.bf16.msra.mxu0 0
  %82 = vmatprep.subr.bf16.mxu0 0
  %83 = vmatpush1.bf16.msra.mxu0 0
  %84 = vmatprep.subr.bf16.mxu0 0
  %85 = vmatpush1.bf16.msra.mxu0 0
  %86 = vmatprep.subr.bf16.mxu0 0
  %87 = vmatpush1.bf16.msra.mxu0 0
  %88 = vmatprep.subr.bf16.mxu0 0
  %89 = vmatpush1.bf16.msra.mxu0 0
  %90 = vmatprep.subr.bf16.mxu0 0
  %91 = vmatpush1.bf16.msra.mxu0 0
  %92 = vmatprep.subr.bf16.mxu0 0
  %93 = vmatpush1.bf16.msra.mxu0 0
  %94 = vmatprep.subr.bf16.mxu0 0
  %95 = vmatpush1.bf16.msra.mxu0 0
  %96 = vmatprep.mubr.bf16.mxu0 0
  %97 = vmatmul.mubr.bf16.gmra.mrb[0].mxu0 %v58
  %v98 = vpop.f32.mrb[0].mxu0
  %v99 = vadd.f32 0.0, %v98
  %v100 = vpop.f32.mrb[0].mxu0
  %v101 = vpop.f32.mrb[0].mxu0
  %v102 = vpop.f32.mrb[0].mxu0
  %103 = vdwg.mxu0
  %v104 = vld [vmem:[%s4] sm:$0x1]
  %v106 = vlaneseq
  %v107 = vshrl.u32 %v106, 7
  %v108 = vsub.s32 0, %v107
  %v109 = vrot.slane %v104, %v108
  %v111 = vmul.f32 %v99, %v109
  %v112 = vld [vmem:[%s5] sm:$0x1]
  %v114 = vlaneseq
  %v115 = vshrl.u32 %v114, 7
  %v116 = vsub.s32 0, %v115
  %v117 = vrot.slane %v112, %v116
  %v119 = vadd.f32 %v111, %v117
  %v120 = vmax.f32 %v119, 0.0
  %v121 = vpack.c.bf16 %v120, %v120
  %vm122 = vcmask 253952
  %123 = vst.msk [vmem:[%s6] sm:$0x1] %vm122, %v121
  // Predicated region
  $region26: #{densenet_forward.39} parent=0 // pred_check
    _
  $region27: #{densenet_forward.39} parent=0 // pred_check_branch
    %125 = sbr.rel (0) target = $region29
  $region28: #{densenet_forward.39} parent=0 // pred_region
    _
  $region29: #{densenet_forward.39} parent=0 // pred_fallthru
    _
  // Predicated region
  $region30: #{densenet_forward.39} parent=0 // pred_check
    _
  $region31: #{densenet_forward.39} parent=0 // pred_check_branch
    %127 = sbr.rel (0) target = $region33
  $region32: #{densenet_forward.39} parent=0 // pred_region
    _
  $region33: #{densenet_forward.39} parent=0 // pred_fallthru
    _

// kernel: densenet_forward.41
$region0: #{densenet_forward.41}
  #allocation0 [shape = 'u32[]', space=smem, size = 0x4, offset = 0x4, fixed_abs, tag = 'smem constant byte address 0x4 - core index']
  #allocation1 [shape = 'u32[144,128]{1,0:T(1,128)}', space=vmem, size = 0x12000, scoped, tag = 'internal scratch']
  %s0 = inlined_call_operand.vmem [shape: bf16[2,32], index: 0, kind: input, shape index: {}]
  %s1 = inlined_call_operand.vmem [shape: bf16[32,10], index: 1, kind: input, shape index: {}]
  %s2 = inlined_call_operand.vmem [shape: f32[1,32], index: 2, kind: input, shape index: {}]
  %s3 = inlined_call_operand.vmem [shape: f32[1,32], index: 3, kind: input, shape index: {}]
  %s4 = inlined_call_operand.vmem [shape: f32[1,10], index: 4, kind: input, shape index: {}]
  %s5 = inlined_call_operand.hbm [shape: f32[2,10], index: 5, kind: output, shape index: {}]
  %s6 = sld [smem:[#allocation0]]
  $region30: #{densenet_forward.41} parent=0
    _
  %s8 = ssub.s32 1, %s6
  %s9 = scalar_select 0, %s8, %s6
  $region1: #{densenet_forward.41} parent=0
    #allocation2 [shape = 'u8[1024]{0}', space=vmem, size = 0x400, scoped, tag = 'output window, operand 0, single buffered']
    #allocation3 [shape = 's32[1]{0}', space=sflag, size = 0x4, scoped, tag = 'scoped memory for densenet_forward.41']
    %10 = vsyncpa [#allocation3], 0
    // Predicated region
    $region2: #{densenet_forward.41} parent=1 // pred_check
      _
    $region3: #{densenet_forward.41} parent=1 // pred_check_branch
      %12 = sbr.rel (0) target = $region5
    $region4: #{densenet_forward.41} parent=1 // pred_region
      _
    $region5: #{densenet_forward.41} parent=1 // pred_fallthru
      _
    // Predicated region
    $region6: #{densenet_forward.41} parent=1 // pred_check
      _
    $region7: #{densenet_forward.41} parent=1 // pred_check_branch
      %14 = sbr.rel (0) target = $region9
    $region8: #{densenet_forward.41} parent=1 // pred_region
      _
    $region9: #{densenet_forward.41} parent=1 // pred_fallthru
      _
    // Predicated region
    $region10: #{densenet_forward.41} parent=1 // pred_check
      _
    $region11: #{densenet_forward.41} parent=1 // pred_check_branch
      %16 = sbr.rel (0) target = $region13
    $region12: #{densenet_forward.41} parent=1 // pred_region
      _
    $region13: #{densenet_forward.41} parent=1 // pred_fallthru
      _
    // Predicated region
    $region14: #{densenet_forward.41} parent=1 // pred_check
      _
    $region15: #{densenet_forward.41} parent=1 // pred_check_branch
      %18 = sbr.rel (0) target = $region17
    $region16: #{densenet_forward.41} parent=1 // pred_region
      _
    $region17: #{densenet_forward.41} parent=1 // pred_fallthru
      _
    // Predicated region
    $region18: #{densenet_forward.41} parent=1 // pred_check
      _
    $region19: #{densenet_forward.41} parent=1 // pred_check_branch
      %20 = sbr.rel (0) target = $region21
    $region20: #{densenet_forward.41} parent=1 // pred_region
      _
    $region21: #{densenet_forward.41} parent=1 // pred_fallthru
      _
    %v22 = vld [vmem:[%s0] sm:$0x1]
    %v23 = vunpack.c.l.bf16 %v22
    %v24 = vld [vmem:[%s2] sm:$0x1]
    %v26 = vlaneseq
    %v27 = vshrl.u32 %v26, 7
    %v28 = vsub.s32 0, %v27
    %v29 = vrot.slane %v24, %v28
    %v31 = vmul.f32 %v23, %v29
    %v32 = vld [vmem:[%s3] sm:$0x1]
    %v34 = vlaneseq
    %v35 = vshrl.u32 %v34, 7
    %v36 = vsub.s32 0, %v35
    %v37 = vrot.slane %v32, %v36
    %v39 = vadd.f32 %v31, %v37
    %v40 = vmax.f32 %v39, 0.0
    %v41 = vpack.c.bf16 %v40, %v40
    %v42 = vld [vmem:[%s1] sm:$0xf]
    %v43 = vld [vmem:[%s1 + $0x4] sm:$0xf]
    %v44 = vld [vmem:[%s1 + $0x8] sm:$0xf]
    %v45 = vld [vmem:[%s1 + $0xc] sm:$0xf]
    %v46 = vld [vmem:[%s4] sm:$0x1]
    %v48 = vlaneseq
    %v49 = vshrl.u32 %v48, 7
    %v50 = vsub.s32 0, %v49
    %v51 = vrot.slane %v46, %v50
    %v57 = vunpack.c.l.b16 %v42
    %v58 = vunpack.c.l.b16 %v43
    %v59 = vunpack.c.l.b16 %v44
    %v60 = vunpack.c.l.b16 %v45
    %v61 = vpack.c.b16 %v58, %v57
    %v62 = vpack.c.b16 %v60, %v59
    %vm65 = vcmask 261120
    %v67 = vsel %vm65, %v41, 0
    %69 = vmatprep.subr.bf16.mxu0 0
    %70 = vmatpush1.bf16.msra.mxu0 %v61
    %71 = vmatprep.subr.bf16.mxu0 0
    %72 = vmatpush1.bf16.msra.mxu0 %v62
    %73 = vmatprep.subr.bf16.mxu0 0
    %74 = vmatpush1.bf16.msra.mxu0 0
    %75 = vmatprep.subr.bf16.mxu0 0
    %76 = vmatpush1.bf16.msra.mxu0 0
    %77 = vmatprep.subr.bf16.mxu0 0
    %78 = vmatpush1.bf16.msra.mxu0 0
    %79 = vmatprep.subr.bf16.mxu0 0
    %80 = vmatpush1.bf16.msra.mxu0 0
    %81 = vmatprep.subr.bf16.mxu0 0
    %82 = vmatpush1.bf16.msra.mxu0 0
    %83 = vmatprep.subr.bf16.mxu0 0
    %84 = vmatpush1.bf16.msra.mxu0 0
    %85 = vmatprep.subr.bf16.mxu0 0
    %86 = vmatpush1.bf16.msra.mxu0 0
    %87 = vmatprep.subr.bf16.mxu0 0
    %88 = vmatpush1.bf16.msra.mxu0 0
    %89 = vmatprep.subr.bf16.mxu0 0
    %90 = vmatpush1.bf16.msra.mxu0 0
    %91 = vmatprep.subr.bf16.mxu0 0
    %92 = vmatpush1.bf16.msra.mxu0 0
    %93 = vmatprep.subr.bf16.mxu0 0
    %94 = vmatpush1.bf16.msra.mxu0 0
    %95 = vmatprep.subr.bf16.mxu0 0
    %96 = vmatpush1.bf16.msra.mxu0 0
    %97 = vmatprep.subr.bf16.mxu0 0
    %98 = vmatpush1.bf16.msra.mxu0 0
    %99 = vmatprep.subr.bf16.mxu0 0
    %100 = vmatpush1.bf16.msra.mxu0 0
    %101 = vmatprep.mubr.bf16.mxu0 0
    %102 = vmatmul.mubr.bf16.gmra.mrb[0].mxu0 %v67
    %v103 = vpop.f32.mrb[0].mxu0
    %v104 = vadd.f32 %v51, %v103
    %v105 = vpop.f32.mrb[0].mxu0
    %v106 = vpop.f32.mrb[0].mxu0
    %v107 = vpop.f32.mrb[0].mxu0
    %108 = vdwg.mxu0
    %vm109 = vcmask 74752
    %v110 = vsel %vm109, %v104, -inf
    %111 = vmax.xlane.f32.xlu0 %v110
    %v112 = vpop.xlane.xlu0 %111
    %v113 = vsub.f32 %v104, %v112
    %v114 = vmul.f32 %v113, 1.442695
    %v115 = vpow.pop %v114
    %v116 = vsel %vm109, %v115, 0.0
    %117 = vadd.xlane.f32.xlu0 %v116
    %v118 = vpop.xlane.xlu0 %117
    %v119 = vlog2.pop %v118
    %v120 = vmul.f32 %v119, 0.6931472
    %v121 = vsub.f32 %v113, %v120
    %122 = vst.msk [vmem:[#allocation2] sm:$0x3] %vm109, %v121
    // Predicated region
    $region22: #{densenet_forward.41} parent=1 // pred_check
      _
    $region23: #{densenet_forward.41} parent=1 // pred_check_branch
      %124 = sbr.rel (0) target = $region25
    $region24: #{densenet_forward.41} parent=1 // pred_region
      %s126 = ssub.s32 32, 32
      %127 = vsyncadd [#allocation3], %s126
      %s129 = sshll.u32 [#allocation2], 4
      %s130 = int_to_ptr.vmem [resolvable:$true] %s129
      %132 = dma.vmem_to_hbm [thread:$0]  %s130, 32, %s5, [#allocation3]
    $region25: #{densenet_forward.41} parent=1 // pred_fallthru
      _
    // Predicated region
    $region26: #{densenet_forward.41} parent=1 // pred_check
      _
    $region27: #{densenet_forward.41} parent=1 // pred_check_branch
      %134 = sbr.rel (0) target = $region29
    $region28: #{densenet_forward.41} parent=1 // pred_region
      %135 = dma.done [#allocation3], 32
    $region29: #{densenet_forward.41} parent=1 // pred_fallthru
      _
    %136 = vsyncpa [#allocation3], 1

</llo_original>
